<compile_context>
chip_gen: v7x
topology: tpu7x:2x2x1
jax: 0.10.0
libtpu: 0.0.40
codegen_flags: <defaults>
</compile_context>

<pallas_src>
import functools

import jax
import jax.numpy as jnp
from jax.experimental import pallas as pl
from jax.experimental.pallas import tpu as pltpu

LRELU_SLOPE = 0.2
BN_EPS = 1e-5
LANE = 128
TM_MAX = 1024                      # row tile for the tiled initial conv
_VMEM_LIMIT = 64 * 1024 * 1024     # > default scoped VMEM on v5e/v6e/v7x

_VMEM_SPEC = pl.BlockSpec(memory_space=pltpu.MemorySpace.VMEM)


def _round_up(x, m):
    return (x + m - 1) // m * m


def _pad_lane(c):
    return max(LANE, _round_up(c, LANE))


# ---------------------------------------------------------------------------
# Pallas kernels
# ---------------------------------------------------------------------------
def _conv_lrelu_kernel(p_ref, w_ref, o_ref):
    """Initial conv (im2col matmul, bf16 in / f32 acc) + LeakyReLU(0.2)."""
    y = jnp.dot(p_ref[...], w_ref[...], preferred_element_type=jnp.float32)
    o_ref[...] = jnp.where(y > 0, y, LRELU_SLOPE * y).astype(o_ref.dtype)


def _pyr_conv_bn_lrelu_kernel(slab_ref, w_ref, mask_ref, g_ref, b_ref, o_ref,
                              *, ow1, inv_count):
    """Fused pyramid layer: 4x4/s2/p1 conv as 16 accumulating dots over the
    four phase slabs (fused im2col), then BatchNorm2d with train-mode batch
    statistics (masked to valid rows, biased variance, eps=1e-5) + LeakyReLU.

    slab_ref : (4, ms_pad, Cin_p) bf16   flattened even/odd phase planes
    w_ref    : (16, Cin_p, Cout_p) bf16  per-tap weight matrices
    mask_ref : (Mo, 1) f32               1 for valid output rows, 0 for garbage
    o_ref    : (Mo, Cout_p) bf16         output in padded (OH+1)x(OW+1) space
    """
    mo = o_ref.shape[0]
    acc = jnp.zeros(o_ref.shape, jnp.float32)
    for ki in range(4):
        for kj in range(4):
            s = (ki % 2) * 2 + (kj % 2)              # which phase slab
            off = (ki // 2) * ow1 + (kj // 2)        # static row offset
            acc = acc + jnp.dot(slab_ref[s, off:off + mo, :],
                                w_ref[ki * 4 + kj],
                                preferred_element_type=jnp.float32)

    msk = mask_ref[...]                               # (Mo, 1)
    mean = jnp.sum(acc * msk, axis=0, keepdims=True) * inv_count
    cen = (acc - mean) * msk
    var = jnp.sum(cen * cen, axis=0, keepdims=True) * inv_count
    yn = (acc - mean) * jax.lax.rsqrt(var + BN_EPS)
    yn = yn * g_ref[...] + b_ref[...]
    o_ref[...] = jnp.where(yn > 0, yn, LRELU_SLOPE * yn).astype(o_ref.dtype)


def _tail_kernel(p_ref, wf_ref, wc_ref, feat_ref, clas_ref):
    """Final 4x4 valid conv as ONE matmul (-> feat) + classifier centre tap
    (VPU lane reduction) + sigmoid (-> clas)."""
    feat = jnp.dot(p_ref[...], wf_ref[...], preferred_element_type=jnp.float32)
    feat_ref[...] = feat
    logits = jnp.sum(feat * wc_ref[...], axis=-1, keepdims=True)
    clas_ref[...] = jax.nn.sigmoid(logits)


# ---------------------------------------------------------------------------
# pallas_call wrappers
# ---------------------------------------------------------------------------
def _call_initial_conv(patches, w2d):
    """Row-tiled initial conv: grid over M = N*OH*OW, parallel semantics."""
    rows, k = patches.shape
    cout_p = w2d.shape[1]
    tm = TM_MAX if rows >= TM_MAX else _round_up(rows, 8)
    rows_p = _round_up(rows, tm)
    if rows_p != rows:
        patches = jnp.pad(patches, ((0, rows_p - rows), (0, 0)))
    out = pl.pallas_call(
        _conv_lrelu_kernel,
        out_shape=jax.ShapeDtypeStruct((rows_p, cout_p), jnp.bfloat16),
        grid=(rows_p // tm,),
        in_specs=[pl.BlockSpec((tm, k), lambda i: (i, 0)),
                  # TODO(synk): single-buffer this invariant weight slab
                  # (pipeline_mode=pl.Buffered(1)) once exercised on v7x.
                  pl.BlockSpec((k, cout_p), lambda i: (0, 0))],
        out_specs=pl.BlockSpec((tm, cout_p), lambda i: (i, 0)),
        compiler_params=pltpu.CompilerParams(
            dimension_semantics=("parallel",),
            vmem_limit_bytes=_VMEM_LIMIT),
    )(patches, w2d)
    return out[:rows] if rows_p != rows else out


def _call_pyr_layer(slabs, wtaps, mask, gamma, beta, *, ow1, mo, inv_count):
    cout_p = wtaps.shape[-1]
    kern = functools.partial(_pyr_conv_bn_lrelu_kernel,
                             ow1=ow1, inv_count=inv_count)
    return pl.pallas_call(
        kern,
        out_shape=jax.ShapeDtypeStruct((mo, cout_p), jnp.bfloat16),
        in_specs=[_VMEM_SPEC] * 5,
        out_specs=_VMEM_SPEC,
        compiler_params=pltpu.CompilerParams(vmem_limit_bytes=_VMEM_LIMIT),
    )(slabs, wtaps, mask, gamma, beta)


def _call_tail(p, wf, wc):
    n, nz_p = p.shape[0], wf.shape[1]
    return pl.pallas_call(
        _tail_kernel,
        out_shape=(jax.ShapeDtypeStruct((n, nz_p), jnp.float32),
                   jax.ShapeDtypeStruct((n, 1), jnp.float32)),
        in_specs=[_VMEM_SPEC] * 3,
        out_specs=(_VMEM_SPEC, _VMEM_SPEC),
        compiler_params=pltpu.CompilerParams(vmem_limit_bytes=_VMEM_LIMIT),
    )(p, wf, wc)


# ---------------------------------------------------------------------------
# XLA glue (cheap layout work only; no patch-matrix materialization for the
# pyramid layers)
# ---------------------------------------------------------------------------
def _im2col_s2p1(x):
    """x: (N, H, W, C) -> (N*OH*OW, 16*C) patches for the 4x4/s2/p1 conv.
    Column order (kh, kw, c) matches the weight slabs.  Used only for the
    initial conv, where C = nc is tiny."""
    n, h, w, c = x.shape
    oh, ow = h // 2, w // 2
    xp = jnp.pad(x, ((0, 0), (1, 1), (1, 1), (0, 0)))
    taps = [xp[:, i:i + 2 * oh:2, j:j + 2 * ow:2, :]
            for i in range(4) for j in range(4)]
    p = jnp.concatenate(taps, axis=-1).reshape(n * oh * ow, 16 * c)
    return p, oh, ow


def _phase_slabs(act):
    """act: (N, H, W, C) bf16 -> stacked phase slabs of the pad-1 input.

    Returns (slabs, oh, ow, mo):
      slabs: (4, ms_pad, C) bf16, slab s = pi*2+pj holds x_pad[:, pi::2, pj::2, :]
             flattened in (n, y, x) order and zero-padded with >= ow+2 rows.
      Inside the kernel, conv tap (ki, kj) is the contiguous row window
      [off, off+mo) of slab (ki%2, kj%2) with off = (ki//2)*(ow+1) + kj//2.
    """
    n, h, w, c = act.shape
    oh, ow = h // 2, w // 2
    xp = jnp.pad(act, ((0, 0), (1, 1), (1, 1), (0, 0)))
    mo = n * (oh + 1) * (ow + 1)
    ms_pad = _round_up(mo + ow + 2, 8)
    slabs = []
    for pi in range(2):
        for pj in range(2):
            ph = xp[:, pi::2, pj::2, :].reshape(mo, c)
            slabs.append(jnp.pad(ph, ((0, ms_pad - mo), (0, 0))))
    return jnp.stack(slabs, axis=0), oh, ow, mo


def _valid_mask(n, oh, ow):
    """f32 mask over the padded (oh+1)x(ow+1) output linear space."""
    oy = jnp.arange(oh + 1)
    ox = jnp.arange(ow + 1)
    m2 = (oy[:, None] < oh) & (ox[None, :] < ow)
    m = jnp.broadcast_to(m2[None], (n, oh + 1, ow + 1))
    return m.reshape(n * (oh + 1) * (ow + 1), 1).astype(jnp.float32)


# ---------------------------------------------------------------------------
# Forward pass (mirrors BasicDiscriminator.forward; n_extra_layers = 0)
# ---------------------------------------------------------------------------
def basic_discriminator_forward(params, x):
    n = x.shape[0]
    # NCHW -> NHWC once, already in bf16 (halves layer-1 input HBM traffic).
    cur = jnp.transpose(x, (0, 2, 3, 1)).astype(jnp.bfloat16)

    # initial conv (nc -> ndf, 4x4, s2, p1) + LeakyReLU   [row-tiled, parallel]
    p, oh, ow = _im2col_s2p1(cur)
    y = _call_initial_conv(p, params["w1"])
    cur = y.reshape(n, oh, ow, -1)                        # lazy view

    # pyramid: fused conv(4x4,s2,p1) + BatchNorm2d(batch stats) + LeakyReLU,
    # im2col fused into the kernel via phase slabs.
    for wtaps, gamma, beta in params["pyramid"]:
        assert cur.shape[-1] == wtaps.shape[1], (cur.shape, wtaps.shape)
        slabs, oh, ow, mo = _phase_slabs(cur)
        mask = _valid_mask(n, oh, ow)
        y = _call_pyr_layer(slabs, wtaps, mask, gamma, beta,
                            ow1=ow + 1, mo=mo,
                            inv_count=1.0 / float(n * oh * ow))
        cout_p = wtaps.shape[-1]
        # drop the garbage edge rows of the padded output space (lazy, fuses
        # into the next layer's pad + phase split)
        cur = y.reshape(n, oh + 1, ow + 1, cout_p)[:, :oh, :ow, :]

    # tail: final 4x4 valid conv (-> feat) + centre-tap classifier + sigmoid
    assert cur.shape[1] == 4 and cur.shape[2] == 4, cur.shape
    p_tail = cur.reshape(n, 16 * cur.shape[-1])
    feat_p, clas2d = _call_tail(p_tail, params["w_final"],
                                params["w_clas_center"])

    nz = params["nz"]
    feat = feat_p[:, :nz].reshape(n, nz, 1, 1)            # (N, nz, 1, 1)
    clas = clas2d.reshape(-1)                             # == .view(-1,1).squeeze(1)
    return clas, feat


# ---------------------------------------------------------------------------
# Raw (PyTorch-layout) weights and MXU packing
# ---------------------------------------------------------------------------
def make_weights(key, isize, nc, ndf, nz):
    assert isize % 16 == 0, "isize has to be a multiple of 16"
    keys = iter(jax.random.split(key, 16))
    raw = {"w1": 0.02 * jax.random.normal(next(keys), (ndf, nc, 4, 4),
                                          jnp.float32)}
    csize, cndf = isize // 2, ndf
    pyramid = []
    while csize > 4:
        out_feat = cndf * 2
        w = 0.02 * jax.random.normal(next(keys), (out_feat, cndf, 4, 4),
                                     jnp.float32)
        gamma = jnp.ones((out_feat,), jnp.float32)        # BatchNorm2d defaults
        beta = jnp.zeros((out_feat,), jnp.float32)
        pyramid.append((w, gamma, beta))
        cndf, csize = out_feat, csize // 2
    raw["pyramid"] = pyramid
    raw["w_final"] = 0.02 * jax.random.normal(next(keys), (nz, cndf, 4, 4),
                                              jnp.float32)
    raw["w_clas"] = 0.02 * jax.random.normal(next(keys), (1, nz, 3, 3),
                                             jnp.float32)
    return raw


def pack_params(raw):
    """Pack weights once: lane-padded (Cout -> multiple of 128) bf16 slabs."""
    params = {}

    w1 = raw["w1"]                                        # (ndf, nc, 4, 4)
    ndf, nc = w1.shape[0], w1.shape[1]
    cout_p = _pad_lane(ndf)
    w1p = jnp.zeros((4, 4, nc, cout_p), jnp.float32)
    w1p = w1p.at[:, :, :, :ndf].set(jnp.transpose(w1, (2, 3, 1, 0)))
    params["w1"] = w1p.reshape(16 * nc, cout_p).astype(jnp.bfloat16)

    cin_p = cout_p
    pyramid = []
    for w, gamma, beta in raw["pyramid"]:
        cout, cin = w.shape[0], w.shape[1]
        cout_p = _pad_lane(cout)
        wp = jnp.zeros((4, 4, cin_p, cout_p), jnp.float32)
        wp = wp.at[:, :, :cin, :cout].set(jnp.transpose(w, (2, 3, 1, 0)))
        wtaps = wp.reshape(16, cin_p, cout_p).astype(jnp.bfloat16)
        g = jnp.zeros((1, cout_p), jnp.float32).at[:, :cout].set(gamma[None, :])
        b = jnp.zeros((1, cout_p), jnp.float32).at[:, :cout].set(beta[None, :])
        pyramid.append((wtaps, g, b))
        cin_p = cout_p
    params["pyramid"] = pyramid

    wf = raw["w_final"]                                   # (nz, cndf, 4, 4)
    nz, cndf = wf.shape[0], wf.shape[1]
    nz_p = _pad_lane(nz)
    wfp = jnp.zeros((4, 4, cin_p, nz_p), jnp.float32)
    wfp = wfp.at[:, :, :cndf, :nz].set(jnp.transpose(wf, (2, 3, 1, 0)))
    params["w_final"] = wfp.reshape(16 * cin_p, nz_p).astype(jnp.bfloat16)

    # classifier 3x3 pad-1 on a 1x1 map: only the centre tap contributes
    wc = raw["w_clas"]                                    # (1, nz, 3, 3)
    params["w_clas_center"] = (
        jnp.zeros((1, nz_p), jnp.float32).at[0, :nz].set(wc[0, :, 1, 1]))
    params["nz"] = nz
    return params


# ---------------------------------------------------------------------------
# Pure-f32 XLA reference (train-mode BatchNorm, matching the PyTorch module)
# ---------------------------------------------------------------------------
def _conv2d_ref(x, w, stride, pad):
    return jax.lax.conv_general_dilated(
        x, w, window_strides=(stride, stride),
        padding=((pad, pad), (pad, pad)),
        dimension_numbers=("NCHW", "OIHW", "NCHW"),
        precision=jax.lax.Precision.HIGHEST)


def reference_forward(raw, x):
    y = _conv2d_ref(x, raw["w1"], 2, 1)
    y = jnp.where(y > 0, y, LRELU_SLOPE * y)
    for w, gamma, beta in raw["pyramid"]:
        y = _conv2d_ref(y, w, 2, 1)
        mean = jnp.mean(y, axis=(0, 2, 3), keepdims=True)
        var = jnp.mean(jnp.square(y - mean), axis=(0, 2, 3), keepdims=True)
        y = (y - mean) * jax.lax.rsqrt(var + BN_EPS)
        y = y * gamma.reshape(1, -1, 1, 1) + beta.reshape(1, -1, 1, 1)
        y = jnp.where(y > 0, y, LRELU_SLOPE * y)
    feat = _conv2d_ref(y, raw["w_final"], 1, 0)           # (N, nz, 1, 1)
    clas = jax.nn.sigmoid(_conv2d_ref(feat, raw["w_clas"], 1, 1))
    return clas.reshape(-1), feat


if __name__ == "__main__":
    # small config: isize=32 -> initial conv + two BN pyramid layers + tail
    isize, nc, ndf, nz = 32, 3, 8, 16
    batch = 2

    key = jax.random.PRNGKey(0)
    kx, kw = jax.random.split(key)
    x = jax.random.normal(kx, (batch, nc, isize, isize), jnp.float32)
    raw = make_weights(kw, isize, nc, ndf, nz)
    params = pack_params(raw)

    fwd = jax.jit(functools.partial(basic_discriminator_forward, params))
    clas, feat = fwd(x)
    jax.block_until_ready((clas, feat))

    assert clas.shape == (batch,), clas.shape
    assert feat.shape == (batch, nz, 1, 1), feat.shape
    assert bool(jnp.all(jnp.isfinite(feat))) and bool(jnp.all(jnp.isfinite(clas)))
    assert bool(jnp.all((clas >= 0.0) & (clas <= 1.0)))

    # pure-f32 reference with explicit (bf16-level) tolerances
    clas_r, feat_r = jax.jit(functools.partial(reference_forward, raw))(x)
    feat_err = float(jnp.max(jnp.abs(feat - feat_r)))
    clas_err = float(jnp.max(jnp.abs(clas - clas_r)))
    assert feat_err < 8e-2, ("feat mismatch", feat_err)
    assert clas_err < 3e-2, ("clas mismatch", clas_err)

    print("KERNEL_OK")
</pallas_src>

<mosaic_0001>
module attributes {stable_mosaic.version = 11 : i64} {
  func.func @_conv_lrelu_kernel(%arg0: i32, %arg1: memref<512x48xbf16, #tpu.memory_space<vmem>>, %arg2: memref<48x128xbf16, #tpu.memory_space<vmem>>, %arg3: memref<512x128xbf16, #tpu.memory_space<vmem>>) attributes {dimension_semantics = [#tpu.dimension_semantics<parallel>], iteration_bounds = array<i64: 1>, scalar_prefetch = 0 : i64, scratch_operands = 0 : i64, tpu.core_type = #tpu.core_type<tc>, window_params = [{transform_indices = @transform_0, window_bounds = array<i64: 512, 48>}, {pipeline_mode = #tpu.pipeline_mode<synchronous>, transform_indices = @transform_1, window_bounds = array<i64: 48, 128>}, {transform_indices = @transform_2, window_bounds = array<i64: 512, 128>}]} {
    %c0 = arith.constant 0 : index
    %c0_0 = arith.constant 0 : index
    %0 = vector.load %arg1[%c0, %c0_0] : memref<512x48xbf16, #tpu.memory_space<vmem>>, vector<512x48xbf16>
    %c0_1 = arith.constant 0 : index
    %c0_2 = arith.constant 0 : index
    %1 = vector.load %arg2[%c0_1, %c0_2] : memref<48x128xbf16, #tpu.memory_space<vmem>>, vector<48x128xbf16>
    %cst = arith.constant dense<0.000000e+00> : vector<512x128xf32>
    %2 = tpu.matmul %0, %1, %cst {dimension_numbers = #tpu.dot_dimension_numbers<[1], [0], [0], [1], [0, 0, 1, 1], [], []>} : vector<512x48xbf16>, vector<48x128xbf16>, vector<512x128xf32> -> vector<512x128xf32>
    %cst_3 = arith.constant 0.000000e+00 : f32
    %3 = vector.broadcast %cst_3 : f32 to vector<512x128xf32>
    %4 = arith.cmpf ogt, %2, %3 : vector<512x128xf32>
    %cst_4 = arith.constant 2.000000e-01 : f32
    %5 = vector.broadcast %cst_4 : f32 to vector<512x128xf32>
    %6 = arith.mulf %5, %2 : vector<512x128xf32>
    %7 = arith.select %4, %2, %6 : vector<512x128xi1>, vector<512x128xf32>
    %8 = arith.truncf %7 : vector<512x128xf32> to vector<512x128xbf16>
    %c0_5 = arith.constant 0 : index
    %c0_6 = arith.constant 0 : index
    %9 = vector.load %arg3[%c0_5, %c0_6] : memref<512x128xbf16, #tpu.memory_space<vmem>>, vector<512x128xbf16>
    tpu.vector_store %arg3[%c0_5, %c0_6], %8 {strides = array<i32>} : memref<512x128xbf16, #tpu.memory_space<vmem>>, vector<512x128xbf16>,
    return
  }
  func.func @transform_0(%arg0: i32) -> (i32, i32) {
    %c0_i32 = arith.constant 0 : i32
    %c0_i32_0 = arith.constant 0 : i32
    return %arg0, %c0_i32 : i32, i32
  }
  func.func @transform_1(%arg0: i32) -> (i32, i32) {
    %c0_i32 = arith.constant 0 : i32
    %c0_i32_0 = arith.constant 0 : i32
    %c0_i32_1 = arith.constant 0 : i32
    return %c0_i32, %c0_i32_0 : i32, i32
  }
  func.func @transform_2(%arg0: i32) -> (i32, i32) {
    %c0_i32 = arith.constant 0 : i32
    %c0_i32_0 = arith.constant 0 : i32
    return %arg0, %c0_i32 : i32, i32
  }
}

module attributes {stable_mosaic.version = 11 : i64} {
  func.func @_pyr_conv_bn_lrelu_kernel(%arg0: memref<4x176x128xbf16, #tpu.memory_space<vmem>>, %arg1: memref<16x128x128xbf16, #tpu.memory_space<vmem>>, %arg2: memref<162x1xf32, #tpu.memory_space<vmem>>, %arg3: memref<1x128xf32, #tpu.memory_space<vmem>>, %arg4: memref<1x128xf32, #tpu.memory_space<vmem>>, %arg5: memref<162x128xbf16, #tpu.memory_space<vmem>>) attributes {dimension_semantics = [], scalar_prefetch = 0 : i64, scratch_operands = 0 : i64, tpu.core_type = #tpu.core_type<tc>} {
    %cst = arith.constant 0.000000e+00 : f32
    %0 = vector.broadcast %cst : f32 to vector<162x128xf32>
    %c0 = arith.constant 0 : index
    %c0_0 = arith.constant 0 : index
    %c0_1 = arith.constant 0 : index
    %1 = vector.load %arg0[%c0, %c0_0, %c0_1] : memref<4x176x128xbf16, #tpu.memory_space<vmem>>, vector<1x162x128xbf16>
    %2 = vector.shape_cast %1 : vector<1x162x128xbf16> to vector<162x128xbf16>
    %c0_2 = arith.constant 0 : index
    %c0_3 = arith.constant 0 : index
    %c0_4 = arith.constant 0 : index
    %3 = vector.load %arg1[%c0_2, %c0_3, %c0_4] : memref<16x128x128xbf16, #tpu.memory_space<vmem>>, vector<1x128x128xbf16>
    %4 = vector.shape_cast %3 : vector<1x128x128xbf16> to vector<128x128xbf16>
    %cst_5 = arith.constant dense<0.000000e+00> : vector<162x128xf32>
    %5 = tpu.matmul %2, %4, %cst_5 {dimension_numbers = #tpu.dot_dimension_numbers<[1], [0], [0], [1], [0, 0, 1, 1], [], []>} : vector<162x128xbf16>, vector<128x128xbf16>, vector<162x128xf32> -> vector<162x128xf32>
    %6 = arith.addf %0, %5 : vector<162x128xf32>
    %c1 = arith.constant 1 : index
    %c0_6 = arith.constant 0 : index
    %c0_7 = arith.constant 0 : index
    %7 = vector.load %arg0[%c1, %c0_6, %c0_7] : memref<4x176x128xbf16, #tpu.memory_space<vmem>>, vector<1x162x128xbf16>
    %8 = vector.shape_cast %7 : vector<1x162x128xbf16> to vector<162x128xbf16>
    %c1_8 = arith.constant 1 : index
    %c0_9 = arith.constant 0 : index
    %c0_10 = arith.constant 0 : index
    %9 = vector.load %arg1[%c1_8, %c0_9, %c0_10] : memref<16x128x128xbf16, #tpu.memory_space<vmem>>, vector<1x128x128xbf16>
    %10 = vector.shape_cast %9 : vector<1x128x128xbf16> to vector<128x128xbf16>
    %cst_11 = arith.constant dense<0.000000e+00> : vector<162x128xf32>
    %11 = tpu.matmul %8, %10, %cst_11 {dimension_numbers = #tpu.dot_dimension_numbers<[1], [0], [0], [1], [0, 0, 1, 1], [], []>} : vector<162x128xbf16>, vector<128x128xbf16>, vector<162x128xf32> -> vector<162x128xf32>
    %12 = arith.addf %6, %11 : vector<162x128xf32>
    %c0_12 = arith.constant 0 : index
    %c1_13 = arith.constant 1 : index
    %c0_14 = arith.constant 0 : index
    %13 = vector.load %arg0[%c0_12, %c1_13, %c0_14] : memref<4x176x128xbf16, #tpu.memory_space<vmem>>, vector<1x162x128xbf16>
    %14 = vector.shape_cast %13 : vector<1x162x128xbf16> to vector<162x128xbf16>
    %c2 = arith.constant 2 : index
    %c0_15 = arith.constant 0 : index
    %c0_16 = arith.constant 0 : index
    %15 = vector.load %arg1[%c2, %c0_15, %c0_16] : memref<16x128x128xbf16, #tpu.memory_space<vmem>>, vector<1x128x128xbf16>
    %16 = vector.shape_cast %15 : vector<1x128x128xbf16> to vector<128x128xbf16>
    %cst_17 = arith.constant dense<0.000000e+00> : vector<162x128xf32>
    %17 = tpu.matmul %14, %16, %cst_17 {dimension_numbers = #tpu.dot_dimension_numbers<[1], [0], [0], [1], [0, 0, 1, 1], [], []>} : vector<162x128xbf16>, vector<128x128xbf16>, vector<162x128xf32> -> vector<162x128xf32>
    %18 = arith.addf %12, %17 : vector<162x128xf32>
    %c1_18 = arith.constant 1 : index
    %c1_19 = arith.constant 1 : index
    %c0_20 = arith.constant 0 : index
    %19 = vector.load %arg0[%c1_18, %c1_19, %c0_20] : memref<4x176x128xbf16, #tpu.memory_space<vmem>>, vector<1x162x128xbf16>
    %20 = vector.shape_cast %19 : vector<1x162x128xbf16> to vector<162x128xbf16>
    %c3 = arith.constant 3 : index
    %c0_21 = arith.constant 0 : index
    %c0_22 = arith.constant 0 : index
    %21 = vector.load %arg1[%c3, %c0_21, %c0_22] : memref<16x128x128xbf16, #tpu.memory_space<vmem>>, vector<1x128x128xbf16>
    %22 = vector.shape_cast %21 : vector<1x128x128xbf16> to vector<128x128xbf16>
    %cst_23 = arith.constant dense<0.000000e+00> : vector<162x128xf32>
    %23 = tpu.matmul %20, %22, %cst_23 {dimension_numbers = #tpu.dot_dimension_numbers<[1], [0], [0], [1], [0, 0, 1, 1], [], []>} : vector<162x128xbf16>, vector<128x128xbf16>, vector<162x128xf32> -> vector<162x128xf32>
    %24 = arith.addf %18, %23 : vector<162x128xf32>
    %c2_24 = arith.constant 2 : index
    %c0_25 = arith.constant 0 : index
    %c0_26 = arith.constant 0 : index
    %25 = vector.load %arg0[%c2_24, %c0_25, %c0_26] : memref<4x176x128xbf16, #tpu.memory_space<vmem>>, vector<1x162x128xbf16>
    %26 = vector.shape_cast %25 : vector<1x162x128xbf16> to vector<162x128xbf16>
    %c4 = arith.constant 4 : index
    %c0_27 = arith.constant 0 : index
    %c0_28 = arith.constant 0 : index
    %27 = vector.load %arg1[%c4, %c0_27, %c0_28] : memref<16x128x128xbf16, #tpu.memory_space<vmem>>, vector<1x128x128xbf16>
    %28 = vector.shape_cast %27 : vector<1x128x128xbf16> to vector<128x128xbf16>
    %cst_29 = arith.constant dense<0.000000e+00> : vector<162x128xf32>
    %29 = tpu.matmul %26, %28, %cst_29 {dimension_numbers = #tpu.dot_dimension_numbers<[1], [0], [0], [1], [0, 0, 1, 1], [], []>} : vector<162x128xbf16>, vector<128x128xbf16>, vector<162x128xf32> -> vector<162x128xf32>
    %30 = arith.addf %24, %29 : vector<162x128xf32>
    %c3_30 = arith.constant 3 : index
    %c0_31 = arith.constant 0 : index
    %c0_32 = arith.constant 0 : index
    %31 = vector.load %arg0[%c3_30, %c0_31, %c0_32] : memref<4x176x128xbf16, #tpu.memory_space<vmem>>, vector<1x162x128xbf16>
    %32 = vector.shape_cast %31 : vector<1x162x128xbf16> to vector<162x128xbf16>
    %c5 = arith.constant 5 : index
    %c0_33 = arith.constant 0 : index
    %c0_34 = arith.constant 0 : index
    %33 = vector.load %arg1[%c5, %c0_33, %c0_34] : memref<16x128x128xbf16, #tpu.memory_space<vmem>>, vector<1x128x128xbf16>
    %34 = vector.shape_cast %33 : vector<1x128x128xbf16> to vector<128x128xbf16>
    %cst_35 = arith.constant dense<0.000000e+00> : vector<162x128xf32>
    %35 = tpu.matmul %32, %34, %cst_35 {dimension_numbers = #tpu.dot_dimension_numbers<[1], [0], [0], [1], [0, 0, 1, 1], [], []>} : vector<162x128xbf16>, vector<128x128xbf16>, vector<162x128xf32> -> vector<162x128xf32>
    %36 = arith.addf %30, %35 : vector<162x128xf32>
    %c2_36 = arith.constant 2 : index
    %c1_37 = arith.constant 1 : index
    %c0_38 = arith.constant 0 : index
    %37 = vector.load %arg0[%c2_36, %c1_37, %c0_38] : memref<4x176x128xbf16, #tpu.memory_space<vmem>>, vector<1x162x128xbf16>
    %38 = vector.shape_cast %37 : vector<1x162x128xbf16> to vector<162x128xbf16>
    %c6 = arith.constant 6 : index
    %c0_39 = arith.constant 0 : index
    %c0_40 = arith.constant 0 : index
    %39 = vector.load %arg1[%c6, %c0_39, %c0_40] : memref<16x128x128xbf16, #tpu.memory_space<vmem>>, vector<1x128x128xbf16>
    %40 = vector.shape_cast %39 : vector<1x128x128xbf16> to vector<128x128xbf16>
    %cst_41 = arith.constant dense<0.000000e+00> : vector<162x128xf32>
    %41 = tpu.matmul %38, %40, %cst_41 {dimension_numbers = #tpu.dot_dimension_numbers<[1], [0], [0], [1], [0, 0, 1, 1], [], []>} : vector<162x128xbf16>, vector<128x128xbf16>, vector<162x128xf32> -> vector<162x128xf32>
    %42 = arith.addf %36, %41 : vector<162x128xf32>
    %c3_42 = arith.constant 3 : index
    %c1_43 = arith.constant 1 : index
    %c0_44 = arith.constant 0 : index
    %43 = vector.load %arg0[%c3_42, %c1_43, %c0_44] : memref<4x176x128xbf16, #tpu.memory_space<vmem>>, vector<1x162x128xbf16>
    %44 = vector.shape_cast %43 : vector<1x162x128xbf16> to vector<162x128xbf16>
    %c7 = arith.constant 7 : index
    %c0_45 = arith.constant 0 : index
    %c0_46 = arith.constant 0 : index
    %45 = vector.load %arg1[%c7, %c0_45, %c0_46] : memref<16x128x128xbf16, #tpu.memory_space<vmem>>, vector<1x128x128xbf16>
    %46 = vector.shape_cast %45 : vector<1x128x128xbf16> to vector<128x128xbf16>
    %cst_47 = arith.constant dense<0.000000e+00> : vector<162x128xf32>
    %47 = tpu.matmul %44, %46, %cst_47 {dimension_numbers = #tpu.dot_dimension_numbers<[1], [0], [0], [1], [0, 0, 1, 1], [], []>} : vector<162x128xbf16>, vector<128x128xbf16>, vector<162x128xf32> -> vector<162x128xf32>
    %48 = arith.addf %42, %47 : vector<162x128xf32>
    %c0_48 = arith.constant 0 : index
    %c9 = arith.constant 9 : index
    %c0_49 = arith.constant 0 : index
    %49 = vector.load %arg0[%c0_48, %c9, %c0_49] : memref<4x176x128xbf16, #tpu.memory_space<vmem>>, vector<1x162x128xbf16>
    %50 = vector.shape_cast %49 : vector<1x162x128xbf16> to vector<162x128xbf16>
    %c8 = arith.constant 8 : index
    %c0_50 = arith.constant 0 : index
    %c0_51 = arith.constant 0 : index
    %51 = vector.load %arg1[%c8, %c0_50, %c0_51] : memref<16x128x128xbf16, #tpu.memory_space<vmem>>, vector<1x128x128xbf16>
    %52 = vector.shape_cast %51 : vector<1x128x128xbf16> to vector<128x128xbf16>
    %cst_52 = arith.constant dense<0.000000e+00> : vector<162x128xf32>
    %53 = tpu.matmul %50, %52, %cst_52 {dimension_numbers = #tpu.dot_dimension_numbers<[1], [0], [0], [1], [0, 0, 1, 1], [], []>} : vector<162x128xbf16>, vector<128x128xbf16>, vector<162x128xf32> -> vector<162x128xf32>
    %54 = arith.addf %48, %53 : vector<162x128xf32>
    %c1_53 = arith.constant 1 : index
    %c9_54 = arith.constant 9 : index
    %c0_55 = arith.constant 0 : index
    %55 = vector.load %arg0[%c1_53, %c9_54, %c0_55] : memref<4x176x128xbf16, #tpu.memory_space<vmem>>, vector<1x162x128xbf16>
    %56 = vector.shape_cast %55 : vector<1x162x128xbf16> to vector<162x128xbf16>
    %c9_56 = arith.constant 9 : index
    %c0_57 = arith.constant 0 : index
    %c0_58 = arith.constant 0 : index
    %57 = vector.load %arg1[%c9_56, %c0_57, %c0_58] : memref<16x128x128xbf16, #tpu.memory_space<vmem>>, vector<1x128x128xbf16>
    %58 = vector.shape_cast %57 : vector<1x128x128xbf16> to vector<128x128xbf16>
    %cst_59 = arith.constant dense<0.000000e+00> : vector<162x128xf32>
    %59 = tpu.matmul %56, %58, %cst_59 {dimension_numbers = #tpu.dot_dimension_numbers<[1], [0], [0], [1], [0, 0, 1, 1], [], []>} : vector<162x128xbf16>, vector<128x128xbf16>, vector<162x128xf32> -> vector<162x128xf32>
    %60 = arith.addf %54, %59 : vector<162x128xf32>
    %c0_60 = arith.constant 0 : index
    %c10 = arith.constant 10 : index
    %c0_61 = arith.constant 0 : index
    %61 = vector.load %arg0[%c0_60, %c10, %c0_61] : memref<4x176x128xbf16, #tpu.memory_space<vmem>>, vector<1x162x128xbf16>
    %62 = vector.shape_cast %61 : vector<1x162x128xbf16> to vector<162x128xbf16>
    %c10_62 = arith.constant 10 : index
    %c0_63 = arith.constant 0 : index
    %c0_64 = arith.constant 0 : index
    %63 = vector.load %arg1[%c10_62, %c0_63, %c0_64] : memref<16x128x128xbf16, #tpu.memory_space<vmem>>, vector<1x128x128xbf16>
    %64 = vector.shape_cast %63 : vector<1x128x128xbf16> to vector<128x128xbf16>
    %cst_65 = arith.constant dense<0.000000e+00> : vector<162x128xf32>
    %65 = tpu.matmul %62, %64, %cst_65 {dimension_numbers = #tpu.dot_dimension_numbers<[1], [0], [0], [1], [0, 0, 1, 1], [], []>} : vector<162x128xbf16>, vector<128x128xbf16>, vector<162x128xf32> -> vector<162x128xf32>
    %66 = arith.addf %60, %65 : vector<162x128xf32>
    %c1_66 = arith.constant 1 : index
    %c10_67 = arith.constant 10 : index
    %c0_68 = arith.constant 0 : index
    %67 = vector.load %arg0[%c1_66, %c10_67, %c0_68] : memref<4x176x128xbf16, #tpu.memory_space<vmem>>, vector<1x162x128xbf16>
    %68 = vector.shape_cast %67 : vector<1x162x128xbf16> to vector<162x128xbf16>
    %c11 = arith.constant 11 : index
    %c0_69 = arith.constant 0 : index
    %c0_70 = arith.constant 0 : index
    %69 = vector.load %arg1[%c11, %c0_69, %c0_70] : memref<16x128x128xbf16, #tpu.memory_space<vmem>>, vector<1x128x128xbf16>
    %70 = vector.shape_cast %69 : vector<1x128x128xbf16> to vector<128x128xbf16>
    %cst_71 = arith.constant dense<0.000000e+00> : vector<162x128xf32>
    %71 = tpu.matmul %68, %70, %cst_71 {dimension_numbers = #tpu.dot_dimension_numbers<[1], [0], [0], [1], [0, 0, 1, 1], [], []>} : vector<162x128xbf16>, vector<128x128xbf16>, vector<162x128xf32> -> vector<162x128xf32>
    %72 = arith.addf %66, %71 : vector<162x128xf32>
    %c2_72 = arith.constant 2 : index
    %c9_73 = arith.constant 9 : index
    %c0_74 = arith.constant 0 : index
    %73 = vector.load %arg0[%c2_72, %c9_73, %c0_74] : memref<4x176x128xbf16, #tpu.memory_space<vmem>>, vector<1x162x128xbf16>
    %74 = vector.shape_cast %73 : vector<1x162x128xbf16> to vector<162x128xbf16>
    %c12 = arith.constant 12 : index
    %c0_75 = arith.constant 0 : index
    %c0_76 = arith.constant 0 : index
    %75 = vector.load %arg1[%c12, %c0_75, %c0_76] : memref<16x128x128xbf16, #tpu.memory_space<vmem>>, vector<1x128x128xbf16>
    %76 = vector.shape_cast %75 : vector<1x128x128xbf16> to vector<128x128xbf16>
    %cst_77 = arith.constant dense<0.000000e+00> : vector<162x128xf32>
    %77 = tpu.matmul %74, %76, %cst_77 {dimension_numbers = #tpu.dot_dimension_numbers<[1], [0], [0], [1], [0, 0, 1, 1], [], []>} : vector<162x128xbf16>, vector<128x128xbf16>, vector<162x128xf32> -> vector<162x128xf32>
    %78 = arith.addf %72, %77 : vector<162x128xf32>
    %c3_78 = arith.constant 3 : index
    %c9_79 = arith.constant 9 : index
    %c0_80 = arith.constant 0 : index
    %79 = vector.load %arg0[%c3_78, %c9_79, %c0_80] : memref<4x176x128xbf16, #tpu.memory_space<vmem>>, vector<1x162x128xbf16>
    %80 = vector.shape_cast %79 : vector<1x162x128xbf16> to vector<162x128xbf16>
    %c13 = arith.constant 13 : index
    %c0_81 = arith.constant 0 : index
    %c0_82 = arith.constant 0 : index
    %81 = vector.load %arg1[%c13, %c0_81, %c0_82] : memref<16x128x128xbf16, #tpu.memory_space<vmem>>, vector<1x128x128xbf16>
    %82 = vector.shape_cast %81 : vector<1x128x128xbf16> to vector<128x128xbf16>
    %cst_83 = arith.constant dense<0.000000e+00> : vector<162x128xf32>
    %83 = tpu.matmul %80, %82, %cst_83 {dimension_numbers = #tpu.dot_dimension_numbers<[1], [0], [0], [1], [0, 0, 1, 1], [], []>} : vector<162x128xbf16>, vector<128x128xbf16>, vector<162x128xf32> -> vector<162x128xf32>
    %84 = arith.addf %78, %83 : vector<162x128xf32>
    %c2_84 = arith.constant 2 : index
    %c10_85 = arith.constant 10 : index
    %c0_86 = arith.constant 0 : index
    %85 = vector.load %arg0[%c2_84, %c10_85, %c0_86] : memref<4x176x128xbf16, #tpu.memory_space<vmem>>, vector<1x162x128xbf16>
    %86 = vector.shape_cast %85 : vector<1x162x128xbf16> to vector<162x128xbf16>
    %c14 = arith.constant 14 : index
    %c0_87 = arith.constant 0 : index
    %c0_88 = arith.constant 0 : index
    %87 = vector.load %arg1[%c14, %c0_87, %c0_88] : memref<16x128x128xbf16, #tpu.memory_space<vmem>>, vector<1x128x128xbf16>
    %88 = vector.shape_cast %87 : vector<1x128x128xbf16> to vector<128x128xbf16>
    %cst_89 = arith.constant dense<0.000000e+00> : vector<162x128xf32>
    %89 = tpu.matmul %86, %88, %cst_89 {dimension_numbers = #tpu.dot_dimension_numbers<[1], [0], [0], [1], [0, 0, 1, 1], [], []>} : vector<162x128xbf16>, vector<128x128xbf16>, vector<162x128xf32> -> vector<162x128xf32>
    %90 = arith.addf %84, %89 : vector<162x128xf32>
    %c3_90 = arith.constant 3 : index
    %c10_91 = arith.constant 10 : index
    %c0_92 = arith.constant 0 : index
    %91 = vector.load %arg0[%c3_90, %c10_91, %c0_92] : memref<4x176x128xbf16, #tpu.memory_space<vmem>>, vector<1x162x128xbf16>
    %92 = vector.shape_cast %91 : vector<1x162x128xbf16> to vector<162x128xbf16>
    %c15 = arith.constant 15 : index
    %c0_93 = arith.constant 0 : index
    %c0_94 = arith.constant 0 : index
    %93 = vector.load %arg1[%c15, %c0_93, %c0_94] : memref<16x128x128xbf16, #tpu.memory_space<vmem>>, vector<1x128x128xbf16>
    %94 = vector.shape_cast %93 : vector<1x128x128xbf16> to vector<128x128xbf16>
    %cst_95 = arith.constant dense<0.000000e+00> : vector<162x128xf32>
    %95 = tpu.matmul %92, %94, %cst_95 {dimension_numbers = #tpu.dot_dimension_numbers<[1], [0], [0], [1], [0, 0, 1, 1], [], []>} : vector<162x128xbf16>, vector<128x128xbf16>, vector<162x128xf32> -> vector<162x128xf32>
    %96 = arith.addf %90, %95 : vector<162x128xf32>
    %c0_96 = arith.constant 0 : index
    %c0_97 = arith.constant 0 : index
    %97 = vector.load %arg2[%c0_96, %c0_97] : memref<162x1xf32, #tpu.memory_space<vmem>>, vector<162x1xf32>
    %98 = vector.broadcast %97 : vector<162x1xf32> to vector<162x128xf32>
    %99 = arith.mulf %96, %98 : vector<162x128xf32>
    %cst_98 = arith.constant dense<0.000000e+00> : vector<128xf32>
    %100 = vector.multi_reduction <add>, %99, %cst_98 [0] : vector<162x128xf32> to vector<128xf32>
    %101 = vector.shape_cast %100 : vector<128xf32> to vector<1x128xf32>
    %cst_99 = arith.constant 7.812500e-03 : f32
    %102 = vector.broadcast %cst_99 : f32 to vector<1x128xf32>
    %103 = arith.mulf %101, %102 : vector<1x128xf32>
    %104 = vector.broadcast %103 : vector<1x128xf32> to vector<162x128xf32>
    %105 = arith.subf %96, %104 : vector<162x128xf32>
    %106 = vector.broadcast %97 : vector<162x1xf32> to vector<162x128xf32>
    %107 = arith.mulf %105, %106 : vector<162x128xf32>
    %108 = arith.mulf %107, %107 : vector<162x128xf32>
    %cst_100 = arith.constant dense<0.000000e+00> : vector<128xf32>
    %109 = vector.multi_reduction <add>, %108, %cst_100 [0] : vector<162x128xf32> to vector<128xf32>
    %110 = vector.shape_cast %109 : vector<128xf32> to vector<1x128xf32>
    %cst_101 = arith.constant 7.812500e-03 : f32
    %111 = vector.broadcast %cst_101 : f32 to vector<1x128xf32>
    %112 = arith.mulf %110, %111 : vector<1x128xf32>
    %113 = vector.broadcast %103 : vector<1x128xf32> to vector<162x128xf32>
    %114 = arith.subf %96, %113 : vector<162x128xf32>
    %cst_102 = arith.constant 9.99999974E-6 : f32
    %115 = vector.broadcast %cst_102 : f32 to vector<1x128xf32>
    %116 = arith.addf %112, %115 : vector<1x128xf32>
    %117 = math.rsqrt %116 : vector<1x128xf32>
    %118 = vector.broadcast %117 : vector<1x128xf32> to vector<162x128xf32>
    %119 = arith.mulf %114, %118 : vector<162x128xf32>
    %c0_103 = arith.constant 0 : index
    %c0_104 = arith.constant 0 : index
    %120 = vector.load %arg3[%c0_103, %c0_104] : memref<1x128xf32, #tpu.memory_space<vmem>>, vector<1x128xf32>
    %121 = vector.broadcast %120 : vector<1x128xf32> to vector<162x128xf32>
    %122 = arith.mulf %119, %121 : vector<162x128xf32>
    %c0_105 = arith.constant 0 : index
    %c0_106 = arith.constant 0 : index
    %123 = vector.load %arg4[%c0_105, %c0_106] : memref<1x128xf32, #tpu.memory_space<vmem>>, vector<1x128xf32>
    %124 = vector.broadcast %123 : vector<1x128xf32> to vector<162x128xf32>
    %125 = arith.addf %122, %124 : vector<162x128xf32>
    %cst_107 = arith.constant 0.000000e+00 : f32
    %126 = vector.broadcast %cst_107 : f32 to vector<162x128xf32>
    %127 = arith.cmpf ogt, %125, %126 : vector<162x128xf32>
    %cst_108 = arith.constant 2.000000e-01 : f32
    %128 = vector.broadcast %cst_108 : f32 to vector<162x128xf32>
    %129 = arith.mulf %128, %125 : vector<162x128xf32>
    %130 = arith.select %127, %125, %129 : vector<162x128xi1>, vector<162x128xf32>
    %131 = arith.truncf %130 : vector<162x128xf32> to vector<162x128xbf16>
    %c0_109 = arith.constant 0 : index
    %c0_110 = arith.constant 0 : index
    %132 = vector.load %arg5[%c0_109, %c0_110] : memref<162x128xbf16, #tpu.memory_space<vmem>>, vector<162x128xbf16>
    tpu.vector_store %arg5[%c0_109, %c0_110], %131 {strides = array<i32>} : memref<162x128xbf16, #tpu.memory_space<vmem>>, vector<162x128xbf16>,
    return
  }
}

module attributes {stable_mosaic.version = 11 : i64} {
  func.func @_pyr_conv_bn_lrelu_kernel(%arg0: memref<4x56x128xbf16, #tpu.memory_space<vmem>>, %arg1: memref<16x128x128xbf16, #tpu.memory_space<vmem>>, %arg2: memref<50x1xf32, #tpu.memory_space<vmem>>, %arg3: memref<1x128xf32, #tpu.memory_space<vmem>>, %arg4: memref<1x128xf32, #tpu.memory_space<vmem>>, %arg5: memref<50x128xbf16, #tpu.memory_space<vmem>>) attributes {dimension_semantics = [], scalar_prefetch = 0 : i64, scratch_operands = 0 : i64, tpu.core_type = #tpu.core_type<tc>} {
    %cst = arith.constant 0.000000e+00 : f32
    %0 = vector.broadcast %cst : f32 to vector<50x128xf32>
    %c0 = arith.constant 0 : index
    %c0_0 = arith.constant 0 : index
    %c0_1 = arith.constant 0 : index
    %1 = vector.load %arg0[%c0, %c0_0, %c0_1] : memref<4x56x128xbf16, #tpu.memory_space<vmem>>, vector<1x50x128xbf16>
    %2 = vector.shape_cast %1 : vector<1x50x128xbf16> to vector<50x128xbf16>
    %c0_2 = arith.constant 0 : index
    %c0_3 = arith.constant 0 : index
    %c0_4 = arith.constant 0 : index
    %3 = vector.load %arg1[%c0_2, %c0_3, %c0_4] : memref<16x128x128xbf16, #tpu.memory_space<vmem>>, vector<1x128x128xbf16>
    %4 = vector.shape_cast %3 : vector<1x128x128xbf16> to vector<128x128xbf16>
    %cst_5 = arith.constant dense<0.000000e+00> : vector<50x128xf32>
    %5 = tpu.matmul %2, %4, %cst_5 {dimension_numbers = #tpu.dot_dimension_numbers<[1], [0], [0], [1], [0, 0, 1, 1], [], []>} : vector<50x128xbf16>, vector<128x128xbf16>, vector<50x128xf32> -> vector<50x128xf32>
    %6 = arith.addf %0, %5 : vector<50x128xf32>
    %c1 = arith.constant 1 : index
    %c0_6 = arith.constant 0 : index
    %c0_7 = arith.constant 0 : index
    %7 = vector.load %arg0[%c1, %c0_6, %c0_7] : memref<4x56x128xbf16, #tpu.memory_space<vmem>>, vector<1x50x128xbf16>
    %8 = vector.shape_cast %7 : vector<1x50x128xbf16> to vector<50x128xbf16>
    %c1_8 = arith.constant 1 : index
    %c0_9 = arith.constant 0 : index
    %c0_10 = arith.constant 0 : index
    %9 = vector.load %arg1[%c1_8, %c0_9, %c0_10] : memref<16x128x128xbf16, #tpu.memory_space<vmem>>, vector<1x128x128xbf16>
    %10 = vector.shape_cast %9 : vector<1x128x128xbf16> to vector<128x128xbf16>
    %cst_11 = arith.constant dense<0.000000e+00> : vector<50x128xf32>
    %11 = tpu.matmul %8, %10, %cst_11 {dimension_numbers = #tpu.dot_dimension_numbers<[1], [0], [0], [1], [0, 0, 1, 1], [], []>} : vector<50x128xbf16>, vector<128x128xbf16>, vector<50x128xf32> -> vector<50x128xf32>
    %12 = arith.addf %6, %11 : vector<50x128xf32>
    %c0_12 = arith.constant 0 : index
    %c1_13 = arith.constant 1 : index
    %c0_14 = arith.constant 0 : index
    %13 = vector.load %arg0[%c0_12, %c1_13, %c0_14] : memref<4x56x128xbf16, #tpu.memory_space<vmem>>, vector<1x50x128xbf16>
    %14 = vector.shape_cast %13 : vector<1x50x128xbf16> to vector<50x128xbf16>
    %c2 = arith.constant 2 : index
    %c0_15 = arith.constant 0 : index
    %c0_16 = arith.constant 0 : index
    %15 = vector.load %arg1[%c2, %c0_15, %c0_16] : memref<16x128x128xbf16, #tpu.memory_space<vmem>>, vector<1x128x128xbf16>
    %16 = vector.shape_cast %15 : vector<1x128x128xbf16> to vector<128x128xbf16>
    %cst_17 = arith.constant dense<0.000000e+00> : vector<50x128xf32>
    %17 = tpu.matmul %14, %16, %cst_17 {dimension_numbers = #tpu.dot_dimension_numbers<[1], [0], [0], [1], [0, 0, 1, 1], [], []>} : vector<50x128xbf16>, vector<128x128xbf16>, vector<50x128xf32> -> vector<50x128xf32>
    %18 = arith.addf %12, %17 : vector<50x128xf32>
    %c1_18 = arith.constant 1 : index
    %c1_19 = arith.constant 1 : index
    %c0_20 = arith.constant 0 : index
    %19 = vector.load %arg0[%c1_18, %c1_19, %c0_20] : memref<4x56x128xbf16, #tpu.memory_space<vmem>>, vector<1x50x128xbf16>
    %20 = vector.shape_cast %19 : vector<1x50x128xbf16> to vector<50x128xbf16>
    %c3 = arith.constant 3 : index
    %c0_21 = arith.constant 0 : index
    %c0_22 = arith.constant 0 : index
    %21 = vector.load %arg1[%c3, %c0_21, %c0_22] : memref<16x128x128xbf16, #tpu.memory_space<vmem>>, vector<1x128x128xbf16>
    %22 = vector.shape_cast %21 : vector<1x128x128xbf16> to vector<128x128xbf16>
    %cst_23 = arith.constant dense<0.000000e+00> : vector<50x128xf32>
    %23 = tpu.matmul %20, %22, %cst_23 {dimension_numbers = #tpu.dot_dimension_numbers<[1], [0], [0], [1], [0, 0, 1, 1], [], []>} : vector<50x128xbf16>, vector<128x128xbf16>, vector<50x128xf32> -> vector<50x128xf32>
    %24 = arith.addf %18, %23 : vector<50x128xf32>
    %c2_24 = arith.constant 2 : index
    %c0_25 = arith.constant 0 : index
    %c0_26 = arith.constant 0 : index
    %25 = vector.load %arg0[%c2_24, %c0_25, %c0_26] : memref<4x56x128xbf16, #tpu.memory_space<vmem>>, vector<1x50x128xbf16>
    %26 = vector.shape_cast %25 : vector<1x50x128xbf16> to vector<50x128xbf16>
    %c4 = arith.constant 4 : index
    %c0_27 = arith.constant 0 : index
    %c0_28 = arith.constant 0 : index
    %27 = vector.load %arg1[%c4, %c0_27, %c0_28] : memref<16x128x128xbf16, #tpu.memory_space<vmem>>, vector<1x128x128xbf16>
    %28 = vector.shape_cast %27 : vector<1x128x128xbf16> to vector<128x128xbf16>
    %cst_29 = arith.constant dense<0.000000e+00> : vector<50x128xf32>
    %29 = tpu.matmul %26, %28, %cst_29 {dimension_numbers = #tpu.dot_dimension_numbers<[1], [0], [0], [1], [0, 0, 1, 1], [], []>} : vector<50x128xbf16>, vector<128x128xbf16>, vector<50x128xf32> -> vector<50x128xf32>
    %30 = arith.addf %24, %29 : vector<50x128xf32>
    %c3_30 = arith.constant 3 : index
    %c0_31 = arith.constant 0 : index
    %c0_32 = arith.constant 0 : index
    %31 = vector.load %arg0[%c3_30, %c0_31, %c0_32] : memref<4x56x128xbf16, #tpu.memory_space<vmem>>, vector<1x50x128xbf16>
    %32 = vector.shape_cast %31 : vector<1x50x128xbf16> to vector<50x128xbf16>
    %c5 = arith.constant 5 : index
    %c0_33 = arith.constant 0 : index
    %c0_34 = arith.constant 0 : index
    %33 = vector.load %arg1[%c5, %c0_33, %c0_34] : memref<16x128x128xbf16, #tpu.memory_space<vmem>>, vector<1x128x128xbf16>
    %34 = vector.shape_cast %33 : vector<1x128x128xbf16> to vector<128x128xbf16>
    %cst_35 = arith.constant dense<0.000000e+00> : vector<50x128xf32>
    %35 = tpu.matmul %32, %34, %cst_35 {dimension_numbers = #tpu.dot_dimension_numbers<[1], [0], [0], [1], [0, 0, 1, 1], [], []>} : vector<50x128xbf16>, vector<128x128xbf16>, vector<50x128xf32> -> vector<50x128xf32>
    %36 = arith.addf %30, %35 : vector<50x128xf32>
    %c2_36 = arith.constant 2 : index
    %c1_37 = arith.constant 1 : index
    %c0_38 = arith.constant 0 : index
    %37 = vector.load %arg0[%c2_36, %c1_37, %c0_38] : memref<4x56x128xbf16, #tpu.memory_space<vmem>>, vector<1x50x128xbf16>
    %38 = vector.shape_cast %37 : vector<1x50x128xbf16> to vector<50x128xbf16>
    %c6 = arith.constant 6 : index
    %c0_39 = arith.constant 0 : index
    %c0_40 = arith.constant 0 : index
    %39 = vector.load %arg1[%c6, %c0_39, %c0_40] : memref<16x128x128xbf16, #tpu.memory_space<vmem>>, vector<1x128x128xbf16>
    %40 = vector.shape_cast %39 : vector<1x128x128xbf16> to vector<128x128xbf16>
    %cst_41 = arith.constant dense<0.000000e+00> : vector<50x128xf32>
    %41 = tpu.matmul %38, %40, %cst_41 {dimension_numbers = #tpu.dot_dimension_numbers<[1], [0], [0], [1], [0, 0, 1, 1], [], []>} : vector<50x128xbf16>, vector<128x128xbf16>, vector<50x128xf32> -> vector<50x128xf32>
    %42 = arith.addf %36, %41 : vector<50x128xf32>
    %c3_42 = arith.constant 3 : index
    %c1_43 = arith.constant 1 : index
    %c0_44 = arith.constant 0 : index
    %43 = vector.load %arg0[%c3_42, %c1_43, %c0_44] : memref<4x56x128xbf16, #tpu.memory_space<vmem>>, vector<1x50x128xbf16>
    %44 = vector.shape_cast %43 : vector<1x50x128xbf16> to vector<50x128xbf16>
    %c7 = arith.constant 7 : index
    %c0_45 = arith.constant 0 : index
    %c0_46 = arith.constant 0 : index
    %45 = vector.load %arg1[%c7, %c0_45, %c0_46] : memref<16x128x128xbf16, #tpu.memory_space<vmem>>, vector<1x128x128xbf16>
    %46 = vector.shape_cast %45 : vector<1x128x128xbf16> to vector<128x128xbf16>
    %cst_47 = arith.constant dense<0.000000e+00> : vector<50x128xf32>
    %47 = tpu.matmul %44, %46, %cst_47 {dimension_numbers = #tpu.dot_dimension_numbers<[1], [0], [0], [1], [0, 0, 1, 1], [], []>} : vector<50x128xbf16>, vector<128x128xbf16>, vector<50x128xf32> -> vector<50x128xf32>
    %48 = arith.addf %42, %47 : vector<50x128xf32>
    %c0_48 = arith.constant 0 : index
    %c5_49 = arith.constant 5 : index
    %c0_50 = arith.constant 0 : index
    %49 = vector.load %arg0[%c0_48, %c5_49, %c0_50] : memref<4x56x128xbf16, #tpu.memory_space<vmem>>, vector<1x50x128xbf16>
    %50 = vector.shape_cast %49 : vector<1x50x128xbf16> to vector<50x128xbf16>
    %c8 = arith.constant 8 : index
    %c0_51 = arith.constant 0 : index
    %c0_52 = arith.constant 0 : index
    %51 = vector.load %arg1[%c8, %c0_51, %c0_52] : memref<16x128x128xbf16, #tpu.memory_space<vmem>>, vector<1x128x128xbf16>
    %52 = vector.shape_cast %51 : vector<1x128x128xbf16> to vector<128x128xbf16>
    %cst_53 = arith.constant dense<0.000000e+00> : vector<50x128xf32>
    %53 = tpu.matmul %50, %52, %cst_53 {dimension_numbers = #tpu.dot_dimension_numbers<[1], [0], [0], [1], [0, 0, 1, 1], [], []>} : vector<50x128xbf16>, vector<128x128xbf16>, vector<50x128xf32> -> vector<50x128xf32>
    %54 = arith.addf %48, %53 : vector<50x128xf32>
    %c1_54 = arith.constant 1 : index
    %c5_55 = arith.constant 5 : index
    %c0_56 = arith.constant 0 : index
    %55 = vector.load %arg0[%c1_54, %c5_55, %c0_56] : memref<4x56x128xbf16, #tpu.memory_space<vmem>>, vector<1x50x128xbf16>
    %56 = vector.shape_cast %55 : vector<1x50x128xbf16> to vector<50x128xbf16>
    %c9 = arith.constant 9 : index
    %c0_57 = arith.constant 0 : index
    %c0_58 = arith.constant 0 : index
    %57 = vector.load %arg1[%c9, %c0_57, %c0_58] : memref<16x128x128xbf16, #tpu.memory_space<vmem>>, vector<1x128x128xbf16>
    %58 = vector.shape_cast %57 : vector<1x128x128xbf16> to vector<128x128xbf16>
    %cst_59 = arith.constant dense<0.000000e+00> : vector<50x128xf32>
    %59 = tpu.matmul %56, %58, %cst_59 {dimension_numbers = #tpu.dot_dimension_numbers<[1], [0], [0], [1], [0, 0, 1, 1], [], []>} : vector<50x128xbf16>, vector<128x128xbf16>, vector<50x128xf32> -> vector<50x128xf32>
    %60 = arith.addf %54, %59 : vector<50x128xf32>
    %c0_60 = arith.constant 0 : index
    %c6_61 = arith.constant 6 : index
    %c0_62 = arith.constant 0 : index
    %61 = vector.load %arg0[%c0_60, %c6_61, %c0_62] : memref<4x56x128xbf16, #tpu.memory_space<vmem>>, vector<1x50x128xbf16>
    %62 = vector.shape_cast %61 : vector<1x50x128xbf16> to vector<50x128xbf16>
    %c10 = arith.constant 10 : index
    %c0_63 = arith.constant 0 : index
    %c0_64 = arith.constant 0 : index
    %63 = vector.load %arg1[%c10, %c0_63, %c0_64] : memref<16x128x128xbf16, #tpu.memory_space<vmem>>, vector<1x128x128xbf16>
    %64 = vector.shape_cast %63 : vector<1x128x128xbf16> to vector<128x128xbf16>
    %cst_65 = arith.constant dense<0.000000e+00> : vector<50x128xf32>
    %65 = tpu.matmul %62, %64, %cst_65 {dimension_numbers = #tpu.dot_dimension_numbers<[1], [0], [0], [1], [0, 0, 1, 1], [], []>} : vector<50x128xbf16>, vector<128x128xbf16>, vector<50x128xf32> -> vector<50x128xf32>
    %66 = arith.addf %60, %65 : vector<50x128xf32>
    %c1_66 = arith.constant 1 : index
    %c6_67 = arith.constant 6 : index
    %c0_68 = arith.constant 0 : index
    %67 = vector.load %arg0[%c1_66, %c6_67, %c0_68] : memref<4x56x128xbf16, #tpu.memory_space<vmem>>, vector<1x50x128xbf16>
    %68 = vector.shape_cast %67 : vector<1x50x128xbf16> to vector<50x128xbf16>
    %c11 = arith.constant 11 : index
    %c0_69 = arith.constant 0 : index
    %c0_70 = arith.constant 0 : index
    %69 = vector.load %arg1[%c11, %c0_69, %c0_70] : memref<16x128x128xbf16, #tpu.memory_space<vmem>>, vector<1x128x128xbf16>
    %70 = vector.shape_cast %69 : vector<1x128x128xbf16> to vector<128x128xbf16>
    %cst_71 = arith.constant dense<0.000000e+00> : vector<50x128xf32>
    %71 = tpu.matmul %68, %70, %cst_71 {dimension_numbers = #tpu.dot_dimension_numbers<[1], [0], [0], [1], [0, 0, 1, 1], [], []>} : vector<50x128xbf16>, vector<128x128xbf16>, vector<50x128xf32> -> vector<50x128xf32>
    %72 = arith.addf %66, %71 : vector<50x128xf32>
    %c2_72 = arith.constant 2 : index
    %c5_73 = arith.constant 5 : index
    %c0_74 = arith.constant 0 : index
    %73 = vector.load %arg0[%c2_72, %c5_73, %c0_74] : memref<4x56x128xbf16, #tpu.memory_space<vmem>>, vector<1x50x128xbf16>
    %74 = vector.shape_cast %73 : vector<1x50x128xbf16> to vector<50x128xbf16>
    %c12 = arith.constant 12 : index
    %c0_75 = arith.constant 0 : index
    %c0_76 = arith.constant 0 : index
    %75 = vector.load %arg1[%c12, %c0_75, %c0_76] : memref<16x128x128xbf16, #tpu.memory_space<vmem>>, vector<1x128x128xbf16>
    %76 = vector.shape_cast %75 : vector<1x128x128xbf16> to vector<128x128xbf16>
    %cst_77 = arith.constant dense<0.000000e+00> : vector<50x128xf32>
    %77 = tpu.matmul %74, %76, %cst_77 {dimension_numbers = #tpu.dot_dimension_numbers<[1], [0], [0], [1], [0, 0, 1, 1], [], []>} : vector<50x128xbf16>, vector<128x128xbf16>, vector<50x128xf32> -> vector<50x128xf32>
    %78 = arith.addf %72, %77 : vector<50x128xf32>
    %c3_78 = arith.constant 3 : index
    %c5_79 = arith.constant 5 : index
    %c0_80 = arith.constant 0 : index
    %79 = vector.load %arg0[%c3_78, %c5_79, %c0_80] : memref<4x56x128xbf16, #tpu.memory_space<vmem>>, vector<1x50x128xbf16>
    %80 = vector.shape_cast %79 : vector<1x50x128xbf16> to vector<50x128xbf16>
    %c13 = arith.constant 13 : index
    %c0_81 = arith.constant 0 : index
    %c0_82 = arith.constant 0 : index
    %81 = vector.load %arg1[%c13, %c0_81, %c0_82] : memref<16x128x128xbf16, #tpu.memory_space<vmem>>, vector<1x128x128xbf16>
    %82 = vector.shape_cast %81 : vector<1x128x128xbf16> to vector<128x128xbf16>
    %cst_83 = arith.constant dense<0.000000e+00> : vector<50x128xf32>
    %83 = tpu.matmul %80, %82, %cst_83 {dimension_numbers = #tpu.dot_dimension_numbers<[1], [0], [0], [1], [0, 0, 1, 1], [], []>} : vector<50x128xbf16>, vector<128x128xbf16>, vector<50x128xf32> -> vector<50x128xf32>
    %84 = arith.addf %78, %83 : vector<50x128xf32>
    %c2_84 = arith.constant 2 : index
    %c6_85 = arith.constant 6 : index
    %c0_86 = arith.constant 0 : index
    %85 = vector.load %arg0[%c2_84, %c6_85, %c0_86] : memref<4x56x128xbf16, #tpu.memory_space<vmem>>, vector<1x50x128xbf16>
    %86 = vector.shape_cast %85 : vector<1x50x128xbf16> to vector<50x128xbf16>
    %c14 = arith.constant 14 : index
    %c0_87 = arith.constant 0 : index
    %c0_88 = arith.constant 0 : index
    %87 = vector.load %arg1[%c14, %c0_87, %c0_88] : memref<16x128x128xbf16, #tpu.memory_space<vmem>>, vector<1x128x128xbf16>
    %88 = vector.shape_cast %87 : vector<1x128x128xbf16> to vector<128x128xbf16>
    %cst_89 = arith.constant dense<0.000000e+00> : vector<50x128xf32>
    %89 = tpu.matmul %86, %88, %cst_89 {dimension_numbers = #tpu.dot_dimension_numbers<[1], [0], [0], [1], [0, 0, 1, 1], [], []>} : vector<50x128xbf16>, vector<128x128xbf16>, vector<50x128xf32> -> vector<50x128xf32>
    %90 = arith.addf %84, %89 : vector<50x128xf32>
    %c3_90 = arith.constant 3 : index
    %c6_91 = arith.constant 6 : index
    %c0_92 = arith.constant 0 : index
    %91 = vector.load %arg0[%c3_90, %c6_91, %c0_92] : memref<4x56x128xbf16, #tpu.memory_space<vmem>>, vector<1x50x128xbf16>
    %92 = vector.shape_cast %91 : vector<1x50x128xbf16> to vector<50x128xbf16>
    %c15 = arith.constant 15 : index
    %c0_93 = arith.constant 0 : index
    %c0_94 = arith.constant 0 : index
    %93 = vector.load %arg1[%c15, %c0_93, %c0_94] : memref<16x128x128xbf16, #tpu.memory_space<vmem>>, vector<1x128x128xbf16>
    %94 = vector.shape_cast %93 : vector<1x128x128xbf16> to vector<128x128xbf16>
    %cst_95 = arith.constant dense<0.000000e+00> : vector<50x128xf32>
    %95 = tpu.matmul %92, %94, %cst_95 {dimension_numbers = #tpu.dot_dimension_numbers<[1], [0], [0], [1], [0, 0, 1, 1], [], []>} : vector<50x128xbf16>, vector<128x128xbf16>, vector<50x128xf32> -> vector<50x128xf32>
    %96 = arith.addf %90, %95 : vector<50x128xf32>
    %c0_96 = arith.constant 0 : index
    %c0_97 = arith.constant 0 : index
    %97 = vector.load %arg2[%c0_96, %c0_97] : memref<50x1xf32, #tpu.memory_space<vmem>>, vector<50x1xf32>
    %98 = vector.broadcast %97 : vector<50x1xf32> to vector<50x128xf32>
    %99 = arith.mulf %96, %98 : vector<50x128xf32>
    %cst_98 = arith.constant dense<0.000000e+00> : vector<128xf32>
    %100 = vector.multi_reduction <add>, %99, %cst_98 [0] : vector<50x128xf32> to vector<128xf32>
    %101 = vector.shape_cast %100 : vector<128xf32> to vector<1x128xf32>
    %cst_99 = arith.constant 3.125000e-02 : f32
    %102 = vector.broadcast %cst_99 : f32 to vector<1x128xf32>
    %103 = arith.mulf %101, %102 : vector<1x128xf32>
    %104 = vector.broadcast %103 : vector<1x128xf32> to vector<50x128xf32>
    %105 = arith.subf %96, %104 : vector<50x128xf32>
    %106 = vector.broadcast %97 : vector<50x1xf32> to vector<50x128xf32>
    %107 = arith.mulf %105, %106 : vector<50x128xf32>
    %108 = arith.mulf %107, %107 : vector<50x128xf32>
    %cst_100 = arith.constant dense<0.000000e+00> : vector<128xf32>
    %109 = vector.multi_reduction <add>, %108, %cst_100 [0] : vector<50x128xf32> to vector<128xf32>
    %110 = vector.shape_cast %109 : vector<128xf32> to vector<1x128xf32>
    %cst_101 = arith.constant 3.125000e-02 : f32
    %111 = vector.broadcast %cst_101 : f32 to vector<1x128xf32>
    %112 = arith.mulf %110, %111 : vector<1x128xf32>
    %113 = vector.broadcast %103 : vector<1x128xf32> to vector<50x128xf32>
    %114 = arith.subf %96, %113 : vector<50x128xf32>
    %cst_102 = arith.constant 9.99999974E-6 : f32
    %115 = vector.broadcast %cst_102 : f32 to vector<1x128xf32>
    %116 = arith.addf %112, %115 : vector<1x128xf32>
    %117 = math.rsqrt %116 : vector<1x128xf32>
    %118 = vector.broadcast %117 : vector<1x128xf32> to vector<50x128xf32>
    %119 = arith.mulf %114, %118 : vector<50x128xf32>
    %c0_103 = arith.constant 0 : index
    %c0_104 = arith.constant 0 : index
    %120 = vector.load %arg3[%c0_103, %c0_104] : memref<1x128xf32, #tpu.memory_space<vmem>>, vector<1x128xf32>
    %121 = vector.broadcast %120 : vector<1x128xf32> to vector<50x128xf32>
    %122 = arith.mulf %119, %121 : vector<50x128xf32>
    %c0_105 = arith.constant 0 : index
    %c0_106 = arith.constant 0 : index
    %123 = vector.load %arg4[%c0_105, %c0_106] : memref<1x128xf32, #tpu.memory_space<vmem>>, vector<1x128xf32>
    %124 = vector.broadcast %123 : vector<1x128xf32> to vector<50x128xf32>
    %125 = arith.addf %122, %124 : vector<50x128xf32>
    %cst_107 = arith.constant 0.000000e+00 : f32
    %126 = vector.broadcast %cst_107 : f32 to vector<50x128xf32>
    %127 = arith.cmpf ogt, %125, %126 : vector<50x128xf32>
    %cst_108 = arith.constant 2.000000e-01 : f32
    %128 = vector.broadcast %cst_108 : f32 to vector<50x128xf32>
    %129 = arith.mulf %128, %125 : vector<50x128xf32>
    %130 = arith.select %127, %125, %129 : vector<50x128xi1>, vector<50x128xf32>
    %131 = arith.truncf %130 : vector<50x128xf32> to vector<50x128xbf16>
    %c0_109 = arith.constant 0 : index
    %c0_110 = arith.constant 0 : index
    %132 = vector.load %arg5[%c0_109, %c0_110] : memref<50x128xbf16, #tpu.memory_space<vmem>>, vector<50x128xbf16>
    tpu.vector_store %arg5[%c0_109, %c0_110], %131 {strides = array<i32>} : memref<50x128xbf16, #tpu.memory_space<vmem>>, vector<50x128xbf16>,
    return
  }
}

module attributes {stable_mosaic.version = 11 : i64} {
  func.func @_tail_kernel(%arg0: memref<2x2048xbf16, #tpu.memory_space<vmem>>, %arg1: memref<2048x128xbf16, #tpu.memory_space<vmem>>, %arg2: memref<1x128xf32, #tpu.memory_space<vmem>>, %arg3: memref<2x128xf32, #tpu.memory_space<vmem>>, %arg4: memref<2x1xf32, #tpu.memory_space<vmem>>) attributes {dimension_semantics = [], scalar_prefetch = 0 : i64, scratch_operands = 0 : i64, tpu.core_type = #tpu.core_type<tc>} {
    %c0 = arith.constant 0 : index
    %c0_0 = arith.constant 0 : index
    %0 = vector.load %arg0[%c0, %c0_0] : memref<2x2048xbf16, #tpu.memory_space<vmem>>, vector<2x2048xbf16>
    %c0_1 = arith.constant 0 : index
    %c0_2 = arith.constant 0 : index
    %1 = vector.load %arg1[%c0_1, %c0_2] : memref<2048x128xbf16, #tpu.memory_space<vmem>>, vector<2048x128xbf16>
    %cst = arith.constant dense<0.000000e+00> : vector<2x128xf32>
    %2 = tpu.matmul %0, %1, %cst {dimension_numbers = #tpu.dot_dimension_numbers<[1], [0], [0], [1], [0, 0, 1, 1], [], []>} : vector<2x2048xbf16>, vector<2048x128xbf16>, vector<2x128xf32> -> vector<2x128xf32>
    %c0_3 = arith.constant 0 : index
    %c0_4 = arith.constant 0 : index
    %3 = vector.load %arg3[%c0_3, %c0_4] : memref<2x128xf32, #tpu.memory_space<vmem>>, vector<2x128xf32>
    tpu.vector_store %arg3[%c0_3, %c0_4], %2 {strides = array<i32>} : memref<2x128xf32, #tpu.memory_space<vmem>>, vector<2x128xf32>,
    %c0_5 = arith.constant 0 : index
    %c0_6 = arith.constant 0 : index
    %4 = vector.load %arg2[%c0_5, %c0_6] : memref<1x128xf32, #tpu.memory_space<vmem>>, vector<1x128xf32>
    %5 = vector.broadcast %4 : vector<1x128xf32> to vector<2x128xf32>
    %6 = arith.mulf %2, %5 : vector<2x128xf32>
    %cst_7 = arith.constant dense<0.000000e+00> : vector<2xf32>
    %7 = vector.multi_reduction <add>, %6, %cst_7 [1] : vector<2x128xf32> to vector<2xf32>
    %8 = vector.shape_cast %7 : vector<2xf32> to vector<2x1xf32>
    %9 = arith.negf %8 : vector<2x1xf32>
    %10 = math.exp %9 : vector<2x1xf32>
    %cst_8 = arith.constant 1.000000e+00 : f32
    %11 = vector.broadcast %cst_8 : f32 to vector<2x1xf32>
    %12 = arith.addf %11, %10 : vector<2x1xf32>
    %13 = arith.divf %11, %12 : vector<2x1xf32>
    %c0_9 = arith.constant 0 : index
    %c0_10 = arith.constant 0 : index
    %14 = vector.load %arg4[%c0_9, %c0_10] : memref<2x1xf32, #tpu.memory_space<vmem>>, vector<2x1xf32>
    tpu.vector_store %arg4[%c0_9, %c0_10], %13 {strides = array<i32>} : memref<2x1xf32, #tpu.memory_space<vmem>>, vector<2x1xf32>,
    return
  }
}

</mosaic_0001>

<llo_original>
// kernel: basic_discriminator_forward.4
$region0: #{basic_discriminator_forward.4}
  #allocation0 [shape = 'u32[]', space=smem, size = 0x4, offset = 0x4, fixed_abs, tag = 'smem constant byte address 0x4 - core index']
  #allocation1 [shape = 'u32[144,128]{1,0:T(1,128)}', space=vmem, size = 0x12000, scoped, tag = 'internal scratch']
  %s0 = inlined_call_operand.hbm [shape: bf16[512,48], index: 0, kind: input, shape index: {}]
  %s1 = inlined_call_operand.hbm [shape: bf16[48,128], index: 1, kind: input, shape index: {}]
  %s2 = inlined_call_operand.hbm [shape: bf16[512,128], index: 2, kind: output, shape index: {}]
  %s3 = sld [smem:[#allocation0]]
  $region26: #{basic_discriminator_forward.4} parent=0
    _
  %s5 = ssub.s32 1, %s3
  %s6 = scalar_select 0, %s5, %s3
  $region1: #{basic_discriminator_forward.4} parent=0
    #allocation2 [shape = 'u8[131072]{0}', space=vmem, size = 0x20000, scoped, tag = 'input window, operand 0, single buffered']
    #allocation3 [shape = 's32[1]{0}', space=sflag, size = 0x4, scoped, tag = 'scoped memory for basic_discriminator_forward.4']
    #allocation4 [shape = 's32[1]{0}', space=sflag, size = 0x4, scoped, tag = 'scoped memory for basic_discriminator_forward.4']
    #allocation5 [shape = 'u8[12288]{0}', space=vmem, size = 0x3000, scoped, tag = 'input window, operand 1, single buffered']
    #allocation6 [shape = 's32[1]{0}', space=sflag, size = 0x4, scoped, tag = 'scoped memory for basic_discriminator_forward.4']
    #allocation7 [shape = 'u8[131072]{0}', space=vmem, size = 0x20000, scoped, tag = 'output window, operand 0, single buffered']
    %7 = vsyncpa [#allocation3], 0
    %8 = vsyncpa [#allocation6], 0
    %9 = vsyncpa [#allocation4], 0
    // Predicated region
    $region2: #{basic_discriminator_forward.4} parent=1 // pred_check
      _
    $region3: #{basic_discriminator_forward.4} parent=1 // pred_check_branch
      %11 = sbr.rel (0) target = $region5
    $region4: #{basic_discriminator_forward.4} parent=1 // pred_region
      %s13 = ssub.s32 4096, 4096
      %14 = vsyncadd [#allocation3], %s13
      %s15 = sshll.u32 [#allocation2], 4
      %s16 = int_to_ptr.vmem [resolvable:$true] %s15
      %21 = dma.hbm_to_vmem [thread:$0]  %s0, 4096, %s16, [#allocation3], 64, 64, 4
    $region5: #{basic_discriminator_forward.4} parent=1 // pred_fallthru
      _
    // Predicated region
    $region6: #{basic_discriminator_forward.4} parent=1 // pred_check
      _
    $region7: #{basic_discriminator_forward.4} parent=1 // pred_check_branch
      %23 = sbr.rel (0) target = $region9
    $region8: #{basic_discriminator_forward.4} parent=1 // pred_region
      %s25 = ssub.s32 384, 384
      %26 = vsyncadd [#allocation6], %s25
      %s27 = sshll.u32 [#allocation5], 4
      %s28 = int_to_ptr.vmem [resolvable:$true] %s27
      %33 = dma.hbm_to_vmem [thread:$0]  %s1, 384, %s28, [#allocation6], 64, 64, 4
    $region9: #{basic_discriminator_forward.4} parent=1 // pred_fallthru
      _
    // Predicated region
    $region10: #{basic_discriminator_forward.4} parent=1 // pred_check
      _
    $region11: #{basic_discriminator_forward.4} parent=1 // pred_check_branch
      %35 = sbr.rel (0) target = $region13
    $region12: #{basic_discriminator_forward.4} parent=1 // pred_region
      %36 = dma.done [#allocation3], 4096
    $region13: #{basic_discriminator_forward.4} parent=1 // pred_fallthru
      _
    // Predicated region
    $region14: #{basic_discriminator_forward.4} parent=1 // pred_check
      _
    $region15: #{basic_discriminator_forward.4} parent=1 // pred_check_branch
      %38 = sbr.rel (0) target = $region17
    $region16: #{basic_discriminator_forward.4} parent=1 // pred_region
      %39 = dma.done [#allocation6], 384
    $region17: #{basic_discriminator_forward.4} parent=1 // pred_fallthru
      _
    %v41 = vld [vmem:[#allocation2] sm:$0xf]
    %v42 = vld [vmem:[#allocation2 + $0x4] sm:$0xf]
    %v43 = vld [vmem:[#allocation2 + $0x8] sm:$0xf]
    %v44 = vld [vmem:[#allocation2 + $0xc] sm:$0xf]
    %v45 = vld [vmem:[#allocation2 + $0x10] sm:$0xf]
    %v46 = vld [vmem:[#allocation2 + $0x14] sm:$0xf]
    %v47 = vld [vmem:[#allocation2 + $0x18] sm:$0xf]
    %v48 = vld [vmem:[#allocation2 + $0x1c] sm:$0xf]
    %v49 = vld [vmem:[#allocation2 + $0x20] sm:$0xf]
    %v50 = vld [vmem:[#allocation2 + $0x24] sm:$0xf]
    %v51 = vld [vmem:[#allocation2 + $0x28] sm:$0xf]
    %v52 = vld [vmem:[#allocation2 + $0x2c] sm:$0xf]
    %v53 = vld [vmem:[#allocation2 + $0x30] sm:$0xf]
    %v54 = vld [vmem:[#allocation2 + $0x34] sm:$0xf]
    %v55 = vld [vmem:[#allocation2 + $0x38] sm:$0xf]
    %v56 = vld [vmem:[#allocation2 + $0x3c] sm:$0xf]
    %v57 = vld [vmem:[#allocation2 + $0x40] sm:$0xf]
    %v58 = vld [vmem:[#allocation2 + $0x44] sm:$0xf]
    %v59 = vld [vmem:[#allocation2 + $0x48] sm:$0xf]
    %v60 = vld [vmem:[#allocation2 + $0x4c] sm:$0xf]
    %v61 = vld [vmem:[#allocation2 + $0x50] sm:$0xf]
    %v62 = vld [vmem:[#allocation2 + $0x54] sm:$0xf]
    %v63 = vld [vmem:[#allocation2 + $0x58] sm:$0xf]
    %v64 = vld [vmem:[#allocation2 + $0x5c] sm:$0xf]
    %v65 = vld [vmem:[#allocation2 + $0x60] sm:$0xf]
    %v66 = vld [vmem:[#allocation2 + $0x64] sm:$0xf]
    %v67 = vld [vmem:[#allocation2 + $0x68] sm:$0xf]
    %v68 = vld [vmem:[#allocation2 + $0x6c] sm:$0xf]
    %v69 = vld [vmem:[#allocation2 + $0x70] sm:$0xf]
    %v70 = vld [vmem:[#allocation2 + $0x74] sm:$0xf]
    %v71 = vld [vmem:[#allocation2 + $0x78] sm:$0xf]
    %v72 = vld [vmem:[#allocation2 + $0x7c] sm:$0xf]
    %v73 = vld [vmem:[#allocation2 + $0x80] sm:$0xf]
    %v74 = vld [vmem:[#allocation2 + $0x84] sm:$0xf]
    %v75 = vld [vmem:[#allocation2 + $0x88] sm:$0xf]
    %v76 = vld [vmem:[#allocation2 + $0x8c] sm:$0xf]
    %v77 = vld [vmem:[#allocation2 + $0x90] sm:$0xf]
    %v78 = vld [vmem:[#allocation2 + $0x94] sm:$0xf]
    %v79 = vld [vmem:[#allocation2 + $0x98] sm:$0xf]
    %v80 = vld [vmem:[#allocation2 + $0x9c] sm:$0xf]
    %v81 = vld [vmem:[#allocation2 + $0xa0] sm:$0xf]
    %v82 = vld [vmem:[#allocation2 + $0xa4] sm:$0xf]
    %v83 = vld [vmem:[#allocation2 + $0xa8] sm:$0xf]
    %v84 = vld [vmem:[#allocation2 + $0xac] sm:$0xf]
    %v85 = vld [vmem:[#allocation2 + $0xb0] sm:$0xf]
    %v86 = vld [vmem:[#allocation2 + $0xb4] sm:$0xf]
    %v87 = vld [vmem:[#allocation2 + $0xb8] sm:$0xf]
    %v88 = vld [vmem:[#allocation2 + $0xbc] sm:$0xf]
    %v89 = vld [vmem:[#allocation2 + $0xc0] sm:$0xf]
    %v90 = vld [vmem:[#allocation2 + $0xc4] sm:$0xf]
    %v91 = vld [vmem:[#allocation2 + $0xc8] sm:$0xf]
    %v92 = vld [vmem:[#allocation2 + $0xcc] sm:$0xf]
    %v93 = vld [vmem:[#allocation2 + $0xd0] sm:$0xf]
    %v94 = vld [vmem:[#allocation2 + $0xd4] sm:$0xf]
    %v95 = vld [vmem:[#allocation2 + $0xd8] sm:$0xf]
    %v96 = vld [vmem:[#allocation2 + $0xdc] sm:$0xf]
    %v97 = vld [vmem:[#allocation2 + $0xe0] sm:$0xf]
    %v98 = vld [vmem:[#allocation2 + $0xe4] sm:$0xf]
    %v99 = vld [vmem:[#allocation2 + $0xe8] sm:$0xf]
    %v100 = vld [vmem:[#allocation2 + $0xec] sm:$0xf]
    %v101 = vld [vmem:[#allocation2 + $0xf0] sm:$0xf]
    %v102 = vld [vmem:[#allocation2 + $0xf4] sm:$0xf]
    %v103 = vld [vmem:[#allocation2 + $0xf8] sm:$0xf]
    %v104 = vld [vmem:[#allocation2 + $0xfc] sm:$0xf]
    %v105 = vld [vmem:[#allocation5] sm:$0xf]
    %v106 = vld [vmem:[#allocation5 + $0x4] sm:$0xf]
    %v107 = vld [vmem:[#allocation5 + $0x8] sm:$0xf]
    %v108 = vld [vmem:[#allocation5 + $0xc] sm:$0xf]
    %v109 = vld [vmem:[#allocation5 + $0x10] sm:$0xf]
    %v110 = vld [vmem:[#allocation5 + $0x14] sm:$0xf]
    %v175 = vunpack.c.l.b16 %v41
    %v176 = vunpack.c.l.b16 %v42
    %v177 = vunpack.c.l.b16 %v43
    %v178 = vunpack.c.l.b16 %v44
    %v179 = vunpack.c.l.b16 %v45
    %v180 = vunpack.c.l.b16 %v46
    %v181 = vunpack.c.l.b16 %v47
    %v182 = vunpack.c.l.b16 %v48
    %v183 = vunpack.c.l.b16 %v49
    %v184 = vunpack.c.l.b16 %v50
    %v185 = vunpack.c.l.b16 %v51
    %v186 = vunpack.c.l.b16 %v52
    %v187 = vunpack.c.l.b16 %v53
    %v188 = vunpack.c.l.b16 %v54
    %v189 = vunpack.c.l.b16 %v55
    %v190 = vunpack.c.l.b16 %v56
    %v191 = vunpack.c.l.b16 %v57
    %v192 = vunpack.c.l.b16 %v58
    %v193 = vunpack.c.l.b16 %v59
    %v194 = vunpack.c.l.b16 %v60
    %v195 = vunpack.c.l.b16 %v61
    %v196 = vunpack.c.l.b16 %v62
    %v197 = vunpack.c.l.b16 %v63
    %v198 = vunpack.c.l.b16 %v64
    %v199 = vunpack.c.l.b16 %v65
    %v200 = vunpack.c.l.b16 %v66
    %v201 = vunpack.c.l.b16 %v67
    %v202 = vunpack.c.l.b16 %v68
    %v203 = vunpack.c.l.b16 %v69
    %v204 = vunpack.c.l.b16 %v70
    %v205 = vunpack.c.l.b16 %v71
    %v206 = vunpack.c.l.b16 %v72
    %v207 = vunpack.c.l.b16 %v73
    %v208 = vunpack.c.l.b16 %v74
    %v209 = vunpack.c.l.b16 %v75
    %v210 = vunpack.c.l.b16 %v76
    %v211 = vunpack.c.l.b16 %v77
    %v212 = vunpack.c.l.b16 %v78
    %v213 = vunpack.c.l.b16 %v79
    %v214 = vunpack.c.l.b16 %v80
    %v215 = vunpack.c.l.b16 %v81
    %v216 = vunpack.c.l.b16 %v82
    %v217 = vunpack.c.l.b16 %v83
    %v218 = vunpack.c.l.b16 %v84
    %v219 = vunpack.c.l.b16 %v85
    %v220 = vunpack.c.l.b16 %v86
    %v221 = vunpack.c.l.b16 %v87
    %v222 = vunpack.c.l.b16 %v88
    %v223 = vunpack.c.l.b16 %v89
    %v224 = vunpack.c.l.b16 %v90
    %v225 = vunpack.c.l.b16 %v91
    %v226 = vunpack.c.l.b16 %v92
    %v227 = vunpack.c.l.b16 %v93
    %v228 = vunpack.c.l.b16 %v94
    %v229 = vunpack.c.l.b16 %v95
    %v230 = vunpack.c.l.b16 %v96
    %v231 = vunpack.c.l.b16 %v97
    %v232 = vunpack.c.l.b16 %v98
    %v233 = vunpack.c.l.b16 %v99
    %v234 = vunpack.c.l.b16 %v100
    %v235 = vunpack.c.l.b16 %v101
    %v236 = vunpack.c.l.b16 %v102
    %v237 = vunpack.c.l.b16 %v103
    %v238 = vunpack.c.l.b16 %v104
    %v239 = vpack.c.b16 %v176, %v175
    %v240 = vpack.c.b16 %v178, %v177
    %v241 = vpack.c.b16 %v180, %v179
    %v242 = vpack.c.b16 %v182, %v181
    %v243 = vpack.c.b16 %v184, %v183
    %v244 = vpack.c.b16 %v186, %v185
    %v245 = vpack.c.b16 %v188, %v187
    %v246 = vpack.c.b16 %v190, %v189
    %v247 = vpack.c.b16 %v192, %v191
    %v248 = vpack.c.b16 %v194, %v193
    %v249 = vpack.c.b16 %v196, %v195
    %v250 = vpack.c.b16 %v198, %v197
    %v251 = vpack.c.b16 %v200, %v199
    %v252 = vpack.c.b16 %v202, %v201
    %v253 = vpack.c.b16 %v204, %v203
    %v254 = vpack.c.b16 %v206, %v205
    %v255 = vpack.c.b16 %v208, %v207
    %v256 = vpack.c.b16 %v210, %v209
    %v257 = vpack.c.b16 %v212, %v211
    %v258 = vpack.c.b16 %v214, %v213
    %v259 = vpack.c.b16 %v216, %v215
    %v260 = vpack.c.b16 %v218, %v217
    %v261 = vpack.c.b16 %v220, %v219
    %v262 = vpack.c.b16 %v222, %v221
    %v263 = vpack.c.b16 %v224, %v223
    %v264 = vpack.c.b16 %v226, %v225
    %v265 = vpack.c.b16 %v228, %v227
    %v266 = vpack.c.b16 %v230, %v229
    %v267 = vpack.c.b16 %v232, %v231
    %v268 = vpack.c.b16 %v234, %v233
    %v269 = vpack.c.b16 %v236, %v235
    %v270 = vpack.c.b16 %v238, %v237
    %v277 = vunpack.c.l.b16 %v105
    %v278 = vunpack.c.l.b16 %v106
    %v279 = vunpack.c.l.b16 %v107
    %v280 = vunpack.c.l.b16 %v108
    %v281 = vunpack.c.l.b16 %v109
    %v282 = vunpack.c.l.b16 %v110
    %v283 = vpack.c.b16 %v278, %v277
    %v284 = vpack.c.b16 %v280, %v279
    %v285 = vpack.c.b16 %v282, %v281
    %vm289 = vcmask 392192
    %v291 = vsel %vm289, %v239, 0
    %v294 = vsel %vm289, %v240, 0
    %v297 = vsel %vm289, %v241, 0
    %v300 = vsel %vm289, %v242, 0
    %v303 = vsel %vm289, %v243, 0
    %v306 = vsel %vm289, %v244, 0
    %v309 = vsel %vm289, %v245, 0
    %v312 = vsel %vm289, %v246, 0
    %v315 = vsel %vm289, %v247, 0
    %v318 = vsel %vm289, %v248, 0
    %v321 = vsel %vm289, %v249, 0
    %v324 = vsel %vm289, %v250, 0
    %v327 = vsel %vm289, %v251, 0
    %v330 = vsel %vm289, %v252, 0
    %v333 = vsel %vm289, %v253, 0
    %v336 = vsel %vm289, %v254, 0
    %v339 = vsel %vm289, %v255, 0
    %v342 = vsel %vm289, %v256, 0
    %v345 = vsel %vm289, %v257, 0
    %v348 = vsel %vm289, %v258, 0
    %v351 = vsel %vm289, %v259, 0
    %v354 = vsel %vm289, %v260, 0
    %v357 = vsel %vm289, %v261, 0
    %v360 = vsel %vm289, %v262, 0
    %v363 = vsel %vm289, %v263, 0
    %v366 = vsel %vm289, %v264, 0
    %v369 = vsel %vm289, %v265, 0
    %v372 = vsel %vm289, %v266, 0
    %v375 = vsel %vm289, %v267, 0
    %v378 = vsel %vm289, %v268, 0
    %v381 = vsel %vm289, %v269, 0
    %v384 = vsel %vm289, %v270, 0
    %386 = vmatprep.subr.bf16.mxu0 0
    %387 = vmatpush1.bf16.msra.mxu0 %v283
    %388 = vmatprep.subr.bf16.mxu0 0
    %389 = vmatpush1.bf16.msra.mxu0 %v284
    %390 = vmatprep.subr.bf16.mxu0 0
    %391 = vmatpush1.bf16.msra.mxu0 %v285
    %392 = vmatprep.subr.bf16.mxu0 0
    %393 = vmatpush1.bf16.msra.mxu0 0
    %394 = vmatprep.subr.bf16.mxu0 0
    %395 = vmatpush1.bf16.msra.mxu0 0
    %396 = vmatprep.subr.bf16.mxu0 0
    %397 = vmatpush1.bf16.msra.mxu0 0
    %398 = vmatprep.subr.bf16.mxu0 0
    %399 = vmatpush1.bf16.msra.mxu0 0
    %400 = vmatprep.subr.bf16.mxu0 0
    %401 = vmatpush1.bf16.msra.mxu0 0
    %402 = vmatprep.subr.bf16.mxu0 0
    %403 = vmatpush1.bf16.msra.mxu0 0
    %404 = vmatprep.subr.bf16.mxu0 0
    %405 = vmatpush1.bf16.msra.mxu0 0
    %406 = vmatprep.subr.bf16.mxu0 0
    %407 = vmatpush1.bf16.msra.mxu0 0
    %408 = vmatprep.subr.bf16.mxu0 0
    %409 = vmatpush1.bf16.msra.mxu0 0
    %410 = vmatprep.subr.bf16.mxu0 0
    %411 = vmatpush1.bf16.msra.mxu0 0
    %412 = vmatprep.subr.bf16.mxu0 0
    %413 = vmatpush1.bf16.msra.mxu0 0
    %414 = vmatprep.subr.bf16.mxu0 0
    %415 = vmatpush1.bf16.msra.mxu0 0
    %416 = vmatprep.subr.bf16.mxu0 0
    %417 = vmatpush1.bf16.msra.mxu0 0
    %418 = vmatprep.mubr.bf16.mxu0 0
    %419 = vmatmul.mubr.bf16.gmra.mrb[0].mxu0 %v291
    %v420 = vpop.f32.mrb[0].mxu0
    %v421 = vadd.f32 0.0, %v420
    %v422 = vpop.f32.mrb[0].mxu0
    %v423 = vpop.f32.mrb[0].mxu0
    %v424 = vadd.f32 0.0, %v423
    %v425 = vpop.f32.mrb[0].mxu0
    %426 = vmatprep.mubr.bf16.mxu0 0
    %427 = vmatmul.mubr.bf16.gmra.mrb[0].mxu0 %v294
    %v428 = vpop.f32.mrb[0].mxu0
    %v429 = vadd.f32 0.0, %v428
    %v430 = vpop.f32.mrb[0].mxu0
    %v431 = vpop.f32.mrb[0].mxu0
    %v432 = vadd.f32 0.0, %v431
    %v433 = vpop.f32.mrb[0].mxu0
    %434 = vmatprep.mubr.bf16.mxu0 0
    %435 = vmatmul.mubr.bf16.gmra.mrb[0].mxu0 %v297
    %v436 = vpop.f32.mrb[0].mxu0
    %v437 = vadd.f32 0.0, %v436
    %v438 = vpop.f32.mrb[0].mxu0
    %v439 = vpop.f32.mrb[0].mxu0
    %v440 = vadd.f32 0.0, %v439
    %v441 = vpop.f32.mrb[0].mxu0
    %442 = vmatprep.mubr.bf16.mxu0 0
    %443 = vmatmul.mubr.bf16.gmra.mrb[0].mxu0 %v300
    %v444 = vpop.f32.mrb[0].mxu0
    %v445 = vadd.f32 0.0, %v444
    %v446 = vpop.f32.mrb[0].mxu0
    %v447 = vpop.f32.mrb[0].mxu0
    %v448 = vadd.f32 0.0, %v447
    %v449 = vpop.f32.mrb[0].mxu0
    %450 = vmatprep.mubr.bf16.mxu0 0
    %451 = vmatmul.mubr.bf16.gmra.mrb[0].mxu0 %v303
    %v452 = vpop.f32.mrb[0].mxu0
    %v453 = vadd.f32 0.0, %v452
    %v454 = vpop.f32.mrb[0].mxu0
    %v455 = vpop.f32.mrb[0].mxu0
    %v456 = vadd.f32 0.0, %v455
    %v457 = vpop.f32.mrb[0].mxu0
    %458 = vmatprep.mubr.bf16.mxu0 0
    %459 = vmatmul.mubr.bf16.gmra.mrb[0].mxu0 %v306
    %v460 = vpop.f32.mrb[0].mxu0
    %v461 = vadd.f32 0.0, %v460
    %v462 = vpop.f32.mrb[0].mxu0
    %v463 = vpop.f32.mrb[0].mxu0
    %v464 = vadd.f32 0.0, %v463
    %v465 = vpop.f32.mrb[0].mxu0
    %466 = vmatprep.mubr.bf16.mxu0 0
    %467 = vmatmul.mubr.bf16.gmra.mrb[0].mxu0 %v309
    %v468 = vpop.f32.mrb[0].mxu0
    %v469 = vadd.f32 0.0, %v468
    %v470 = vpop.f32.mrb[0].mxu0
    %v471 = vpop.f32.mrb[0].mxu0
    %v472 = vadd.f32 0.0, %v471
    %v473 = vpop.f32.mrb[0].mxu0
    %474 = vmatprep.mubr.bf16.mxu0 0
    %475 = vmatmul.mubr.bf16.gmra.mrb[0].mxu0 %v312
    %v476 = vpop.f32.mrb[0].mxu0
    %v477 = vadd.f32 0.0, %v476
    %v478 = vpop.f32.mrb[0].mxu0
    %v479 = vpop.f32.mrb[0].mxu0
    %v480 = vadd.f32 0.0, %v479
    %v481 = vpop.f32.mrb[0].mxu0
    %482 = vmatprep.mubr.bf16.mxu0 0
    %483 = vmatmul.mubr.bf16.gmra.mrb[0].mxu0 %v315
    %v484 = vpop.f32.mrb[0].mxu0
    %v485 = vadd.f32 0.0, %v484
    %v486 = vpop.f32.mrb[0].mxu0
    %v487 = vpop.f32.mrb[0].mxu0
    %v488 = vadd.f32 0.0, %v487
    %v489 = vpop.f32.mrb[0].mxu0
    %490 = vmatprep.mubr.bf16.mxu0 0
    %491 = vmatmul.mubr.bf16.gmra.mrb[0].mxu0 %v318
    %v492 = vpop.f32.mrb[0].mxu0
    %v493 = vadd.f32 0.0, %v492
    %v494 = vpop.f32.mrb[0].mxu0
    %v495 = vpop.f32.mrb[0].mxu0
    %v496 = vadd.f32 0.0, %v495
    %v497 = vpop.f32.mrb[0].mxu0
    %498 = vmatprep.mubr.bf16.mxu0 0
    %499 = vmatmul.mubr.bf16.gmra.mrb[0].mxu0 %v321
    %v500 = vpop.f32.mrb[0].mxu0
    %v501 = vadd.f32 0.0, %v500
    %v502 = vpop.f32.mrb[0].mxu0
    %v503 = vpop.f32.mrb[0].mxu0
    %v504 = vadd.f32 0.0, %v503
    %v505 = vpop.f32.mrb[0].mxu0
    %506 = vmatprep.mubr.bf16.mxu0 0
    %507 = vmatmul.mubr.bf16.gmra.mrb[0].mxu0 %v324
    %v508 = vpop.f32.mrb[0].mxu0
    %v509 = vadd.f32 0.0, %v508
    %v510 = vpop.f32.mrb[0].mxu0
    %v511 = vpop.f32.mrb[0].mxu0
    %v512 = vadd.f32 0.0, %v511
    %v513 = vpop.f32.mrb[0].mxu0
    %514 = vmatprep.mubr.bf16.mxu0 0
    %515 = vmatmul.mubr.bf16.gmra.mrb[0].mxu0 %v327
    %v516 = vpop.f32.mrb[0].mxu0
    %v517 = vadd.f32 0.0, %v516
    %v518 = vpop.f32.mrb[0].mxu0
    %v519 = vpop.f32.mrb[0].mxu0
    %v520 = vadd.f32 0.0, %v519
    %v521 = vpop.f32.mrb[0].mxu0
    %522 = vmatprep.mubr.bf16.mxu0 0
    %523 = vmatmul.mubr.bf16.gmra.mrb[0].mxu0 %v330
    %v524 = vpop.f32.mrb[0].mxu0
    %v525 = vadd.f32 0.0, %v524
    %v526 = vpop.f32.mrb[0].mxu0
    %v527 = vpop.f32.mrb[0].mxu0
    %v528 = vadd.f32 0.0, %v527
    %v529 = vpop.f32.mrb[0].mxu0
    %530 = vmatprep.mubr.bf16.mxu0 0
    %531 = vmatmul.mubr.bf16.gmra.mrb[0].mxu0 %v333
    %v532 = vpop.f32.mrb[0].mxu0
    %v533 = vadd.f32 0.0, %v532
    %v534 = vpop.f32.mrb[0].mxu0
    %v535 = vpop.f32.mrb[0].mxu0
    %v536 = vadd.f32 0.0, %v535
    %v537 = vpop.f32.mrb[0].mxu0
    %538 = vmatprep.mubr.bf16.mxu0 0
    %539 = vmatmul.mubr.bf16.gmra.mrb[0].mxu0 %v336
    %v540 = vpop.f32.mrb[0].mxu0
    %v541 = vadd.f32 0.0, %v540
    %v542 = vpop.f32.mrb[0].mxu0
    %v543 = vpop.f32.mrb[0].mxu0
    %v544 = vadd.f32 0.0, %v543
    %v545 = vpop.f32.mrb[0].mxu0
    %546 = vmatprep.mubr.bf16.mxu0 0
    %547 = vmatmul.mubr.bf16.gmra.mrb[0].mxu0 %v339
    %v548 = vpop.f32.mrb[0].mxu0
    %v549 = vadd.f32 0.0, %v548
    %v550 = vpop.f32.mrb[0].mxu0
    %v551 = vpop.f32.mrb[0].mxu0
    %v552 = vadd.f32 0.0, %v551
    %v553 = vpop.f32.mrb[0].mxu0
    %554 = vmatprep.mubr.bf16.mxu0 0
    %555 = vmatmul.mubr.bf16.gmra.mrb[0].mxu0 %v342
    %v556 = vpop.f32.mrb[0].mxu0
    %v557 = vadd.f32 0.0, %v556
    %v558 = vpop.f32.mrb[0].mxu0
    %v559 = vpop.f32.mrb[0].mxu0
    %v560 = vadd.f32 0.0, %v559
    %v561 = vpop.f32.mrb[0].mxu0
    %562 = vmatprep.mubr.bf16.mxu0 0
    %563 = vmatmul.mubr.bf16.gmra.mrb[0].mxu0 %v345
    %v564 = vpop.f32.mrb[0].mxu0
    %v565 = vadd.f32 0.0, %v564
    %v566 = vpop.f32.mrb[0].mxu0
    %v567 = vpop.f32.mrb[0].mxu0
    %v568 = vadd.f32 0.0, %v567
    %v569 = vpop.f32.mrb[0].mxu0
    %570 = vmatprep.mubr.bf16.mxu0 0
    %571 = vmatmul.mubr.bf16.gmra.mrb[0].mxu0 %v348
    %v572 = vpop.f32.mrb[0].mxu0
    %v573 = vadd.f32 0.0, %v572
    %v574 = vpop.f32.mrb[0].mxu0
    %v575 = vpop.f32.mrb[0].mxu0
    %v576 = vadd.f32 0.0, %v575
    %v577 = vpop.f32.mrb[0].mxu0
    %578 = vmatprep.mubr.bf16.mxu0 0
    %579 = vmatmul.mubr.bf16.gmra.mrb[0].mxu0 %v351
    %v580 = vpop.f32.mrb[0].mxu0
    %v581 = vadd.f32 0.0, %v580
    %v582 = vpop.f32.mrb[0].mxu0
    %v583 = vpop.f32.mrb[0].mxu0
    %v584 = vadd.f32 0.0, %v583
    %v585 = vpop.f32.mrb[0].mxu0
    %586 = vmatprep.mubr.bf16.mxu0 0
    %587 = vmatmul.mubr.bf16.gmra.mrb[0].mxu0 %v354
    %v588 = vpop.f32.mrb[0].mxu0
    %v589 = vadd.f32 0.0, %v588
    %v590 = vpop.f32.mrb[0].mxu0
    %v591 = vpop.f32.mrb[0].mxu0
    %v592 = vadd.f32 0.0, %v591
    %v593 = vpop.f32.mrb[0].mxu0
    %594 = vmatprep.mubr.bf16.mxu0 0
    %595 = vmatmul.mubr.bf16.gmra.mrb[0].mxu0 %v357
    %v596 = vpop.f32.mrb[0].mxu0
    %v597 = vadd.f32 0.0, %v596
    %v598 = vpop.f32.mrb[0].mxu0
    %v599 = vpop.f32.mrb[0].mxu0
    %v600 = vadd.f32 0.0, %v599
    %v601 = vpop.f32.mrb[0].mxu0
    %602 = vmatprep.mubr.bf16.mxu0 0
    %603 = vmatmul.mubr.bf16.gmra.mrb[0].mxu0 %v360
    %v604 = vpop.f32.mrb[0].mxu0
    %v605 = vadd.f32 0.0, %v604
    %v606 = vpop.f32.mrb[0].mxu0
    %v607 = vpop.f32.mrb[0].mxu0
    %v608 = vadd.f32 0.0, %v607
    %v609 = vpop.f32.mrb[0].mxu0
    %610 = vmatprep.mubr.bf16.mxu0 0
    %611 = vmatmul.mubr.bf16.gmra.mrb[0].mxu0 %v363
    %v612 = vpop.f32.mrb[0].mxu0
    %v613 = vadd.f32 0.0, %v612
    %v614 = vpop.f32.mrb[0].mxu0
    %v615 = vpop.f32.mrb[0].mxu0
    %v616 = vadd.f32 0.0, %v615
    %v617 = vpop.f32.mrb[0].mxu0
    %618 = vmatprep.mubr.bf16.mxu0 0
    %619 = vmatmul.mubr.bf16.gmra.mrb[0].mxu0 %v366
    %v620 = vpop.f32.mrb[0].mxu0
    %v621 = vadd.f32 0.0, %v620
    %v622 = vpop.f32.mrb[0].mxu0
    %v623 = vpop.f32.mrb[0].mxu0
    %v624 = vadd.f32 0.0, %v623
    %v625 = vpop.f32.mrb[0].mxu0
    %626 = vmatprep.mubr.bf16.mxu0 0
    %627 = vmatmul.mubr.bf16.gmra.mrb[0].mxu0 %v369
    %v628 = vpop.f32.mrb[0].mxu0
    %v629 = vadd.f32 0.0, %v628
    %v630 = vpop.f32.mrb[0].mxu0
    %v631 = vpop.f32.mrb[0].mxu0
    %v632 = vadd.f32 0.0, %v631
    %v633 = vpop.f32.mrb[0].mxu0
    %634 = vmatprep.mubr.bf16.mxu0 0
    %635 = vmatmul.mubr.bf16.gmra.mrb[0].mxu0 %v372
    %v636 = vpop.f32.mrb[0].mxu0
    %v637 = vadd.f32 0.0, %v636
    %v638 = vpop.f32.mrb[0].mxu0
    %v639 = vpop.f32.mrb[0].mxu0
    %v640 = vadd.f32 0.0, %v639
    %v641 = vpop.f32.mrb[0].mxu0
    %642 = vmatprep.mubr.bf16.mxu0 0
    %643 = vmatmul.mubr.bf16.gmra.mrb[0].mxu0 %v375
    %v644 = vpop.f32.mrb[0].mxu0
    %v645 = vadd.f32 0.0, %v644
    %v646 = vpop.f32.mrb[0].mxu0
    %v647 = vpop.f32.mrb[0].mxu0
    %v648 = vadd.f32 0.0, %v647
    %v649 = vpop.f32.mrb[0].mxu0
    %650 = vmatprep.mubr.bf16.mxu0 0
    %651 = vmatmul.mubr.bf16.gmra.mrb[0].mxu0 %v378
    %v652 = vpop.f32.mrb[0].mxu0
    %v653 = vadd.f32 0.0, %v652
    %v654 = vpop.f32.mrb[0].mxu0
    %v655 = vpop.f32.mrb[0].mxu0
    %v656 = vadd.f32 0.0, %v655
    %v657 = vpop.f32.mrb[0].mxu0
    %658 = vmatprep.mubr.bf16.mxu0 0
    %659 = vmatmul.mubr.bf16.gmra.mrb[0].mxu0 %v381
    %v660 = vpop.f32.mrb[0].mxu0
    %v661 = vadd.f32 0.0, %v660
    %v662 = vpop.f32.mrb[0].mxu0
    %v663 = vpop.f32.mrb[0].mxu0
    %v664 = vadd.f32 0.0, %v663
    %v665 = vpop.f32.mrb[0].mxu0
    %666 = vmatprep.mubr.bf16.mxu0 0
    %667 = vmatmul.mubr.bf16.gmra.mrb[0].mxu0 %v384
    %v668 = vpop.f32.mrb[0].mxu0
    %v669 = vadd.f32 0.0, %v668
    %v670 = vpop.f32.mrb[0].mxu0
    %v671 = vpop.f32.mrb[0].mxu0
    %v672 = vadd.f32 0.0, %v671
    %v673 = vpop.f32.mrb[0].mxu0
    %674 = vdwg.mxu0
    %vm675 = vcmp.gt.f32.partialorder %v421, 0.0
    %vm676 = vcmp.gt.f32.partialorder %v424, 0.0
    %vm677 = vcmp.gt.f32.partialorder %v429, 0.0
    %vm678 = vcmp.gt.f32.partialorder %v432, 0.0
    %vm679 = vcmp.gt.f32.partialorder %v437, 0.0
    %vm680 = vcmp.gt.f32.partialorder %v440, 0.0
    %vm681 = vcmp.gt.f32.partialorder %v445, 0.0
    %vm682 = vcmp.gt.f32.partialorder %v448, 0.0
    %vm683 = vcmp.gt.f32.partialorder %v453, 0.0
    %vm684 = vcmp.gt.f32.partialorder %v456, 0.0
    %vm685 = vcmp.gt.f32.partialorder %v461, 0.0
    %vm686 = vcmp.gt.f32.partialorder %v464, 0.0
    %vm687 = vcmp.gt.f32.partialorder %v469, 0.0
    %vm688 = vcmp.gt.f32.partialorder %v472, 0.0
    %vm689 = vcmp.gt.f32.partialorder %v477, 0.0
    %vm690 = vcmp.gt.f32.partialorder %v480, 0.0
    %vm691 = vcmp.gt.f32.partialorder %v485, 0.0
    %vm692 = vcmp.gt.f32.partialorder %v488, 0.0
    %vm693 = vcmp.gt.f32.partialorder %v493, 0.0
    %vm694 = vcmp.gt.f32.partialorder %v496, 0.0
    %vm695 = vcmp.gt.f32.partialorder %v501, 0.0
    %vm696 = vcmp.gt.f32.partialorder %v504, 0.0
    %vm697 = vcmp.gt.f32.partialorder %v509, 0.0
    %vm698 = vcmp.gt.f32.partialorder %v512, 0.0
    %vm699 = vcmp.gt.f32.partialorder %v517, 0.0
    %vm700 = vcmp.gt.f32.partialorder %v520, 0.0
    %vm701 = vcmp.gt.f32.partialorder %v525, 0.0
    %vm702 = vcmp.gt.f32.partialorder %v528, 0.0
    %vm703 = vcmp.gt.f32.partialorder %v533, 0.0
    %vm704 = vcmp.gt.f32.partialorder %v536, 0.0
    %vm705 = vcmp.gt.f32.partialorder %v541, 0.0
    %vm706 = vcmp.gt.f32.partialorder %v544, 0.0
    %vm707 = vcmp.gt.f32.partialorder %v549, 0.0
    %vm708 = vcmp.gt.f32.partialorder %v552, 0.0
    %vm709 = vcmp.gt.f32.partialorder %v557, 0.0
    %vm710 = vcmp.gt.f32.partialorder %v560, 0.0
    %vm711 = vcmp.gt.f32.partialorder %v565, 0.0
    %vm712 = vcmp.gt.f32.partialorder %v568, 0.0
    %vm713 = vcmp.gt.f32.partialorder %v573, 0.0
    %vm714 = vcmp.gt.f32.partialorder %v576, 0.0
    %vm715 = vcmp.gt.f32.partialorder %v581, 0.0
    %vm716 = vcmp.gt.f32.partialorder %v584, 0.0
    %vm717 = vcmp.gt.f32.partialorder %v589, 0.0
    %vm718 = vcmp.gt.f32.partialorder %v592, 0.0
    %vm719 = vcmp.gt.f32.partialorder %v597, 0.0
    %vm720 = vcmp.gt.f32.partialorder %v600, 0.0
    %vm721 = vcmp.gt.f32.partialorder %v605, 0.0
    %vm722 = vcmp.gt.f32.partialorder %v608, 0.0
    %vm723 = vcmp.gt.f32.partialorder %v613, 0.0
    %vm724 = vcmp.gt.f32.partialorder %v616, 0.0
    %vm725 = vcmp.gt.f32.partialorder %v621, 0.0
    %vm726 = vcmp.gt.f32.partialorder %v624, 0.0
    %vm727 = vcmp.gt.f32.partialorder %v629, 0.0
    %vm728 = vcmp.gt.f32.partialorder %v632, 0.0
    %vm729 = vcmp.gt.f32.partialorder %v637, 0.0
    %vm730 = vcmp.gt.f32.partialorder %v640, 0.0
    %vm731 = vcmp.gt.f32.partialorder %v645, 0.0
    %vm732 = vcmp.gt.f32.partialorder %v648, 0.0
    %vm733 = vcmp.gt.f32.partialorder %v653, 0.0
    %vm734 = vcmp.gt.f32.partialorder %v656, 0.0
    %vm735 = vcmp.gt.f32.partialorder %v661, 0.0
    %vm736 = vcmp.gt.f32.partialorder %v664, 0.0
    %vm737 = vcmp.gt.f32.partialorder %v669, 0.0
    %vm738 = vcmp.gt.f32.partialorder %v672, 0.0
    %v739 = vmul.f32 %v421, 0.2
    %v740 = vmul.f32 %v424, 0.2
    %v741 = vmul.f32 %v429, 0.2
    %v742 = vmul.f32 %v432, 0.2
    %v743 = vmul.f32 %v437, 0.2
    %v744 = vmul.f32 %v440, 0.2
    %v745 = vmul.f32 %v445, 0.2
    %v746 = vmul.f32 %v448, 0.2
    %v747 = vmul.f32 %v453, 0.2
    %v748 = vmul.f32 %v456, 0.2
    %v749 = vmul.f32 %v461, 0.2
    %v750 = vmul.f32 %v464, 0.2
    %v751 = vmul.f32 %v469, 0.2
    %v752 = vmul.f32 %v472, 0.2
    %v753 = vmul.f32 %v477, 0.2
    %v754 = vmul.f32 %v480, 0.2
    %v755 = vmul.f32 %v485, 0.2
    %v756 = vmul.f32 %v488, 0.2
    %v757 = vmul.f32 %v493, 0.2
    %v758 = vmul.f32 %v496, 0.2
    %v759 = vmul.f32 %v501, 0.2
    %v760 = vmul.f32 %v504, 0.2
    %v761 = vmul.f32 %v509, 0.2
    %v762 = vmul.f32 %v512, 0.2
    %v763 = vmul.f32 %v517, 0.2
    %v764 = vmul.f32 %v520, 0.2
    %v765 = vmul.f32 %v525, 0.2
    %v766 = vmul.f32 %v528, 0.2
    %v767 = vmul.f32 %v533, 0.2
    %v768 = vmul.f32 %v536, 0.2
    %v769 = vmul.f32 %v541, 0.2
    %v770 = vmul.f32 %v544, 0.2
    %v771 = vmul.f32 %v549, 0.2
    %v772 = vmul.f32 %v552, 0.2
    %v773 = vmul.f32 %v557, 0.2
    %v774 = vmul.f32 %v560, 0.2
    %v775 = vmul.f32 %v565, 0.2
    %v776 = vmul.f32 %v568, 0.2
    %v777 = vmul.f32 %v573, 0.2
    %v778 = vmul.f32 %v576, 0.2
    %v779 = vmul.f32 %v581, 0.2
    %v780 = vmul.f32 %v584, 0.2
    %v781 = vmul.f32 %v589, 0.2
    %v782 = vmul.f32 %v592, 0.2
    %v783 = vmul.f32 %v597, 0.2
    %v784 = vmul.f32 %v600, 0.2
    %v785 = vmul.f32 %v605, 0.2
    %v786 = vmul.f32 %v608, 0.2
    %v787 = vmul.f32 %v613, 0.2
    %v788 = vmul.f32 %v616, 0.2
    %v789 = vmul.f32 %v621, 0.2
    %v790 = vmul.f32 %v624, 0.2
    %v791 = vmul.f32 %v629, 0.2
    %v792 = vmul.f32 %v632, 0.2
    %v793 = vmul.f32 %v637, 0.2
    %v794 = vmul.f32 %v640, 0.2
    %v795 = vmul.f32 %v645, 0.2
    %v796 = vmul.f32 %v648, 0.2
    %v797 = vmul.f32 %v653, 0.2
    %v798 = vmul.f32 %v656, 0.2
    %v799 = vmul.f32 %v661, 0.2
    %v800 = vmul.f32 %v664, 0.2
    %v801 = vmul.f32 %v669, 0.2
    %v802 = vmul.f32 %v672, 0.2
    %v803 = vsel %vm675, %v421, %v739
    %v804 = vsel %vm676, %v424, %v740
    %v805 = vsel %vm677, %v429, %v741
    %v806 = vsel %vm678, %v432, %v742
    %v807 = vsel %vm679, %v437, %v743
    %v808 = vsel %vm680, %v440, %v744
    %v809 = vsel %vm681, %v445, %v745
    %v810 = vsel %vm682, %v448, %v746
    %v811 = vsel %vm683, %v453, %v747
    %v812 = vsel %vm684, %v456, %v748
    %v813 = vsel %vm685, %v461, %v749
    %v814 = vsel %vm686, %v464, %v750
    %v815 = vsel %vm687, %v469, %v751
    %v816 = vsel %vm688, %v472, %v752
    %v817 = vsel %vm689, %v477, %v753
    %v818 = vsel %vm690, %v480, %v754
    %v819 = vsel %vm691, %v485, %v755
    %v820 = vsel %vm692, %v488, %v756
    %v821 = vsel %vm693, %v493, %v757
    %v822 = vsel %vm694, %v496, %v758
    %v823 = vsel %vm695, %v501, %v759
    %v824 = vsel %vm696, %v504, %v760
    %v825 = vsel %vm697, %v509, %v761
    %v826 = vsel %vm698, %v512, %v762
    %v827 = vsel %vm699, %v517, %v763
    %v828 = vsel %vm700, %v520, %v764
    %v829 = vsel %vm701, %v525, %v765
    %v830 = vsel %vm702, %v528, %v766
    %v831 = vsel %vm703, %v533, %v767
    %v832 = vsel %vm704, %v536, %v768
    %v833 = vsel %vm705, %v541, %v769
    %v834 = vsel %vm706, %v544, %v770
    %v835 = vsel %vm707, %v549, %v771
    %v836 = vsel %vm708, %v552, %v772
    %v837 = vsel %vm709, %v557, %v773
    %v838 = vsel %vm710, %v560, %v774
    %v839 = vsel %vm711, %v565, %v775
    %v840 = vsel %vm712, %v568, %v776
    %v841 = vsel %vm713, %v573, %v777
    %v842 = vsel %vm714, %v576, %v778
    %v843 = vsel %vm715, %v581, %v779
    %v844 = vsel %vm716, %v584, %v780
    %v845 = vsel %vm717, %v589, %v781
    %v846 = vsel %vm718, %v592, %v782
    %v847 = vsel %vm719, %v597, %v783
    %v848 = vsel %vm720, %v600, %v784
    %v849 = vsel %vm721, %v605, %v785
    %v850 = vsel %vm722, %v608, %v786
    %v851 = vsel %vm723, %v613, %v787
    %v852 = vsel %vm724, %v616, %v788
    %v853 = vsel %vm725, %v621, %v789
    %v854 = vsel %vm726, %v624, %v790
    %v855 = vsel %vm727, %v629, %v791
    %v856 = vsel %vm728, %v632, %v792
    %v857 = vsel %vm729, %v637, %v793
    %v858 = vsel %vm730, %v640, %v794
    %v859 = vsel %vm731, %v645, %v795
    %v860 = vsel %vm732, %v648, %v796
    %v861 = vsel %vm733, %v653, %v797
    %v862 = vsel %vm734, %v656, %v798
    %v863 = vsel %vm735, %v661, %v799
    %v864 = vsel %vm736, %v664, %v800
    %v865 = vsel %vm737, %v669, %v801
    %v866 = vsel %vm738, %v672, %v802
    %v867 = vpack.c.bf16 %v804, %v803
    %v868 = vpack.c.bf16 %v806, %v805
    %v869 = vpack.c.bf16 %v808, %v807
    %v870 = vpack.c.bf16 %v810, %v809
    %v871 = vpack.c.bf16 %v812, %v811
    %v872 = vpack.c.bf16 %v814, %v813
    %v873 = vpack.c.bf16 %v816, %v815
    %v874 = vpack.c.bf16 %v818, %v817
    %v875 = vpack.c.bf16 %v820, %v819
    %v876 = vpack.c.bf16 %v822, %v821
    %v877 = vpack.c.bf16 %v824, %v823
    %v878 = vpack.c.bf16 %v826, %v825
    %v879 = vpack.c.bf16 %v828, %v827
    %v880 = vpack.c.bf16 %v830, %v829
    %v881 = vpack.c.bf16 %v832, %v831
    %v882 = vpack.c.bf16 %v834, %v833
    %v883 = vpack.c.bf16 %v836, %v835
    %v884 = vpack.c.bf16 %v838, %v837
    %v885 = vpack.c.bf16 %v840, %v839
    %v886 = vpack.c.bf16 %v842, %v841
    %v887 = vpack.c.bf16 %v844, %v843
    %v888 = vpack.c.bf16 %v846, %v845
    %v889 = vpack.c.bf16 %v848, %v847
    %v890 = vpack.c.bf16 %v850, %v849
    %v891 = vpack.c.bf16 %v852, %v851
    %v892 = vpack.c.bf16 %v854, %v853
    %v893 = vpack.c.bf16 %v856, %v855
    %v894 = vpack.c.bf16 %v858, %v857
    %v895 = vpack.c.bf16 %v860, %v859
    %v896 = vpack.c.bf16 %v862, %v861
    %v897 = vpack.c.bf16 %v864, %v863
    %v898 = vpack.c.bf16 %v866, %v865
    %v931 = vunpack.c.l.b16 %v867
    %v932 = vunpack.c.h.b16 %v867
    %v933 = vunpack.c.l.b16 %v868
    %v934 = vunpack.c.h.b16 %v868
    %v935 = vunpack.c.l.b16 %v869
    %v936 = vunpack.c.h.b16 %v869
    %v937 = vunpack.c.l.b16 %v870
    %v938 = vunpack.c.h.b16 %v870
    %v939 = vunpack.c.l.b16 %v871
    %v940 = vunpack.c.h.b16 %v871
    %v941 = vunpack.c.l.b16 %v872
    %v942 = vunpack.c.h.b16 %v872
    %v943 = vunpack.c.l.b16 %v873
    %v944 = vunpack.c.h.b16 %v873
    %v945 = vunpack.c.l.b16 %v874
    %v946 = vunpack.c.h.b16 %v874
    %v947 = vunpack.c.l.b16 %v875
    %v948 = vunpack.c.h.b16 %v875
    %v949 = vunpack.c.l.b16 %v876
    %v950 = vunpack.c.h.b16 %v876
    %v951 = vunpack.c.l.b16 %v877
    %v952 = vunpack.c.h.b16 %v877
    %v953 = vunpack.c.l.b16 %v878
    %v954 = vunpack.c.h.b16 %v878
    %v955 = vunpack.c.l.b16 %v879
    %v956 = vunpack.c.h.b16 %v879
    %v957 = vunpack.c.l.b16 %v880
    %v958 = vunpack.c.h.b16 %v880
    %v959 = vunpack.c.l.b16 %v881
    %v960 = vunpack.c.h.b16 %v881
    %v961 = vunpack.c.l.b16 %v882
    %v962 = vunpack.c.h.b16 %v882
    %v963 = vunpack.c.l.b16 %v883
    %v964 = vunpack.c.h.b16 %v883
    %v965 = vunpack.c.l.b16 %v884
    %v966 = vunpack.c.h.b16 %v884
    %v967 = vunpack.c.l.b16 %v885
    %v968 = vunpack.c.h.b16 %v885
    %v969 = vunpack.c.l.b16 %v886
    %v970 = vunpack.c.h.b16 %v886
    %v971 = vunpack.c.l.b16 %v887
    %v972 = vunpack.c.h.b16 %v887
    %v973 = vunpack.c.l.b16 %v888
    %v974 = vunpack.c.h.b16 %v888
    %v975 = vunpack.c.l.b16 %v889
    %v976 = vunpack.c.h.b16 %v889
    %v977 = vunpack.c.l.b16 %v890
    %v978 = vunpack.c.h.b16 %v890
    %v979 = vunpack.c.l.b16 %v891
    %v980 = vunpack.c.h.b16 %v891
    %v981 = vunpack.c.l.b16 %v892
    %v982 = vunpack.c.h.b16 %v892
    %v983 = vunpack.c.l.b16 %v893
    %v984 = vunpack.c.h.b16 %v893
    %v985 = vunpack.c.l.b16 %v894
    %v986 = vunpack.c.h.b16 %v894
    %v987 = vunpack.c.l.b16 %v895
    %v988 = vunpack.c.h.b16 %v895
    %v989 = vunpack.c.l.b16 %v896
    %v990 = vunpack.c.h.b16 %v896
    %v991 = vunpack.c.l.b16 %v897
    %v992 = vunpack.c.h.b16 %v897
    %v993 = vunpack.c.l.b16 %v898
    %v994 = vunpack.c.h.b16 %v898
    %v995 = vpack.c.b16 %v931, %v931
    %v996 = vpack.c.b16 %v932, %v932
    %v997 = vpack.c.b16 %v933, %v933
    %v998 = vpack.c.b16 %v934, %v934
    %v999 = vpack.c.b16 %v935, %v935
    %v1000 = vpack.c.b16 %v936, %v936
    %v1001 = vpack.c.b16 %v937, %v937
    %v1002 = vpack.c.b16 %v938, %v938
    %v1003 = vpack.c.b16 %v939, %v939
    %v1004 = vpack.c.b16 %v940, %v940
    %v1005 = vpack.c.b16 %v941, %v941
    %v1006 = vpack.c.b16 %v942, %v942
    %v1007 = vpack.c.b16 %v943, %v943
    %v1008 = vpack.c.b16 %v944, %v944
    %v1009 = vpack.c.b16 %v945, %v945
    %v1010 = vpack.c.b16 %v946, %v946
    %v1011 = vpack.c.b16 %v947, %v947
    %v1012 = vpack.c.b16 %v948, %v948
    %v1013 = vpack.c.b16 %v949, %v949
    %v1014 = vpack.c.b16 %v950, %v950
    %v1015 = vpack.c.b16 %v951, %v951
    %v1016 = vpack.c.b16 %v952, %v952
    %v1017 = vpack.c.b16 %v953, %v953
    %v1018 = vpack.c.b16 %v954, %v954
    %v1019 = vpack.c.b16 %v955, %v955
    %v1020 = vpack.c.b16 %v956, %v956
    %v1021 = vpack.c.b16 %v957, %v957
    %v1022 = vpack.c.b16 %v958, %v958
    %v1023 = vpack.c.b16 %v959, %v959
    %v1024 = vpack.c.b16 %v960, %v960
    %v1025 = vpack.c.b16 %v961, %v961
    %v1026 = vpack.c.b16 %v962, %v962
    %v1027 = vpack.c.b16 %v963, %v963
    %v1028 = vpack.c.b16 %v964, %v964
    %v1029 = vpack.c.b16 %v965, %v965
    %v1030 = vpack.c.b16 %v966, %v966
    %v1031 = vpack.c.b16 %v967, %v967
    %v1032 = vpack.c.b16 %v968, %v968
    %v1033 = vpack.c.b16 %v969, %v969
    %v1034 = vpack.c.b16 %v970, %v970
    %v1035 = vpack.c.b16 %v971, %v971
    %v1036 = vpack.c.b16 %v972, %v972
    %v1037 = vpack.c.b16 %v973, %v973
    %v1038 = vpack.c.b16 %v974, %v974
    %v1039 = vpack.c.b16 %v975, %v975
    %v1040 = vpack.c.b16 %v976, %v976
    %v1041 = vpack.c.b16 %v977, %v977
    %v1042 = vpack.c.b16 %v978, %v978
    %v1043 = vpack.c.b16 %v979, %v979
    %v1044 = vpack.c.b16 %v980, %v980
    %v1045 = vpack.c.b16 %v981, %v981
    %v1046 = vpack.c.b16 %v982, %v982
    %v1047 = vpack.c.b16 %v983, %v983
    %v1048 = vpack.c.b16 %v984, %v984
    %v1049 = vpack.c.b16 %v985, %v985
    %v1050 = vpack.c.b16 %v986, %v986
    %v1051 = vpack.c.b16 %v987, %v987
    %v1052 = vpack.c.b16 %v988, %v988
    %v1053 = vpack.c.b16 %v989, %v989
    %v1054 = vpack.c.b16 %v990, %v990
    %v1055 = vpack.c.b16 %v991, %v991
    %v1056 = vpack.c.b16 %v992, %v992
    %v1057 = vpack.c.b16 %v993, %v993
    %v1058 = vpack.c.b16 %v994, %v994
    %1123 = vst [vmem:[#allocation7] sm:$0xf] %v995
    %1124 = vst [vmem:[#allocation7 + $0x4] sm:$0xf] %v996
    %1125 = vst [vmem:[#allocation7 + $0x8] sm:$0xf] %v997
    %1126 = vst [vmem:[#allocation7 + $0xc] sm:$0xf] %v998
    %1127 = vst [vmem:[#allocation7 + $0x10] sm:$0xf] %v999
    %1128 = vst [vmem:[#allocation7 + $0x14] sm:$0xf] %v1000
    %1129 = vst [vmem:[#allocation7 + $0x18] sm:$0xf] %v1001
    %1130 = vst [vmem:[#allocation7 + $0x1c] sm:$0xf] %v1002
    %1131 = vst [vmem:[#allocation7 + $0x20] sm:$0xf] %v1003
    %1132 = vst [vmem:[#allocation7 + $0x24] sm:$0xf] %v1004
    %1133 = vst [vmem:[#allocation7 + $0x28] sm:$0xf] %v1005
    %1134 = vst [vmem:[#allocation7 + $0x2c] sm:$0xf] %v1006
    %1135 = vst [vmem:[#allocation7 + $0x30] sm:$0xf] %v1007
    %1136 = vst [vmem:[#allocation7 + $0x34] sm:$0xf] %v1008
    %1137 = vst [vmem:[#allocation7 + $0x38] sm:$0xf] %v1009
    %1138 = vst [vmem:[#allocation7 + $0x3c] sm:$0xf] %v1010
    %1139 = vst [vmem:[#allocation7 + $0x40] sm:$0xf] %v1011
    %1140 = vst [vmem:[#allocation7 + $0x44] sm:$0xf] %v1012
    %1141 = vst [vmem:[#allocation7 + $0x48] sm:$0xf] %v1013
    %1142 = vst [vmem:[#allocation7 + $0x4c] sm:$0xf] %v1014
    %1143 = vst [vmem:[#allocation7 + $0x50] sm:$0xf] %v1015
    %1144 = vst [vmem:[#allocation7 + $0x54] sm:$0xf] %v1016
    %1145 = vst [vmem:[#allocation7 + $0x58] sm:$0xf] %v1017
    %1146 = vst [vmem:[#allocation7 + $0x5c] sm:$0xf] %v1018
    %1147 = vst [vmem:[#allocation7 + $0x60] sm:$0xf] %v1019
    %1148 = vst [vmem:[#allocation7 + $0x64] sm:$0xf] %v1020
    %1149 = vst [vmem:[#allocation7 + $0x68] sm:$0xf] %v1021
    %1150 = vst [vmem:[#allocation7 + $0x6c] sm:$0xf] %v1022
    %1151 = vst [vmem:[#allocation7 + $0x70] sm:$0xf] %v1023
    %1152 = vst [vmem:[#allocation7 + $0x74] sm:$0xf] %v1024
    %1153 = vst [vmem:[#allocation7 + $0x78] sm:$0xf] %v1025
    %1154 = vst [vmem:[#allocation7 + $0x7c] sm:$0xf] %v1026
    %1155 = vst [vmem:[#allocation7 + $0x80] sm:$0xf] %v1027
    %1156 = vst [vmem:[#allocation7 + $0x84] sm:$0xf] %v1028
    %1157 = vst [vmem:[#allocation7 + $0x88] sm:$0xf] %v1029
    %1158 = vst [vmem:[#allocation7 + $0x8c] sm:$0xf] %v1030
    %1159 = vst [vmem:[#allocation7 + $0x90] sm:$0xf] %v1031
    %1160 = vst [vmem:[#allocation7 + $0x94] sm:$0xf] %v1032
    %1161 = vst [vmem:[#allocation7 + $0x98] sm:$0xf] %v1033
    %1162 = vst [vmem:[#allocation7 + $0x9c] sm:$0xf] %v1034
    %1163 = vst [vmem:[#allocation7 + $0xa0] sm:$0xf] %v1035
    %1164 = vst [vmem:[#allocation7 + $0xa4] sm:$0xf] %v1036
    %1165 = vst [vmem:[#allocation7 + $0xa8] sm:$0xf] %v1037
    %1166 = vst [vmem:[#allocation7 + $0xac] sm:$0xf] %v1038
    %1167 = vst [vmem:[#allocation7 + $0xb0] sm:$0xf] %v1039
    %1168 = vst [vmem:[#allocation7 + $0xb4] sm:$0xf] %v1040
    %1169 = vst [vmem:[#allocation7 + $0xb8] sm:$0xf] %v1041
    %1170 = vst [vmem:[#allocation7 + $0xbc] sm:$0xf] %v1042
    %1171 = vst [vmem:[#allocation7 + $0xc0] sm:$0xf] %v1043
    %1172 = vst [vmem:[#allocation7 + $0xc4] sm:$0xf] %v1044
    %1173 = vst [vmem:[#allocation7 + $0xc8] sm:$0xf] %v1045
    %1174 = vst [vmem:[#allocation7 + $0xcc] sm:$0xf] %v1046
    %1175 = vst [vmem:[#allocation7 + $0xd0] sm:$0xf] %v1047
    %1176 = vst [vmem:[#allocation7 + $0xd4] sm:$0xf] %v1048
    %1177 = vst [vmem:[#allocation7 + $0xd8] sm:$0xf] %v1049
    %1178 = vst [vmem:[#allocation7 + $0xdc] sm:$0xf] %v1050
    %1179 = vst [vmem:[#allocation7 + $0xe0] sm:$0xf] %v1051
    %1180 = vst [vmem:[#allocation7 + $0xe4] sm:$0xf] %v1052
    %1181 = vst [vmem:[#allocation7 + $0xe8] sm:$0xf] %v1053
    %1182 = vst [vmem:[#allocation7 + $0xec] sm:$0xf] %v1054
    %1183 = vst [vmem:[#allocation7 + $0xf0] sm:$0xf] %v1055
    %1184 = vst [vmem:[#allocation7 + $0xf4] sm:$0xf] %v1056
    %1185 = vst [vmem:[#allocation7 + $0xf8] sm:$0xf] %v1057
    %1186 = vst [vmem:[#allocation7 + $0xfc] sm:$0xf] %v1058
    // Predicated region
    $region18: #{basic_discriminator_forward.4} parent=1 // pred_check
      _
    $region19: #{basic_discriminator_forward.4} parent=1 // pred_check_branch
      %1188 = sbr.rel (0) target = $region21
    $region20: #{basic_discriminator_forward.4} parent=1 // pred_region
      %s1190 = ssub.s32 4096, 4096
      %1191 = vsyncadd [#allocation4], %s1190
      %s1192 = sshll.u32 [#allocation7], 4
      %s1193 = int_to_ptr.vmem [resolvable:$true] %s1192
      %1198 = dma.vmem_to_hbm [thread:$0]  %s1193, 4096, %s2, [#allocation4], 64, 64, 4
    $region21: #{basic_discriminator_forward.4} parent=1 // pred_fallthru
      _
    // Predicated region
    $region22: #{basic_discriminator_forward.4} parent=1 // pred_check
      _
    $region23: #{basic_discriminator_forward.4} parent=1 // pred_check_branch
      %1200 = sbr.rel (0) target = $region25
    $region24: #{basic_discriminator_forward.4} parent=1 // pred_region
      %1201 = dma.done [#allocation4], 4096
    $region25: #{basic_discriminator_forward.4} parent=1 // pred_fallthru
      _
    %1202 = vsyncpa [#allocation3], 1
    %1203 = vsyncpa [#allocation6], 1
    %1204 = vsyncpa [#allocation4], 1

// kernel: basic_discriminator_forward.7
$region0: #{basic_discriminator_forward.7}
  #allocation0 [shape = 'u32[]', space=smem, size = 0x4, offset = 0x4, fixed_abs, tag = 'smem constant byte address 0x4 - core index']
  #allocation1 [shape = 'u32[144,128]{1,0:T(1,128)}', space=vmem, size = 0x12000, scoped, tag = 'internal scratch']
  %s0 = inlined_call_operand.hbm [shape: bf16[2,2048], index: 0, kind: input, shape index: {}]
  %s1 = inlined_call_operand.hbm [shape: bf16[2048,128], index: 1, kind: input, shape index: {}]
  %s2 = inlined_call_operand.hbm [shape: f32[1,128], index: 2, kind: input, shape index: {}]
  %s3 = inlined_call_operand.hbm [shape: f32[2,128], index: 3, kind: output, shape index: {0}]
  %s4 = inlined_call_operand.hbm [shape: f32[2,1], index: 4, kind: output, shape index: {1}]
  %5 = xla_tuple %s3, %s4
  %s6 = sld [smem:[#allocation0]]
  $region42: #{basic_discriminator_forward.7} parent=0
    _
  %s8 = ssub.s32 1, %s6
  %s9 = scalar_select 0, %s8, %s6
  $region1: #{basic_discriminator_forward.7} parent=0
    #allocation2 [shape = 'u8[8192]{0}', space=vmem, size = 0x2000, scoped, tag = 'input window, operand 0, single buffered']
    #allocation3 [shape = 's32[1]{0}', space=sflag, size = 0x4, scoped, tag = 'scoped memory for basic_discriminator_forward.7']
    #allocation4 [shape = 's32[1]{0}', space=sflag, size = 0x4, scoped, tag = 'scoped memory for basic_discriminator_forward.7']
    #allocation5 [shape = 'u8[524288]{0}', space=vmem, size = 0x80000, scoped, tag = 'input window, operand 1, single buffered']
    #allocation6 [shape = 's32[1]{0}', space=sflag, size = 0x4, scoped, tag = 'scoped memory for basic_discriminator_forward.7']
    #allocation7 [shape = 'u8[512]{0}', space=vmem, size = 0x400, scoped, tag = 'input window, operand 2, single buffered']
    #allocation8 [shape = 'u8[1024]{0}', space=vmem, size = 0x400, scoped, tag = 'output window, operand 0, single buffered']
    #allocation9 [shape = 'u8[1024]{0}', space=vmem, size = 0x400, scoped, tag = 'output window, operand 1, single buffered']
    #allocation10 [shape = 's32[1]{0}', space=sflag, size = 0x4, scoped, tag = 'scoped memory for basic_discriminator_forward.7']
    %10 = vsyncpa [#allocation3], 0
    %11 = vsyncpa [#allocation6], 0
    %12 = vsyncpa [#allocation4], 0
    %13 = vsyncpa [#allocation10], 0
    // Predicated region
    $region2: #{basic_discriminator_forward.7} parent=1 // pred_check
      _
    $region3: #{basic_discriminator_forward.7} parent=1 // pred_check_branch
      %15 = sbr.rel (0) target = $region5
    $region4: #{basic_discriminator_forward.7} parent=1 // pred_region
      %s17 = ssub.s32 256, 256
      %18 = vsyncadd [#allocation3], %s17
      %s20 = sshll.u32 [#allocation2], 4
      %s21 = int_to_ptr.vmem [resolvable:$true] %s20
      %23 = dma.hbm_to_vmem [thread:$0]  %s0, 256, %s21, [#allocation3]
    $region5: #{basic_discriminator_forward.7} parent=1 // pred_fallthru
      _
    // Predicated region
    $region6: #{basic_discriminator_forward.7} parent=1 // pred_check
      _
    $region7: #{basic_discriminator_forward.7} parent=1 // pred_check_branch
      %25 = sbr.rel (0) target = $region9
    $region8: #{basic_discriminator_forward.7} parent=1 // pred_region
      %s27 = ssub.s32 16384, 16384
      %28 = vsyncadd [#allocation6], %s27
      %s29 = sshll.u32 [#allocation5], 4
      %s30 = int_to_ptr.vmem [resolvable:$true] %s29
      %35 = dma.hbm_to_vmem [thread:$0]  %s1, 16384, %s30, [#allocation6], 64, 64, 4
    $region9: #{basic_discriminator_forward.7} parent=1 // pred_fallthru
      _
    // Predicated region
    $region10: #{basic_discriminator_forward.7} parent=1 // pred_check
      _
    $region11: #{basic_discriminator_forward.7} parent=1 // pred_check_branch
      %37 = sbr.rel (0) target = $region13
    $region12: #{basic_discriminator_forward.7} parent=1 // pred_region
      %s39 = ssub.s32 16, 16
      %40 = vsyncadd [#allocation6], %s39
      %s42 = sshll.u32 [#allocation7], 4
      %s43 = int_to_ptr.vmem [resolvable:$true] %s42
      %45 = dma.hbm_to_vmem [thread:$0]  %s2, 16, %s43, [#allocation6]
    $region13: #{basic_discriminator_forward.7} parent=1 // pred_fallthru
      _
    // Predicated region
    $region14: #{basic_discriminator_forward.7} parent=1 // pred_check
      _
    $region15: #{basic_discriminator_forward.7} parent=1 // pred_check_branch
      %47 = sbr.rel (0) target = $region17
    $region16: #{basic_discriminator_forward.7} parent=1 // pred_region
      %48 = dma.done [#allocation3], 256
    $region17: #{basic_discriminator_forward.7} parent=1 // pred_fallthru
      _
    // Predicated region
    $region18: #{basic_discriminator_forward.7} parent=1 // pred_check
      _
    $region19: #{basic_discriminator_forward.7} parent=1 // pred_check_branch
      %50 = sbr.rel (0) target = $region21
    $region20: #{basic_discriminator_forward.7} parent=1 // pred_region
      %51 = dma.done [#allocation6], 16384
    $region21: #{basic_discriminator_forward.7} parent=1 // pred_fallthru
      _
    // Predicated region
    $region22: #{basic_discriminator_forward.7} parent=1 // pred_check
      _
    $region23: #{basic_discriminator_forward.7} parent=1 // pred_check_branch
      %53 = sbr.rel (0) target = $region25
    $region24: #{basic_discriminator_forward.7} parent=1 // pred_region
      %54 = dma.done [#allocation6], 16
    $region25: #{basic_discriminator_forward.7} parent=1 // pred_fallthru
      _
    %v56 = vld [vmem:[#allocation2] sm:$0xff]
    %v57 = vld [vmem:[#allocation2 + $0x8] sm:$0xff]
    %v58 = vld [vmem:[#allocation5] sm:$0xf]
    %v59 = vld [vmem:[#allocation5 + $0x4] sm:$0xf]
    %v60 = vld [vmem:[#allocation5 + $0x8] sm:$0xf]
    %v61 = vld [vmem:[#allocation5 + $0xc] sm:$0xf]
    %v62 = vld [vmem:[#allocation5 + $0x10] sm:$0xf]
    %v63 = vld [vmem:[#allocation5 + $0x14] sm:$0xf]
    %v64 = vld [vmem:[#allocation5 + $0x18] sm:$0xf]
    %v65 = vld [vmem:[#allocation5 + $0x1c] sm:$0xf]
    %v66 = vld [vmem:[#allocation5 + $0x20] sm:$0xf]
    %v67 = vld [vmem:[#allocation5 + $0x24] sm:$0xf]
    %v68 = vld [vmem:[#allocation5 + $0x28] sm:$0xf]
    %v69 = vld [vmem:[#allocation5 + $0x2c] sm:$0xf]
    %v70 = vld [vmem:[#allocation5 + $0x30] sm:$0xf]
    %v71 = vld [vmem:[#allocation5 + $0x34] sm:$0xf]
    %v72 = vld [vmem:[#allocation5 + $0x38] sm:$0xf]
    %v73 = vld [vmem:[#allocation5 + $0x3c] sm:$0xf]
    %v74 = vld [vmem:[#allocation5 + $0x40] sm:$0xf]
    %v75 = vld [vmem:[#allocation5 + $0x44] sm:$0xf]
    %v76 = vld [vmem:[#allocation5 + $0x48] sm:$0xf]
    %v77 = vld [vmem:[#allocation5 + $0x4c] sm:$0xf]
    %v78 = vld [vmem:[#allocation5 + $0x50] sm:$0xf]
    %v79 = vld [vmem:[#allocation5 + $0x54] sm:$0xf]
    %v80 = vld [vmem:[#allocation5 + $0x58] sm:$0xf]
    %v81 = vld [vmem:[#allocation5 + $0x5c] sm:$0xf]
    %v82 = vld [vmem:[#allocation5 + $0x60] sm:$0xf]
    %v83 = vld [vmem:[#allocation5 + $0x64] sm:$0xf]
    %v84 = vld [vmem:[#allocation5 + $0x68] sm:$0xf]
    %v85 = vld [vmem:[#allocation5 + $0x6c] sm:$0xf]
    %v86 = vld [vmem:[#allocation5 + $0x70] sm:$0xf]
    %v87 = vld [vmem:[#allocation5 + $0x74] sm:$0xf]
    %v88 = vld [vmem:[#allocation5 + $0x78] sm:$0xf]
    %v89 = vld [vmem:[#allocation5 + $0x7c] sm:$0xf]
    %v90 = vld [vmem:[#allocation5 + $0x80] sm:$0xf]
    %v91 = vld [vmem:[#allocation5 + $0x84] sm:$0xf]
    %v92 = vld [vmem:[#allocation5 + $0x88] sm:$0xf]
    %v93 = vld [vmem:[#allocation5 + $0x8c] sm:$0xf]
    %v94 = vld [vmem:[#allocation5 + $0x90] sm:$0xf]
    %v95 = vld [vmem:[#allocation5 + $0x94] sm:$0xf]
    %v96 = vld [vmem:[#allocation5 + $0x98] sm:$0xf]
    %v97 = vld [vmem:[#allocation5 + $0x9c] sm:$0xf]
    %v98 = vld [vmem:[#allocation5 + $0xa0] sm:$0xf]
    %v99 = vld [vmem:[#allocation5 + $0xa4] sm:$0xf]
    %v100 = vld [vmem:[#allocation5 + $0xa8] sm:$0xf]
    %v101 = vld [vmem:[#allocation5 + $0xac] sm:$0xf]
    %v102 = vld [vmem:[#allocation5 + $0xb0] sm:$0xf]
    %v103 = vld [vmem:[#allocation5 + $0xb4] sm:$0xf]
    %v104 = vld [vmem:[#allocation5 + $0xb8] sm:$0xf]
    %v105 = vld [vmem:[#allocation5 + $0xbc] sm:$0xf]
    %v106 = vld [vmem:[#allocation5 + $0xc0] sm:$0xf]
    %v107 = vld [vmem:[#allocation5 + $0xc4] sm:$0xf]
    %v108 = vld [vmem:[#allocation5 + $0xc8] sm:$0xf]
    %v109 = vld [vmem:[#allocation5 + $0xcc] sm:$0xf]
    %v110 = vld [vmem:[#allocation5 + $0xd0] sm:$0xf]
    %v111 = vld [vmem:[#allocation5 + $0xd4] sm:$0xf]
    %v112 = vld [vmem:[#allocation5 + $0xd8] sm:$0xf]
    %v113 = vld [vmem:[#allocation5 + $0xdc] sm:$0xf]
    %v114 = vld [vmem:[#allocation5 + $0xe0] sm:$0xf]
    %v115 = vld [vmem:[#allocation5 + $0xe4] sm:$0xf]
    %v116 = vld [vmem:[#allocation5 + $0xe8] sm:$0xf]
    %v117 = vld [vmem:[#allocation5 + $0xec] sm:$0xf]
    %v118 = vld [vmem:[#allocation5 + $0xf0] sm:$0xf]
    %v119 = vld [vmem:[#allocation5 + $0xf4] sm:$0xf]
    %v120 = vld [vmem:[#allocation5 + $0xf8] sm:$0xf]
    %v121 = vld [vmem:[#allocation5 + $0xfc] sm:$0xf]
    %v122 = vld [vmem:[#allocation5 + $0x100] sm:$0xf]
    %v123 = vld [vmem:[#allocation5 + $0x104] sm:$0xf]
    %v124 = vld [vmem:[#allocation5 + $0x108] sm:$0xf]
    %v125 = vld [vmem:[#allocation5 + $0x10c] sm:$0xf]
    %v126 = vld [vmem:[#allocation5 + $0x110] sm:$0xf]
    %v127 = vld [vmem:[#allocation5 + $0x114] sm:$0xf]
    %v128 = vld [vmem:[#allocation5 + $0x118] sm:$0xf]
    %v129 = vld [vmem:[#allocation5 + $0x11c] sm:$0xf]
    %v130 = vld [vmem:[#allocation5 + $0x120] sm:$0xf]
    %v131 = vld [vmem:[#allocation5 + $0x124] sm:$0xf]
    %v132 = vld [vmem:[#allocation5 + $0x128] sm:$0xf]
    %v133 = vld [vmem:[#allocation5 + $0x12c] sm:$0xf]
    %v134 = vld [vmem:[#allocation5 + $0x130] sm:$0xf]
    %v135 = vld [vmem:[#allocation5 + $0x134] sm:$0xf]
    %v136 = vld [vmem:[#allocation5 + $0x138] sm:$0xf]
    %v137 = vld [vmem:[#allocation5 + $0x13c] sm:$0xf]
    %v138 = vld [vmem:[#allocation5 + $0x140] sm:$0xf]
    %v139 = vld [vmem:[#allocation5 + $0x144] sm:$0xf]
    %v140 = vld [vmem:[#allocation5 + $0x148] sm:$0xf]
    %v141 = vld [vmem:[#allocation5 + $0x14c] sm:$0xf]
    %v142 = vld [vmem:[#allocation5 + $0x150] sm:$0xf]
    %v143 = vld [vmem:[#allocation5 + $0x154] sm:$0xf]
    %v144 = vld [vmem:[#allocation5 + $0x158] sm:$0xf]
    %v145 = vld [vmem:[#allocation5 + $0x15c] sm:$0xf]
    %v146 = vld [vmem:[#allocation5 + $0x160] sm:$0xf]
    %v147 = vld [vmem:[#allocation5 + $0x164] sm:$0xf]
    %v148 = vld [vmem:[#allocation5 + $0x168] sm:$0xf]
    %v149 = vld [vmem:[#allocation5 + $0x16c] sm:$0xf]
    %v150 = vld [vmem:[#allocation5 + $0x170] sm:$0xf]
    %v151 = vld [vmem:[#allocation5 + $0x174] sm:$0xf]
    %v152 = vld [vmem:[#allocation5 + $0x178] sm:$0xf]
    %v153 = vld [vmem:[#allocation5 + $0x17c] sm:$0xf]
    %v154 = vld [vmem:[#allocation5 + $0x180] sm:$0xf]
    %v155 = vld [vmem:[#allocation5 + $0x184] sm:$0xf]
    %v156 = vld [vmem:[#allocation5 + $0x188] sm:$0xf]
    %v157 = vld [vmem:[#allocation5 + $0x18c] sm:$0xf]
    %v158 = vld [vmem:[#allocation5 + $0x190] sm:$0xf]
    %v159 = vld [vmem:[#allocation5 + $0x194] sm:$0xf]
    %v160 = vld [vmem:[#allocation5 + $0x198] sm:$0xf]
    %v161 = vld [vmem:[#allocation5 + $0x19c] sm:$0xf]
    %v162 = vld [vmem:[#allocation5 + $0x1a0] sm:$0xf]
    %v163 = vld [vmem:[#allocation5 + $0x1a4] sm:$0xf]
    %v164 = vld [vmem:[#allocation5 + $0x1a8] sm:$0xf]
    %v165 = vld [vmem:[#allocation5 + $0x1ac] sm:$0xf]
    %v166 = vld [vmem:[#allocation5 + $0x1b0] sm:$0xf]
    %v167 = vld [vmem:[#allocation5 + $0x1b4] sm:$0xf]
    %v168 = vld [vmem:[#allocation5 + $0x1b8] sm:$0xf]
    %v169 = vld [vmem:[#allocation5 + $0x1bc] sm:$0xf]
    %v170 = vld [vmem:[#allocation5 + $0x1c0] sm:$0xf]
    %v171 = vld [vmem:[#allocation5 + $0x1c4] sm:$0xf]
    %v172 = vld [vmem:[#allocation5 + $0x1c8] sm:$0xf]
    %v173 = vld [vmem:[#allocation5 + $0x1cc] sm:$0xf]
    %v174 = vld [vmem:[#allocation5 + $0x1d0] sm:$0xf]
    %v175 = vld [vmem:[#allocation5 + $0x1d4] sm:$0xf]
    %v176 = vld [vmem:[#allocation5 + $0x1d8] sm:$0xf]
    %v177 = vld [vmem:[#allocation5 + $0x1dc] sm:$0xf]
    %v178 = vld [vmem:[#allocation5 + $0x1e0] sm:$0xf]
    %v179 = vld [vmem:[#allocation5 + $0x1e4] sm:$0xf]
    %v180 = vld [vmem:[#allocation5 + $0x1e8] sm:$0xf]
    %v181 = vld [vmem:[#allocation5 + $0x1ec] sm:$0xf]
    %v182 = vld [vmem:[#allocation5 + $0x1f0] sm:$0xf]
    %v183 = vld [vmem:[#allocation5 + $0x1f4] sm:$0xf]
    %v184 = vld [vmem:[#allocation5 + $0x1f8] sm:$0xf]
    %v185 = vld [vmem:[#allocation5 + $0x1fc] sm:$0xf]
    %v186 = vld [vmem:[#allocation5 + $0x200] sm:$0xf]
    %v187 = vld [vmem:[#allocation5 + $0x204] sm:$0xf]
    %v188 = vld [vmem:[#allocation5 + $0x208] sm:$0xf]
    %v189 = vld [vmem:[#allocation5 + $0x20c] sm:$0xf]
    %v190 = vld [vmem:[#allocation5 + $0x210] sm:$0xf]
    %v191 = vld [vmem:[#allocation5 + $0x214] sm:$0xf]
    %v192 = vld [vmem:[#allocation5 + $0x218] sm:$0xf]
    %v193 = vld [vmem:[#allocation5 + $0x21c] sm:$0xf]
    %v194 = vld [vmem:[#allocation5 + $0x220] sm:$0xf]
    %v195 = vld [vmem:[#allocation5 + $0x224] sm:$0xf]
    %v196 = vld [vmem:[#allocation5 + $0x228] sm:$0xf]
    %v197 = vld [vmem:[#allocation5 + $0x22c] sm:$0xf]
    %v198 = vld [vmem:[#allocation5 + $0x230] sm:$0xf]
    %v199 = vld [vmem:[#allocation5 + $0x234] sm:$0xf]
    %v200 = vld [vmem:[#allocation5 + $0x238] sm:$0xf]
    %v201 = vld [vmem:[#allocation5 + $0x23c] sm:$0xf]
    %v202 = vld [vmem:[#allocation5 + $0x240] sm:$0xf]
    %v203 = vld [vmem:[#allocation5 + $0x244] sm:$0xf]
    %v204 = vld [vmem:[#allocation5 + $0x248] sm:$0xf]
    %v205 = vld [vmem:[#allocation5 + $0x24c] sm:$0xf]
    %v206 = vld [vmem:[#allocation5 + $0x250] sm:$0xf]
    %v207 = vld [vmem:[#allocation5 + $0x254] sm:$0xf]
    %v208 = vld [vmem:[#allocation5 + $0x258] sm:$0xf]
    %v209 = vld [vmem:[#allocation5 + $0x25c] sm:$0xf]
    %v210 = vld [vmem:[#allocation5 + $0x260] sm:$0xf]
    %v211 = vld [vmem:[#allocation5 + $0x264] sm:$0xf]
    %v212 = vld [vmem:[#allocation5 + $0x268] sm:$0xf]
    %v213 = vld [vmem:[#allocation5 + $0x26c] sm:$0xf]
    %v214 = vld [vmem:[#allocation5 + $0x270] sm:$0xf]
    %v215 = vld [vmem:[#allocation5 + $0x274] sm:$0xf]
    %v216 = vld [vmem:[#allocation5 + $0x278] sm:$0xf]
    %v217 = vld [vmem:[#allocation5 + $0x27c] sm:$0xf]
    %v218 = vld [vmem:[#allocation5 + $0x280] sm:$0xf]
    %v219 = vld [vmem:[#allocation5 + $0x284] sm:$0xf]
    %v220 = vld [vmem:[#allocation5 + $0x288] sm:$0xf]
    %v221 = vld [vmem:[#allocation5 + $0x28c] sm:$0xf]
    %v222 = vld [vmem:[#allocation5 + $0x290] sm:$0xf]
    %v223 = vld [vmem:[#allocation5 + $0x294] sm:$0xf]
    %v224 = vld [vmem:[#allocation5 + $0x298] sm:$0xf]
    %v225 = vld [vmem:[#allocation5 + $0x29c] sm:$0xf]
    %v226 = vld [vmem:[#allocation5 + $0x2a0] sm:$0xf]
    %v227 = vld [vmem:[#allocation5 + $0x2a4] sm:$0xf]
    %v228 = vld [vmem:[#allocation5 + $0x2a8] sm:$0xf]
    %v229 = vld [vmem:[#allocation5 + $0x2ac] sm:$0xf]
    %v230 = vld [vmem:[#allocation5 + $0x2b0] sm:$0xf]
    %v231 = vld [vmem:[#allocation5 + $0x2b4] sm:$0xf]
    %v232 = vld [vmem:[#allocation5 + $0x2b8] sm:$0xf]
    %v233 = vld [vmem:[#allocation5 + $0x2bc] sm:$0xf]
    %v234 = vld [vmem:[#allocation5 + $0x2c0] sm:$0xf]
    %v235 = vld [vmem:[#allocation5 + $0x2c4] sm:$0xf]
    %v236 = vld [vmem:[#allocation5 + $0x2c8] sm:$0xf]
    %v237 = vld [vmem:[#allocation5 + $0x2cc] sm:$0xf]
    %v238 = vld [vmem:[#allocation5 + $0x2d0] sm:$0xf]
    %v239 = vld [vmem:[#allocation5 + $0x2d4] sm:$0xf]
    %v240 = vld [vmem:[#allocation5 + $0x2d8] sm:$0xf]
    %v241 = vld [vmem:[#allocation5 + $0x2dc] sm:$0xf]
    %v242 = vld [vmem:[#allocation5 + $0x2e0] sm:$0xf]
    %v243 = vld [vmem:[#allocation5 + $0x2e4] sm:$0xf]
    %v244 = vld [vmem:[#allocation5 + $0x2e8] sm:$0xf]
    %v245 = vld [vmem:[#allocation5 + $0x2ec] sm:$0xf]
    %v246 = vld [vmem:[#allocation5 + $0x2f0] sm:$0xf]
    %v247 = vld [vmem:[#allocation5 + $0x2f4] sm:$0xf]
    %v248 = vld [vmem:[#allocation5 + $0x2f8] sm:$0xf]
    %v249 = vld [vmem:[#allocation5 + $0x2fc] sm:$0xf]
    %v250 = vld [vmem:[#allocation5 + $0x300] sm:$0xf]
    %v251 = vld [vmem:[#allocation5 + $0x304] sm:$0xf]
    %v252 = vld [vmem:[#allocation5 + $0x308] sm:$0xf]
    %v253 = vld [vmem:[#allocation5 + $0x30c] sm:$0xf]
    %v254 = vld [vmem:[#allocation5 + $0x310] sm:$0xf]
    %v255 = vld [vmem:[#allocation5 + $0x314] sm:$0xf]
    %v256 = vld [vmem:[#allocation5 + $0x318] sm:$0xf]
    %v257 = vld [vmem:[#allocation5 + $0x31c] sm:$0xf]
    %v258 = vld [vmem:[#allocation5 + $0x320] sm:$0xf]
    %v259 = vld [vmem:[#allocation5 + $0x324] sm:$0xf]
    %v260 = vld [vmem:[#allocation5 + $0x328] sm:$0xf]
    %v261 = vld [vmem:[#allocation5 + $0x32c] sm:$0xf]
    %v262 = vld [vmem:[#allocation5 + $0x330] sm:$0xf]
    %v263 = vld [vmem:[#allocation5 + $0x334] sm:$0xf]
    %v264 = vld [vmem:[#allocation5 + $0x338] sm:$0xf]
    %v265 = vld [vmem:[#allocation5 + $0x33c] sm:$0xf]
    %v266 = vld [vmem:[#allocation5 + $0x340] sm:$0xf]
    %v267 = vld [vmem:[#allocation5 + $0x344] sm:$0xf]
    %v268 = vld [vmem:[#allocation5 + $0x348] sm:$0xf]
    %v269 = vld [vmem:[#allocation5 + $0x34c] sm:$0xf]
    %v270 = vld [vmem:[#allocation5 + $0x350] sm:$0xf]
    %v271 = vld [vmem:[#allocation5 + $0x354] sm:$0xf]
    %v272 = vld [vmem:[#allocation5 + $0x358] sm:$0xf]
    %v273 = vld [vmem:[#allocation5 + $0x35c] sm:$0xf]
    %v274 = vld [vmem:[#allocation5 + $0x360] sm:$0xf]
    %v275 = vld [vmem:[#allocation5 + $0x364] sm:$0xf]
    %v276 = vld [vmem:[#allocation5 + $0x368] sm:$0xf]
    %v277 = vld [vmem:[#allocation5 + $0x36c] sm:$0xf]
    %v278 = vld [vmem:[#allocation5 + $0x370] sm:$0xf]
    %v279 = vld [vmem:[#allocation5 + $0x374] sm:$0xf]
    %v280 = vld [vmem:[#allocation5 + $0x378] sm:$0xf]
    %v281 = vld [vmem:[#allocation5 + $0x37c] sm:$0xf]
    %v282 = vld [vmem:[#allocation5 + $0x380] sm:$0xf]
    %v283 = vld [vmem:[#allocation5 + $0x384] sm:$0xf]
    %v284 = vld [vmem:[#allocation5 + $0x388] sm:$0xf]
    %v285 = vld [vmem:[#allocation5 + $0x38c] sm:$0xf]
    %v286 = vld [vmem:[#allocation5 + $0x390] sm:$0xf]
    %v287 = vld [vmem:[#allocation5 + $0x394] sm:$0xf]
    %v288 = vld [vmem:[#allocation5 + $0x398] sm:$0xf]
    %v289 = vld [vmem:[#allocation5 + $0x39c] sm:$0xf]
    %v290 = vld [vmem:[#allocation5 + $0x3a0] sm:$0xf]
    %v291 = vld [vmem:[#allocation5 + $0x3a4] sm:$0xf]
    %v292 = vld [vmem:[#allocation5 + $0x3a8] sm:$0xf]
    %v293 = vld [vmem:[#allocation5 + $0x3ac] sm:$0xf]
    %v294 = vld [vmem:[#allocation5 + $0x3b0] sm:$0xf]
    %v295 = vld [vmem:[#allocation5 + $0x3b4] sm:$0xf]
    %v296 = vld [vmem:[#allocation5 + $0x3b8] sm:$0xf]
    %v297 = vld [vmem:[#allocation5 + $0x3bc] sm:$0xf]
    %v298 = vld [vmem:[#allocation5 + $0x3c0] sm:$0xf]
    %v299 = vld [vmem:[#allocation5 + $0x3c4] sm:$0xf]
    %v300 = vld [vmem:[#allocation5 + $0x3c8] sm:$0xf]
    %v301 = vld [vmem:[#allocation5 + $0x3cc] sm:$0xf]
    %v302 = vld [vmem:[#allocation5 + $0x3d0] sm:$0xf]
    %v303 = vld [vmem:[#allocation5 + $0x3d4] sm:$0xf]
    %v304 = vld [vmem:[#allocation5 + $0x3d8] sm:$0xf]
    %v305 = vld [vmem:[#allocation5 + $0x3dc] sm:$0xf]
    %v306 = vld [vmem:[#allocation5 + $0x3e0] sm:$0xf]
    %v307 = vld [vmem:[#allocation5 + $0x3e4] sm:$0xf]
    %v308 = vld [vmem:[#allocation5 + $0x3e8] sm:$0xf]
    %v309 = vld [vmem:[#allocation5 + $0x3ec] sm:$0xf]
    %v310 = vld [vmem:[#allocation5 + $0x3f0] sm:$0xf]
    %v311 = vld [vmem:[#allocation5 + $0x3f4] sm:$0xf]
    %v312 = vld [vmem:[#allocation5 + $0x3f8] sm:$0xf]
    %v313 = vld [vmem:[#allocation5 + $0x3fc] sm:$0xf]
    %v316 = vcombine.high %v56, %v56
    %v318 = vunpack.c.l.s4 1966171168
    %v319 = vunpack.c.0.s8 %v318
    %v320 = vlaneseq
    %v321 = vshrl.u32 %v320, 7
    %v322 = vsub.s32 %v319, %v321
    %v323 = vrot.slane %v56, %v322
    %v325 = vunpack.c.l.s4 1966171168
    %v326 = vunpack.c.0.s8 %v325
    %v327 = vlaneseq
    %v328 = vshrl.u32 %v327, 7
    %v329 = vsub.s32 %v326, %v328
    %v330 = vrot.slane %v316, %v329
    %v331 = vcombine.high %v323, %v323
    %v332 = vcombine.high %v330, %v330
    %v334 = vunpack.c.l.s4 1966171168
    %v335 = vunpack.c.0.s8 %v334
    %v336 = vlaneseq
    %v337 = vshrl.u32 %v336, 7
    %v338 = vsub.s32 %v335, %v337
    %v339 = vrot.slane %v323, %v338
    %v341 = vunpack.c.l.s4 1966171168
    %v342 = vunpack.c.0.s8 %v341
    %v343 = vlaneseq
    %v344 = vshrl.u32 %v343, 7
    %v345 = vsub.s32 %v342, %v344
    %v346 = vrot.slane %v330, %v345
    %v348 = vunpack.c.l.s4 1966171168
    %v349 = vunpack.c.0.s8 %v348
    %v350 = vlaneseq
    %v351 = vshrl.u32 %v350, 7
    %v352 = vsub.s32 %v349, %v351
    %v353 = vrot.slane %v331, %v352
    %v355 = vunpack.c.l.s4 1966171168
    %v356 = vunpack.c.0.s8 %v355
    %v357 = vlaneseq
    %v358 = vshrl.u32 %v357, 7
    %v359 = vsub.s32 %v356, %v358
    %v360 = vrot.slane %v332, %v359
    %v361 = vcombine.high %v339, %v339
    %v362 = vcombine.high %v346, %v346
    %v363 = vcombine.high %v353, %v353
    %v364 = vcombine.high %v360, %v360
    %v365 = vcombine.high %v57, %v57
    %v367 = vunpack.c.l.s4 1966171168
    %v368 = vunpack.c.0.s8 %v367
    %v369 = vlaneseq
    %v370 = vshrl.u32 %v369, 7
    %v371 = vsub.s32 %v368, %v370
    %v372 = vrot.slane %v57, %v371
    %v374 = vunpack.c.l.s4 1966171168
    %v375 = vunpack.c.0.s8 %v374
    %v376 = vlaneseq
    %v377 = vshrl.u32 %v376, 7
    %v378 = vsub.s32 %v375, %v377
    %v379 = vrot.slane %v365, %v378
    %v380 = vcombine.high %v372, %v372
    %v381 = vcombine.high %v379, %v379
    %v383 = vunpack.c.l.s4 1966171168
    %v384 = vunpack.c.0.s8 %v383
    %v385 = vlaneseq
    %v386 = vshrl.u32 %v385, 7
    %v387 = vsub.s32 %v384, %v386
    %v388 = vrot.slane %v372, %v387
    %v390 = vunpack.c.l.s4 1966171168
    %v391 = vunpack.c.0.s8 %v390
    %v392 = vlaneseq
    %v393 = vshrl.u32 %v392, 7
    %v394 = vsub.s32 %v391, %v393
    %v395 = vrot.slane %v379, %v394
    %v397 = vunpack.c.l.s4 1966171168
    %v398 = vunpack.c.0.s8 %v397
    %v399 = vlaneseq
    %v400 = vshrl.u32 %v399, 7
    %v401 = vsub.s32 %v398, %v400
    %v402 = vrot.slane %v380, %v401
    %v404 = vunpack.c.l.s4 1966171168
    %v405 = vunpack.c.0.s8 %v404
    %v406 = vlaneseq
    %v407 = vshrl.u32 %v406, 7
    %v408 = vsub.s32 %v405, %v407
    %v409 = vrot.slane %v381, %v408
    %v410 = vcombine.high %v388, %v388
    %v411 = vcombine.high %v395, %v395
    %v412 = vcombine.high %v402, %v402
    %v413 = vcombine.high %v409, %v409
    %v686 = vunpack.c.l.b16 %v58
    %v687 = vunpack.c.l.b16 %v59
    %v688 = vunpack.c.l.b16 %v60
    %v689 = vunpack.c.l.b16 %v61
    %v690 = vunpack.c.l.b16 %v62
    %v691 = vunpack.c.l.b16 %v63
    %v692 = vunpack.c.l.b16 %v64
    %v693 = vunpack.c.l.b16 %v65
    %v694 = vunpack.c.l.b16 %v66
    %v695 = vunpack.c.l.b16 %v67
    %v696 = vunpack.c.l.b16 %v68
    %v697 = vunpack.c.l.b16 %v69
    %v698 = vunpack.c.l.b16 %v70
    %v699 = vunpack.c.l.b16 %v71
    %v700 = vunpack.c.l.b16 %v72
    %v701 = vunpack.c.l.b16 %v73
    %v702 = vunpack.c.l.b16 %v74
    %v703 = vunpack.c.l.b16 %v75
    %v704 = vunpack.c.l.b16 %v76
    %v705 = vunpack.c.l.b16 %v77
    %v706 = vunpack.c.l.b16 %v78
    %v707 = vunpack.c.l.b16 %v79
    %v708 = vunpack.c.l.b16 %v80
    %v709 = vunpack.c.l.b16 %v81
    %v710 = vunpack.c.l.b16 %v82
    %v711 = vunpack.c.l.b16 %v83
    %v712 = vunpack.c.l.b16 %v84
    %v713 = vunpack.c.l.b16 %v85
    %v714 = vunpack.c.l.b16 %v86
    %v715 = vunpack.c.l.b16 %v87
    %v716 = vunpack.c.l.b16 %v88
    %v717 = vunpack.c.l.b16 %v89
    %v718 = vunpack.c.l.b16 %v90
    %v719 = vunpack.c.l.b16 %v91
    %v720 = vunpack.c.l.b16 %v92
    %v721 = vunpack.c.l.b16 %v93
    %v722 = vunpack.c.l.b16 %v94
    %v723 = vunpack.c.l.b16 %v95
    %v724 = vunpack.c.l.b16 %v96
    %v725 = vunpack.c.l.b16 %v97
    %v726 = vunpack.c.l.b16 %v98
    %v727 = vunpack.c.l.b16 %v99
    %v728 = vunpack.c.l.b16 %v100
    %v729 = vunpack.c.l.b16 %v101
    %v730 = vunpack.c.l.b16 %v102
    %v731 = vunpack.c.l.b16 %v103
    %v732 = vunpack.c.l.b16 %v104
    %v733 = vunpack.c.l.b16 %v105
    %v734 = vunpack.c.l.b16 %v106
    %v735 = vunpack.c.l.b16 %v107
    %v736 = vunpack.c.l.b16 %v108
    %v737 = vunpack.c.l.b16 %v109
    %v738 = vunpack.c.l.b16 %v110
    %v739 = vunpack.c.l.b16 %v111
    %v740 = vunpack.c.l.b16 %v112
    %v741 = vunpack.c.l.b16 %v113
    %v742 = vunpack.c.l.b16 %v114
    %v743 = vunpack.c.l.b16 %v115
    %v744 = vunpack.c.l.b16 %v116
    %v745 = vunpack.c.l.b16 %v117
    %v746 = vunpack.c.l.b16 %v118
    %v747 = vunpack.c.l.b16 %v119
    %v748 = vunpack.c.l.b16 %v120
    %v749 = vunpack.c.l.b16 %v121
    %v750 = vunpack.c.l.b16 %v122
    %v751 = vunpack.c.l.b16 %v123
    %v752 = vunpack.c.l.b16 %v124
    %v753 = vunpack.c.l.b16 %v125
    %v754 = vunpack.c.l.b16 %v126
    %v755 = vunpack.c.l.b16 %v127
    %v756 = vunpack.c.l.b16 %v128
    %v757 = vunpack.c.l.b16 %v129
    %v758 = vunpack.c.l.b16 %v130
    %v759 = vunpack.c.l.b16 %v131
    %v760 = vunpack.c.l.b16 %v132
    %v761 = vunpack.c.l.b16 %v133
    %v762 = vunpack.c.l.b16 %v134
    %v763 = vunpack.c.l.b16 %v135
    %v764 = vunpack.c.l.b16 %v136
    %v765 = vunpack.c.l.b16 %v137
    %v766 = vunpack.c.l.b16 %v138
    %v767 = vunpack.c.l.b16 %v139
    %v768 = vunpack.c.l.b16 %v140
    %v769 = vunpack.c.l.b16 %v141
    %v770 = vunpack.c.l.b16 %v142
    %v771 = vunpack.c.l.b16 %v143
    %v772 = vunpack.c.l.b16 %v144
    %v773 = vunpack.c.l.b16 %v145
    %v774 = vunpack.c.l.b16 %v146
    %v775 = vunpack.c.l.b16 %v147
    %v776 = vunpack.c.l.b16 %v148
    %v777 = vunpack.c.l.b16 %v149
    %v778 = vunpack.c.l.b16 %v150
    %v779 = vunpack.c.l.b16 %v151
    %v780 = vunpack.c.l.b16 %v152
    %v781 = vunpack.c.l.b16 %v153
    %v782 = vunpack.c.l.b16 %v154
    %v783 = vunpack.c.l.b16 %v155
    %v784 = vunpack.c.l.b16 %v156
    %v785 = vunpack.c.l.b16 %v157
    %v786 = vunpack.c.l.b16 %v158
    %v787 = vunpack.c.l.b16 %v159
    %v788 = vunpack.c.l.b16 %v160
    %v789 = vunpack.c.l.b16 %v161
    %v790 = vunpack.c.l.b16 %v162
    %v791 = vunpack.c.l.b16 %v163
    %v792 = vunpack.c.l.b16 %v164
    %v793 = vunpack.c.l.b16 %v165
    %v794 = vunpack.c.l.b16 %v166
    %v795 = vunpack.c.l.b16 %v167
    %v796 = vunpack.c.l.b16 %v168
    %v797 = vunpack.c.l.b16 %v169
    %v798 = vunpack.c.l.b16 %v170
    %v799 = vunpack.c.l.b16 %v171
    %v800 = vunpack.c.l.b16 %v172
    %v801 = vunpack.c.l.b16 %v173
    %v802 = vunpack.c.l.b16 %v174
    %v803 = vunpack.c.l.b16 %v175
    %v804 = vunpack.c.l.b16 %v176
    %v805 = vunpack.c.l.b16 %v177
    %v806 = vunpack.c.l.b16 %v178
    %v807 = vunpack.c.l.b16 %v179
    %v808 = vunpack.c.l.b16 %v180
    %v809 = vunpack.c.l.b16 %v181
    %v810 = vunpack.c.l.b16 %v182
    %v811 = vunpack.c.l.b16 %v183
    %v812 = vunpack.c.l.b16 %v184
    %v813 = vunpack.c.l.b16 %v185
    %v814 = vunpack.c.l.b16 %v186
    %v815 = vunpack.c.l.b16 %v187
    %v816 = vunpack.c.l.b16 %v188
    %v817 = vunpack.c.l.b16 %v189
    %v818 = vunpack.c.l.b16 %v190
    %v819 = vunpack.c.l.b16 %v191
    %v820 = vunpack.c.l.b16 %v192
    %v821 = vunpack.c.l.b16 %v193
    %v822 = vunpack.c.l.b16 %v194
    %v823 = vunpack.c.l.b16 %v195
    %v824 = vunpack.c.l.b16 %v196
    %v825 = vunpack.c.l.b16 %v197
    %v826 = vunpack.c.l.b16 %v198
    %v827 = vunpack.c.l.b16 %v199
    %v828 = vunpack.c.l.b16 %v200
    %v829 = vunpack.c.l.b16 %v201
    %v830 = vunpack.c.l.b16 %v202
    %v831 = vunpack.c.l.b16 %v203
    %v832 = vunpack.c.l.b16 %v204
    %v833 = vunpack.c.l.b16 %v205
    %v834 = vunpack.c.l.b16 %v206
    %v835 = vunpack.c.l.b16 %v207
    %v836 = vunpack.c.l.b16 %v208
    %v837 = vunpack.c.l.b16 %v209
    %v838 = vunpack.c.l.b16 %v210
    %v839 = vunpack.c.l.b16 %v211
    %v840 = vunpack.c.l.b16 %v212
    %v841 = vunpack.c.l.b16 %v213
    %v842 = vunpack.c.l.b16 %v214
    %v843 = vunpack.c.l.b16 %v215
    %v844 = vunpack.c.l.b16 %v216
    %v845 = vunpack.c.l.b16 %v217
    %v846 = vunpack.c.l.b16 %v218
    %v847 = vunpack.c.l.b16 %v219
    %v848 = vunpack.c.l.b16 %v220
    %v849 = vunpack.c.l.b16 %v221
    %v850 = vunpack.c.l.b16 %v222
    %v851 = vunpack.c.l.b16 %v223
    %v852 = vunpack.c.l.b16 %v224
    %v853 = vunpack.c.l.b16 %v225
    %v854 = vunpack.c.l.b16 %v226
    %v855 = vunpack.c.l.b16 %v227
    %v856 = vunpack.c.l.b16 %v228
    %v857 = vunpack.c.l.b16 %v229
    %v858 = vunpack.c.l.b16 %v230
    %v859 = vunpack.c.l.b16 %v231
    %v860 = vunpack.c.l.b16 %v232
    %v861 = vunpack.c.l.b16 %v233
    %v862 = vunpack.c.l.b16 %v234
    %v863 = vunpack.c.l.b16 %v235
    %v864 = vunpack.c.l.b16 %v236
    %v865 = vunpack.c.l.b16 %v237
    %v866 = vunpack.c.l.b16 %v238
    %v867 = vunpack.c.l.b16 %v239
    %v868 = vunpack.c.l.b16 %v240
    %v869 = vunpack.c.l.b16 %v241
    %v870 = vunpack.c.l.b16 %v242
    %v871 = vunpack.c.l.b16 %v243
    %v872 = vunpack.c.l.b16 %v244
    %v873 = vunpack.c.l.b16 %v245
    %v874 = vunpack.c.l.b16 %v246
    %v875 = vunpack.c.l.b16 %v247
    %v876 = vunpack.c.l.b16 %v248
    %v877 = vunpack.c.l.b16 %v249
    %v878 = vunpack.c.l.b16 %v250
    %v879 = vunpack.c.l.b16 %v251
    %v880 = vunpack.c.l.b16 %v252
    %v881 = vunpack.c.l.b16 %v253
    %v882 = vunpack.c.l.b16 %v254
    %v883 = vunpack.c.l.b16 %v255
    %v884 = vunpack.c.l.b16 %v256
    %v885 = vunpack.c.l.b16 %v257
    %v886 = vunpack.c.l.b16 %v258
    %v887 = vunpack.c.l.b16 %v259
    %v888 = vunpack.c.l.b16 %v260
    %v889 = vunpack.c.l.b16 %v261
    %v890 = vunpack.c.l.b16 %v262
    %v891 = vunpack.c.l.b16 %v263
    %v892 = vunpack.c.l.b16 %v264
    %v893 = vunpack.c.l.b16 %v265
    %v894 = vunpack.c.l.b16 %v266
    %v895 = vunpack.c.l.b16 %v267
    %v896 = vunpack.c.l.b16 %v268
    %v897 = vunpack.c.l.b16 %v269
    %v898 = vunpack.c.l.b16 %v270
    %v899 = vunpack.c.l.b16 %v271
    %v900 = vunpack.c.l.b16 %v272
    %v901 = vunpack.c.l.b16 %v273
    %v902 = vunpack.c.l.b16 %v274
    %v903 = vunpack.c.l.b16 %v275
    %v904 = vunpack.c.l.b16 %v276
    %v905 = vunpack.c.l.b16 %v277
    %v906 = vunpack.c.l.b16 %v278
    %v907 = vunpack.c.l.b16 %v279
    %v908 = vunpack.c.l.b16 %v280
    %v909 = vunpack.c.l.b16 %v281
    %v910 = vunpack.c.l.b16 %v282
    %v911 = vunpack.c.l.b16 %v283
    %v912 = vunpack.c.l.b16 %v284
    %v913 = vunpack.c.l.b16 %v285
    %v914 = vunpack.c.l.b16 %v286
    %v915 = vunpack.c.l.b16 %v287
    %v916 = vunpack.c.l.b16 %v288
    %v917 = vunpack.c.l.b16 %v289
    %v918 = vunpack.c.l.b16 %v290
    %v919 = vunpack.c.l.b16 %v291
    %v920 = vunpack.c.l.b16 %v292
    %v921 = vunpack.c.l.b16 %v293
    %v922 = vunpack.c.l.b16 %v294
    %v923 = vunpack.c.l.b16 %v295
    %v924 = vunpack.c.l.b16 %v296
    %v925 = vunpack.c.l.b16 %v297
    %v926 = vunpack.c.l.b16 %v298
    %v927 = vunpack.c.l.b16 %v299
    %v928 = vunpack.c.l.b16 %v300
    %v929 = vunpack.c.l.b16 %v301
    %v930 = vunpack.c.l.b16 %v302
    %v931 = vunpack.c.l.b16 %v303
    %v932 = vunpack.c.l.b16 %v304
    %v933 = vunpack.c.l.b16 %v305
    %v934 = vunpack.c.l.b16 %v306
    %v935 = vunpack.c.l.b16 %v307
    %v936 = vunpack.c.l.b16 %v308
    %v937 = vunpack.c.l.b16 %v309
    %v938 = vunpack.c.l.b16 %v310
    %v939 = vunpack.c.l.b16 %v311
    %v940 = vunpack.c.l.b16 %v312
    %v941 = vunpack.c.l.b16 %v313
    %v942 = vpack.c.b16 %v687, %v686
    %v943 = vpack.c.b16 %v689, %v688
    %v944 = vpack.c.b16 %v691, %v690
    %v945 = vpack.c.b16 %v693, %v692
    %v946 = vpack.c.b16 %v695, %v694
    %v947 = vpack.c.b16 %v697, %v696
    %v948 = vpack.c.b16 %v699, %v698
    %v949 = vpack.c.b16 %v701, %v700
    %v950 = vpack.c.b16 %v703, %v702
    %v951 = vpack.c.b16 %v705, %v704
    %v952 = vpack.c.b16 %v707, %v706
    %v953 = vpack.c.b16 %v709, %v708
    %v954 = vpack.c.b16 %v711, %v710
    %v955 = vpack.c.b16 %v713, %v712
    %v956 = vpack.c.b16 %v715, %v714
    %v957 = vpack.c.b16 %v717, %v716
    %v958 = vpack.c.b16 %v719, %v718
    %v959 = vpack.c.b16 %v721, %v720
    %v960 = vpack.c.b16 %v723, %v722
    %v961 = vpack.c.b16 %v725, %v724
    %v962 = vpack.c.b16 %v727, %v726
    %v963 = vpack.c.b16 %v729, %v728
    %v964 = vpack.c.b16 %v731, %v730
    %v965 = vpack.c.b16 %v733, %v732
    %v966 = vpack.c.b16 %v735, %v734
    %v967 = vpack.c.b16 %v737, %v736
    %v968 = vpack.c.b16 %v739, %v738
    %v969 = vpack.c.b16 %v741, %v740
    %v970 = vpack.c.b16 %v743, %v742
    %v971 = vpack.c.b16 %v745, %v744
    %v972 = vpack.c.b16 %v747, %v746
    %v973 = vpack.c.b16 %v749, %v748
    %v974 = vpack.c.b16 %v751, %v750
    %v975 = vpack.c.b16 %v753, %v752
    %v976 = vpack.c.b16 %v755, %v754
    %v977 = vpack.c.b16 %v757, %v756
    %v978 = vpack.c.b16 %v759, %v758
    %v979 = vpack.c.b16 %v761, %v760
    %v980 = vpack.c.b16 %v763, %v762
    %v981 = vpack.c.b16 %v765, %v764
    %v982 = vpack.c.b16 %v767, %v766
    %v983 = vpack.c.b16 %v769, %v768
    %v984 = vpack.c.b16 %v771, %v770
    %v985 = vpack.c.b16 %v773, %v772
    %v986 = vpack.c.b16 %v775, %v774
    %v987 = vpack.c.b16 %v777, %v776
    %v988 = vpack.c.b16 %v779, %v778
    %v989 = vpack.c.b16 %v781, %v780
    %v990 = vpack.c.b16 %v783, %v782
    %v991 = vpack.c.b16 %v785, %v784
    %v992 = vpack.c.b16 %v787, %v786
    %v993 = vpack.c.b16 %v789, %v788
    %v994 = vpack.c.b16 %v791, %v790
    %v995 = vpack.c.b16 %v793, %v792
    %v996 = vpack.c.b16 %v795, %v794
    %v997 = vpack.c.b16 %v797, %v796
    %v998 = vpack.c.b16 %v799, %v798
    %v999 = vpack.c.b16 %v801, %v800
    %v1000 = vpack.c.b16 %v803, %v802
    %v1001 = vpack.c.b16 %v805, %v804
    %v1002 = vpack.c.b16 %v807, %v806
    %v1003 = vpack.c.b16 %v809, %v808
    %v1004 = vpack.c.b16 %v811, %v810
    %v1005 = vpack.c.b16 %v813, %v812
    %v1006 = vpack.c.b16 %v815, %v814
    %v1007 = vpack.c.b16 %v817, %v816
    %v1008 = vpack.c.b16 %v819, %v818
    %v1009 = vpack.c.b16 %v821, %v820
    %v1010 = vpack.c.b16 %v823, %v822
    %v1011 = vpack.c.b16 %v825, %v824
    %v1012 = vpack.c.b16 %v827, %v826
    %v1013 = vpack.c.b16 %v829, %v828
    %v1014 = vpack.c.b16 %v831, %v830
    %v1015 = vpack.c.b16 %v833, %v832
    %v1016 = vpack.c.b16 %v835, %v834
    %v1017 = vpack.c.b16 %v837, %v836
    %v1018 = vpack.c.b16 %v839, %v838
    %v1019 = vpack.c.b16 %v841, %v840
    %v1020 = vpack.c.b16 %v843, %v842
    %v1021 = vpack.c.b16 %v845, %v844
    %v1022 = vpack.c.b16 %v847, %v846
    %v1023 = vpack.c.b16 %v849, %v848
    %v1024 = vpack.c.b16 %v851, %v850
    %v1025 = vpack.c.b16 %v853, %v852
    %v1026 = vpack.c.b16 %v855, %v854
    %v1027 = vpack.c.b16 %v857, %v856
    %v1028 = vpack.c.b16 %v859, %v858
    %v1029 = vpack.c.b16 %v861, %v860
    %v1030 = vpack.c.b16 %v863, %v862
    %v1031 = vpack.c.b16 %v865, %v864
    %v1032 = vpack.c.b16 %v867, %v866
    %v1033 = vpack.c.b16 %v869, %v868
    %v1034 = vpack.c.b16 %v871, %v870
    %v1035 = vpack.c.b16 %v873, %v872
    %v1036 = vpack.c.b16 %v875, %v874
    %v1037 = vpack.c.b16 %v877, %v876
    %v1038 = vpack.c.b16 %v879, %v878
    %v1039 = vpack.c.b16 %v881, %v880
    %v1040 = vpack.c.b16 %v883, %v882
    %v1041 = vpack.c.b16 %v885, %v884
    %v1042 = vpack.c.b16 %v887, %v886
    %v1043 = vpack.c.b16 %v889, %v888
    %v1044 = vpack.c.b16 %v891, %v890
    %v1045 = vpack.c.b16 %v893, %v892
    %v1046 = vpack.c.b16 %v895, %v894
    %v1047 = vpack.c.b16 %v897, %v896
    %v1048 = vpack.c.b16 %v899, %v898
    %v1049 = vpack.c.b16 %v901, %v900
    %v1050 = vpack.c.b16 %v903, %v902
    %v1051 = vpack.c.b16 %v905, %v904
    %v1052 = vpack.c.b16 %v907, %v906
    %v1053 = vpack.c.b16 %v909, %v908
    %v1054 = vpack.c.b16 %v911, %v910
    %v1055 = vpack.c.b16 %v913, %v912
    %v1056 = vpack.c.b16 %v915, %v914
    %v1057 = vpack.c.b16 %v917, %v916
    %v1058 = vpack.c.b16 %v919, %v918
    %v1059 = vpack.c.b16 %v921, %v920
    %v1060 = vpack.c.b16 %v923, %v922
    %v1061 = vpack.c.b16 %v925, %v924
    %v1062 = vpack.c.b16 %v927, %v926
    %v1063 = vpack.c.b16 %v929, %v928
    %v1064 = vpack.c.b16 %v931, %v930
    %v1065 = vpack.c.b16 %v933, %v932
    %v1066 = vpack.c.b16 %v935, %v934
    %v1067 = vpack.c.b16 %v937, %v936
    %v1068 = vpack.c.b16 %v939, %v938
    %v1069 = vpack.c.b16 %v941, %v940
    %1198 = vmatprep.subr.bf16.mxu0 0
    %1199 = vmatpush1.bf16.msra.mxu0 %v942
    %1200 = vmatprep.subr.bf16.mxu0 0
    %1201 = vmatpush1.bf16.msra.mxu0 %v943
    %1202 = vmatprep.subr.bf16.mxu0 0
    %1203 = vmatpush1.bf16.msra.mxu0 %v944
    %1204 = vmatprep.subr.bf16.mxu0 0
    %1205 = vmatpush1.bf16.msra.mxu0 %v945
    %1206 = vmatprep.subr.bf16.mxu0 0
    %1207 = vmatpush1.bf16.msra.mxu0 %v946
    %1208 = vmatprep.subr.bf16.mxu0 0
    %1209 = vmatpush1.bf16.msra.mxu0 %v947
    %1210 = vmatprep.subr.bf16.mxu0 0
    %1211 = vmatpush1.bf16.msra.mxu0 %v948
    %1212 = vmatprep.subr.bf16.mxu0 0
    %1213 = vmatpush1.bf16.msra.mxu0 %v949
    %1214 = vmatprep.subr.bf16.mxu0 0
    %1215 = vmatpush1.bf16.msra.mxu0 %v950
    %1216 = vmatprep.subr.bf16.mxu0 0
    %1217 = vmatpush1.bf16.msra.mxu0 %v951
    %1218 = vmatprep.subr.bf16.mxu0 0
    %1219 = vmatpush1.bf16.msra.mxu0 %v952
    %1220 = vmatprep.subr.bf16.mxu0 0
    %1221 = vmatpush1.bf16.msra.mxu0 %v953
    %1222 = vmatprep.subr.bf16.mxu0 0
    %1223 = vmatpush1.bf16.msra.mxu0 %v954
    %1224 = vmatprep.subr.bf16.mxu0 0
    %1225 = vmatpush1.bf16.msra.mxu0 %v955
    %1226 = vmatprep.subr.bf16.mxu0 0
    %1227 = vmatpush1.bf16.msra.mxu0 %v956
    %1228 = vmatprep.subr.bf16.mxu0 0
    %1229 = vmatpush1.bf16.msra.mxu0 %v957
    %1230 = vmatprep.mubr.bf16.mxu0 %v353
    %1231 = vmatmul.mubr.bf16.gmra.mrb[0].mxu0 %v339
    %v1232 = vpop.f32.mrb[0].mxu0
    %v1233 = vadd.f32 0.0, %v1232
    %v1234 = vpop.f32.mrb[0].mxu0
    %v1235 = vpop.f32.mrb[0].mxu0
    %v1236 = vpop.f32.mrb[0].mxu0
    %1237 = vdwg.mxu0
    %1238 = vmatprep.subr.bf16.mxu0 0
    %1239 = vmatpush1.bf16.msra.mxu0 %v958
    %1240 = vmatprep.subr.bf16.mxu0 0
    %1241 = vmatpush1.bf16.msra.mxu0 %v959
    %1242 = vmatprep.subr.bf16.mxu0 0
    %1243 = vmatpush1.bf16.msra.mxu0 %v960
    %1244 = vmatprep.subr.bf16.mxu0 0
    %1245 = vmatpush1.bf16.msra.mxu0 %v961
    %1246 = vmatprep.subr.bf16.mxu0 0
    %1247 = vmatpush1.bf16.msra.mxu0 %v962
    %1248 = vmatprep.subr.bf16.mxu0 0
    %1249 = vmatpush1.bf16.msra.mxu0 %v963
    %1250 = vmatprep.subr.bf16.mxu0 0
    %1251 = vmatpush1.bf16.msra.mxu0 %v964
    %1252 = vmatprep.subr.bf16.mxu0 0
    %1253 = vmatpush1.bf16.msra.mxu0 %v965
    %1254 = vmatprep.subr.bf16.mxu0 0
    %1255 = vmatpush1.bf16.msra.mxu0 %v966
    %1256 = vmatprep.subr.bf16.mxu0 0
    %1257 = vmatpush1.bf16.msra.mxu0 %v967
    %1258 = vmatprep.subr.bf16.mxu0 0
    %1259 = vmatpush1.bf16.msra.mxu0 %v968
    %1260 = vmatprep.subr.bf16.mxu0 0
    %1261 = vmatpush1.bf16.msra.mxu0 %v969
    %1262 = vmatprep.subr.bf16.mxu0 0
    %1263 = vmatpush1.bf16.msra.mxu0 %v970
    %1264 = vmatprep.subr.bf16.mxu0 0
    %1265 = vmatpush1.bf16.msra.mxu0 %v971
    %1266 = vmatprep.subr.bf16.mxu0 0
    %1267 = vmatpush1.bf16.msra.mxu0 %v972
    %1268 = vmatprep.subr.bf16.mxu0 0
    %1269 = vmatpush1.bf16.msra.mxu0 %v973
    %1270 = vmatprep.mubr.bf16.mxu0 %v363
    %1271 = vmatmul.mubr.bf16.gmra.mrb[0].mxu0 %v361
    %v1272 = vpop.f32.mrb[0].mxu0
    %v1273 = vadd.f32 %v1233, %v1272
    %v1274 = vpop.f32.mrb[0].mxu0
    %v1275 = vpop.f32.mrb[0].mxu0
    %v1276 = vpop.f32.mrb[0].mxu0
    %1277 = vdwg.mxu0
    %1278 = vmatprep.subr.bf16.mxu0 0
    %1279 = vmatpush1.bf16.msra.mxu0 %v974
    %1280 = vmatprep.subr.bf16.mxu0 0
    %1281 = vmatpush1.bf16.msra.mxu0 %v975
    %1282 = vmatprep.subr.bf16.mxu0 0
    %1283 = vmatpush1.bf16.msra.mxu0 %v976
    %1284 = vmatprep.subr.bf16.mxu0 0
    %1285 = vmatpush1.bf16.msra.mxu0 %v977
    %1286 = vmatprep.subr.bf16.mxu0 0
    %1287 = vmatpush1.bf16.msra.mxu0 %v978
    %1288 = vmatprep.subr.bf16.mxu0 0
    %1289 = vmatpush1.bf16.msra.mxu0 %v979
    %1290 = vmatprep.subr.bf16.mxu0 0
    %1291 = vmatpush1.bf16.msra.mxu0 %v980
    %1292 = vmatprep.subr.bf16.mxu0 0
    %1293 = vmatpush1.bf16.msra.mxu0 %v981
    %1294 = vmatprep.subr.bf16.mxu0 0
    %1295 = vmatpush1.bf16.msra.mxu0 %v982
    %1296 = vmatprep.subr.bf16.mxu0 0
    %1297 = vmatpush1.bf16.msra.mxu0 %v983
    %1298 = vmatprep.subr.bf16.mxu0 0
    %1299 = vmatpush1.bf16.msra.mxu0 %v984
    %1300 = vmatprep.subr.bf16.mxu0 0
    %1301 = vmatpush1.bf16.msra.mxu0 %v985
    %1302 = vmatprep.subr.bf16.mxu0 0
    %1303 = vmatpush1.bf16.msra.mxu0 %v986
    %1304 = vmatprep.subr.bf16.mxu0 0
    %1305 = vmatpush1.bf16.msra.mxu0 %v987
    %1306 = vmatprep.subr.bf16.mxu0 0
    %1307 = vmatpush1.bf16.msra.mxu0 %v988
    %1308 = vmatprep.subr.bf16.mxu0 0
    %1309 = vmatpush1.bf16.msra.mxu0 %v989
    %1310 = vmatprep.mubr.bf16.mxu0 %v360
    %1311 = vmatmul.mubr.bf16.gmra.mrb[0].mxu0 %v346
    %v1312 = vpop.f32.mrb[0].mxu0
    %v1313 = vadd.f32 %v1273, %v1312
    %v1314 = vpop.f32.mrb[0].mxu0
    %v1315 = vpop.f32.mrb[0].mxu0
    %v1316 = vpop.f32.mrb[0].mxu0
    %1317 = vdwg.mxu0
    %1318 = vmatprep.subr.bf16.mxu0 0
    %1319 = vmatpush1.bf16.msra.mxu0 %v990
    %1320 = vmatprep.subr.bf16.mxu0 0
    %1321 = vmatpush1.bf16.msra.mxu0 %v991
    %1322 = vmatprep.subr.bf16.mxu0 0
    %1323 = vmatpush1.bf16.msra.mxu0 %v992
    %1324 = vmatprep.subr.bf16.mxu0 0
    %1325 = vmatpush1.bf16.msra.mxu0 %v993
    %1326 = vmatprep.subr.bf16.mxu0 0
    %1327 = vmatpush1.bf16.msra.mxu0 %v994
    %1328 = vmatprep.subr.bf16.mxu0 0
    %1329 = vmatpush1.bf16.msra.mxu0 %v995
    %1330 = vmatprep.subr.bf16.mxu0 0
    %1331 = vmatpush1.bf16.msra.mxu0 %v996
    %1332 = vmatprep.subr.bf16.mxu0 0
    %1333 = vmatpush1.bf16.msra.mxu0 %v997
    %1334 = vmatprep.subr.bf16.mxu0 0
    %1335 = vmatpush1.bf16.msra.mxu0 %v998
    %1336 = vmatprep.subr.bf16.mxu0 0
    %1337 = vmatpush1.bf16.msra.mxu0 %v999
    %1338 = vmatprep.subr.bf16.mxu0 0
    %1339 = vmatpush1.bf16.msra.mxu0 %v1000
    %1340 = vmatprep.subr.bf16.mxu0 0
    %1341 = vmatpush1.bf16.msra.mxu0 %v1001
    %1342 = vmatprep.subr.bf16.mxu0 0
    %1343 = vmatpush1.bf16.msra.mxu0 %v1002
    %1344 = vmatprep.subr.bf16.mxu0 0
    %1345 = vmatpush1.bf16.msra.mxu0 %v1003
    %1346 = vmatprep.subr.bf16.mxu0 0
    %1347 = vmatpush1.bf16.msra.mxu0 %v1004
    %1348 = vmatprep.subr.bf16.mxu0 0
    %1349 = vmatpush1.bf16.msra.mxu0 %v1005
    %1350 = vmatprep.mubr.bf16.mxu0 %v364
    %1351 = vmatmul.mubr.bf16.gmra.mrb[0].mxu0 %v362
    %v1352 = vpop.f32.mrb[0].mxu0
    %v1353 = vadd.f32 %v1313, %v1352
    %v1354 = vpop.f32.mrb[0].mxu0
    %v1355 = vpop.f32.mrb[0].mxu0
    %v1356 = vpop.f32.mrb[0].mxu0
    %1357 = vdwg.mxu0
    %1358 = vmatprep.subr.bf16.mxu0 0
    %1359 = vmatpush1.bf16.msra.mxu0 %v1006
    %1360 = vmatprep.subr.bf16.mxu0 0
    %1361 = vmatpush1.bf16.msra.mxu0 %v1007
    %1362 = vmatprep.subr.bf16.mxu0 0
    %1363 = vmatpush1.bf16.msra.mxu0 %v1008
    %1364 = vmatprep.subr.bf16.mxu0 0
    %1365 = vmatpush1.bf16.msra.mxu0 %v1009
    %1366 = vmatprep.subr.bf16.mxu0 0
    %1367 = vmatpush1.bf16.msra.mxu0 %v1010
    %1368 = vmatprep.subr.bf16.mxu0 0
    %1369 = vmatpush1.bf16.msra.mxu0 %v1011
    %1370 = vmatprep.subr.bf16.mxu0 0
    %1371 = vmatpush1.bf16.msra.mxu0 %v1012
    %1372 = vmatprep.subr.bf16.mxu0 0
    %1373 = vmatpush1.bf16.msra.mxu0 %v1013
    %1374 = vmatprep.subr.bf16.mxu0 0
    %1375 = vmatpush1.bf16.msra.mxu0 %v1014
    %1376 = vmatprep.subr.bf16.mxu0 0
    %1377 = vmatpush1.bf16.msra.mxu0 %v1015
    %1378 = vmatprep.subr.bf16.mxu0 0
    %1379 = vmatpush1.bf16.msra.mxu0 %v1016
    %1380 = vmatprep.subr.bf16.mxu0 0
    %1381 = vmatpush1.bf16.msra.mxu0 %v1017
    %1382 = vmatprep.subr.bf16.mxu0 0
    %1383 = vmatpush1.bf16.msra.mxu0 %v1018
    %1384 = vmatprep.subr.bf16.mxu0 0
    %1385 = vmatpush1.bf16.msra.mxu0 %v1019
    %1386 = vmatprep.subr.bf16.mxu0 0
    %1387 = vmatpush1.bf16.msra.mxu0 %v1020
    %1388 = vmatprep.subr.bf16.mxu0 0
    %1389 = vmatpush1.bf16.msra.mxu0 %v1021
    %1390 = vmatprep.mubr.bf16.mxu0 %v402
    %1391 = vmatmul.mubr.bf16.gmra.mrb[0].mxu0 %v388
    %v1392 = vpop.f32.mrb[0].mxu0
    %v1393 = vadd.f32 %v1353, %v1392
    %v1394 = vpop.f32.mrb[0].mxu0
    %v1395 = vpop.f32.mrb[0].mxu0
    %v1396 = vpop.f32.mrb[0].mxu0
    %1397 = vdwg.mxu0
    %1398 = vmatprep.subr.bf16.mxu0 0
    %1399 = vmatpush1.bf16.msra.mxu0 %v1022
    %1400 = vmatprep.subr.bf16.mxu0 0
    %1401 = vmatpush1.bf16.msra.mxu0 %v1023
    %1402 = vmatprep.subr.bf16.mxu0 0
    %1403 = vmatpush1.bf16.msra.mxu0 %v1024
    %1404 = vmatprep.subr.bf16.mxu0 0
    %1405 = vmatpush1.bf16.msra.mxu0 %v1025
    %1406 = vmatprep.subr.bf16.mxu0 0
    %1407 = vmatpush1.bf16.msra.mxu0 %v1026
    %1408 = vmatprep.subr.bf16.mxu0 0
    %1409 = vmatpush1.bf16.msra.mxu0 %v1027
    %1410 = vmatprep.subr.bf16.mxu0 0
    %1411 = vmatpush1.bf16.msra.mxu0 %v1028
    %1412 = vmatprep.subr.bf16.mxu0 0
    %1413 = vmatpush1.bf16.msra.mxu0 %v1029
    %1414 = vmatprep.subr.bf16.mxu0 0
    %1415 = vmatpush1.bf16.msra.mxu0 %v1030
    %1416 = vmatprep.subr.bf16.mxu0 0
    %1417 = vmatpush1.bf16.msra.mxu0 %v1031
    %1418 = vmatprep.subr.bf16.mxu0 0
    %1419 = vmatpush1.bf16.msra.mxu0 %v1032
    %1420 = vmatprep.subr.bf16.mxu0 0
    %1421 = vmatpush1.bf16.msra.mxu0 %v1033
    %1422 = vmatprep.subr.bf16.mxu0 0
    %1423 = vmatpush1.bf16.msra.mxu0 %v1034
    %1424 = vmatprep.subr.bf16.mxu0 0
    %1425 = vmatpush1.bf16.msra.mxu0 %v1035
    %1426 = vmatprep.subr.bf16.mxu0 0
    %1427 = vmatpush1.bf16.msra.mxu0 %v1036
    %1428 = vmatprep.subr.bf16.mxu0 0
    %1429 = vmatpush1.bf16.msra.mxu0 %v1037
    %1430 = vmatprep.mubr.bf16.mxu0 %v412
    %1431 = vmatmul.mubr.bf16.gmra.mrb[0].mxu0 %v410
    %v1432 = vpop.f32.mrb[0].mxu0
    %v1433 = vadd.f32 %v1393, %v1432
    %v1434 = vpop.f32.mrb[0].mxu0
    %v1435 = vpop.f32.mrb[0].mxu0
    %v1436 = vpop.f32.mrb[0].mxu0
    %1437 = vdwg.mxu0
    %1438 = vmatprep.subr.bf16.mxu0 0
    %1439 = vmatpush1.bf16.msra.mxu0 %v1038
    %1440 = vmatprep.subr.bf16.mxu0 0
    %1441 = vmatpush1.bf16.msra.mxu0 %v1039
    %1442 = vmatprep.subr.bf16.mxu0 0
    %1443 = vmatpush1.bf16.msra.mxu0 %v1040
    %1444 = vmatprep.subr.bf16.mxu0 0
    %1445 = vmatpush1.bf16.msra.mxu0 %v1041
    %1446 = vmatprep.subr.bf16.mxu0 0
    %1447 = vmatpush1.bf16.msra.mxu0 %v1042
    %1448 = vmatprep.subr.bf16.mxu0 0
    %1449 = vmatpush1.bf16.msra.mxu0 %v1043
    %1450 = vmatprep.subr.bf16.mxu0 0
    %1451 = vmatpush1.bf16.msra.mxu0 %v1044
    %1452 = vmatprep.subr.bf16.mxu0 0
    %1453 = vmatpush1.bf16.msra.mxu0 %v1045
    %1454 = vmatprep.subr.bf16.mxu0 0
    %1455 = vmatpush1.bf16.msra.mxu0 %v1046
    %1456 = vmatprep.subr.bf16.mxu0 0
    %1457 = vmatpush1.bf16.msra.mxu0 %v1047
    %1458 = vmatprep.subr.bf16.mxu0 0
    %1459 = vmatpush1.bf16.msra.mxu0 %v1048
    %1460 = vmatprep.subr.bf16.mxu0 0
    %1461 = vmatpush1.bf16.msra.mxu0 %v1049
    %1462 = vmatprep.subr.bf16.mxu0 0
    %1463 = vmatpush1.bf16.msra.mxu0 %v1050
    %1464 = vmatprep.subr.bf16.mxu0 0
    %1465 = vmatpush1.bf16.msra.mxu0 %v1051
    %1466 = vmatprep.subr.bf16.mxu0 0
    %1467 = vmatpush1.bf16.msra.mxu0 %v1052
    %1468 = vmatprep.subr.bf16.mxu0 0
    %1469 = vmatpush1.bf16.msra.mxu0 %v1053
    %1470 = vmatprep.mubr.bf16.mxu0 %v409
    %1471 = vmatmul.mubr.bf16.gmra.mrb[0].mxu0 %v395
    %v1472 = vpop.f32.mrb[0].mxu0
    %v1473 = vadd.f32 %v1433, %v1472
    %v1474 = vpop.f32.mrb[0].mxu0
    %v1475 = vpop.f32.mrb[0].mxu0
    %v1476 = vpop.f32.mrb[0].mxu0
    %1477 = vdwg.mxu0
    %1478 = vmatprep.subr.bf16.mxu0 0
    %1479 = vmatpush1.bf16.msra.mxu0 %v1054
    %1480 = vmatprep.subr.bf16.mxu0 0
    %1481 = vmatpush1.bf16.msra.mxu0 %v1055
    %1482 = vmatprep.subr.bf16.mxu0 0
    %1483 = vmatpush1.bf16.msra.mxu0 %v1056
    %1484 = vmatprep.subr.bf16.mxu0 0
    %1485 = vmatpush1.bf16.msra.mxu0 %v1057
    %1486 = vmatprep.subr.bf16.mxu0 0
    %1487 = vmatpush1.bf16.msra.mxu0 %v1058
    %1488 = vmatprep.subr.bf16.mxu0 0
    %1489 = vmatpush1.bf16.msra.mxu0 %v1059
    %1490 = vmatprep.subr.bf16.mxu0 0
    %1491 = vmatpush1.bf16.msra.mxu0 %v1060
    %1492 = vmatprep.subr.bf16.mxu0 0
    %1493 = vmatpush1.bf16.msra.mxu0 %v1061
    %1494 = vmatprep.subr.bf16.mxu0 0
    %1495 = vmatpush1.bf16.msra.mxu0 %v1062
    %1496 = vmatprep.subr.bf16.mxu0 0
    %1497 = vmatpush1.bf16.msra.mxu0 %v1063
    %1498 = vmatprep.subr.bf16.mxu0 0
    %1499 = vmatpush1.bf16.msra.mxu0 %v1064
    %1500 = vmatprep.subr.bf16.mxu0 0
    %1501 = vmatpush1.bf16.msra.mxu0 %v1065
    %1502 = vmatprep.subr.bf16.mxu0 0
    %1503 = vmatpush1.bf16.msra.mxu0 %v1066
    %1504 = vmatprep.subr.bf16.mxu0 0
    %1505 = vmatpush1.bf16.msra.mxu0 %v1067
    %1506 = vmatprep.subr.bf16.mxu0 0
    %1507 = vmatpush1.bf16.msra.mxu0 %v1068
    %1508 = vmatprep.subr.bf16.mxu0 0
    %1509 = vmatpush1.bf16.msra.mxu0 %v1069
    %1510 = vmatprep.mubr.bf16.mxu0 %v413
    %1511 = vmatmul.mubr.bf16.gmra.mrb[0].mxu0 %v411
    %v1512 = vpop.f32.mrb[0].mxu0
    %v1513 = vadd.f32 %v1473, %v1512
    %v1514 = vpop.f32.mrb[0].mxu0
    %v1515 = vpop.f32.mrb[0].mxu0
    %v1516 = vpop.f32.mrb[0].mxu0
    %1517 = vdwg.mxu0
    %1518 = vst [vmem:[#allocation8] sm:$0x3] %v1513
    %v1519 = vld [vmem:[#allocation7] sm:$0x1]
    %v1521 = vlaneseq
    %v1522 = vshrl.u32 %v1521, 7
    %v1523 = vsub.s32 0, %v1522
    %v1524 = vrot.slane %v1519, %v1523
    %v1526 = vmul.f32 %v1513, %v1524
    %vm1527 = vcmask 1041408
    %v1528 = vsel %vm1527, %v1526, 0.0
    %1529 = vadd.xlane.f32.xlu0 %v1528
    %v1530 = vpop.xlane.xlu0 %1529
    %v1531 = vxor.u32 %v1530, 2147483648
    %v1532 = vmul.f32 %v1531, 1.442695
    %v1533 = vpow.pop %v1532
    %v1534 = vadd.f32 %v1533, 1.0
    %v1535 = vrcp.pop %v1534
    %v1536 = vmul.f32 1.0, %v1535
    %vm1537 = vcmask 1024
    %1538 = vst.msk [vmem:[#allocation9] sm:$0x3] %vm1537, %v1536
    // Predicated region
    $region26: #{basic_discriminator_forward.7} parent=1 // pred_check
      _
    $region27: #{basic_discriminator_forward.7} parent=1 // pred_check_branch
      %1540 = sbr.rel (0) target = $region29
    $region28: #{basic_discriminator_forward.7} parent=1 // pred_region
      %s1542 = ssub.s32 32, 32
      %1543 = vsyncadd [#allocation4], %s1542
      %s1545 = sshll.u32 [#allocation8], 4
      %s1546 = int_to_ptr.vmem [resolvable:$true] %s1545
      %1548 = dma.vmem_to_hbm [thread:$0]  %s1546, 32, %s3, [#allocation4]
    $region29: #{basic_discriminator_forward.7} parent=1 // pred_fallthru
      _
    // Predicated region
    $region30: #{basic_discriminator_forward.7} parent=1 // pred_check
      _
    $region31: #{basic_discriminator_forward.7} parent=1 // pred_check_branch
      %1550 = sbr.rel (0) target = $region33
    $region32: #{basic_discriminator_forward.7} parent=1 // pred_region
      %s1552 = ssub.s32 32, 32
      %1553 = vsyncadd [#allocation10], %s1552
      %s1555 = sshll.u32 [#allocation9], 4
      %s1556 = int_to_ptr.vmem [resolvable:$true] %s1555
      %1558 = dma.vmem_to_hbm [thread:$0]  %s1556, 32, %s4, [#allocation10]
    $region33: #{basic_discriminator_forward.7} parent=1 // pred_fallthru
      _
    // Predicated region
    $region34: #{basic_discriminator_forward.7} parent=1 // pred_check
      _
    $region35: #{basic_discriminator_forward.7} parent=1 // pred_check_branch
      %1560 = sbr.rel (0) target = $region37
    $region36: #{basic_discriminator_forward.7} parent=1 // pred_region
      %1561 = dma.done [#allocation4], 32
    $region37: #{basic_discriminator_forward.7} parent=1 // pred_fallthru
      _
    // Predicated region
    $region38: #{basic_discriminator_forward.7} parent=1 // pred_check
      _
    $region39: #{basic_discriminator_forward.7} parent=1 // pred_check_branch
      %1563 = sbr.rel (0) target = $region41
    $region40: #{basic_discriminator_forward.7} parent=1 // pred_region
      %1564 = dma.done [#allocation10], 32
    $region41: #{basic_discriminator_forward.7} parent=1 // pred_fallthru
      _
    %1565 = vsyncpa [#allocation3], 1
    %1566 = vsyncpa [#allocation6], 1
    %1567 = vsyncpa [#allocation4], 1
    %1568 = vsyncpa [#allocation10], 1

// kernel: basic_discriminator_forward.6
$region0: #{basic_discriminator_forward.6}
  #allocation0 [shape = 'u32[]', space=smem, size = 0x4, offset = 0x4, fixed_abs, tag = 'smem constant byte address 0x4 - core index']
  #allocation1 [shape = 'u32[144,128]{1,0:T(1,128)}', space=vmem, size = 0x12000, scoped, tag = 'internal scratch']
  %s0 = inlined_call_operand.hbm [shape: bf16[4,56,128], index: 0, kind: input, shape index: {}]
  %s1 = inlined_call_operand.hbm [shape: bf16[16,128,128], index: 1, kind: input, shape index: {}]
  %s2 = inlined_call_operand.hbm [shape: f32[50,1], index: 2, kind: input, shape index: {}]
  %s3 = inlined_call_operand.hbm [shape: f32[1,128], index: 3, kind: input, shape index: {}]
  %s4 = inlined_call_operand.hbm [shape: f32[1,128], index: 4, kind: input, shape index: {}]
  %s5 = inlined_call_operand.hbm [shape: bf16[50,128], index: 5, kind: output, shape index: {}]
  %s6 = sld [smem:[#allocation0]]
  $region50: #{basic_discriminator_forward.6} parent=0
    _
  %s8 = ssub.s32 1, %s6
  %s9 = scalar_select 0, %s8, %s6
  $region1: #{basic_discriminator_forward.6} parent=0
    #allocation2 [shape = 'u8[57344]{0}', space=vmem, size = 0xe000, scoped, tag = 'input window, operand 0, single buffered']
    #allocation3 [shape = 's32[1]{0}', space=sflag, size = 0x4, scoped, tag = 'scoped memory for basic_discriminator_forward.6']
    #allocation4 [shape = 's32[1]{0}', space=sflag, size = 0x4, scoped, tag = 'scoped memory for basic_discriminator_forward.6']
    #allocation5 [shape = 'u8[524288]{0}', space=vmem, size = 0x80000, scoped, tag = 'input window, operand 1, single buffered']
    #allocation6 [shape = 's32[1]{0}', space=sflag, size = 0x4, scoped, tag = 'scoped memory for basic_discriminator_forward.6']
    #allocation7 [shape = 'u8[28672]{0}', space=vmem, size = 0x7000, scoped, tag = 'input window, operand 2, single buffered']
    #allocation8 [shape = 'u8[512]{0}', space=vmem, size = 0x400, scoped, tag = 'input window, operand 3, single buffered']
    #allocation9 [shape = 's32[1]{0}', space=sflag, size = 0x4, scoped, tag = 'scoped memory for basic_discriminator_forward.6']
    #allocation10 [shape = 'u8[512]{0}', space=vmem, size = 0x400, scoped, tag = 'input window, operand 4, single buffered']
    #allocation11 [shape = 'u8[14336]{0}', space=vmem, size = 0x3800, scoped, tag = 'output window, operand 0, single buffered']
    %10 = vsyncpa [#allocation3], 0
    %11 = vsyncpa [#allocation6], 0
    %12 = vsyncpa [#allocation9], 0
    %13 = vsyncpa [#allocation4], 0
    // Predicated region
    $region2: #{basic_discriminator_forward.6} parent=1 // pred_check
      _
    $region3: #{basic_discriminator_forward.6} parent=1 // pred_check_branch
      %15 = sbr.rel (0) target = $region5
    $region4: #{basic_discriminator_forward.6} parent=1 // pred_region
      %s17 = ssub.s32 1792, 1792
      %18 = vsyncadd [#allocation3], %s17
      %s19 = sshll.u32 [#allocation2], 4
      %s20 = int_to_ptr.vmem [resolvable:$true] %s19
      %25 = dma.hbm_to_vmem [thread:$0]  %s0, 1792, %s20, [#allocation3], 64, 64, 4
    $region5: #{basic_discriminator_forward.6} parent=1 // pred_fallthru
      _
    // Predicated region
    $region6: #{basic_discriminator_forward.6} parent=1 // pred_check
      _
    $region7: #{basic_discriminator_forward.6} parent=1 // pred_check_branch
      %27 = sbr.rel (0) target = $region9
    $region8: #{basic_discriminator_forward.6} parent=1 // pred_region
      %s29 = ssub.s32 16384, 16384
      %30 = vsyncadd [#allocation6], %s29
      %s31 = sshll.u32 [#allocation5], 4
      %s32 = int_to_ptr.vmem [resolvable:$true] %s31
      %37 = dma.hbm_to_vmem [thread:$0]  %s1, 16384, %s32, [#allocation6], 64, 64, 4
    $region9: #{basic_discriminator_forward.6} parent=1 // pred_fallthru
      _
    // Predicated region
    $region10: #{basic_discriminator_forward.6} parent=1 // pred_check
      _
    $region11: #{basic_discriminator_forward.6} parent=1 // pred_check_branch
      %39 = sbr.rel (0) target = $region13
    $region12: #{basic_discriminator_forward.6} parent=1 // pred_region
      %s41 = ssub.s32 896, 896
      %42 = vsyncadd [#allocation6], %s41
      %s43 = sshll.u32 [#allocation7], 4
      %s44 = int_to_ptr.vmem [resolvable:$true] %s43
      %49 = dma.hbm_to_vmem [thread:$0]  %s2, 896, %s44, [#allocation6], 128, 128, 8
    $region13: #{basic_discriminator_forward.6} parent=1 // pred_fallthru
      _
    // Predicated region
    $region14: #{basic_discriminator_forward.6} parent=1 // pred_check
      _
    $region15: #{basic_discriminator_forward.6} parent=1 // pred_check_branch
      %51 = sbr.rel (0) target = $region17
    $region16: #{basic_discriminator_forward.6} parent=1 // pred_region
      %s53 = ssub.s32 16, 16
      %54 = vsyncadd [#allocation9], %s53
      %s56 = sshll.u32 [#allocation8], 4
      %s57 = int_to_ptr.vmem [resolvable:$true] %s56
      %59 = dma.hbm_to_vmem [thread:$0]  %s3, 16, %s57, [#allocation9]
    $region17: #{basic_discriminator_forward.6} parent=1 // pred_fallthru
      _
    // Predicated region
    $region18: #{basic_discriminator_forward.6} parent=1 // pred_check
      _
    $region19: #{basic_discriminator_forward.6} parent=1 // pred_check_branch
      %61 = sbr.rel (0) target = $region21
    $region20: #{basic_discriminator_forward.6} parent=1 // pred_region
      %s63 = ssub.s32 16, 16
      %64 = vsyncadd [#allocation9], %s63
      %s66 = sshll.u32 [#allocation10], 4
      %s67 = int_to_ptr.vmem [resolvable:$true] %s66
      %69 = dma.hbm_to_vmem [thread:$0]  %s4, 16, %s67, [#allocation9]
    $region21: #{basic_discriminator_forward.6} parent=1 // pred_fallthru
      _
    // Predicated region
    $region22: #{basic_discriminator_forward.6} parent=1 // pred_check
      _
    $region23: #{basic_discriminator_forward.6} parent=1 // pred_check_branch
      %71 = sbr.rel (0) target = $region25
    $region24: #{basic_discriminator_forward.6} parent=1 // pred_region
      %72 = dma.done [#allocation3], 1792
    $region25: #{basic_discriminator_forward.6} parent=1 // pred_fallthru
      _
    // Predicated region
    $region26: #{basic_discriminator_forward.6} parent=1 // pred_check
      _
    $region27: #{basic_discriminator_forward.6} parent=1 // pred_check_branch
      %74 = sbr.rel (0) target = $region29
    $region28: #{basic_discriminator_forward.6} parent=1 // pred_region
      %75 = dma.done [#allocation6], 16384
    $region29: #{basic_discriminator_forward.6} parent=1 // pred_fallthru
      _
    // Predicated region
    $region30: #{basic_discriminator_forward.6} parent=1 // pred_check
      _
    $region31: #{basic_discriminator_forward.6} parent=1 // pred_check_branch
      %77 = sbr.rel (0) target = $region33
    $region32: #{basic_discriminator_forward.6} parent=1 // pred_region
      %78 = dma.done [#allocation6], 896
    $region33: #{basic_discriminator_forward.6} parent=1 // pred_fallthru
      _
    // Predicated region
    $region34: #{basic_discriminator_forward.6} parent=1 // pred_check
      _
    $region35: #{basic_discriminator_forward.6} parent=1 // pred_check_branch
      %80 = sbr.rel (0) target = $region37
    $region36: #{basic_discriminator_forward.6} parent=1 // pred_region
      %81 = dma.done [#allocation9], 16
    $region37: #{basic_discriminator_forward.6} parent=1 // pred_fallthru
      _
    // Predicated region
    $region38: #{basic_discriminator_forward.6} parent=1 // pred_check
      _
    $region39: #{basic_discriminator_forward.6} parent=1 // pred_check_branch
      %83 = sbr.rel (0) target = $region41
    $region40: #{basic_discriminator_forward.6} parent=1 // pred_region
      %84 = dma.done [#allocation9], 16
    $region41: #{basic_discriminator_forward.6} parent=1 // pred_fallthru
      _
    %v86 = vld [vmem:[#allocation2] sm:$0xf]
    %v87 = vld [vmem:[#allocation2 + $0x4] sm:$0xf]
    %v88 = vld [vmem:[#allocation2 + $0x8] sm:$0xf]
    %v89 = vld [vmem:[#allocation2 + $0xc] sm:$0xf]
    %v90 = vld [vmem:[#allocation2 + $0x10] sm:$0xf]
    %v91 = vld [vmem:[#allocation2 + $0x14] sm:$0xf]
    %v92 = vld [vmem:[#allocation2 + $0x18] sm:$0x1]
    %v93 = vld [vmem:[#allocation5] sm:$0xf]
    %v94 = vld [vmem:[#allocation5 + $0x4] sm:$0xf]
    %v95 = vld [vmem:[#allocation5 + $0x8] sm:$0xf]
    %v96 = vld [vmem:[#allocation5 + $0xc] sm:$0xf]
    %v97 = vld [vmem:[#allocation5 + $0x10] sm:$0xf]
    %v98 = vld [vmem:[#allocation5 + $0x14] sm:$0xf]
    %v99 = vld [vmem:[#allocation5 + $0x18] sm:$0xf]
    %v100 = vld [vmem:[#allocation5 + $0x1c] sm:$0xf]
    %v101 = vld [vmem:[#allocation5 + $0x20] sm:$0xf]
    %v102 = vld [vmem:[#allocation5 + $0x24] sm:$0xf]
    %v103 = vld [vmem:[#allocation5 + $0x28] sm:$0xf]
    %v104 = vld [vmem:[#allocation5 + $0x2c] sm:$0xf]
    %v105 = vld [vmem:[#allocation5 + $0x30] sm:$0xf]
    %v106 = vld [vmem:[#allocation5 + $0x34] sm:$0xf]
    %v107 = vld [vmem:[#allocation5 + $0x38] sm:$0xf]
    %v108 = vld [vmem:[#allocation5 + $0x3c] sm:$0xf]
    %s109 = scalar_lea.vmem [#allocation2], 28
    %v110 = vld [vmem:[%s109] sm:$0xf]
    %v111 = vld [vmem:[%s109 + $0x4] sm:$0xf]
    %v112 = vld [vmem:[%s109 + $0x8] sm:$0xf]
    %v113 = vld [vmem:[%s109 + $0xc] sm:$0xf]
    %v114 = vld [vmem:[%s109 + $0x10] sm:$0xf]
    %v115 = vld [vmem:[%s109 + $0x14] sm:$0xf]
    %v116 = vld [vmem:[%s109 + $0x18] sm:$0x1]
    %s117 = scalar_lea.vmem [#allocation5], 64
    %v118 = vld [vmem:[%s117] sm:$0xf]
    %v119 = vld [vmem:[%s117 + $0x4] sm:$0xf]
    %v120 = vld [vmem:[%s117 + $0x8] sm:$0xf]
    %v121 = vld [vmem:[%s117 + $0xc] sm:$0xf]
    %v122 = vld [vmem:[%s117 + $0x10] sm:$0xf]
    %v123 = vld [vmem:[%s117 + $0x14] sm:$0xf]
    %v124 = vld [vmem:[%s117 + $0x18] sm:$0xf]
    %v125 = vld [vmem:[%s117 + $0x1c] sm:$0xf]
    %v126 = vld [vmem:[%s117 + $0x20] sm:$0xf]
    %v127 = vld [vmem:[%s117 + $0x24] sm:$0xf]
    %v128 = vld [vmem:[%s117 + $0x28] sm:$0xf]
    %v129 = vld [vmem:[%s117 + $0x2c] sm:$0xf]
    %v130 = vld [vmem:[%s117 + $0x30] sm:$0xf]
    %v131 = vld [vmem:[%s117 + $0x34] sm:$0xf]
    %v132 = vld [vmem:[%s117 + $0x38] sm:$0xf]
    %v133 = vld [vmem:[%s117 + $0x3c] sm:$0xf]
    %v141 = vunpack.c.l.b16 %v110
    %v142 = vunpack.c.l.b16 %v111
    %v143 = vunpack.c.l.b16 %v112
    %v144 = vunpack.c.l.b16 %v113
    %v145 = vunpack.c.l.b16 %v114
    %v146 = vunpack.c.l.b16 %v115
    %v147 = vunpack.c.l.b16 %v116
    %v148 = vpack.c.b16 %v142, %v141
    %v149 = vpack.c.b16 %v144, %v143
    %v150 = vpack.c.b16 %v146, %v145
    %v151 = vpack.c.b16 %v147, %v147
    %v172 = vunpack.c.l.b16 %v118
    %v173 = vunpack.c.l.b16 %v119
    %v174 = vunpack.c.l.b16 %v120
    %v175 = vunpack.c.l.b16 %v121
    %v176 = vunpack.c.l.b16 %v122
    %v177 = vunpack.c.l.b16 %v123
    %v178 = vunpack.c.l.b16 %v124
    %v179 = vunpack.c.l.b16 %v125
    %v180 = vunpack.c.l.b16 %v126
    %v181 = vunpack.c.l.b16 %v127
    %v182 = vunpack.c.l.b16 %v128
    %v183 = vunpack.c.l.b16 %v129
    %v184 = vunpack.c.l.b16 %v130
    %v185 = vunpack.c.l.b16 %v131
    %v186 = vunpack.c.l.b16 %v132
    %v187 = vunpack.c.l.b16 %v133
    %v188 = vpack.c.b16 %v173, %v172
    %v189 = vpack.c.b16 %v175, %v174
    %v190 = vpack.c.b16 %v177, %v176
    %v191 = vpack.c.b16 %v179, %v178
    %v192 = vpack.c.b16 %v181, %v180
    %v193 = vpack.c.b16 %v183, %v182
    %v194 = vpack.c.b16 %v185, %v184
    %v195 = vpack.c.b16 %v187, %v186
    %204 = vmatprep.subr.bf16.mxu0 0
    %205 = vmatpush1.bf16.msra.mxu0 %v188
    %206 = vmatprep.subr.bf16.mxu0 0
    %207 = vmatpush1.bf16.msra.mxu0 %v189
    %208 = vmatprep.subr.bf16.mxu0 0
    %209 = vmatpush1.bf16.msra.mxu0 %v190
    %210 = vmatprep.subr.bf16.mxu0 0
    %211 = vmatpush1.bf16.msra.mxu0 %v191
    %212 = vmatprep.subr.bf16.mxu0 0
    %213 = vmatpush1.bf16.msra.mxu0 %v192
    %214 = vmatprep.subr.bf16.mxu0 0
    %215 = vmatpush1.bf16.msra.mxu0 %v193
    %216 = vmatprep.subr.bf16.mxu0 0
    %217 = vmatpush1.bf16.msra.mxu0 %v194
    %218 = vmatprep.subr.bf16.mxu0 0
    %219 = vmatpush1.bf16.msra.mxu0 %v195
    %220 = vmatprep.subr.bf16.mxu0 0
    %221 = vmatpush1.bf16.msra.mxu0 0
    %222 = vmatprep.subr.bf16.mxu0 0
    %223 = vmatpush1.bf16.msra.mxu0 0
    %224 = vmatprep.subr.bf16.mxu0 0
    %225 = vmatpush1.bf16.msra.mxu0 0
    %226 = vmatprep.subr.bf16.mxu0 0
    %227 = vmatpush1.bf16.msra.mxu0 0
    %228 = vmatprep.subr.bf16.mxu0 0
    %229 = vmatpush1.bf16.msra.mxu0 0
    %230 = vmatprep.subr.bf16.mxu0 0
    %231 = vmatpush1.bf16.msra.mxu0 0
    %232 = vmatprep.subr.bf16.mxu0 0
    %233 = vmatpush1.bf16.msra.mxu0 0
    %234 = vmatprep.subr.bf16.mxu0 0
    %235 = vmatpush1.bf16.msra.mxu0 0
    %236 = vmatprep.mubr.bf16.mxu0 0
    %237 = vmatmul.mubr.bf16.gmra.mrb[0].mxu0 %v148
    %v238 = vpop.f32.mrb[0].mxu0
    %v239 = vadd.f32 0.0, %v238
    %v240 = vpop.f32.mrb[0].mxu0
    %v241 = vpop.f32.mrb[0].mxu0
    %v242 = vadd.f32 0.0, %v241
    %v243 = vpop.f32.mrb[0].mxu0
    %244 = vmatprep.mubr.bf16.mxu0 0
    %245 = vmatmul.mubr.bf16.gmra.mrb[0].mxu0 %v149
    %v246 = vpop.f32.mrb[0].mxu0
    %v247 = vadd.f32 0.0, %v246
    %v248 = vpop.f32.mrb[0].mxu0
    %v249 = vpop.f32.mrb[0].mxu0
    %v250 = vadd.f32 0.0, %v249
    %v251 = vpop.f32.mrb[0].mxu0
    %252 = vmatprep.mubr.bf16.mxu0 0
    %253 = vmatmul.mubr.bf16.gmra.mrb[0].mxu0 %v150
    %v254 = vpop.f32.mrb[0].mxu0
    %v255 = vadd.f32 0.0, %v254
    %v256 = vpop.f32.mrb[0].mxu0
    %v257 = vpop.f32.mrb[0].mxu0
    %v258 = vadd.f32 0.0, %v257
    %v259 = vpop.f32.mrb[0].mxu0
    %260 = vmatprep.mubr.bf16.mxu0 0
    %261 = vmatmul.mubr.bf16.gmra.mrb[0].mxu0 %v151
    %v262 = vpop.f32.mrb[0].mxu0
    %v263 = vadd.f32 0.0, %v262
    %v264 = vpop.f32.mrb[0].mxu0
    %v265 = vpop.f32.mrb[0].mxu0
    %v266 = vpop.f32.mrb[0].mxu0
    %267 = vdwg.mxu0
    %v275 = vunpack.c.l.b16 %v86
    %v276 = vunpack.c.l.b16 %v87
    %v277 = vunpack.c.l.b16 %v88
    %v278 = vunpack.c.l.b16 %v89
    %v279 = vunpack.c.l.b16 %v90
    %v280 = vunpack.c.l.b16 %v91
    %v281 = vunpack.c.l.b16 %v92
    %v282 = vpack.c.b16 %v276, %v275
    %v283 = vpack.c.b16 %v278, %v277
    %v284 = vpack.c.b16 %v280, %v279
    %v285 = vpack.c.b16 %v281, %v281
    %v306 = vunpack.c.l.b16 %v93
    %v307 = vunpack.c.l.b16 %v94
    %v308 = vunpack.c.l.b16 %v95
    %v309 = vunpack.c.l.b16 %v96
    %v310 = vunpack.c.l.b16 %v97
    %v311 = vunpack.c.l.b16 %v98
    %v312 = vunpack.c.l.b16 %v99
    %v313 = vunpack.c.l.b16 %v100
    %v314 = vunpack.c.l.b16 %v101
    %v315 = vunpack.c.l.b16 %v102
    %v316 = vunpack.c.l.b16 %v103
    %v317 = vunpack.c.l.b16 %v104
    %v318 = vunpack.c.l.b16 %v105
    %v319 = vunpack.c.l.b16 %v106
    %v320 = vunpack.c.l.b16 %v107
    %v321 = vunpack.c.l.b16 %v108
    %v322 = vpack.c.b16 %v307, %v306
    %v323 = vpack.c.b16 %v309, %v308
    %v324 = vpack.c.b16 %v311, %v310
    %v325 = vpack.c.b16 %v313, %v312
    %v326 = vpack.c.b16 %v315, %v314
    %v327 = vpack.c.b16 %v317, %v316
    %v328 = vpack.c.b16 %v319, %v318
    %v329 = vpack.c.b16 %v321, %v320
    %338 = vmatprep.subr.bf16.mxu0 0
    %339 = vmatpush1.bf16.msra.mxu0 %v322
    %340 = vmatprep.subr.bf16.mxu0 0
    %341 = vmatpush1.bf16.msra.mxu0 %v323
    %342 = vmatprep.subr.bf16.mxu0 0
    %343 = vmatpush1.bf16.msra.mxu0 %v324
    %344 = vmatprep.subr.bf16.mxu0 0
    %345 = vmatpush1.bf16.msra.mxu0 %v325
    %346 = vmatprep.subr.bf16.mxu0 0
    %347 = vmatpush1.bf16.msra.mxu0 %v326
    %348 = vmatprep.subr.bf16.mxu0 0
    %349 = vmatpush1.bf16.msra.mxu0 %v327
    %350 = vmatprep.subr.bf16.mxu0 0
    %351 = vmatpush1.bf16.msra.mxu0 %v328
    %352 = vmatprep.subr.bf16.mxu0 0
    %353 = vmatpush1.bf16.msra.mxu0 %v329
    %354 = vmatprep.subr.bf16.mxu0 0
    %355 = vmatpush1.bf16.msra.mxu0 0
    %356 = vmatprep.subr.bf16.mxu0 0
    %357 = vmatpush1.bf16.msra.mxu0 0
    %358 = vmatprep.subr.bf16.mxu0 0
    %359 = vmatpush1.bf16.msra.mxu0 0
    %360 = vmatprep.subr.bf16.mxu0 0
    %361 = vmatpush1.bf16.msra.mxu0 0
    %362 = vmatprep.subr.bf16.mxu0 0
    %363 = vmatpush1.bf16.msra.mxu0 0
    %364 = vmatprep.subr.bf16.mxu0 0
    %365 = vmatpush1.bf16.msra.mxu0 0
    %366 = vmatprep.subr.bf16.mxu0 0
    %367 = vmatpush1.bf16.msra.mxu0 0
    %368 = vmatprep.subr.bf16.mxu0 0
    %369 = vmatpush1.bf16.msra.mxu0 0
    %370 = vmatprep.mubr.bf16.mxu0 0
    %371 = vmatmul.mubr.bf16.gmra.mrb[0].mxu0 %v282
    %v372 = vpop.f32.mrb[0].mxu0
    %v373 = vadd.f32 %v239, %v372
    %v374 = vpop.f32.mrb[0].mxu0
    %v375 = vpop.f32.mrb[0].mxu0
    %v376 = vadd.f32 %v242, %v375
    %v377 = vpop.f32.mrb[0].mxu0
    %378 = vmatprep.mubr.bf16.mxu0 0
    %379 = vmatmul.mubr.bf16.gmra.mrb[0].mxu0 %v283
    %v380 = vpop.f32.mrb[0].mxu0
    %v381 = vadd.f32 %v247, %v380
    %v382 = vpop.f32.mrb[0].mxu0
    %v383 = vpop.f32.mrb[0].mxu0
    %v384 = vadd.f32 %v250, %v383
    %v385 = vpop.f32.mrb[0].mxu0
    %386 = vmatprep.mubr.bf16.mxu0 0
    %387 = vmatmul.mubr.bf16.gmra.mrb[0].mxu0 %v284
    %v388 = vpop.f32.mrb[0].mxu0
    %v389 = vadd.f32 %v255, %v388
    %v390 = vpop.f32.mrb[0].mxu0
    %v391 = vpop.f32.mrb[0].mxu0
    %v392 = vadd.f32 %v258, %v391
    %v393 = vpop.f32.mrb[0].mxu0
    %394 = vmatprep.mubr.bf16.mxu0 0
    %395 = vmatmul.mubr.bf16.gmra.mrb[0].mxu0 %v285
    %v396 = vpop.f32.mrb[0].mxu0
    %v397 = vadd.f32 %v263, %v396
    %v398 = vpop.f32.mrb[0].mxu0
    %v399 = vpop.f32.mrb[0].mxu0
    %v400 = vpop.f32.mrb[0].mxu0
    %401 = vdwg.mxu0
    %v402 = vld [vmem:[#allocation2 + $0x18] sm:$0x3]
    %s403 = scalar_lea.vmem [#allocation5], 128
    %v404 = vld [vmem:[%s403] sm:$0xf]
    %v405 = vld [vmem:[%s403 + $0x4] sm:$0xf]
    %v406 = vld [vmem:[%s403 + $0x8] sm:$0xf]
    %v407 = vld [vmem:[%s403 + $0xc] sm:$0xf]
    %v408 = vld [vmem:[%s403 + $0x10] sm:$0xf]
    %v409 = vld [vmem:[%s403 + $0x14] sm:$0xf]
    %v410 = vld [vmem:[%s403 + $0x18] sm:$0xf]
    %v411 = vld [vmem:[%s403 + $0x1c] sm:$0xf]
    %v412 = vld [vmem:[%s403 + $0x20] sm:$0xf]
    %v413 = vld [vmem:[%s403 + $0x24] sm:$0xf]
    %v414 = vld [vmem:[%s403 + $0x28] sm:$0xf]
    %v415 = vld [vmem:[%s403 + $0x2c] sm:$0xf]
    %v416 = vld [vmem:[%s403 + $0x30] sm:$0xf]
    %v417 = vld [vmem:[%s403 + $0x34] sm:$0xf]
    %v418 = vld [vmem:[%s403 + $0x38] sm:$0xf]
    %v419 = vld [vmem:[%s403 + $0x3c] sm:$0xf]
    %v421 = vunpack.c.l.b16 %v402
    %v422 = vpack.c.b16 %v421, %v421
    %vm423 = vsmask.f32 7424
    %v425 = vshrl.u32 %v282, 16
    %v427 = vshll.u32 %v282, 16
    %v429 = vrot.slane %v427, 1
    %v430 = vor.u32 %v425, %v429
    %v432 = vshll.u32 %v283, 16
    %v434 = vrot.slane %v432, 1
    %v435 = vsel %vm423, %v430, %v434
    %v436 = vshrl.u32 %v283, 16
    %v438 = vor.u32 %v436, %v434
    %v440 = vshll.u32 %v284, 16
    %v442 = vrot.slane %v440, 1
    %v443 = vsel %vm423, %v438, %v442
    %v444 = vshrl.u32 %v284, 16
    %v446 = vor.u32 %v444, %v442
    %v448 = vshll.u32 %v422, 16
    %v450 = vrot.slane %v448, 1
    %v451 = vsel %vm423, %v446, %v450
    %v452 = vshrl.u32 %v422, 16
    %v454 = vor.u32 %v452, %v450
    %v475 = vunpack.c.l.b16 %v404
    %v476 = vunpack.c.l.b16 %v405
    %v477 = vunpack.c.l.b16 %v406
    %v478 = vunpack.c.l.b16 %v407
    %v479 = vunpack.c.l.b16 %v408
    %v480 = vunpack.c.l.b16 %v409
    %v481 = vunpack.c.l.b16 %v410
    %v482 = vunpack.c.l.b16 %v411
    %v483 = vunpack.c.l.b16 %v412
    %v484 = vunpack.c.l.b16 %v413
    %v485 = vunpack.c.l.b16 %v414
    %v486 = vunpack.c.l.b16 %v415
    %v487 = vunpack.c.l.b16 %v416
    %v488 = vunpack.c.l.b16 %v417
    %v489 = vunpack.c.l.b16 %v418
    %v490 = vunpack.c.l.b16 %v419
    %v491 = vpack.c.b16 %v476, %v475
    %v492 = vpack.c.b16 %v478, %v477
    %v493 = vpack.c.b16 %v480, %v479
    %v494 = vpack.c.b16 %v482, %v481
    %v495 = vpack.c.b16 %v484, %v483
    %v496 = vpack.c.b16 %v486, %v485
    %v497 = vpack.c.b16 %v488, %v487
    %v498 = vpack.c.b16 %v490, %v489
    %507 = vmatprep.subr.bf16.mxu0 0
    %508 = vmatpush1.bf16.msra.mxu0 %v491
    %509 = vmatprep.subr.bf16.mxu0 0
    %510 = vmatpush1.bf16.msra.mxu0 %v492
    %511 = vmatprep.subr.bf16.mxu0 0
    %512 = vmatpush1.bf16.msra.mxu0 %v493
    %513 = vmatprep.subr.bf16.mxu0 0
    %514 = vmatpush1.bf16.msra.mxu0 %v494
    %515 = vmatprep.subr.bf16.mxu0 0
    %516 = vmatpush1.bf16.msra.mxu0 %v495
    %517 = vmatprep.subr.bf16.mxu0 0
    %518 = vmatpush1.bf16.msra.mxu0 %v496
    %519 = vmatprep.subr.bf16.mxu0 0
    %520 = vmatpush1.bf16.msra.mxu0 %v497
    %521 = vmatprep.subr.bf16.mxu0 0
    %522 = vmatpush1.bf16.msra.mxu0 %v498
    %523 = vmatprep.subr.bf16.mxu0 0
    %524 = vmatpush1.bf16.msra.mxu0 0
    %525 = vmatprep.subr.bf16.mxu0 0
    %526 = vmatpush1.bf16.msra.mxu0 0
    %527 = vmatprep.subr.bf16.mxu0 0
    %528 = vmatpush1.bf16.msra.mxu0 0
    %529 = vmatprep.subr.bf16.mxu0 0
    %530 = vmatpush1.bf16.msra.mxu0 0
    %531 = vmatprep.subr.bf16.mxu0 0
    %532 = vmatpush1.bf16.msra.mxu0 0
    %533 = vmatprep.subr.bf16.mxu0 0
    %534 = vmatpush1.bf16.msra.mxu0 0
    %535 = vmatprep.subr.bf16.mxu0 0
    %536 = vmatpush1.bf16.msra.mxu0 0
    %537 = vmatprep.subr.bf16.mxu0 0
    %538 = vmatpush1.bf16.msra.mxu0 0
    %539 = vmatprep.mubr.bf16.mxu0 0
    %540 = vmatmul.mubr.bf16.gmra.mrb[0].mxu0 %v435
    %v541 = vpop.f32.mrb[0].mxu0
    %v542 = vadd.f32 0.0, %v541
    %v543 = vpop.f32.mrb[0].mxu0
    %v544 = vpop.f32.mrb[0].mxu0
    %v545 = vadd.f32 0.0, %v544
    %v546 = vpop.f32.mrb[0].mxu0
    %547 = vmatprep.mubr.bf16.mxu0 0
    %548 = vmatmul.mubr.bf16.gmra.mrb[0].mxu0 %v443
    %v549 = vpop.f32.mrb[0].mxu0
    %v550 = vadd.f32 0.0, %v549
    %v551 = vpop.f32.mrb[0].mxu0
    %v552 = vpop.f32.mrb[0].mxu0
    %v553 = vadd.f32 0.0, %v552
    %v554 = vpop.f32.mrb[0].mxu0
    %555 = vmatprep.mubr.bf16.mxu0 0
    %556 = vmatmul.mubr.bf16.gmra.mrb[0].mxu0 %v451
    %v557 = vpop.f32.mrb[0].mxu0
    %v558 = vadd.f32 0.0, %v557
    %v559 = vpop.f32.mrb[0].mxu0
    %v560 = vpop.f32.mrb[0].mxu0
    %v561 = vadd.f32 0.0, %v560
    %v562 = vpop.f32.mrb[0].mxu0
    %563 = vmatprep.mubr.bf16.mxu0 0
    %564 = vmatmul.mubr.bf16.gmra.mrb[0].mxu0 %v454
    %v565 = vpop.f32.mrb[0].mxu0
    %v566 = vadd.f32 0.0, %v565
    %v567 = vpop.f32.mrb[0].mxu0
    %v568 = vpop.f32.mrb[0].mxu0
    %v569 = vpop.f32.mrb[0].mxu0
    %570 = vdwg.mxu0
    %v571 = vadd.f32 %v373, %v542
    %v572 = vadd.f32 %v376, %v545
    %v573 = vadd.f32 %v381, %v550
    %v574 = vadd.f32 %v384, %v553
    %v575 = vadd.f32 %v389, %v558
    %v576 = vadd.f32 %v392, %v561
    %v577 = vadd.f32 %v397, %v566
    %v578 = vld [vmem:[%s109 + $0x18] sm:$0x3]
    %s579 = scalar_lea.vmem [#allocation5], 192
    %v580 = vld [vmem:[%s579] sm:$0xf]
    %v581 = vld [vmem:[%s579 + $0x4] sm:$0xf]
    %v582 = vld [vmem:[%s579 + $0x8] sm:$0xf]
    %v583 = vld [vmem:[%s579 + $0xc] sm:$0xf]
    %v584 = vld [vmem:[%s579 + $0x10] sm:$0xf]
    %v585 = vld [vmem:[%s579 + $0x14] sm:$0xf]
    %v586 = vld [vmem:[%s579 + $0x18] sm:$0xf]
    %v587 = vld [vmem:[%s579 + $0x1c] sm:$0xf]
    %v588 = vld [vmem:[%s579 + $0x20] sm:$0xf]
    %v589 = vld [vmem:[%s579 + $0x24] sm:$0xf]
    %v590 = vld [vmem:[%s579 + $0x28] sm:$0xf]
    %v591 = vld [vmem:[%s579 + $0x2c] sm:$0xf]
    %v592 = vld [vmem:[%s579 + $0x30] sm:$0xf]
    %v593 = vld [vmem:[%s579 + $0x34] sm:$0xf]
    %v594 = vld [vmem:[%s579 + $0x38] sm:$0xf]
    %v595 = vld [vmem:[%s579 + $0x3c] sm:$0xf]
    %v597 = vunpack.c.l.b16 %v578
    %v598 = vpack.c.b16 %v597, %v597
    %v600 = vshrl.u32 %v148, 16
    %v602 = vshll.u32 %v148, 16
    %v604 = vrot.slane %v602, 1
    %v605 = vor.u32 %v600, %v604
    %v607 = vshll.u32 %v149, 16
    %v609 = vrot.slane %v607, 1
    %v610 = vsel %vm423, %v605, %v609
    %v611 = vshrl.u32 %v149, 16
    %v613 = vor.u32 %v611, %v609
    %v615 = vshll.u32 %v150, 16
    %v617 = vrot.slane %v615, 1
    %v618 = vsel %vm423, %v613, %v617
    %v619 = vshrl.u32 %v150, 16
    %v621 = vor.u32 %v619, %v617
    %v623 = vshll.u32 %v598, 16
    %v625 = vrot.slane %v623, 1
    %v626 = vsel %vm423, %v621, %v625
    %v627 = vshrl.u32 %v598, 16
    %v629 = vor.u32 %v627, %v625
    %v650 = vunpack.c.l.b16 %v580
    %v651 = vunpack.c.l.b16 %v581
    %v652 = vunpack.c.l.b16 %v582
    %v653 = vunpack.c.l.b16 %v583
    %v654 = vunpack.c.l.b16 %v584
    %v655 = vunpack.c.l.b16 %v585
    %v656 = vunpack.c.l.b16 %v586
    %v657 = vunpack.c.l.b16 %v587
    %v658 = vunpack.c.l.b16 %v588
    %v659 = vunpack.c.l.b16 %v589
    %v660 = vunpack.c.l.b16 %v590
    %v661 = vunpack.c.l.b16 %v591
    %v662 = vunpack.c.l.b16 %v592
    %v663 = vunpack.c.l.b16 %v593
    %v664 = vunpack.c.l.b16 %v594
    %v665 = vunpack.c.l.b16 %v595
    %v666 = vpack.c.b16 %v651, %v650
    %v667 = vpack.c.b16 %v653, %v652
    %v668 = vpack.c.b16 %v655, %v654
    %v669 = vpack.c.b16 %v657, %v656
    %v670 = vpack.c.b16 %v659, %v658
    %v671 = vpack.c.b16 %v661, %v660
    %v672 = vpack.c.b16 %v663, %v662
    %v673 = vpack.c.b16 %v665, %v664
    %682 = vmatprep.subr.bf16.mxu0 0
    %683 = vmatpush1.bf16.msra.mxu0 %v666
    %684 = vmatprep.subr.bf16.mxu0 0
    %685 = vmatpush1.bf16.msra.mxu0 %v667
    %686 = vmatprep.subr.bf16.mxu0 0
    %687 = vmatpush1.bf16.msra.mxu0 %v668
    %688 = vmatprep.subr.bf16.mxu0 0
    %689 = vmatpush1.bf16.msra.mxu0 %v669
    %690 = vmatprep.subr.bf16.mxu0 0
    %691 = vmatpush1.bf16.msra.mxu0 %v670
    %692 = vmatprep.subr.bf16.mxu0 0
    %693 = vmatpush1.bf16.msra.mxu0 %v671
    %694 = vmatprep.subr.bf16.mxu0 0
    %695 = vmatpush1.bf16.msra.mxu0 %v672
    %696 = vmatprep.subr.bf16.mxu0 0
    %697 = vmatpush1.bf16.msra.mxu0 %v673
    %698 = vmatprep.subr.bf16.mxu0 0
    %699 = vmatpush1.bf16.msra.mxu0 0
    %700 = vmatprep.subr.bf16.mxu0 0
    %701 = vmatpush1.bf16.msra.mxu0 0
    %702 = vmatprep.subr.bf16.mxu0 0
    %703 = vmatpush1.bf16.msra.mxu0 0
    %704 = vmatprep.subr.bf16.mxu0 0
    %705 = vmatpush1.bf16.msra.mxu0 0
    %706 = vmatprep.subr.bf16.mxu0 0
    %707 = vmatpush1.bf16.msra.mxu0 0
    %708 = vmatprep.subr.bf16.mxu0 0
    %709 = vmatpush1.bf16.msra.mxu0 0
    %710 = vmatprep.subr.bf16.mxu0 0
    %711 = vmatpush1.bf16.msra.mxu0 0
    %712 = vmatprep.subr.bf16.mxu0 0
    %713 = vmatpush1.bf16.msra.mxu0 0
    %714 = vmatprep.mubr.bf16.mxu0 0
    %715 = vmatmul.mubr.bf16.gmra.mrb[0].mxu0 %v610
    %v716 = vpop.f32.mrb[0].mxu0
    %v717 = vadd.f32 0.0, %v716
    %v718 = vpop.f32.mrb[0].mxu0
    %v719 = vpop.f32.mrb[0].mxu0
    %v720 = vadd.f32 0.0, %v719
    %v721 = vpop.f32.mrb[0].mxu0
    %722 = vmatprep.mubr.bf16.mxu0 0
    %723 = vmatmul.mubr.bf16.gmra.mrb[0].mxu0 %v618
    %v724 = vpop.f32.mrb[0].mxu0
    %v725 = vadd.f32 0.0, %v724
    %v726 = vpop.f32.mrb[0].mxu0
    %v727 = vpop.f32.mrb[0].mxu0
    %v728 = vadd.f32 0.0, %v727
    %v729 = vpop.f32.mrb[0].mxu0
    %730 = vmatprep.mubr.bf16.mxu0 0
    %731 = vmatmul.mubr.bf16.gmra.mrb[0].mxu0 %v626
    %v732 = vpop.f32.mrb[0].mxu0
    %v733 = vadd.f32 0.0, %v732
    %v734 = vpop.f32.mrb[0].mxu0
    %v735 = vpop.f32.mrb[0].mxu0
    %v736 = vadd.f32 0.0, %v735
    %v737 = vpop.f32.mrb[0].mxu0
    %738 = vmatprep.mubr.bf16.mxu0 0
    %739 = vmatmul.mubr.bf16.gmra.mrb[0].mxu0 %v629
    %v740 = vpop.f32.mrb[0].mxu0
    %v741 = vadd.f32 0.0, %v740
    %v742 = vpop.f32.mrb[0].mxu0
    %v743 = vpop.f32.mrb[0].mxu0
    %v744 = vpop.f32.mrb[0].mxu0
    %745 = vdwg.mxu0
    %v746 = vadd.f32 %v571, %v717
    %v747 = vadd.f32 %v572, %v720
    %v748 = vadd.f32 %v573, %v725
    %v749 = vadd.f32 %v574, %v728
    %v750 = vadd.f32 %v575, %v733
    %v751 = vadd.f32 %v576, %v736
    %v752 = vadd.f32 %v577, %v741
    %s753 = scalar_lea.vmem [#allocation2], 56
    %v754 = vld [vmem:[%s753] sm:$0xf]
    %v755 = vld [vmem:[%s753 + $0x4] sm:$0xf]
    %v756 = vld [vmem:[%s753 + $0x8] sm:$0xf]
    %v757 = vld [vmem:[%s753 + $0xc] sm:$0xf]
    %v758 = vld [vmem:[%s753 + $0x10] sm:$0xf]
    %v759 = vld [vmem:[%s753 + $0x14] sm:$0xf]
    %v760 = vld [vmem:[%s753 + $0x18] sm:$0x1]
    %s761 = scalar_lea.vmem [#allocation5], 256
    %v762 = vld [vmem:[%s761] sm:$0xf]
    %v763 = vld [vmem:[%s761 + $0x4] sm:$0xf]
    %v764 = vld [vmem:[%s761 + $0x8] sm:$0xf]
    %v765 = vld [vmem:[%s761 + $0xc] sm:$0xf]
    %v766 = vld [vmem:[%s761 + $0x10] sm:$0xf]
    %v767 = vld [vmem:[%s761 + $0x14] sm:$0xf]
    %v768 = vld [vmem:[%s761 + $0x18] sm:$0xf]
    %v769 = vld [vmem:[%s761 + $0x1c] sm:$0xf]
    %v770 = vld [vmem:[%s761 + $0x20] sm:$0xf]
    %v771 = vld [vmem:[%s761 + $0x24] sm:$0xf]
    %v772 = vld [vmem:[%s761 + $0x28] sm:$0xf]
    %v773 = vld [vmem:[%s761 + $0x2c] sm:$0xf]
    %v774 = vld [vmem:[%s761 + $0x30] sm:$0xf]
    %v775 = vld [vmem:[%s761 + $0x34] sm:$0xf]
    %v776 = vld [vmem:[%s761 + $0x38] sm:$0xf]
    %v777 = vld [vmem:[%s761 + $0x3c] sm:$0xf]
    %v785 = vunpack.c.l.b16 %v754
    %v786 = vunpack.c.l.b16 %v755
    %v787 = vunpack.c.l.b16 %v756
    %v788 = vunpack.c.l.b16 %v757
    %v789 = vunpack.c.l.b16 %v758
    %v790 = vunpack.c.l.b16 %v759
    %v791 = vunpack.c.l.b16 %v760
    %v792 = vpack.c.b16 %v786, %v785
    %v793 = vpack.c.b16 %v788, %v787
    %v794 = vpack.c.b16 %v790, %v789
    %v795 = vpack.c.b16 %v791, %v791
    %v816 = vunpack.c.l.b16 %v762
    %v817 = vunpack.c.l.b16 %v763
    %v818 = vunpack.c.l.b16 %v764
    %v819 = vunpack.c.l.b16 %v765
    %v820 = vunpack.c.l.b16 %v766
    %v821 = vunpack.c.l.b16 %v767
    %v822 = vunpack.c.l.b16 %v768
    %v823 = vunpack.c.l.b16 %v769
    %v824 = vunpack.c.l.b16 %v770
    %v825 = vunpack.c.l.b16 %v771
    %v826 = vunpack.c.l.b16 %v772
    %v827 = vunpack.c.l.b16 %v773
    %v828 = vunpack.c.l.b16 %v774
    %v829 = vunpack.c.l.b16 %v775
    %v830 = vunpack.c.l.b16 %v776
    %v831 = vunpack.c.l.b16 %v777
    %v832 = vpack.c.b16 %v817, %v816
    %v833 = vpack.c.b16 %v819, %v818
    %v834 = vpack.c.b16 %v821, %v820
    %v835 = vpack.c.b16 %v823, %v822
    %v836 = vpack.c.b16 %v825, %v824
    %v837 = vpack.c.b16 %v827, %v826
    %v838 = vpack.c.b16 %v829, %v828
    %v839 = vpack.c.b16 %v831, %v830
    %848 = vmatprep.subr.bf16.mxu0 0
    %849 = vmatpush1.bf16.msra.mxu0 %v832
    %850 = vmatprep.subr.bf16.mxu0 0
    %851 = vmatpush1.bf16.msra.mxu0 %v833
    %852 = vmatprep.subr.bf16.mxu0 0
    %853 = vmatpush1.bf16.msra.mxu0 %v834
    %854 = vmatprep.subr.bf16.mxu0 0
    %855 = vmatpush1.bf16.msra.mxu0 %v835
    %856 = vmatprep.subr.bf16.mxu0 0
    %857 = vmatpush1.bf16.msra.mxu0 %v836
    %858 = vmatprep.subr.bf16.mxu0 0
    %859 = vmatpush1.bf16.msra.mxu0 %v837
    %860 = vmatprep.subr.bf16.mxu0 0
    %861 = vmatpush1.bf16.msra.mxu0 %v838
    %862 = vmatprep.subr.bf16.mxu0 0
    %863 = vmatpush1.bf16.msra.mxu0 %v839
    %864 = vmatprep.subr.bf16.mxu0 0
    %865 = vmatpush1.bf16.msra.mxu0 0
    %866 = vmatprep.subr.bf16.mxu0 0
    %867 = vmatpush1.bf16.msra.mxu0 0
    %868 = vmatprep.subr.bf16.mxu0 0
    %869 = vmatpush1.bf16.msra.mxu0 0
    %870 = vmatprep.subr.bf16.mxu0 0
    %871 = vmatpush1.bf16.msra.mxu0 0
    %872 = vmatprep.subr.bf16.mxu0 0
    %873 = vmatpush1.bf16.msra.mxu0 0
    %874 = vmatprep.subr.bf16.mxu0 0
    %875 = vmatpush1.bf16.msra.mxu0 0
    %876 = vmatprep.subr.bf16.mxu0 0
    %877 = vmatpush1.bf16.msra.mxu0 0
    %878 = vmatprep.subr.bf16.mxu0 0
    %879 = vmatpush1.bf16.msra.mxu0 0
    %880 = vmatprep.mubr.bf16.mxu0 0
    %881 = vmatmul.mubr.bf16.gmra.mrb[0].mxu0 %v792
    %v882 = vpop.f32.mrb[0].mxu0
    %v883 = vadd.f32 0.0, %v882
    %v884 = vpop.f32.mrb[0].mxu0
    %v885 = vpop.f32.mrb[0].mxu0
    %v886 = vadd.f32 0.0, %v885
    %v887 = vpop.f32.mrb[0].mxu0
    %888 = vmatprep.mubr.bf16.mxu0 0
    %889 = vmatmul.mubr.bf16.gmra.mrb[0].mxu0 %v793
    %v890 = vpop.f32.mrb[0].mxu0
    %v891 = vadd.f32 0.0, %v890
    %v892 = vpop.f32.mrb[0].mxu0
    %v893 = vpop.f32.mrb[0].mxu0
    %v894 = vadd.f32 0.0, %v893
    %v895 = vpop.f32.mrb[0].mxu0
    %896 = vmatprep.mubr.bf16.mxu0 0
    %897 = vmatmul.mubr.bf16.gmra.mrb[0].mxu0 %v794
    %v898 = vpop.f32.mrb[0].mxu0
    %v899 = vadd.f32 0.0, %v898
    %v900 = vpop.f32.mrb[0].mxu0
    %v901 = vpop.f32.mrb[0].mxu0
    %v902 = vadd.f32 0.0, %v901
    %v903 = vpop.f32.mrb[0].mxu0
    %904 = vmatprep.mubr.bf16.mxu0 0
    %905 = vmatmul.mubr.bf16.gmra.mrb[0].mxu0 %v795
    %v906 = vpop.f32.mrb[0].mxu0
    %v907 = vadd.f32 0.0, %v906
    %v908 = vpop.f32.mrb[0].mxu0
    %v909 = vpop.f32.mrb[0].mxu0
    %v910 = vpop.f32.mrb[0].mxu0
    %911 = vdwg.mxu0
    %v912 = vadd.f32 %v746, %v883
    %v913 = vadd.f32 %v747, %v886
    %v914 = vadd.f32 %v748, %v891
    %v915 = vadd.f32 %v749, %v894
    %v916 = vadd.f32 %v750, %v899
    %v917 = vadd.f32 %v751, %v902
    %v918 = vadd.f32 %v752, %v907
    %s919 = scalar_lea.vmem [#allocation2], 84
    %v920 = vld [vmem:[%s919] sm:$0xf]
    %v921 = vld [vmem:[%s919 + $0x4] sm:$0xf]
    %v922 = vld [vmem:[%s919 + $0x8] sm:$0xf]
    %v923 = vld [vmem:[%s919 + $0xc] sm:$0xf]
    %v924 = vld [vmem:[%s919 + $0x10] sm:$0xf]
    %v925 = vld [vmem:[%s919 + $0x14] sm:$0xf]
    %v926 = vld [vmem:[%s919 + $0x18] sm:$0x1]
    %s927 = scalar_lea.vmem [#allocation5], 320
    %v928 = vld [vmem:[%s927] sm:$0xf]
    %v929 = vld [vmem:[%s927 + $0x4] sm:$0xf]
    %v930 = vld [vmem:[%s927 + $0x8] sm:$0xf]
    %v931 = vld [vmem:[%s927 + $0xc] sm:$0xf]
    %v932 = vld [vmem:[%s927 + $0x10] sm:$0xf]
    %v933 = vld [vmem:[%s927 + $0x14] sm:$0xf]
    %v934 = vld [vmem:[%s927 + $0x18] sm:$0xf]
    %v935 = vld [vmem:[%s927 + $0x1c] sm:$0xf]
    %v936 = vld [vmem:[%s927 + $0x20] sm:$0xf]
    %v937 = vld [vmem:[%s927 + $0x24] sm:$0xf]
    %v938 = vld [vmem:[%s927 + $0x28] sm:$0xf]
    %v939 = vld [vmem:[%s927 + $0x2c] sm:$0xf]
    %v940 = vld [vmem:[%s927 + $0x30] sm:$0xf]
    %v941 = vld [vmem:[%s927 + $0x34] sm:$0xf]
    %v942 = vld [vmem:[%s927 + $0x38] sm:$0xf]
    %v943 = vld [vmem:[%s927 + $0x3c] sm:$0xf]
    %v951 = vunpack.c.l.b16 %v920
    %v952 = vunpack.c.l.b16 %v921
    %v953 = vunpack.c.l.b16 %v922
    %v954 = vunpack.c.l.b16 %v923
    %v955 = vunpack.c.l.b16 %v924
    %v956 = vunpack.c.l.b16 %v925
    %v957 = vunpack.c.l.b16 %v926
    %v958 = vpack.c.b16 %v952, %v951
    %v959 = vpack.c.b16 %v954, %v953
    %v960 = vpack.c.b16 %v956, %v955
    %v961 = vpack.c.b16 %v957, %v957
    %v982 = vunpack.c.l.b16 %v928
    %v983 = vunpack.c.l.b16 %v929
    %v984 = vunpack.c.l.b16 %v930
    %v985 = vunpack.c.l.b16 %v931
    %v986 = vunpack.c.l.b16 %v932
    %v987 = vunpack.c.l.b16 %v933
    %v988 = vunpack.c.l.b16 %v934
    %v989 = vunpack.c.l.b16 %v935
    %v990 = vunpack.c.l.b16 %v936
    %v991 = vunpack.c.l.b16 %v937
    %v992 = vunpack.c.l.b16 %v938
    %v993 = vunpack.c.l.b16 %v939
    %v994 = vunpack.c.l.b16 %v940
    %v995 = vunpack.c.l.b16 %v941
    %v996 = vunpack.c.l.b16 %v942
    %v997 = vunpack.c.l.b16 %v943
    %v998 = vpack.c.b16 %v983, %v982
    %v999 = vpack.c.b16 %v985, %v984
    %v1000 = vpack.c.b16 %v987, %v986
    %v1001 = vpack.c.b16 %v989, %v988
    %v1002 = vpack.c.b16 %v991, %v990
    %v1003 = vpack.c.b16 %v993, %v992
    %v1004 = vpack.c.b16 %v995, %v994
    %v1005 = vpack.c.b16 %v997, %v996
    %1014 = vmatprep.subr.bf16.mxu0 0
    %1015 = vmatpush1.bf16.msra.mxu0 %v998
    %1016 = vmatprep.subr.bf16.mxu0 0
    %1017 = vmatpush1.bf16.msra.mxu0 %v999
    %1018 = vmatprep.subr.bf16.mxu0 0
    %1019 = vmatpush1.bf16.msra.mxu0 %v1000
    %1020 = vmatprep.subr.bf16.mxu0 0
    %1021 = vmatpush1.bf16.msra.mxu0 %v1001
    %1022 = vmatprep.subr.bf16.mxu0 0
    %1023 = vmatpush1.bf16.msra.mxu0 %v1002
    %1024 = vmatprep.subr.bf16.mxu0 0
    %1025 = vmatpush1.bf16.msra.mxu0 %v1003
    %1026 = vmatprep.subr.bf16.mxu0 0
    %1027 = vmatpush1.bf16.msra.mxu0 %v1004
    %1028 = vmatprep.subr.bf16.mxu0 0
    %1029 = vmatpush1.bf16.msra.mxu0 %v1005
    %1030 = vmatprep.subr.bf16.mxu0 0
    %1031 = vmatpush1.bf16.msra.mxu0 0
    %1032 = vmatprep.subr.bf16.mxu0 0
    %1033 = vmatpush1.bf16.msra.mxu0 0
    %1034 = vmatprep.subr.bf16.mxu0 0
    %1035 = vmatpush1.bf16.msra.mxu0 0
    %1036 = vmatprep.subr.bf16.mxu0 0
    %1037 = vmatpush1.bf16.msra.mxu0 0
    %1038 = vmatprep.subr.bf16.mxu0 0
    %1039 = vmatpush1.bf16.msra.mxu0 0
    %1040 = vmatprep.subr.bf16.mxu0 0
    %1041 = vmatpush1.bf16.msra.mxu0 0
    %1042 = vmatprep.subr.bf16.mxu0 0
    %1043 = vmatpush1.bf16.msra.mxu0 0
    %1044 = vmatprep.subr.bf16.mxu0 0
    %1045 = vmatpush1.bf16.msra.mxu0 0
    %1046 = vmatprep.mubr.bf16.mxu0 0
    %1047 = vmatmul.mubr.bf16.gmra.mrb[0].mxu0 %v958
    %v1048 = vpop.f32.mrb[0].mxu0
    %v1049 = vadd.f32 0.0, %v1048
    %v1050 = vpop.f32.mrb[0].mxu0
    %v1051 = vpop.f32.mrb[0].mxu0
    %v1052 = vadd.f32 0.0, %v1051
    %v1053 = vpop.f32.mrb[0].mxu0
    %1054 = vmatprep.mubr.bf16.mxu0 0
    %1055 = vmatmul.mubr.bf16.gmra.mrb[0].mxu0 %v959
    %v1056 = vpop.f32.mrb[0].mxu0
    %v1057 = vadd.f32 0.0, %v1056
    %v1058 = vpop.f32.mrb[0].mxu0
    %v1059 = vpop.f32.mrb[0].mxu0
    %v1060 = vadd.f32 0.0, %v1059
    %v1061 = vpop.f32.mrb[0].mxu0
    %1062 = vmatprep.mubr.bf16.mxu0 0
    %1063 = vmatmul.mubr.bf16.gmra.mrb[0].mxu0 %v960
    %v1064 = vpop.f32.mrb[0].mxu0
    %v1065 = vadd.f32 0.0, %v1064
    %v1066 = vpop.f32.mrb[0].mxu0
    %v1067 = vpop.f32.mrb[0].mxu0
    %v1068 = vadd.f32 0.0, %v1067
    %v1069 = vpop.f32.mrb[0].mxu0
    %1070 = vmatprep.mubr.bf16.mxu0 0
    %1071 = vmatmul.mubr.bf16.gmra.mrb[0].mxu0 %v961
    %v1072 = vpop.f32.mrb[0].mxu0
    %v1073 = vadd.f32 0.0, %v1072
    %v1074 = vpop.f32.mrb[0].mxu0
    %v1075 = vpop.f32.mrb[0].mxu0
    %v1076 = vpop.f32.mrb[0].mxu0
    %1077 = vdwg.mxu0
    %v1078 = vadd.f32 %v912, %v1049
    %v1079 = vadd.f32 %v913, %v1052
    %v1080 = vadd.f32 %v914, %v1057
    %v1081 = vadd.f32 %v915, %v1060
    %v1082 = vadd.f32 %v916, %v1065
    %v1083 = vadd.f32 %v917, %v1068
    %v1084 = vadd.f32 %v918, %v1073
    %v1085 = vld [vmem:[%s753 + $0x18] sm:$0x3]
    %s1086 = scalar_lea.vmem [#allocation5], 384
    %v1087 = vld [vmem:[%s1086] sm:$0xf]
    %v1088 = vld [vmem:[%s1086 + $0x4] sm:$0xf]
    %v1089 = vld [vmem:[%s1086 + $0x8] sm:$0xf]
    %v1090 = vld [vmem:[%s1086 + $0xc] sm:$0xf]
    %v1091 = vld [vmem:[%s1086 + $0x10] sm:$0xf]
    %v1092 = vld [vmem:[%s1086 + $0x14] sm:$0xf]
    %v1093 = vld [vmem:[%s1086 + $0x18] sm:$0xf]
    %v1094 = vld [vmem:[%s1086 + $0x1c] sm:$0xf]
    %v1095 = vld [vmem:[%s1086 + $0x20] sm:$0xf]
    %v1096 = vld [vmem:[%s1086 + $0x24] sm:$0xf]
    %v1097 = vld [vmem:[%s1086 + $0x28] sm:$0xf]
    %v1098 = vld [vmem:[%s1086 + $0x2c] sm:$0xf]
    %v1099 = vld [vmem:[%s1086 + $0x30] sm:$0xf]
    %v1100 = vld [vmem:[%s1086 + $0x34] sm:$0xf]
    %v1101 = vld [vmem:[%s1086 + $0x38] sm:$0xf]
    %v1102 = vld [vmem:[%s1086 + $0x3c] sm:$0xf]
    %v1104 = vunpack.c.l.b16 %v1085
    %v1105 = vpack.c.b16 %v1104, %v1104
    %v1107 = vshrl.u32 %v792, 16
    %v1109 = vshll.u32 %v792, 16
    %v1111 = vrot.slane %v1109, 1
    %v1112 = vor.u32 %v1107, %v1111
    %v1114 = vshll.u32 %v793, 16
    %v1116 = vrot.slane %v1114, 1
    %v1117 = vsel %vm423, %v1112, %v1116
    %v1118 = vshrl.u32 %v793, 16
    %v1120 = vor.u32 %v1118, %v1116
    %v1122 = vshll.u32 %v794, 16
    %v1124 = vrot.slane %v1122, 1
    %v1125 = vsel %vm423, %v1120, %v1124
    %v1126 = vshrl.u32 %v794, 16
    %v1128 = vor.u32 %v1126, %v1124
    %v1130 = vshll.u32 %v1105, 16
    %v1132 = vrot.slane %v1130, 1
    %v1133 = vsel %vm423, %v1128, %v1132
    %v1134 = vshrl.u32 %v1105, 16
    %v1136 = vor.u32 %v1134, %v1132
    %v1157 = vunpack.c.l.b16 %v1087
    %v1158 = vunpack.c.l.b16 %v1088
    %v1159 = vunpack.c.l.b16 %v1089
    %v1160 = vunpack.c.l.b16 %v1090
    %v1161 = vunpack.c.l.b16 %v1091
    %v1162 = vunpack.c.l.b16 %v1092
    %v1163 = vunpack.c.l.b16 %v1093
    %v1164 = vunpack.c.l.b16 %v1094
    %v1165 = vunpack.c.l.b16 %v1095
    %v1166 = vunpack.c.l.b16 %v1096
    %v1167 = vunpack.c.l.b16 %v1097
    %v1168 = vunpack.c.l.b16 %v1098
    %v1169 = vunpack.c.l.b16 %v1099
    %v1170 = vunpack.c.l.b16 %v1100
    %v1171 = vunpack.c.l.b16 %v1101
    %v1172 = vunpack.c.l.b16 %v1102
    %v1173 = vpack.c.b16 %v1158, %v1157
    %v1174 = vpack.c.b16 %v1160, %v1159
    %v1175 = vpack.c.b16 %v1162, %v1161
    %v1176 = vpack.c.b16 %v1164, %v1163
    %v1177 = vpack.c.b16 %v1166, %v1165
    %v1178 = vpack.c.b16 %v1168, %v1167
    %v1179 = vpack.c.b16 %v1170, %v1169
    %v1180 = vpack.c.b16 %v1172, %v1171
    %1189 = vmatprep.subr.bf16.mxu0 0
    %1190 = vmatpush1.bf16.msra.mxu0 %v1173
    %1191 = vmatprep.subr.bf16.mxu0 0
    %1192 = vmatpush1.bf16.msra.mxu0 %v1174
    %1193 = vmatprep.subr.bf16.mxu0 0
    %1194 = vmatpush1.bf16.msra.mxu0 %v1175
    %1195 = vmatprep.subr.bf16.mxu0 0
    %1196 = vmatpush1.bf16.msra.mxu0 %v1176
    %1197 = vmatprep.subr.bf16.mxu0 0
    %1198 = vmatpush1.bf16.msra.mxu0 %v1177
    %1199 = vmatprep.subr.bf16.mxu0 0
    %1200 = vmatpush1.bf16.msra.mxu0 %v1178
    %1201 = vmatprep.subr.bf16.mxu0 0
    %1202 = vmatpush1.bf16.msra.mxu0 %v1179
    %1203 = vmatprep.subr.bf16.mxu0 0
    %1204 = vmatpush1.bf16.msra.mxu0 %v1180
    %1205 = vmatprep.subr.bf16.mxu0 0
    %1206 = vmatpush1.bf16.msra.mxu0 0
    %1207 = vmatprep.subr.bf16.mxu0 0
    %1208 = vmatpush1.bf16.msra.mxu0 0
    %1209 = vmatprep.subr.bf16.mxu0 0
    %1210 = vmatpush1.bf16.msra.mxu0 0
    %1211 = vmatprep.subr.bf16.mxu0 0
    %1212 = vmatpush1.bf16.msra.mxu0 0
    %1213 = vmatprep.subr.bf16.mxu0 0
    %1214 = vmatpush1.bf16.msra.mxu0 0
    %1215 = vmatprep.subr.bf16.mxu0 0
    %1216 = vmatpush1.bf16.msra.mxu0 0
    %1217 = vmatprep.subr.bf16.mxu0 0
    %1218 = vmatpush1.bf16.msra.mxu0 0
    %1219 = vmatprep.subr.bf16.mxu0 0
    %1220 = vmatpush1.bf16.msra.mxu0 0
    %1221 = vmatprep.mubr.bf16.mxu0 0
    %1222 = vmatmul.mubr.bf16.gmra.mrb[0].mxu0 %v1117
    %v1223 = vpop.f32.mrb[0].mxu0
    %v1224 = vadd.f32 0.0, %v1223
    %v1225 = vpop.f32.mrb[0].mxu0
    %v1226 = vpop.f32.mrb[0].mxu0
    %v1227 = vadd.f32 0.0, %v1226
    %v1228 = vpop.f32.mrb[0].mxu0
    %1229 = vmatprep.mubr.bf16.mxu0 0
    %1230 = vmatmul.mubr.bf16.gmra.mrb[0].mxu0 %v1125
    %v1231 = vpop.f32.mrb[0].mxu0
    %v1232 = vadd.f32 0.0, %v1231
    %v1233 = vpop.f32.mrb[0].mxu0
    %v1234 = vpop.f32.mrb[0].mxu0
    %v1235 = vadd.f32 0.0, %v1234
    %v1236 = vpop.f32.mrb[0].mxu0
    %1237 = vmatprep.mubr.bf16.mxu0 0
    %1238 = vmatmul.mubr.bf16.gmra.mrb[0].mxu0 %v1133
    %v1239 = vpop.f32.mrb[0].mxu0
    %v1240 = vadd.f32 0.0, %v1239
    %v1241 = vpop.f32.mrb[0].mxu0
    %v1242 = vpop.f32.mrb[0].mxu0
    %v1243 = vadd.f32 0.0, %v1242
    %v1244 = vpop.f32.mrb[0].mxu0
    %1245 = vmatprep.mubr.bf16.mxu0 0
    %1246 = vmatmul.mubr.bf16.gmra.mrb[0].mxu0 %v1136
    %v1247 = vpop.f32.mrb[0].mxu0
    %v1248 = vadd.f32 0.0, %v1247
    %v1249 = vpop.f32.mrb[0].mxu0
    %v1250 = vpop.f32.mrb[0].mxu0
    %v1251 = vpop.f32.mrb[0].mxu0
    %1252 = vdwg.mxu0
    %v1253 = vadd.f32 %v1078, %v1224
    %v1254 = vadd.f32 %v1079, %v1227
    %v1255 = vadd.f32 %v1080, %v1232
    %v1256 = vadd.f32 %v1081, %v1235
    %v1257 = vadd.f32 %v1082, %v1240
    %v1258 = vadd.f32 %v1083, %v1243
    %v1259 = vadd.f32 %v1084, %v1248
    %v1260 = vld [vmem:[%s919 + $0x18] sm:$0x3]
    %s1261 = scalar_lea.vmem [#allocation5], 448
    %v1262 = vld [vmem:[%s1261] sm:$0xf]
    %v1263 = vld [vmem:[%s1261 + $0x4] sm:$0xf]
    %v1264 = vld [vmem:[%s1261 + $0x8] sm:$0xf]
    %v1265 = vld [vmem:[%s1261 + $0xc] sm:$0xf]
    %v1266 = vld [vmem:[%s1261 + $0x10] sm:$0xf]
    %v1267 = vld [vmem:[%s1261 + $0x14] sm:$0xf]
    %v1268 = vld [vmem:[%s1261 + $0x18] sm:$0xf]
    %v1269 = vld [vmem:[%s1261 + $0x1c] sm:$0xf]
    %v1270 = vld [vmem:[%s1261 + $0x20] sm:$0xf]
    %v1271 = vld [vmem:[%s1261 + $0x24] sm:$0xf]
    %v1272 = vld [vmem:[%s1261 + $0x28] sm:$0xf]
    %v1273 = vld [vmem:[%s1261 + $0x2c] sm:$0xf]
    %v1274 = vld [vmem:[%s1261 + $0x30] sm:$0xf]
    %v1275 = vld [vmem:[%s1261 + $0x34] sm:$0xf]
    %v1276 = vld [vmem:[%s1261 + $0x38] sm:$0xf]
    %v1277 = vld [vmem:[%s1261 + $0x3c] sm:$0xf]
    %v1279 = vunpack.c.l.b16 %v1260
    %v1280 = vpack.c.b16 %v1279, %v1279
    %v1282 = vshrl.u32 %v958, 16
    %v1284 = vshll.u32 %v958, 16
    %v1286 = vrot.slane %v1284, 1
    %v1287 = vor.u32 %v1282, %v1286
    %v1289 = vshll.u32 %v959, 16
    %v1291 = vrot.slane %v1289, 1
    %v1292 = vsel %vm423, %v1287, %v1291
    %v1293 = vshrl.u32 %v959, 16
    %v1295 = vor.u32 %v1293, %v1291
    %v1297 = vshll.u32 %v960, 16
    %v1299 = vrot.slane %v1297, 1
    %v1300 = vsel %vm423, %v1295, %v1299
    %v1301 = vshrl.u32 %v960, 16
    %v1303 = vor.u32 %v1301, %v1299
    %v1305 = vshll.u32 %v1280, 16
    %v1307 = vrot.slane %v1305, 1
    %v1308 = vsel %vm423, %v1303, %v1307
    %v1309 = vshrl.u32 %v1280, 16
    %v1311 = vor.u32 %v1309, %v1307
    %v1332 = vunpack.c.l.b16 %v1262
    %v1333 = vunpack.c.l.b16 %v1263
    %v1334 = vunpack.c.l.b16 %v1264
    %v1335 = vunpack.c.l.b16 %v1265
    %v1336 = vunpack.c.l.b16 %v1266
    %v1337 = vunpack.c.l.b16 %v1267
    %v1338 = vunpack.c.l.b16 %v1268
    %v1339 = vunpack.c.l.b16 %v1269
    %v1340 = vunpack.c.l.b16 %v1270
    %v1341 = vunpack.c.l.b16 %v1271
    %v1342 = vunpack.c.l.b16 %v1272
    %v1343 = vunpack.c.l.b16 %v1273
    %v1344 = vunpack.c.l.b16 %v1274
    %v1345 = vunpack.c.l.b16 %v1275
    %v1346 = vunpack.c.l.b16 %v1276
    %v1347 = vunpack.c.l.b16 %v1277
    %v1348 = vpack.c.b16 %v1333, %v1332
    %v1349 = vpack.c.b16 %v1335, %v1334
    %v1350 = vpack.c.b16 %v1337, %v1336
    %v1351 = vpack.c.b16 %v1339, %v1338
    %v1352 = vpack.c.b16 %v1341, %v1340
    %v1353 = vpack.c.b16 %v1343, %v1342
    %v1354 = vpack.c.b16 %v1345, %v1344
    %v1355 = vpack.c.b16 %v1347, %v1346
    %1364 = vmatprep.subr.bf16.mxu0 0
    %1365 = vmatpush1.bf16.msra.mxu0 %v1348
    %1366 = vmatprep.subr.bf16.mxu0 0
    %1367 = vmatpush1.bf16.msra.mxu0 %v1349
    %1368 = vmatprep.subr.bf16.mxu0 0
    %1369 = vmatpush1.bf16.msra.mxu0 %v1350
    %1370 = vmatprep.subr.bf16.mxu0 0
    %1371 = vmatpush1.bf16.msra.mxu0 %v1351
    %1372 = vmatprep.subr.bf16.mxu0 0
    %1373 = vmatpush1.bf16.msra.mxu0 %v1352
    %1374 = vmatprep.subr.bf16.mxu0 0
    %1375 = vmatpush1.bf16.msra.mxu0 %v1353
    %1376 = vmatprep.subr.bf16.mxu0 0
    %1377 = vmatpush1.bf16.msra.mxu0 %v1354
    %1378 = vmatprep.subr.bf16.mxu0 0
    %1379 = vmatpush1.bf16.msra.mxu0 %v1355
    %1380 = vmatprep.subr.bf16.mxu0 0
    %1381 = vmatpush1.bf16.msra.mxu0 0
    %1382 = vmatprep.subr.bf16.mxu0 0
    %1383 = vmatpush1.bf16.msra.mxu0 0
    %1384 = vmatprep.subr.bf16.mxu0 0
    %1385 = vmatpush1.bf16.msra.mxu0 0
    %1386 = vmatprep.subr.bf16.mxu0 0
    %1387 = vmatpush1.bf16.msra.mxu0 0
    %1388 = vmatprep.subr.bf16.mxu0 0
    %1389 = vmatpush1.bf16.msra.mxu0 0
    %1390 = vmatprep.subr.bf16.mxu0 0
    %1391 = vmatpush1.bf16.msra.mxu0 0
    %1392 = vmatprep.subr.bf16.mxu0 0
    %1393 = vmatpush1.bf16.msra.mxu0 0
    %1394 = vmatprep.subr.bf16.mxu0 0
    %1395 = vmatpush1.bf16.msra.mxu0 0
    %1396 = vmatprep.mubr.bf16.mxu0 0
    %1397 = vmatmul.mubr.bf16.gmra.mrb[0].mxu0 %v1292
    %v1398 = vpop.f32.mrb[0].mxu0
    %v1399 = vadd.f32 0.0, %v1398
    %v1400 = vpop.f32.mrb[0].mxu0
    %v1401 = vpop.f32.mrb[0].mxu0
    %v1402 = vadd.f32 0.0, %v1401
    %v1403 = vpop.f32.mrb[0].mxu0
    %1404 = vmatprep.mubr.bf16.mxu0 0
    %1405 = vmatmul.mubr.bf16.gmra.mrb[0].mxu0 %v1300
    %v1406 = vpop.f32.mrb[0].mxu0
    %v1407 = vadd.f32 0.0, %v1406
    %v1408 = vpop.f32.mrb[0].mxu0
    %v1409 = vpop.f32.mrb[0].mxu0
    %v1410 = vadd.f32 0.0, %v1409
    %v1411 = vpop.f32.mrb[0].mxu0
    %1412 = vmatprep.mubr.bf16.mxu0 0
    %1413 = vmatmul.mubr.bf16.gmra.mrb[0].mxu0 %v1308
    %v1414 = vpop.f32.mrb[0].mxu0
    %v1415 = vadd.f32 0.0, %v1414
    %v1416 = vpop.f32.mrb[0].mxu0
    %v1417 = vpop.f32.mrb[0].mxu0
    %v1418 = vadd.f32 0.0, %v1417
    %v1419 = vpop.f32.mrb[0].mxu0
    %1420 = vmatprep.mubr.bf16.mxu0 0
    %1421 = vmatmul.mubr.bf16.gmra.mrb[0].mxu0 %v1311
    %v1422 = vpop.f32.mrb[0].mxu0
    %v1423 = vadd.f32 0.0, %v1422
    %v1424 = vpop.f32.mrb[0].mxu0
    %v1425 = vpop.f32.mrb[0].mxu0
    %v1426 = vpop.f32.mrb[0].mxu0
    %1427 = vdwg.mxu0
    %v1428 = vadd.f32 %v1253, %v1399
    %v1429 = vadd.f32 %v1254, %v1402
    %v1430 = vadd.f32 %v1255, %v1407
    %v1431 = vadd.f32 %v1256, %v1410
    %v1432 = vadd.f32 %v1257, %v1415
    %v1433 = vadd.f32 %v1258, %v1418
    %v1434 = vadd.f32 %v1259, %v1423
    %v1435 = vld [vmem:[#allocation2] sm:$0xc]
    %v1436 = vld [vmem:[#allocation2 + $0x18] sm:$0xf]
    %s1437 = scalar_lea.vmem [#allocation5], 512
    %v1438 = vld [vmem:[%s1437] sm:$0xf]
    %v1439 = vld [vmem:[%s1437 + $0x4] sm:$0xf]
    %v1440 = vld [vmem:[%s1437 + $0x8] sm:$0xf]
    %v1441 = vld [vmem:[%s1437 + $0xc] sm:$0xf]
    %v1442 = vld [vmem:[%s1437 + $0x10] sm:$0xf]
    %v1443 = vld [vmem:[%s1437 + $0x14] sm:$0xf]
    %v1444 = vld [vmem:[%s1437 + $0x18] sm:$0xf]
    %v1445 = vld [vmem:[%s1437 + $0x1c] sm:$0xf]
    %v1446 = vld [vmem:[%s1437 + $0x20] sm:$0xf]
    %v1447 = vld [vmem:[%s1437 + $0x24] sm:$0xf]
    %v1448 = vld [vmem:[%s1437 + $0x28] sm:$0xf]
    %v1449 = vld [vmem:[%s1437 + $0x2c] sm:$0xf]
    %v1450 = vld [vmem:[%s1437 + $0x30] sm:$0xf]
    %v1451 = vld [vmem:[%s1437 + $0x34] sm:$0xf]
    %v1452 = vld [vmem:[%s1437 + $0x38] sm:$0xf]
    %v1453 = vld [vmem:[%s1437 + $0x3c] sm:$0xf]
    %v1456 = vunpack.c.l.b16 %v1435
    %v1457 = vunpack.c.l.b16 %v1436
    %v1458 = vpack.c.b16 %v276, %v1456
    %v1459 = vpack.c.b16 %v1457, %v1457
    %vm1460 = vsmask.f32 5376
    %v1462 = vshrl.u32 %v1458, 16
    %v1464 = vrot.slane %v1462, 2
    %v1465 = vshll.u32 %v1458, 16
    %v1467 = vrot.slane %v1465, 3
    %v1468 = vor.u32 %v1464, %v1467
    %v1469 = vrot.slane %v436, 2
    %v1470 = vrot.slane %v432, 3
    %v1471 = vor.u32 %v1469, %v1470
    %v1472 = vsel %vm1460, %v1468, %v1471
    %v1473 = vrot.slane %v444, 2
    %v1474 = vrot.slane %v440, 3
    %v1475 = vor.u32 %v1473, %v1474
    %v1476 = vsel %vm1460, %v1471, %v1475
    %v1478 = vshrl.u32 %v1459, 16
    %v1480 = vrot.slane %v1478, 2
    %v1481 = vshll.u32 %v1459, 16
    %v1483 = vrot.slane %v1481, 3
    %v1484 = vor.u32 %v1480, %v1483
    %v1485 = vsel %vm1460, %v1475, %v1484
    %v1506 = vunpack.c.l.b16 %v1438
    %v1507 = vunpack.c.l.b16 %v1439
    %v1508 = vunpack.c.l.b16 %v1440
    %v1509 = vunpack.c.l.b16 %v1441
    %v1510 = vunpack.c.l.b16 %v1442
    %v1511 = vunpack.c.l.b16 %v1443
    %v1512 = vunpack.c.l.b16 %v1444
    %v1513 = vunpack.c.l.b16 %v1445
    %v1514 = vunpack.c.l.b16 %v1446
    %v1515 = vunpack.c.l.b16 %v1447
    %v1516 = vunpack.c.l.b16 %v1448
    %v1517 = vunpack.c.l.b16 %v1449
    %v1518 = vunpack.c.l.b16 %v1450
    %v1519 = vunpack.c.l.b16 %v1451
    %v1520 = vunpack.c.l.b16 %v1452
    %v1521 = vunpack.c.l.b16 %v1453
    %v1522 = vpack.c.b16 %v1507, %v1506
    %v1523 = vpack.c.b16 %v1509, %v1508
    %v1524 = vpack.c.b16 %v1511, %v1510
    %v1525 = vpack.c.b16 %v1513, %v1512
    %v1526 = vpack.c.b16 %v1515, %v1514
    %v1527 = vpack.c.b16 %v1517, %v1516
    %v1528 = vpack.c.b16 %v1519, %v1518
    %v1529 = vpack.c.b16 %v1521, %v1520
    %1538 = vmatprep.subr.bf16.mxu0 0
    %1539 = vmatpush1.bf16.msra.mxu0 %v1522
    %1540 = vmatprep.subr.bf16.mxu0 0
    %1541 = vmatpush1.bf16.msra.mxu0 %v1523
    %1542 = vmatprep.subr.bf16.mxu0 0
    %1543 = vmatpush1.bf16.msra.mxu0 %v1524
    %1544 = vmatprep.subr.bf16.mxu0 0
    %1545 = vmatpush1.bf16.msra.mxu0 %v1525
    %1546 = vmatprep.subr.bf16.mxu0 0
    %1547 = vmatpush1.bf16.msra.mxu0 %v1526
    %1548 = vmatprep.subr.bf16.mxu0 0
    %1549 = vmatpush1.bf16.msra.mxu0 %v1527
    %1550 = vmatprep.subr.bf16.mxu0 0
    %1551 = vmatpush1.bf16.msra.mxu0 %v1528
    %1552 = vmatprep.subr.bf16.mxu0 0
    %1553 = vmatpush1.bf16.msra.mxu0 %v1529
    %1554 = vmatprep.subr.bf16.mxu0 0
    %1555 = vmatpush1.bf16.msra.mxu0 0
    %1556 = vmatprep.subr.bf16.mxu0 0
    %1557 = vmatpush1.bf16.msra.mxu0 0
    %1558 = vmatprep.subr.bf16.mxu0 0
    %1559 = vmatpush1.bf16.msra.mxu0 0
    %1560 = vmatprep.subr.bf16.mxu0 0
    %1561 = vmatpush1.bf16.msra.mxu0 0
    %1562 = vmatprep.subr.bf16.mxu0 0
    %1563 = vmatpush1.bf16.msra.mxu0 0
    %1564 = vmatprep.subr.bf16.mxu0 0
    %1565 = vmatpush1.bf16.msra.mxu0 0
    %1566 = vmatprep.subr.bf16.mxu0 0
    %1567 = vmatpush1.bf16.msra.mxu0 0
    %1568 = vmatprep.subr.bf16.mxu0 0
    %1569 = vmatpush1.bf16.msra.mxu0 0
    %1570 = vmatprep.mubr.bf16.mxu0 0
    %1571 = vmatmul.mubr.bf16.gmra.mrb[0].mxu0 %v1472
    %v1572 = vpop.f32.mrb[0].mxu0
    %v1573 = vadd.f32 0.0, %v1572
    %v1574 = vpop.f32.mrb[0].mxu0
    %v1575 = vpop.f32.mrb[0].mxu0
    %v1576 = vadd.f32 0.0, %v1575
    %v1577 = vpop.f32.mrb[0].mxu0
    %1578 = vmatprep.mubr.bf16.mxu0 0
    %1579 = vmatmul.mubr.bf16.gmra.mrb[0].mxu0 %v1476
    %v1580 = vpop.f32.mrb[0].mxu0
    %v1581 = vadd.f32 0.0, %v1580
    %v1582 = vpop.f32.mrb[0].mxu0
    %v1583 = vpop.f32.mrb[0].mxu0
    %v1584 = vadd.f32 0.0, %v1583
    %v1585 = vpop.f32.mrb[0].mxu0
    %1586 = vmatprep.mubr.bf16.mxu0 0
    %1587 = vmatmul.mubr.bf16.gmra.mrb[0].mxu0 %v1485
    %v1588 = vpop.f32.mrb[0].mxu0
    %v1589 = vadd.f32 0.0, %v1588
    %v1590 = vpop.f32.mrb[0].mxu0
    %v1591 = vpop.f32.mrb[0].mxu0
    %v1592 = vadd.f32 0.0, %v1591
    %v1593 = vpop.f32.mrb[0].mxu0
    %1594 = vmatprep.mubr.bf16.mxu0 0
    %1595 = vmatmul.mubr.bf16.gmra.mrb[0].mxu0 %v1484
    %v1596 = vpop.f32.mrb[0].mxu0
    %v1597 = vadd.f32 0.0, %v1596
    %v1598 = vpop.f32.mrb[0].mxu0
    %v1599 = vpop.f32.mrb[0].mxu0
    %v1600 = vpop.f32.mrb[0].mxu0
    %1601 = vdwg.mxu0
    %v1602 = vadd.f32 %v1428, %v1573
    %v1603 = vadd.f32 %v1429, %v1576
    %v1604 = vadd.f32 %v1430, %v1581
    %v1605 = vadd.f32 %v1431, %v1584
    %v1606 = vadd.f32 %v1432, %v1589
    %v1607 = vadd.f32 %v1433, %v1592
    %v1608 = vadd.f32 %v1434, %v1597
    %v1609 = vld [vmem:[%s109] sm:$0xc]
    %v1610 = vld [vmem:[%s109 + $0x18] sm:$0xf]
    %s1611 = scalar_lea.vmem [#allocation5], 576
    %v1612 = vld [vmem:[%s1611] sm:$0xf]
    %v1613 = vld [vmem:[%s1611 + $0x4] sm:$0xf]
    %v1614 = vld [vmem:[%s1611 + $0x8] sm:$0xf]
    %v1615 = vld [vmem:[%s1611 + $0xc] sm:$0xf]
    %v1616 = vld [vmem:[%s1611 + $0x10] sm:$0xf]
    %v1617 = vld [vmem:[%s1611 + $0x14] sm:$0xf]
    %v1618 = vld [vmem:[%s1611 + $0x18] sm:$0xf]
    %v1619 = vld [vmem:[%s1611 + $0x1c] sm:$0xf]
    %v1620 = vld [vmem:[%s1611 + $0x20] sm:$0xf]
    %v1621 = vld [vmem:[%s1611 + $0x24] sm:$0xf]
    %v1622 = vld [vmem:[%s1611 + $0x28] sm:$0xf]
    %v1623 = vld [vmem:[%s1611 + $0x2c] sm:$0xf]
    %v1624 = vld [vmem:[%s1611 + $0x30] sm:$0xf]
    %v1625 = vld [vmem:[%s1611 + $0x34] sm:$0xf]
    %v1626 = vld [vmem:[%s1611 + $0x38] sm:$0xf]
    %v1627 = vld [vmem:[%s1611 + $0x3c] sm:$0xf]
    %v1630 = vunpack.c.l.b16 %v1609
    %v1631 = vunpack.c.l.b16 %v1610
    %v1632 = vpack.c.b16 %v142, %v1630
    %v1633 = vpack.c.b16 %v1631, %v1631
    %v1635 = vshrl.u32 %v1632, 16
    %v1637 = vrot.slane %v1635, 2
    %v1638 = vshll.u32 %v1632, 16
    %v1640 = vrot.slane %v1638, 3
    %v1641 = vor.u32 %v1637, %v1640
    %v1642 = vrot.slane %v611, 2
    %v1643 = vrot.slane %v607, 3
    %v1644 = vor.u32 %v1642, %v1643
    %v1645 = vsel %vm1460, %v1641, %v1644
    %v1646 = vrot.slane %v619, 2
    %v1647 = vrot.slane %v615, 3
    %v1648 = vor.u32 %v1646, %v1647
    %v1649 = vsel %vm1460, %v1644, %v1648
    %v1651 = vshrl.u32 %v1633, 16
    %v1653 = vrot.slane %v1651, 2
    %v1654 = vshll.u32 %v1633, 16
    %v1656 = vrot.slane %v1654, 3
    %v1657 = vor.u32 %v1653, %v1656
    %v1658 = vsel %vm1460, %v1648, %v1657
    %v1679 = vunpack.c.l.b16 %v1612
    %v1680 = vunpack.c.l.b16 %v1613
    %v1681 = vunpack.c.l.b16 %v1614
    %v1682 = vunpack.c.l.b16 %v1615
    %v1683 = vunpack.c.l.b16 %v1616
    %v1684 = vunpack.c.l.b16 %v1617
    %v1685 = vunpack.c.l.b16 %v1618
    %v1686 = vunpack.c.l.b16 %v1619
    %v1687 = vunpack.c.l.b16 %v1620
    %v1688 = vunpack.c.l.b16 %v1621
    %v1689 = vunpack.c.l.b16 %v1622
    %v1690 = vunpack.c.l.b16 %v1623
    %v1691 = vunpack.c.l.b16 %v1624
    %v1692 = vunpack.c.l.b16 %v1625
    %v1693 = vunpack.c.l.b16 %v1626
    %v1694 = vunpack.c.l.b16 %v1627
    %v1695 = vpack.c.b16 %v1680, %v1679
    %v1696 = vpack.c.b16 %v1682, %v1681
    %v1697 = vpack.c.b16 %v1684, %v1683
    %v1698 = vpack.c.b16 %v1686, %v1685
    %v1699 = vpack.c.b16 %v1688, %v1687
    %v1700 = vpack.c.b16 %v1690, %v1689
    %v1701 = vpack.c.b16 %v1692, %v1691
    %v1702 = vpack.c.b16 %v1694, %v1693
    %1711 = vmatprep.subr.bf16.mxu0 0
    %1712 = vmatpush1.bf16.msra.mxu0 %v1695
    %1713 = vmatprep.subr.bf16.mxu0 0
    %1714 = vmatpush1.bf16.msra.mxu0 %v1696
    %1715 = vmatprep.subr.bf16.mxu0 0
    %1716 = vmatpush1.bf16.msra.mxu0 %v1697
    %1717 = vmatprep.subr.bf16.mxu0 0
    %1718 = vmatpush1.bf16.msra.mxu0 %v1698
    %1719 = vmatprep.subr.bf16.mxu0 0
    %1720 = vmatpush1.bf16.msra.mxu0 %v1699
    %1721 = vmatprep.subr.bf16.mxu0 0
    %1722 = vmatpush1.bf16.msra.mxu0 %v1700
    %1723 = vmatprep.subr.bf16.mxu0 0
    %1724 = vmatpush1.bf16.msra.mxu0 %v1701
    %1725 = vmatprep.subr.bf16.mxu0 0
    %1726 = vmatpush1.bf16.msra.mxu0 %v1702
    %1727 = vmatprep.subr.bf16.mxu0 0
    %1728 = vmatpush1.bf16.msra.mxu0 0
    %1729 = vmatprep.subr.bf16.mxu0 0
    %1730 = vmatpush1.bf16.msra.mxu0 0
    %1731 = vmatprep.subr.bf16.mxu0 0
    %1732 = vmatpush1.bf16.msra.mxu0 0
    %1733 = vmatprep.subr.bf16.mxu0 0
    %1734 = vmatpush1.bf16.msra.mxu0 0
    %1735 = vmatprep.subr.bf16.mxu0 0
    %1736 = vmatpush1.bf16.msra.mxu0 0
    %1737 = vmatprep.subr.bf16.mxu0 0
    %1738 = vmatpush1.bf16.msra.mxu0 0
    %1739 = vmatprep.subr.bf16.mxu0 0
    %1740 = vmatpush1.bf16.msra.mxu0 0
    %1741 = vmatprep.subr.bf16.mxu0 0
    %1742 = vmatpush1.bf16.msra.mxu0 0
    %1743 = vmatprep.mubr.bf16.mxu0 0
    %1744 = vmatmul.mubr.bf16.gmra.mrb[0].mxu0 %v1645
    %v1745 = vpop.f32.mrb[0].mxu0
    %v1746 = vadd.f32 0.0, %v1745
    %v1747 = vpop.f32.mrb[0].mxu0
    %v1748 = vpop.f32.mrb[0].mxu0
    %v1749 = vadd.f32 0.0, %v1748
    %v1750 = vpop.f32.mrb[0].mxu0
    %1751 = vmatprep.mubr.bf16.mxu0 0
    %1752 = vmatmul.mubr.bf16.gmra.mrb[0].mxu0 %v1649
    %v1753 = vpop.f32.mrb[0].mxu0
    %v1754 = vadd.f32 0.0, %v1753
    %v1755 = vpop.f32.mrb[0].mxu0
    %v1756 = vpop.f32.mrb[0].mxu0
    %v1757 = vadd.f32 0.0, %v1756
    %v1758 = vpop.f32.mrb[0].mxu0
    %1759 = vmatprep.mubr.bf16.mxu0 0
    %1760 = vmatmul.mubr.bf16.gmra.mrb[0].mxu0 %v1658
    %v1761 = vpop.f32.mrb[0].mxu0
    %v1762 = vadd.f32 0.0, %v1761
    %v1763 = vpop.f32.mrb[0].mxu0
    %v1764 = vpop.f32.mrb[0].mxu0
    %v1765 = vadd.f32 0.0, %v1764
    %v1766 = vpop.f32.mrb[0].mxu0
    %1767 = vmatprep.mubr.bf16.mxu0 0
    %1768 = vmatmul.mubr.bf16.gmra.mrb[0].mxu0 %v1657
    %v1769 = vpop.f32.mrb[0].mxu0
    %v1770 = vadd.f32 0.0, %v1769
    %v1771 = vpop.f32.mrb[0].mxu0
    %v1772 = vpop.f32.mrb[0].mxu0
    %v1773 = vpop.f32.mrb[0].mxu0
    %1774 = vdwg.mxu0
    %v1775 = vadd.f32 %v1602, %v1746
    %v1776 = vadd.f32 %v1603, %v1749
    %v1777 = vadd.f32 %v1604, %v1754
    %v1778 = vadd.f32 %v1605, %v1757
    %v1779 = vadd.f32 %v1606, %v1762
    %v1780 = vadd.f32 %v1607, %v1765
    %v1781 = vadd.f32 %v1608, %v1770
    %v1782 = vld [vmem:[#allocation2] sm:$0x8]
    %s1783 = scalar_lea.vmem [#allocation5], 640
    %v1784 = vld [vmem:[%s1783] sm:$0xf]
    %v1785 = vld [vmem:[%s1783 + $0x4] sm:$0xf]
    %v1786 = vld [vmem:[%s1783 + $0x8] sm:$0xf]
    %v1787 = vld [vmem:[%s1783 + $0xc] sm:$0xf]
    %v1788 = vld [vmem:[%s1783 + $0x10] sm:$0xf]
    %v1789 = vld [vmem:[%s1783 + $0x14] sm:$0xf]
    %v1790 = vld [vmem:[%s1783 + $0x18] sm:$0xf]
    %v1791 = vld [vmem:[%s1783 + $0x1c] sm:$0xf]
    %v1792 = vld [vmem:[%s1783 + $0x20] sm:$0xf]
    %v1793 = vld [vmem:[%s1783 + $0x24] sm:$0xf]
    %v1794 = vld [vmem:[%s1783 + $0x28] sm:$0xf]
    %v1795 = vld [vmem:[%s1783 + $0x2c] sm:$0xf]
    %v1796 = vld [vmem:[%s1783 + $0x30] sm:$0xf]
    %v1797 = vld [vmem:[%s1783 + $0x34] sm:$0xf]
    %v1798 = vld [vmem:[%s1783 + $0x38] sm:$0xf]
    %v1799 = vld [vmem:[%s1783 + $0x3c] sm:$0xf]
    %v1801 = vunpack.c.l.b16 %v1782
    %v1802 = vpack.c.b16 %v276, %v1801
    %vm1803 = vcmask 1044480
    %v1804 = vrot.slane %v1802, 3
    %v1805 = vrot.slane %v283, 3
    %v1806 = vsel %vm1803, %v1804, %v1805
    %v1807 = vrot.slane %v284, 3
    %v1808 = vsel %vm1803, %v1805, %v1807
    %v1809 = vrot.slane %v1459, 3
    %v1810 = vsel %vm1803, %v1807, %v1809
    %v1831 = vunpack.c.l.b16 %v1784
    %v1832 = vunpack.c.l.b16 %v1785
    %v1833 = vunpack.c.l.b16 %v1786
    %v1834 = vunpack.c.l.b16 %v1787
    %v1835 = vunpack.c.l.b16 %v1788
    %v1836 = vunpack.c.l.b16 %v1789
    %v1837 = vunpack.c.l.b16 %v1790
    %v1838 = vunpack.c.l.b16 %v1791
    %v1839 = vunpack.c.l.b16 %v1792
    %v1840 = vunpack.c.l.b16 %v1793
    %v1841 = vunpack.c.l.b16 %v1794
    %v1842 = vunpack.c.l.b16 %v1795
    %v1843 = vunpack.c.l.b16 %v1796
    %v1844 = vunpack.c.l.b16 %v1797
    %v1845 = vunpack.c.l.b16 %v1798
    %v1846 = vunpack.c.l.b16 %v1799
    %v1847 = vpack.c.b16 %v1832, %v1831
    %v1848 = vpack.c.b16 %v1834, %v1833
    %v1849 = vpack.c.b16 %v1836, %v1835
    %v1850 = vpack.c.b16 %v1838, %v1837
    %v1851 = vpack.c.b16 %v1840, %v1839
    %v1852 = vpack.c.b16 %v1842, %v1841
    %v1853 = vpack.c.b16 %v1844, %v1843
    %v1854 = vpack.c.b16 %v1846, %v1845
    %1863 = vmatprep.subr.bf16.mxu0 0
    %1864 = vmatpush1.bf16.msra.mxu0 %v1847
    %1865 = vmatprep.subr.bf16.mxu0 0
    %1866 = vmatpush1.bf16.msra.mxu0 %v1848
    %1867 = vmatprep.subr.bf16.mxu0 0
    %1868 = vmatpush1.bf16.msra.mxu0 %v1849
    %1869 = vmatprep.subr.bf16.mxu0 0
    %1870 = vmatpush1.bf16.msra.mxu0 %v1850
    %1871 = vmatprep.subr.bf16.mxu0 0
    %1872 = vmatpush1.bf16.msra.mxu0 %v1851
    %1873 = vmatprep.subr.bf16.mxu0 0
    %1874 = vmatpush1.bf16.msra.mxu0 %v1852
    %1875 = vmatprep.subr.bf16.mxu0 0
    %1876 = vmatpush1.bf16.msra.mxu0 %v1853
    %1877 = vmatprep.subr.bf16.mxu0 0
    %1878 = vmatpush1.bf16.msra.mxu0 %v1854
    %1879 = vmatprep.subr.bf16.mxu0 0
    %1880 = vmatpush1.bf16.msra.mxu0 0
    %1881 = vmatprep.subr.bf16.mxu0 0
    %1882 = vmatpush1.bf16.msra.mxu0 0
    %1883 = vmatprep.subr.bf16.mxu0 0
    %1884 = vmatpush1.bf16.msra.mxu0 0
    %1885 = vmatprep.subr.bf16.mxu0 0
    %1886 = vmatpush1.bf16.msra.mxu0 0
    %1887 = vmatprep.subr.bf16.mxu0 0
    %1888 = vmatpush1.bf16.msra.mxu0 0
    %1889 = vmatprep.subr.bf16.mxu0 0
    %1890 = vmatpush1.bf16.msra.mxu0 0
    %1891 = vmatprep.subr.bf16.mxu0 0
    %1892 = vmatpush1.bf16.msra.mxu0 0
    %1893 = vmatprep.subr.bf16.mxu0 0
    %1894 = vmatpush1.bf16.msra.mxu0 0
    %1895 = vmatprep.mubr.bf16.mxu0 0
    %1896 = vmatmul.mubr.bf16.gmra.mrb[0].mxu0 %v1806
    %v1897 = vpop.f32.mrb[0].mxu0
    %v1898 = vadd.f32 0.0, %v1897
    %v1899 = vpop.f32.mrb[0].mxu0
    %v1900 = vpop.f32.mrb[0].mxu0
    %v1901 = vadd.f32 0.0, %v1900
    %v1902 = vpop.f32.mrb[0].mxu0
    %1903 = vmatprep.mubr.bf16.mxu0 0
    %1904 = vmatmul.mubr.bf16.gmra.mrb[0].mxu0 %v1808
    %v1905 = vpop.f32.mrb[0].mxu0
    %v1906 = vadd.f32 0.0, %v1905
    %v1907 = vpop.f32.mrb[0].mxu0
    %v1908 = vpop.f32.mrb[0].mxu0
    %v1909 = vadd.f32 0.0, %v1908
    %v1910 = vpop.f32.mrb[0].mxu0
    %1911 = vmatprep.mubr.bf16.mxu0 0
    %1912 = vmatmul.mubr.bf16.gmra.mrb[0].mxu0 %v1810
    %v1913 = vpop.f32.mrb[0].mxu0
    %v1914 = vadd.f32 0.0, %v1913
    %v1915 = vpop.f32.mrb[0].mxu0
    %v1916 = vpop.f32.mrb[0].mxu0
    %v1917 = vadd.f32 0.0, %v1916
    %v1918 = vpop.f32.mrb[0].mxu0
    %1919 = vmatprep.mubr.bf16.mxu0 0
    %1920 = vmatmul.mubr.bf16.gmra.mrb[0].mxu0 %v1809
    %v1921 = vpop.f32.mrb[0].mxu0
    %v1922 = vadd.f32 0.0, %v1921
    %v1923 = vpop.f32.mrb[0].mxu0
    %v1924 = vpop.f32.mrb[0].mxu0
    %v1925 = vpop.f32.mrb[0].mxu0
    %1926 = vdwg.mxu0
    %v1927 = vadd.f32 %v1775, %v1898
    %v1928 = vadd.f32 %v1776, %v1901
    %v1929 = vadd.f32 %v1777, %v1906
    %v1930 = vadd.f32 %v1778, %v1909
    %v1931 = vadd.f32 %v1779, %v1914
    %v1932 = vadd.f32 %v1780, %v1917
    %v1933 = vadd.f32 %v1781, %v1922
    %v1934 = vld [vmem:[%s109] sm:$0x8]
    %s1935 = scalar_lea.vmem [#allocation5], 704
    %v1936 = vld [vmem:[%s1935] sm:$0xf]
    %v1937 = vld [vmem:[%s1935 + $0x4] sm:$0xf]
    %v1938 = vld [vmem:[%s1935 + $0x8] sm:$0xf]
    %v1939 = vld [vmem:[%s1935 + $0xc] sm:$0xf]
    %v1940 = vld [vmem:[%s1935 + $0x10] sm:$0xf]
    %v1941 = vld [vmem:[%s1935 + $0x14] sm:$0xf]
    %v1942 = vld [vmem:[%s1935 + $0x18] sm:$0xf]
    %v1943 = vld [vmem:[%s1935 + $0x1c] sm:$0xf]
    %v1944 = vld [vmem:[%s1935 + $0x20] sm:$0xf]
    %v1945 = vld [vmem:[%s1935 + $0x24] sm:$0xf]
    %v1946 = vld [vmem:[%s1935 + $0x28] sm:$0xf]
    %v1947 = vld [vmem:[%s1935 + $0x2c] sm:$0xf]
    %v1948 = vld [vmem:[%s1935 + $0x30] sm:$0xf]
    %v1949 = vld [vmem:[%s1935 + $0x34] sm:$0xf]
    %v1950 = vld [vmem:[%s1935 + $0x38] sm:$0xf]
    %v1951 = vld [vmem:[%s1935 + $0x3c] sm:$0xf]
    %v1953 = vunpack.c.l.b16 %v1934
    %v1954 = vpack.c.b16 %v142, %v1953
    %v1955 = vrot.slane %v1954, 3
    %v1956 = vrot.slane %v149, 3
    %v1957 = vsel %vm1803, %v1955, %v1956
    %v1958 = vrot.slane %v150, 3
    %v1959 = vsel %vm1803, %v1956, %v1958
    %v1960 = vrot.slane %v1633, 3
    %v1961 = vsel %vm1803, %v1958, %v1960
    %v1982 = vunpack.c.l.b16 %v1936
    %v1983 = vunpack.c.l.b16 %v1937
    %v1984 = vunpack.c.l.b16 %v1938
    %v1985 = vunpack.c.l.b16 %v1939
    %v1986 = vunpack.c.l.b16 %v1940
    %v1987 = vunpack.c.l.b16 %v1941
    %v1988 = vunpack.c.l.b16 %v1942
    %v1989 = vunpack.c.l.b16 %v1943
    %v1990 = vunpack.c.l.b16 %v1944
    %v1991 = vunpack.c.l.b16 %v1945
    %v1992 = vunpack.c.l.b16 %v1946
    %v1993 = vunpack.c.l.b16 %v1947
    %v1994 = vunpack.c.l.b16 %v1948
    %v1995 = vunpack.c.l.b16 %v1949
    %v1996 = vunpack.c.l.b16 %v1950
    %v1997 = vunpack.c.l.b16 %v1951
    %v1998 = vpack.c.b16 %v1983, %v1982
    %v1999 = vpack.c.b16 %v1985, %v1984
    %v2000 = vpack.c.b16 %v1987, %v1986
    %v2001 = vpack.c.b16 %v1989, %v1988
    %v2002 = vpack.c.b16 %v1991, %v1990
    %v2003 = vpack.c.b16 %v1993, %v1992
    %v2004 = vpack.c.b16 %v1995, %v1994
    %v2005 = vpack.c.b16 %v1997, %v1996
    %2014 = vmatprep.subr.bf16.mxu0 0
    %2015 = vmatpush1.bf16.msra.mxu0 %v1998
    %2016 = vmatprep.subr.bf16.mxu0 0
    %2017 = vmatpush1.bf16.msra.mxu0 %v1999
    %2018 = vmatprep.subr.bf16.mxu0 0
    %2019 = vmatpush1.bf16.msra.mxu0 %v2000
    %2020 = vmatprep.subr.bf16.mxu0 0
    %2021 = vmatpush1.bf16.msra.mxu0 %v2001
    %2022 = vmatprep.subr.bf16.mxu0 0
    %2023 = vmatpush1.bf16.msra.mxu0 %v2002
    %2024 = vmatprep.subr.bf16.mxu0 0
    %2025 = vmatpush1.bf16.msra.mxu0 %v2003
    %2026 = vmatprep.subr.bf16.mxu0 0
    %2027 = vmatpush1.bf16.msra.mxu0 %v2004
    %2028 = vmatprep.subr.bf16.mxu0 0
    %2029 = vmatpush1.bf16.msra.mxu0 %v2005
    %2030 = vmatprep.subr.bf16.mxu0 0
    %2031 = vmatpush1.bf16.msra.mxu0 0
    %2032 = vmatprep.subr.bf16.mxu0 0
    %2033 = vmatpush1.bf16.msra.mxu0 0
    %2034 = vmatprep.subr.bf16.mxu0 0
    %2035 = vmatpush1.bf16.msra.mxu0 0
    %2036 = vmatprep.subr.bf16.mxu0 0
    %2037 = vmatpush1.bf16.msra.mxu0 0
    %2038 = vmatprep.subr.bf16.mxu0 0
    %2039 = vmatpush1.bf16.msra.mxu0 0
    %2040 = vmatprep.subr.bf16.mxu0 0
    %2041 = vmatpush1.bf16.msra.mxu0 0
    %2042 = vmatprep.subr.bf16.mxu0 0
    %2043 = vmatpush1.bf16.msra.mxu0 0
    %2044 = vmatprep.subr.bf16.mxu0 0
    %2045 = vmatpush1.bf16.msra.mxu0 0
    %2046 = vmatprep.mubr.bf16.mxu0 0
    %2047 = vmatmul.mubr.bf16.gmra.mrb[0].mxu0 %v1957
    %v2048 = vpop.f32.mrb[0].mxu0
    %v2049 = vadd.f32 0.0, %v2048
    %v2050 = vpop.f32.mrb[0].mxu0
    %v2051 = vpop.f32.mrb[0].mxu0
    %v2052 = vadd.f32 0.0, %v2051
    %v2053 = vpop.f32.mrb[0].mxu0
    %2054 = vmatprep.mubr.bf16.mxu0 0
    %2055 = vmatmul.mubr.bf16.gmra.mrb[0].mxu0 %v1959
    %v2056 = vpop.f32.mrb[0].mxu0
    %v2057 = vadd.f32 0.0, %v2056
    %v2058 = vpop.f32.mrb[0].mxu0
    %v2059 = vpop.f32.mrb[0].mxu0
    %v2060 = vadd.f32 0.0, %v2059
    %v2061 = vpop.f32.mrb[0].mxu0
    %2062 = vmatprep.mubr.bf16.mxu0 0
    %2063 = vmatmul.mubr.bf16.gmra.mrb[0].mxu0 %v1961
    %v2064 = vpop.f32.mrb[0].mxu0
    %v2065 = vadd.f32 0.0, %v2064
    %v2066 = vpop.f32.mrb[0].mxu0
    %v2067 = vpop.f32.mrb[0].mxu0
    %v2068 = vadd.f32 0.0, %v2067
    %v2069 = vpop.f32.mrb[0].mxu0
    %2070 = vmatprep.mubr.bf16.mxu0 0
    %2071 = vmatmul.mubr.bf16.gmra.mrb[0].mxu0 %v1960
    %v2072 = vpop.f32.mrb[0].mxu0
    %v2073 = vadd.f32 0.0, %v2072
    %v2074 = vpop.f32.mrb[0].mxu0
    %v2075 = vpop.f32.mrb[0].mxu0
    %v2076 = vpop.f32.mrb[0].mxu0
    %2077 = vdwg.mxu0
    %v2078 = vadd.f32 %v1927, %v2049
    %v2079 = vadd.f32 %v1928, %v2052
    %v2080 = vadd.f32 %v1929, %v2057
    %v2081 = vadd.f32 %v1930, %v2060
    %v2082 = vadd.f32 %v1931, %v2065
    %v2083 = vadd.f32 %v1932, %v2068
    %v2084 = vadd.f32 %v1933, %v2073
    %v2085 = vld [vmem:[%s753] sm:$0xc]
    %v2086 = vld [vmem:[%s753 + $0x18] sm:$0xf]
    %s2087 = scalar_lea.vmem [#allocation5], 768
    %v2088 = vld [vmem:[%s2087] sm:$0xf]
    %v2089 = vld [vmem:[%s2087 + $0x4] sm:$0xf]
    %v2090 = vld [vmem:[%s2087 + $0x8] sm:$0xf]
    %v2091 = vld [vmem:[%s2087 + $0xc] sm:$0xf]
    %v2092 = vld [vmem:[%s2087 + $0x10] sm:$0xf]
    %v2093 = vld [vmem:[%s2087 + $0x14] sm:$0xf]
    %v2094 = vld [vmem:[%s2087 + $0x18] sm:$0xf]
    %v2095 = vld [vmem:[%s2087 + $0x1c] sm:$0xf]
    %v2096 = vld [vmem:[%s2087 + $0x20] sm:$0xf]
    %v2097 = vld [vmem:[%s2087 + $0x24] sm:$0xf]
    %v2098 = vld [vmem:[%s2087 + $0x28] sm:$0xf]
    %v2099 = vld [vmem:[%s2087 + $0x2c] sm:$0xf]
    %v2100 = vld [vmem:[%s2087 + $0x30] sm:$0xf]
    %v2101 = vld [vmem:[%s2087 + $0x34] sm:$0xf]
    %v2102 = vld [vmem:[%s2087 + $0x38] sm:$0xf]
    %v2103 = vld [vmem:[%s2087 + $0x3c] sm:$0xf]
    %v2106 = vunpack.c.l.b16 %v2085
    %v2107 = vunpack.c.l.b16 %v2086
    %v2108 = vpack.c.b16 %v786, %v2106
    %v2109 = vpack.c.b16 %v2107, %v2107
    %v2111 = vshrl.u32 %v2108, 16
    %v2113 = vrot.slane %v2111, 2
    %v2114 = vshll.u32 %v2108, 16
    %v2116 = vrot.slane %v2114, 3
    %v2117 = vor.u32 %v2113, %v2116
    %v2118 = vrot.slane %v1118, 2
    %v2119 = vrot.slane %v1114, 3
    %v2120 = vor.u32 %v2118, %v2119
    %v2121 = vsel %vm1460, %v2117, %v2120
    %v2122 = vrot.slane %v1126, 2
    %v2123 = vrot.slane %v1122, 3
    %v2124 = vor.u32 %v2122, %v2123
    %v2125 = vsel %vm1460, %v2120, %v2124
    %v2127 = vshrl.u32 %v2109, 16
    %v2129 = vrot.slane %v2127, 2
    %v2130 = vshll.u32 %v2109, 16
    %v2132 = vrot.slane %v2130, 3
    %v2133 = vor.u32 %v2129, %v2132
    %v2134 = vsel %vm1460, %v2124, %v2133
    %v2155 = vunpack.c.l.b16 %v2088
    %v2156 = vunpack.c.l.b16 %v2089
    %v2157 = vunpack.c.l.b16 %v2090
    %v2158 = vunpack.c.l.b16 %v2091
    %v2159 = vunpack.c.l.b16 %v2092
    %v2160 = vunpack.c.l.b16 %v2093
    %v2161 = vunpack.c.l.b16 %v2094
    %v2162 = vunpack.c.l.b16 %v2095
    %v2163 = vunpack.c.l.b16 %v2096
    %v2164 = vunpack.c.l.b16 %v2097
    %v2165 = vunpack.c.l.b16 %v2098
    %v2166 = vunpack.c.l.b16 %v2099
    %v2167 = vunpack.c.l.b16 %v2100
    %v2168 = vunpack.c.l.b16 %v2101
    %v2169 = vunpack.c.l.b16 %v2102
    %v2170 = vunpack.c.l.b16 %v2103
    %v2171 = vpack.c.b16 %v2156, %v2155
    %v2172 = vpack.c.b16 %v2158, %v2157
    %v2173 = vpack.c.b16 %v2160, %v2159
    %v2174 = vpack.c.b16 %v2162, %v2161
    %v2175 = vpack.c.b16 %v2164, %v2163
    %v2176 = vpack.c.b16 %v2166, %v2165
    %v2177 = vpack.c.b16 %v2168, %v2167
    %v2178 = vpack.c.b16 %v2170, %v2169
    %2187 = vmatprep.subr.bf16.mxu0 0
    %2188 = vmatpush1.bf16.msra.mxu0 %v2171
    %2189 = vmatprep.subr.bf16.mxu0 0
    %2190 = vmatpush1.bf16.msra.mxu0 %v2172
    %2191 = vmatprep.subr.bf16.mxu0 0
    %2192 = vmatpush1.bf16.msra.mxu0 %v2173
    %2193 = vmatprep.subr.bf16.mxu0 0
    %2194 = vmatpush1.bf16.msra.mxu0 %v2174
    %2195 = vmatprep.subr.bf16.mxu0 0
    %2196 = vmatpush1.bf16.msra.mxu0 %v2175
    %2197 = vmatprep.subr.bf16.mxu0 0
    %2198 = vmatpush1.bf16.msra.mxu0 %v2176
    %2199 = vmatprep.subr.bf16.mxu0 0
    %2200 = vmatpush1.bf16.msra.mxu0 %v2177
    %2201 = vmatprep.subr.bf16.mxu0 0
    %2202 = vmatpush1.bf16.msra.mxu0 %v2178
    %2203 = vmatprep.subr.bf16.mxu0 0
    %2204 = vmatpush1.bf16.msra.mxu0 0
    %2205 = vmatprep.subr.bf16.mxu0 0
    %2206 = vmatpush1.bf16.msra.mxu0 0
    %2207 = vmatprep.subr.bf16.mxu0 0
    %2208 = vmatpush1.bf16.msra.mxu0 0
    %2209 = vmatprep.subr.bf16.mxu0 0
    %2210 = vmatpush1.bf16.msra.mxu0 0
    %2211 = vmatprep.subr.bf16.mxu0 0
    %2212 = vmatpush1.bf16.msra.mxu0 0
    %2213 = vmatprep.subr.bf16.mxu0 0
    %2214 = vmatpush1.bf16.msra.mxu0 0
    %2215 = vmatprep.subr.bf16.mxu0 0
    %2216 = vmatpush1.bf16.msra.mxu0 0
    %2217 = vmatprep.subr.bf16.mxu0 0
    %2218 = vmatpush1.bf16.msra.mxu0 0
    %2219 = vmatprep.mubr.bf16.mxu0 0
    %2220 = vmatmul.mubr.bf16.gmra.mrb[0].mxu0 %v2121
    %v2221 = vpop.f32.mrb[0].mxu0
    %v2222 = vadd.f32 0.0, %v2221
    %v2223 = vpop.f32.mrb[0].mxu0
    %v2224 = vpop.f32.mrb[0].mxu0
    %v2225 = vadd.f32 0.0, %v2224
    %v2226 = vpop.f32.mrb[0].mxu0
    %2227 = vmatprep.mubr.bf16.mxu0 0
    %2228 = vmatmul.mubr.bf16.gmra.mrb[0].mxu0 %v2125
    %v2229 = vpop.f32.mrb[0].mxu0
    %v2230 = vadd.f32 0.0, %v2229
    %v2231 = vpop.f32.mrb[0].mxu0
    %v2232 = vpop.f32.mrb[0].mxu0
    %v2233 = vadd.f32 0.0, %v2232
    %v2234 = vpop.f32.mrb[0].mxu0
    %2235 = vmatprep.mubr.bf16.mxu0 0
    %2236 = vmatmul.mubr.bf16.gmra.mrb[0].mxu0 %v2134
    %v2237 = vpop.f32.mrb[0].mxu0
    %v2238 = vadd.f32 0.0, %v2237
    %v2239 = vpop.f32.mrb[0].mxu0
    %v2240 = vpop.f32.mrb[0].mxu0
    %v2241 = vadd.f32 0.0, %v2240
    %v2242 = vpop.f32.mrb[0].mxu0
    %2243 = vmatprep.mubr.bf16.mxu0 0
    %2244 = vmatmul.mubr.bf16.gmra.mrb[0].mxu0 %v2133
    %v2245 = vpop.f32.mrb[0].mxu0
    %v2246 = vadd.f32 0.0, %v2245
    %v2247 = vpop.f32.mrb[0].mxu0
    %v2248 = vpop.f32.mrb[0].mxu0
    %v2249 = vpop.f32.mrb[0].mxu0
    %2250 = vdwg.mxu0
    %v2251 = vadd.f32 %v2078, %v2222
    %v2252 = vadd.f32 %v2079, %v2225
    %v2253 = vadd.f32 %v2080, %v2230
    %v2254 = vadd.f32 %v2081, %v2233
    %v2255 = vadd.f32 %v2082, %v2238
    %v2256 = vadd.f32 %v2083, %v2241
    %v2257 = vadd.f32 %v2084, %v2246
    %v2258 = vld [vmem:[%s919] sm:$0xc]
    %v2259 = vld [vmem:[%s919 + $0x18] sm:$0xf]
    %s2260 = scalar_lea.vmem [#allocation5], 832
    %v2261 = vld [vmem:[%s2260] sm:$0xf]
    %v2262 = vld [vmem:[%s2260 + $0x4] sm:$0xf]
    %v2263 = vld [vmem:[%s2260 + $0x8] sm:$0xf]
    %v2264 = vld [vmem:[%s2260 + $0xc] sm:$0xf]
    %v2265 = vld [vmem:[%s2260 + $0x10] sm:$0xf]
    %v2266 = vld [vmem:[%s2260 + $0x14] sm:$0xf]
    %v2267 = vld [vmem:[%s2260 + $0x18] sm:$0xf]
    %v2268 = vld [vmem:[%s2260 + $0x1c] sm:$0xf]
    %v2269 = vld [vmem:[%s2260 + $0x20] sm:$0xf]
    %v2270 = vld [vmem:[%s2260 + $0x24] sm:$0xf]
    %v2271 = vld [vmem:[%s2260 + $0x28] sm:$0xf]
    %v2272 = vld [vmem:[%s2260 + $0x2c] sm:$0xf]
    %v2273 = vld [vmem:[%s2260 + $0x30] sm:$0xf]
    %v2274 = vld [vmem:[%s2260 + $0x34] sm:$0xf]
    %v2275 = vld [vmem:[%s2260 + $0x38] sm:$0xf]
    %v2276 = vld [vmem:[%s2260 + $0x3c] sm:$0xf]
    %v2279 = vunpack.c.l.b16 %v2258
    %v2280 = vunpack.c.l.b16 %v2259
    %v2281 = vpack.c.b16 %v952, %v2279
    %v2282 = vpack.c.b16 %v2280, %v2280
    %v2284 = vshrl.u32 %v2281, 16
    %v2286 = vrot.slane %v2284, 2
    %v2287 = vshll.u32 %v2281, 16
    %v2289 = vrot.slane %v2287, 3
    %v2290 = vor.u32 %v2286, %v2289
    %v2291 = vrot.slane %v1293, 2
    %v2292 = vrot.slane %v1289, 3
    %v2293 = vor.u32 %v2291, %v2292
    %v2294 = vsel %vm1460, %v2290, %v2293
    %v2295 = vrot.slane %v1301, 2
    %v2296 = vrot.slane %v1297, 3
    %v2297 = vor.u32 %v2295, %v2296
    %v2298 = vsel %vm1460, %v2293, %v2297
    %v2300 = vshrl.u32 %v2282, 16
    %v2302 = vrot.slane %v2300, 2
    %v2303 = vshll.u32 %v2282, 16
    %v2305 = vrot.slane %v2303, 3
    %v2306 = vor.u32 %v2302, %v2305
    %v2307 = vsel %vm1460, %v2297, %v2306
    %v2328 = vunpack.c.l.b16 %v2261
    %v2329 = vunpack.c.l.b16 %v2262
    %v2330 = vunpack.c.l.b16 %v2263
    %v2331 = vunpack.c.l.b16 %v2264
    %v2332 = vunpack.c.l.b16 %v2265
    %v2333 = vunpack.c.l.b16 %v2266
    %v2334 = vunpack.c.l.b16 %v2267
    %v2335 = vunpack.c.l.b16 %v2268
    %v2336 = vunpack.c.l.b16 %v2269
    %v2337 = vunpack.c.l.b16 %v2270
    %v2338 = vunpack.c.l.b16 %v2271
    %v2339 = vunpack.c.l.b16 %v2272
    %v2340 = vunpack.c.l.b16 %v2273
    %v2341 = vunpack.c.l.b16 %v2274
    %v2342 = vunpack.c.l.b16 %v2275
    %v2343 = vunpack.c.l.b16 %v2276
    %v2344 = vpack.c.b16 %v2329, %v2328
    %v2345 = vpack.c.b16 %v2331, %v2330
    %v2346 = vpack.c.b16 %v2333, %v2332
    %v2347 = vpack.c.b16 %v2335, %v2334
    %v2348 = vpack.c.b16 %v2337, %v2336
    %v2349 = vpack.c.b16 %v2339, %v2338
    %v2350 = vpack.c.b16 %v2341, %v2340
    %v2351 = vpack.c.b16 %v2343, %v2342
    %2360 = vmatprep.subr.bf16.mxu0 0
    %2361 = vmatpush1.bf16.msra.mxu0 %v2344
    %2362 = vmatprep.subr.bf16.mxu0 0
    %2363 = vmatpush1.bf16.msra.mxu0 %v2345
    %2364 = vmatprep.subr.bf16.mxu0 0
    %2365 = vmatpush1.bf16.msra.mxu0 %v2346
    %2366 = vmatprep.subr.bf16.mxu0 0
    %2367 = vmatpush1.bf16.msra.mxu0 %v2347
    %2368 = vmatprep.subr.bf16.mxu0 0
    %2369 = vmatpush1.bf16.msra.mxu0 %v2348
    %2370 = vmatprep.subr.bf16.mxu0 0
    %2371 = vmatpush1.bf16.msra.mxu0 %v2349
    %2372 = vmatprep.subr.bf16.mxu0 0
    %2373 = vmatpush1.bf16.msra.mxu0 %v2350
    %2374 = vmatprep.subr.bf16.mxu0 0
    %2375 = vmatpush1.bf16.msra.mxu0 %v2351
    %2376 = vmatprep.subr.bf16.mxu0 0
    %2377 = vmatpush1.bf16.msra.mxu0 0
    %2378 = vmatprep.subr.bf16.mxu0 0
    %2379 = vmatpush1.bf16.msra.mxu0 0
    %2380 = vmatprep.subr.bf16.mxu0 0
    %2381 = vmatpush1.bf16.msra.mxu0 0
    %2382 = vmatprep.subr.bf16.mxu0 0
    %2383 = vmatpush1.bf16.msra.mxu0 0
    %2384 = vmatprep.subr.bf16.mxu0 0
    %2385 = vmatpush1.bf16.msra.mxu0 0
    %2386 = vmatprep.subr.bf16.mxu0 0
    %2387 = vmatpush1.bf16.msra.mxu0 0
    %2388 = vmatprep.subr.bf16.mxu0 0
    %2389 = vmatpush1.bf16.msra.mxu0 0
    %2390 = vmatprep.subr.bf16.mxu0 0
    %2391 = vmatpush1.bf16.msra.mxu0 0
    %2392 = vmatprep.mubr.bf16.mxu0 0
    %2393 = vmatmul.mubr.bf16.gmra.mrb[0].mxu0 %v2294
    %v2394 = vpop.f32.mrb[0].mxu0
    %v2395 = vadd.f32 0.0, %v2394
    %v2396 = vpop.f32.mrb[0].mxu0
    %v2397 = vpop.f32.mrb[0].mxu0
    %v2398 = vadd.f32 0.0, %v2397
    %v2399 = vpop.f32.mrb[0].mxu0
    %2400 = vmatprep.mubr.bf16.mxu0 0
    %2401 = vmatmul.mubr.bf16.gmra.mrb[0].mxu0 %v2298
    %v2402 = vpop.f32.mrb[0].mxu0
    %v2403 = vadd.f32 0.0, %v2402
    %v2404 = vpop.f32.mrb[0].mxu0
    %v2405 = vpop.f32.mrb[0].mxu0
    %v2406 = vadd.f32 0.0, %v2405
    %v2407 = vpop.f32.mrb[0].mxu0
    %2408 = vmatprep.mubr.bf16.mxu0 0
    %2409 = vmatmul.mubr.bf16.gmra.mrb[0].mxu0 %v2307
    %v2410 = vpop.f32.mrb[0].mxu0
    %v2411 = vadd.f32 0.0, %v2410
    %v2412 = vpop.f32.mrb[0].mxu0
    %v2413 = vpop.f32.mrb[0].mxu0
    %v2414 = vadd.f32 0.0, %v2413
    %v2415 = vpop.f32.mrb[0].mxu0
    %2416 = vmatprep.mubr.bf16.mxu0 0
    %2417 = vmatmul.mubr.bf16.gmra.mrb[0].mxu0 %v2306
    %v2418 = vpop.f32.mrb[0].mxu0
    %v2419 = vadd.f32 0.0, %v2418
    %v2420 = vpop.f32.mrb[0].mxu0
    %v2421 = vpop.f32.mrb[0].mxu0
    %v2422 = vpop.f32.mrb[0].mxu0
    %2423 = vdwg.mxu0
    %v2424 = vadd.f32 %v2251, %v2395
    %v2425 = vadd.f32 %v2252, %v2398
    %v2426 = vadd.f32 %v2253, %v2403
    %v2427 = vadd.f32 %v2254, %v2406
    %v2428 = vadd.f32 %v2255, %v2411
    %v2429 = vadd.f32 %v2256, %v2414
    %v2430 = vadd.f32 %v2257, %v2419
    %v2431 = vld [vmem:[%s753] sm:$0x8]
    %s2432 = scalar_lea.vmem [#allocation5], 896
    %v2433 = vld [vmem:[%s2432] sm:$0xf]
    %v2434 = vld [vmem:[%s2432 + $0x4] sm:$0xf]
    %v2435 = vld [vmem:[%s2432 + $0x8] sm:$0xf]
    %v2436 = vld [vmem:[%s2432 + $0xc] sm:$0xf]
    %v2437 = vld [vmem:[%s2432 + $0x10] sm:$0xf]
    %v2438 = vld [vmem:[%s2432 + $0x14] sm:$0xf]
    %v2439 = vld [vmem:[%s2432 + $0x18] sm:$0xf]
    %v2440 = vld [vmem:[%s2432 + $0x1c] sm:$0xf]
    %v2441 = vld [vmem:[%s2432 + $0x20] sm:$0xf]
    %v2442 = vld [vmem:[%s2432 + $0x24] sm:$0xf]
    %v2443 = vld [vmem:[%s2432 + $0x28] sm:$0xf]
    %v2444 = vld [vmem:[%s2432 + $0x2c] sm:$0xf]
    %v2445 = vld [vmem:[%s2432 + $0x30] sm:$0xf]
    %v2446 = vld [vmem:[%s2432 + $0x34] sm:$0xf]
    %v2447 = vld [vmem:[%s2432 + $0x38] sm:$0xf]
    %v2448 = vld [vmem:[%s2432 + $0x3c] sm:$0xf]
    %v2450 = vunpack.c.l.b16 %v2431
    %v2451 = vpack.c.b16 %v786, %v2450
    %v2452 = vrot.slane %v2451, 3
    %v2453 = vrot.slane %v793, 3
    %v2454 = vsel %vm1803, %v2452, %v2453
    %v2455 = vrot.slane %v794, 3
    %v2456 = vsel %vm1803, %v2453, %v2455
    %v2457 = vrot.slane %v2109, 3
    %v2458 = vsel %vm1803, %v2455, %v2457
    %v2479 = vunpack.c.l.b16 %v2433
    %v2480 = vunpack.c.l.b16 %v2434
    %v2481 = vunpack.c.l.b16 %v2435
    %v2482 = vunpack.c.l.b16 %v2436
    %v2483 = vunpack.c.l.b16 %v2437
    %v2484 = vunpack.c.l.b16 %v2438
    %v2485 = vunpack.c.l.b16 %v2439
    %v2486 = vunpack.c.l.b16 %v2440
    %v2487 = vunpack.c.l.b16 %v2441
    %v2488 = vunpack.c.l.b16 %v2442
    %v2489 = vunpack.c.l.b16 %v2443
    %v2490 = vunpack.c.l.b16 %v2444
    %v2491 = vunpack.c.l.b16 %v2445
    %v2492 = vunpack.c.l.b16 %v2446
    %v2493 = vunpack.c.l.b16 %v2447
    %v2494 = vunpack.c.l.b16 %v2448
    %v2495 = vpack.c.b16 %v2480, %v2479
    %v2496 = vpack.c.b16 %v2482, %v2481
    %v2497 = vpack.c.b16 %v2484, %v2483
    %v2498 = vpack.c.b16 %v2486, %v2485
    %v2499 = vpack.c.b16 %v2488, %v2487
    %v2500 = vpack.c.b16 %v2490, %v2489
    %v2501 = vpack.c.b16 %v2492, %v2491
    %v2502 = vpack.c.b16 %v2494, %v2493
    %2511 = vmatprep.subr.bf16.mxu0 0
    %2512 = vmatpush1.bf16.msra.mxu0 %v2495
    %2513 = vmatprep.subr.bf16.mxu0 0
    %2514 = vmatpush1.bf16.msra.mxu0 %v2496
    %2515 = vmatprep.subr.bf16.mxu0 0
    %2516 = vmatpush1.bf16.msra.mxu0 %v2497
    %2517 = vmatprep.subr.bf16.mxu0 0
    %2518 = vmatpush1.bf16.msra.mxu0 %v2498
    %2519 = vmatprep.subr.bf16.mxu0 0
    %2520 = vmatpush1.bf16.msra.mxu0 %v2499
    %2521 = vmatprep.subr.bf16.mxu0 0
    %2522 = vmatpush1.bf16.msra.mxu0 %v2500
    %2523 = vmatprep.subr.bf16.mxu0 0
    %2524 = vmatpush1.bf16.msra.mxu0 %v2501
    %2525 = vmatprep.subr.bf16.mxu0 0
    %2526 = vmatpush1.bf16.msra.mxu0 %v2502
    %2527 = vmatprep.subr.bf16.mxu0 0
    %2528 = vmatpush1.bf16.msra.mxu0 0
    %2529 = vmatprep.subr.bf16.mxu0 0
    %2530 = vmatpush1.bf16.msra.mxu0 0
    %2531 = vmatprep.subr.bf16.mxu0 0
    %2532 = vmatpush1.bf16.msra.mxu0 0
    %2533 = vmatprep.subr.bf16.mxu0 0
    %2534 = vmatpush1.bf16.msra.mxu0 0
    %2535 = vmatprep.subr.bf16.mxu0 0
    %2536 = vmatpush1.bf16.msra.mxu0 0
    %2537 = vmatprep.subr.bf16.mxu0 0
    %2538 = vmatpush1.bf16.msra.mxu0 0
    %2539 = vmatprep.subr.bf16.mxu0 0
    %2540 = vmatpush1.bf16.msra.mxu0 0
    %2541 = vmatprep.subr.bf16.mxu0 0
    %2542 = vmatpush1.bf16.msra.mxu0 0
    %2543 = vmatprep.mubr.bf16.mxu0 0
    %2544 = vmatmul.mubr.bf16.gmra.mrb[0].mxu0 %v2454
    %v2545 = vpop.f32.mrb[0].mxu0
    %v2546 = vadd.f32 0.0, %v2545
    %v2547 = vpop.f32.mrb[0].mxu0
    %v2548 = vpop.f32.mrb[0].mxu0
    %v2549 = vadd.f32 0.0, %v2548
    %v2550 = vpop.f32.mrb[0].mxu0
    %2551 = vmatprep.mubr.bf16.mxu0 0
    %2552 = vmatmul.mubr.bf16.gmra.mrb[0].mxu0 %v2456
    %v2553 = vpop.f32.mrb[0].mxu0
    %v2554 = vadd.f32 0.0, %v2553
    %v2555 = vpop.f32.mrb[0].mxu0
    %v2556 = vpop.f32.mrb[0].mxu0
    %v2557 = vadd.f32 0.0, %v2556
    %v2558 = vpop.f32.mrb[0].mxu0
    %2559 = vmatprep.mubr.bf16.mxu0 0
    %2560 = vmatmul.mubr.bf16.gmra.mrb[0].mxu0 %v2458
    %v2561 = vpop.f32.mrb[0].mxu0
    %v2562 = vadd.f32 0.0, %v2561
    %v2563 = vpop.f32.mrb[0].mxu0
    %v2564 = vpop.f32.mrb[0].mxu0
    %v2565 = vadd.f32 0.0, %v2564
    %v2566 = vpop.f32.mrb[0].mxu0
    %2567 = vmatprep.mubr.bf16.mxu0 0
    %2568 = vmatmul.mubr.bf16.gmra.mrb[0].mxu0 %v2457
    %v2569 = vpop.f32.mrb[0].mxu0
    %v2570 = vadd.f32 0.0, %v2569
    %v2571 = vpop.f32.mrb[0].mxu0
    %v2572 = vpop.f32.mrb[0].mxu0
    %v2573 = vpop.f32.mrb[0].mxu0
    %2574 = vdwg.mxu0
    %v2575 = vadd.f32 %v2424, %v2546
    %v2576 = vadd.f32 %v2425, %v2549
    %v2577 = vadd.f32 %v2426, %v2554
    %v2578 = vadd.f32 %v2427, %v2557
    %v2579 = vadd.f32 %v2428, %v2562
    %v2580 = vadd.f32 %v2429, %v2565
    %v2581 = vadd.f32 %v2430, %v2570
    %v2582 = vld [vmem:[%s919] sm:$0x8]
    %s2583 = scalar_lea.vmem [#allocation5], 960
    %v2584 = vld [vmem:[%s2583] sm:$0xf]
    %v2585 = vld [vmem:[%s2583 + $0x4] sm:$0xf]
    %v2586 = vld [vmem:[%s2583 + $0x8] sm:$0xf]
    %v2587 = vld [vmem:[%s2583 + $0xc] sm:$0xf]
    %v2588 = vld [vmem:[%s2583 + $0x10] sm:$0xf]
    %v2589 = vld [vmem:[%s2583 + $0x14] sm:$0xf]
    %v2590 = vld [vmem:[%s2583 + $0x18] sm:$0xf]
    %v2591 = vld [vmem:[%s2583 + $0x1c] sm:$0xf]
    %v2592 = vld [vmem:[%s2583 + $0x20] sm:$0xf]
    %v2593 = vld [vmem:[%s2583 + $0x24] sm:$0xf]
    %v2594 = vld [vmem:[%s2583 + $0x28] sm:$0xf]
    %v2595 = vld [vmem:[%s2583 + $0x2c] sm:$0xf]
    %v2596 = vld [vmem:[%s2583 + $0x30] sm:$0xf]
    %v2597 = vld [vmem:[%s2583 + $0x34] sm:$0xf]
    %v2598 = vld [vmem:[%s2583 + $0x38] sm:$0xf]
    %v2599 = vld [vmem:[%s2583 + $0x3c] sm:$0xf]
    %v2601 = vunpack.c.l.b16 %v2582
    %v2602 = vpack.c.b16 %v952, %v2601
    %v2603 = vrot.slane %v2602, 3
    %v2604 = vrot.slane %v959, 3
    %v2605 = vsel %vm1803, %v2603, %v2604
    %v2606 = vrot.slane %v960, 3
    %v2607 = vsel %vm1803, %v2604, %v2606
    %v2608 = vrot.slane %v2282, 3
    %v2609 = vsel %vm1803, %v2606, %v2608
    %v2630 = vunpack.c.l.b16 %v2584
    %v2631 = vunpack.c.l.b16 %v2585
    %v2632 = vunpack.c.l.b16 %v2586
    %v2633 = vunpack.c.l.b16 %v2587
    %v2634 = vunpack.c.l.b16 %v2588
    %v2635 = vunpack.c.l.b16 %v2589
    %v2636 = vunpack.c.l.b16 %v2590
    %v2637 = vunpack.c.l.b16 %v2591
    %v2638 = vunpack.c.l.b16 %v2592
    %v2639 = vunpack.c.l.b16 %v2593
    %v2640 = vunpack.c.l.b16 %v2594
    %v2641 = vunpack.c.l.b16 %v2595
    %v2642 = vunpack.c.l.b16 %v2596
    %v2643 = vunpack.c.l.b16 %v2597
    %v2644 = vunpack.c.l.b16 %v2598
    %v2645 = vunpack.c.l.b16 %v2599
    %v2646 = vpack.c.b16 %v2631, %v2630
    %v2647 = vpack.c.b16 %v2633, %v2632
    %v2648 = vpack.c.b16 %v2635, %v2634
    %v2649 = vpack.c.b16 %v2637, %v2636
    %v2650 = vpack.c.b16 %v2639, %v2638
    %v2651 = vpack.c.b16 %v2641, %v2640
    %v2652 = vpack.c.b16 %v2643, %v2642
    %v2653 = vpack.c.b16 %v2645, %v2644
    %2662 = vmatprep.subr.bf16.mxu0 0
    %2663 = vmatpush1.bf16.msra.mxu0 %v2646
    %2664 = vmatprep.subr.bf16.mxu0 0
    %2665 = vmatpush1.bf16.msra.mxu0 %v2647
    %2666 = vmatprep.subr.bf16.mxu0 0
    %2667 = vmatpush1.bf16.msra.mxu0 %v2648
    %2668 = vmatprep.subr.bf16.mxu0 0
    %2669 = vmatpush1.bf16.msra.mxu0 %v2649
    %2670 = vmatprep.subr.bf16.mxu0 0
    %2671 = vmatpush1.bf16.msra.mxu0 %v2650
    %2672 = vmatprep.subr.bf16.mxu0 0
    %2673 = vmatpush1.bf16.msra.mxu0 %v2651
    %2674 = vmatprep.subr.bf16.mxu0 0
    %2675 = vmatpush1.bf16.msra.mxu0 %v2652
    %2676 = vmatprep.subr.bf16.mxu0 0
    %2677 = vmatpush1.bf16.msra.mxu0 %v2653
    %2678 = vmatprep.subr.bf16.mxu0 0
    %2679 = vmatpush1.bf16.msra.mxu0 0
    %2680 = vmatprep.subr.bf16.mxu0 0
    %2681 = vmatpush1.bf16.msra.mxu0 0
    %2682 = vmatprep.subr.bf16.mxu0 0
    %2683 = vmatpush1.bf16.msra.mxu0 0
    %2684 = vmatprep.subr.bf16.mxu0 0
    %2685 = vmatpush1.bf16.msra.mxu0 0
    %2686 = vmatprep.subr.bf16.mxu0 0
    %2687 = vmatpush1.bf16.msra.mxu0 0
    %2688 = vmatprep.subr.bf16.mxu0 0
    %2689 = vmatpush1.bf16.msra.mxu0 0
    %2690 = vmatprep.subr.bf16.mxu0 0
    %2691 = vmatpush1.bf16.msra.mxu0 0
    %2692 = vmatprep.subr.bf16.mxu0 0
    %2693 = vmatpush1.bf16.msra.mxu0 0
    %2694 = vmatprep.mubr.bf16.mxu0 0
    %2695 = vmatmul.mubr.bf16.gmra.mrb[0].mxu0 %v2605
    %v2696 = vpop.f32.mrb[0].mxu0
    %v2697 = vadd.f32 0.0, %v2696
    %v2698 = vpop.f32.mrb[0].mxu0
    %v2699 = vpop.f32.mrb[0].mxu0
    %v2700 = vadd.f32 0.0, %v2699
    %v2701 = vpop.f32.mrb[0].mxu0
    %2702 = vmatprep.mubr.bf16.mxu0 0
    %2703 = vmatmul.mubr.bf16.gmra.mrb[0].mxu0 %v2607
    %v2704 = vpop.f32.mrb[0].mxu0
    %v2705 = vadd.f32 0.0, %v2704
    %v2706 = vpop.f32.mrb[0].mxu0
    %v2707 = vpop.f32.mrb[0].mxu0
    %v2708 = vadd.f32 0.0, %v2707
    %v2709 = vpop.f32.mrb[0].mxu0
    %2710 = vmatprep.mubr.bf16.mxu0 0
    %2711 = vmatmul.mubr.bf16.gmra.mrb[0].mxu0 %v2609
    %v2712 = vpop.f32.mrb[0].mxu0
    %v2713 = vadd.f32 0.0, %v2712
    %v2714 = vpop.f32.mrb[0].mxu0
    %v2715 = vpop.f32.mrb[0].mxu0
    %v2716 = vadd.f32 0.0, %v2715
    %v2717 = vpop.f32.mrb[0].mxu0
    %2718 = vmatprep.mubr.bf16.mxu0 0
    %2719 = vmatmul.mubr.bf16.gmra.mrb[0].mxu0 %v2608
    %v2720 = vpop.f32.mrb[0].mxu0
    %v2721 = vadd.f32 0.0, %v2720
    %v2722 = vpop.f32.mrb[0].mxu0
    %v2723 = vpop.f32.mrb[0].mxu0
    %v2724 = vpop.f32.mrb[0].mxu0
    %2725 = vdwg.mxu0
    %v2726 = vadd.f32 %v2575, %v2697
    %v2727 = vadd.f32 %v2576, %v2700
    %v2728 = vadd.f32 %v2577, %v2705
    %v2729 = vadd.f32 %v2578, %v2708
    %v2730 = vadd.f32 %v2579, %v2713
    %v2731 = vadd.f32 %v2580, %v2716
    %v2732 = vadd.f32 %v2581, %v2721
    %v2733 = vld [vmem:[#allocation7] sm:$0xff]
    %v2734 = vld [vmem:[#allocation7 + $0x8] sm:$0xff]
    %v2735 = vld [vmem:[#allocation7 + $0x10] sm:$0xff]
    %v2736 = vld [vmem:[#allocation7 + $0x18] sm:$0xff]
    %v2737 = vld [vmem:[#allocation7 + $0x20] sm:$0xff]
    %v2738 = vld [vmem:[#allocation7 + $0x28] sm:$0xff]
    %v2739 = vld [vmem:[#allocation7 + $0x30] sm:$0x3]
    %2741 = vset.pattern.permute.xlu0 0
    %2742 = vperm.xlu0 %2741, %v2733
    %v2743 = vpop.permute.xlu0 %2742
    %2746 = vset.pattern.permute.xlu0 0
    %2747 = vperm.xlu0 %2746, %v2734
    %v2748 = vpop.permute.xlu0 %2747
    %2751 = vset.pattern.permute.xlu0 0
    %2752 = vperm.xlu0 %2751, %v2735
    %v2753 = vpop.permute.xlu0 %2752
    %2756 = vset.pattern.permute.xlu0 0
    %2757 = vperm.xlu0 %2756, %v2736
    %v2758 = vpop.permute.xlu0 %2757
    %2761 = vset.pattern.permute.xlu0 0
    %2762 = vperm.xlu0 %2761, %v2737
    %v2763 = vpop.permute.xlu0 %2762
    %2766 = vset.pattern.permute.xlu0 0
    %2767 = vperm.xlu0 %2766, %v2738
    %v2768 = vpop.permute.xlu0 %2767
    %2771 = vset.pattern.permute.xlu0 0
    %2772 = vperm.xlu0 %2771, %v2739
    %v2773 = vpop.permute.xlu0 %2772
    %v2775 = vmul.f32 %v2726, %v2743
    %v2776 = vmul.f32 %v2727, %v2748
    %v2777 = vmul.f32 %v2728, %v2753
    %v2778 = vmul.f32 %v2729, %v2758
    %v2779 = vmul.f32 %v2730, %v2763
    %v2780 = vmul.f32 %v2731, %v2768
    %v2781 = vmul.f32 %v2732, %v2773
    %v2782 = vadd.f32 %v2775, %v2776
    %v2783 = vadd.f32 %v2782, %v2777
    %v2784 = vadd.f32 %v2783, %v2778
    %v2785 = vadd.f32 %v2784, %v2779
    %v2786 = vadd.f32 %v2785, %v2780
    %vm2787 = vcmask 1041408
    %v2788 = vsel %vm2787, %v2781, 0.0
    %v2789 = vadd.f32 %v2786, %v2788
    %v2790 = vrot.slane %v2789, 4
    %v2791 = vadd.f32 %v2789, %v2790
    %v2792 = vrot.slane %v2791, 2
    %v2793 = vadd.f32 %v2791, %v2792
    %v2794 = vrot.slane %v2793, 1
    %v2795 = vadd.f32 %v2793, %v2794
    %v2796 = vmul.f32 %v2795, 0.03125
    %v2797 = vsub.f32 %v2726, %v2796
    %v2798 = vsub.f32 %v2727, %v2796
    %v2799 = vsub.f32 %v2728, %v2796
    %v2800 = vsub.f32 %v2729, %v2796
    %v2801 = vsub.f32 %v2730, %v2796
    %v2802 = vsub.f32 %v2731, %v2796
    %v2803 = vsub.f32 %v2732, %v2796
    %v2804 = vmul.f32 %v2797, %v2743
    %v2805 = vmul.f32 %v2798, %v2748
    %v2806 = vmul.f32 %v2799, %v2753
    %v2807 = vmul.f32 %v2800, %v2758
    %v2808 = vmul.f32 %v2801, %v2763
    %v2809 = vmul.f32 %v2802, %v2768
    %v2810 = vmul.f32 %v2803, %v2773
    %v2811 = vmul.f32 %v2804, %v2804
    %v2812 = vmul.f32 %v2805, %v2805
    %v2813 = vmul.f32 %v2806, %v2806
    %v2814 = vmul.f32 %v2807, %v2807
    %v2815 = vmul.f32 %v2808, %v2808
    %v2816 = vmul.f32 %v2809, %v2809
    %v2817 = vmul.f32 %v2810, %v2810
    %v2818 = vadd.f32 %v2811, %v2812
    %v2819 = vadd.f32 %v2818, %v2813
    %v2820 = vadd.f32 %v2819, %v2814
    %v2821 = vadd.f32 %v2820, %v2815
    %v2822 = vadd.f32 %v2821, %v2816
    %v2823 = vsel %vm2787, %v2817, 0.0
    %v2824 = vadd.f32 %v2822, %v2823
    %v2825 = vrot.slane %v2824, 4
    %v2826 = vadd.f32 %v2824, %v2825
    %v2827 = vrot.slane %v2826, 2
    %v2828 = vadd.f32 %v2826, %v2827
    %v2829 = vrot.slane %v2828, 1
    %v2830 = vadd.f32 %v2828, %v2829
    %v2831 = vmul.f32 %v2830, 0.03125
    %v2832 = vadd.f32 %v2831, 1e-05
    %v2833 = vrsqrt.pop %v2832
    %v2834 = vmul.f32 %v2797, %v2833
    %v2835 = vmul.f32 %v2798, %v2833
    %v2836 = vmul.f32 %v2799, %v2833
    %v2837 = vmul.f32 %v2800, %v2833
    %v2838 = vmul.f32 %v2801, %v2833
    %v2839 = vmul.f32 %v2802, %v2833
    %v2840 = vmul.f32 %v2803, %v2833
    %v2841 = vld [vmem:[#allocation8] sm:$0x1]
    %v2843 = vlaneseq
    %v2844 = vshrl.u32 %v2843, 7
    %v2845 = vsub.s32 0, %v2844
    %v2846 = vrot.slane %v2841, %v2845
    %v2848 = vmul.f32 %v2834, %v2846
    %v2849 = vmul.f32 %v2835, %v2846
    %v2850 = vmul.f32 %v2836, %v2846
    %v2851 = vmul.f32 %v2837, %v2846
    %v2852 = vmul.f32 %v2838, %v2846
    %v2853 = vmul.f32 %v2839, %v2846
    %v2854 = vmul.f32 %v2840, %v2846
    %v2855 = vld [vmem:[#allocation10] sm:$0x1]
    %v2857 = vlaneseq
    %v2858 = vshrl.u32 %v2857, 7
    %v2859 = vsub.s32 0, %v2858
    %v2860 = vrot.slane %v2855, %v2859
    %v2862 = vadd.f32 %v2848, %v2860
    %v2863 = vadd.f32 %v2849, %v2860
    %v2864 = vadd.f32 %v2850, %v2860
    %v2865 = vadd.f32 %v2851, %v2860
    %v2866 = vadd.f32 %v2852, %v2860
    %v2867 = vadd.f32 %v2853, %v2860
    %v2868 = vadd.f32 %v2854, %v2860
    %vm2869 = vcmp.gt.f32.partialorder %v2862, 0.0
    %vm2870 = vcmp.gt.f32.partialorder %v2863, 0.0
    %vm2871 = vcmp.gt.f32.partialorder %v2864, 0.0
    %vm2872 = vcmp.gt.f32.partialorder %v2865, 0.0
    %vm2873 = vcmp.gt.f32.partialorder %v2866, 0.0
    %vm2874 = vcmp.gt.f32.partialorder %v2867, 0.0
    %vm2875 = vcmp.gt.f32.partialorder %v2868, 0.0
    %v2876 = vmul.f32 %v2862, 0.2
    %v2877 = vmul.f32 %v2863, 0.2
    %v2878 = vmul.f32 %v2864, 0.2
    %v2879 = vmul.f32 %v2865, 0.2
    %v2880 = vmul.f32 %v2866, 0.2
    %v2881 = vmul.f32 %v2867, 0.2
    %v2882 = vmul.f32 %v2868, 0.2
    %v2883 = vsel %vm2869, %v2862, %v2876
    %v2884 = vsel %vm2870, %v2863, %v2877
    %v2885 = vsel %vm2871, %v2864, %v2878
    %v2886 = vsel %vm2872, %v2865, %v2879
    %v2887 = vsel %vm2873, %v2866, %v2880
    %v2888 = vsel %vm2874, %v2867, %v2881
    %v2889 = vsel %vm2875, %v2868, %v2882
    %v2890 = vpack.c.bf16 %v2884, %v2883
    %v2891 = vpack.c.bf16 %v2886, %v2885
    %v2892 = vpack.c.bf16 %v2888, %v2887
    %v2893 = vpack.c.bf16 %v2889, %v2889
    %v2898 = vunpack.c.l.b16 %v2890
    %v2899 = vunpack.c.h.b16 %v2890
    %v2900 = vunpack.c.l.b16 %v2891
    %v2901 = vunpack.c.h.b16 %v2891
    %v2902 = vunpack.c.l.b16 %v2892
    %v2903 = vunpack.c.h.b16 %v2892
    %v2904 = vunpack.c.l.b16 %v2893
    %v2905 = vpack.c.b16 %v2898, %v2898
    %v2906 = vpack.c.b16 %v2899, %v2899
    %v2907 = vpack.c.b16 %v2900, %v2900
    %v2908 = vpack.c.b16 %v2901, %v2901
    %v2909 = vpack.c.b16 %v2902, %v2902
    %v2910 = vpack.c.b16 %v2903, %v2903
    %v2911 = vpack.c.b16 %v2904, %v2904
    %2919 = vst [vmem:[#allocation11] sm:$0xf] %v2905
    %2920 = vst [vmem:[#allocation11 + $0x4] sm:$0xf] %v2906
    %2921 = vst [vmem:[#allocation11 + $0x8] sm:$0xf] %v2907
    %2922 = vst [vmem:[#allocation11 + $0xc] sm:$0xf] %v2908
    %2923 = vst [vmem:[#allocation11 + $0x10] sm:$0xf] %v2909
    %2924 = vst [vmem:[#allocation11 + $0x14] sm:$0xf] %v2910
    %2925 = vst [vmem:[#allocation11 + $0x18] sm:$0x1] %v2911
    // Predicated region
    $region42: #{basic_discriminator_forward.6} parent=1 // pred_check
      _
    $region43: #{basic_discriminator_forward.6} parent=1 // pred_check_branch
      %2927 = sbr.rel (0) target = $region45
    $region44: #{basic_discriminator_forward.6} parent=1 // pred_region
      %s2929 = ssub.s32 448, 448
      %2930 = vsyncadd [#allocation4], %s2929
      %s2931 = sshll.u32 [#allocation11], 4
      %s2932 = int_to_ptr.vmem [resolvable:$true] %s2931
      %2937 = dma.vmem_to_hbm [thread:$0]  %s2932, 448, %s5, [#allocation4], 64, 64, 4
    $region45: #{basic_discriminator_forward.6} parent=1 // pred_fallthru
      _
    // Predicated region
    $region46: #{basic_discriminator_forward.6} parent=1 // pred_check
      _
    $region47: #{basic_discriminator_forward.6} parent=1 // pred_check_branch
      %2939 = sbr.rel (0) target = $region49
    $region48: #{basic_discriminator_forward.6} parent=1 // pred_region
      %2940 = dma.done [#allocation4], 448
    $region49: #{basic_discriminator_forward.6} parent=1 // pred_fallthru
      _
    %2941 = vsyncpa [#allocation3], 1
    %2942 = vsyncpa [#allocation6], 1
    %2943 = vsyncpa [#allocation9], 1
    %2944 = vsyncpa [#allocation4], 1

// kernel: basic_discriminator_forward.5
$region0: #{basic_discriminator_forward.5}
  #allocation0 [shape = 'u32[]', space=smem, size = 0x4, offset = 0x4, fixed_abs, tag = 'smem constant byte address 0x4 - core index']
  #allocation1 [shape = 'u32[144,128]{1,0:T(1,128)}', space=vmem, size = 0x12000, scoped, tag = 'internal scratch']
  %s0 = inlined_call_operand.hbm [shape: bf16[4,176,128], index: 0, kind: input, shape index: {}]
  %s1 = inlined_call_operand.hbm [shape: bf16[16,128,128], index: 1, kind: input, shape index: {}]
  %s2 = inlined_call_operand.hbm [shape: f32[162,1], index: 2, kind: input, shape index: {}]
  %s3 = inlined_call_operand.hbm [shape: f32[1,128], index: 3, kind: input, shape index: {}]
  %s4 = inlined_call_operand.hbm [shape: f32[1,128], index: 4, kind: input, shape index: {}]
  %s5 = inlined_call_operand.hbm [shape: bf16[162,128], index: 5, kind: output, shape index: {}]
  %s6 = sld [smem:[#allocation0]]
  $region50: #{basic_discriminator_forward.5} parent=0
    _
  %s8 = ssub.s32 1, %s6
  %s9 = scalar_select 0, %s8, %s6
  $region1: #{basic_discriminator_forward.5} parent=0
    #allocation2 [shape = 'u8[180224]{0}', space=vmem, size = 0x2c000, scoped, tag = 'input window, operand 0, single buffered']
    #allocation3 [shape = 's32[1]{0}', space=sflag, size = 0x4, scoped, tag = 'scoped memory for basic_discriminator_forward.5']
    #allocation4 [shape = 's32[1]{0}', space=sflag, size = 0x4, scoped, tag = 'scoped memory for basic_discriminator_forward.5']
    #allocation5 [shape = 'u8[524288]{0}', space=vmem, size = 0x80000, scoped, tag = 'input window, operand 1, single buffered']
    #allocation6 [shape = 's32[1]{0}', space=sflag, size = 0x4, scoped, tag = 'scoped memory for basic_discriminator_forward.5']
    #allocation7 [shape = 'u8[86016]{0}', space=vmem, size = 0x15000, scoped, tag = 'input window, operand 2, single buffered']
    #allocation8 [shape = 'u8[512]{0}', space=vmem, size = 0x400, scoped, tag = 'input window, operand 3, single buffered']
    #allocation9 [shape = 's32[1]{0}', space=sflag, size = 0x4, scoped, tag = 'scoped memory for basic_discriminator_forward.5']
    #allocation10 [shape = 'u8[512]{0}', space=vmem, size = 0x400, scoped, tag = 'input window, operand 4, single buffered']
    #allocation11 [shape = 'u8[43008]{0}', space=vmem, size = 0xa800, scoped, tag = 'output window, operand 0, single buffered']
    %10 = vsyncpa [#allocation3], 0
    %11 = vsyncpa [#allocation6], 0
    %12 = vsyncpa [#allocation9], 0
    %13 = vsyncpa [#allocation4], 0
    // Predicated region
    $region2: #{basic_discriminator_forward.5} parent=1 // pred_check
      _
    $region3: #{basic_discriminator_forward.5} parent=1 // pred_check_branch
      %15 = sbr.rel (0) target = $region5
    $region4: #{basic_discriminator_forward.5} parent=1 // pred_region
      %s17 = ssub.s32 5632, 5632
      %18 = vsyncadd [#allocation3], %s17
      %s19 = sshll.u32 [#allocation2], 4
      %s20 = int_to_ptr.vmem [resolvable:$true] %s19
      %25 = dma.hbm_to_vmem [thread:$0]  %s0, 5632, %s20, [#allocation3], 64, 64, 4
    $region5: #{basic_discriminator_forward.5} parent=1 // pred_fallthru
      _
    // Predicated region
    $region6: #{basic_discriminator_forward.5} parent=1 // pred_check
      _
    $region7: #{basic_discriminator_forward.5} parent=1 // pred_check_branch
      %27 = sbr.rel (0) target = $region9
    $region8: #{basic_discriminator_forward.5} parent=1 // pred_region
      %s29 = ssub.s32 16384, 16384
      %30 = vsyncadd [#allocation6], %s29
      %s31 = sshll.u32 [#allocation5], 4
      %s32 = int_to_ptr.vmem [resolvable:$true] %s31
      %37 = dma.hbm_to_vmem [thread:$0]  %s1, 16384, %s32, [#allocation6], 64, 64, 4
    $region9: #{basic_discriminator_forward.5} parent=1 // pred_fallthru
      _
    // Predicated region
    $region10: #{basic_discriminator_forward.5} parent=1 // pred_check
      _
    $region11: #{basic_discriminator_forward.5} parent=1 // pred_check_branch
      %39 = sbr.rel (0) target = $region13
    $region12: #{basic_discriminator_forward.5} parent=1 // pred_region
      %s41 = ssub.s32 2688, 2688
      %42 = vsyncadd [#allocation6], %s41
      %s43 = sshll.u32 [#allocation7], 4
      %s44 = int_to_ptr.vmem [resolvable:$true] %s43
      %49 = dma.hbm_to_vmem [thread:$0]  %s2, 2688, %s44, [#allocation6], 128, 128, 8
    $region13: #{basic_discriminator_forward.5} parent=1 // pred_fallthru
      _
    // Predicated region
    $region14: #{basic_discriminator_forward.5} parent=1 // pred_check
      _
    $region15: #{basic_discriminator_forward.5} parent=1 // pred_check_branch
      %51 = sbr.rel (0) target = $region17
    $region16: #{basic_discriminator_forward.5} parent=1 // pred_region
      %s53 = ssub.s32 16, 16
      %54 = vsyncadd [#allocation9], %s53
      %s56 = sshll.u32 [#allocation8], 4
      %s57 = int_to_ptr.vmem [resolvable:$true] %s56
      %59 = dma.hbm_to_vmem [thread:$0]  %s3, 16, %s57, [#allocation9]
    $region17: #{basic_discriminator_forward.5} parent=1 // pred_fallthru
      _
    // Predicated region
    $region18: #{basic_discriminator_forward.5} parent=1 // pred_check
      _
    $region19: #{basic_discriminator_forward.5} parent=1 // pred_check_branch
      %61 = sbr.rel (0) target = $region21
    $region20: #{basic_discriminator_forward.5} parent=1 // pred_region
      %s63 = ssub.s32 16, 16
      %64 = vsyncadd [#allocation9], %s63
      %s66 = sshll.u32 [#allocation10], 4
      %s67 = int_to_ptr.vmem [resolvable:$true] %s66
      %69 = dma.hbm_to_vmem [thread:$0]  %s4, 16, %s67, [#allocation9]
    $region21: #{basic_discriminator_forward.5} parent=1 // pred_fallthru
      _
    // Predicated region
    $region22: #{basic_discriminator_forward.5} parent=1 // pred_check
      _
    $region23: #{basic_discriminator_forward.5} parent=1 // pred_check_branch
      %71 = sbr.rel (0) target = $region25
    $region24: #{basic_discriminator_forward.5} parent=1 // pred_region
      %72 = dma.done [#allocation3], 5632
    $region25: #{basic_discriminator_forward.5} parent=1 // pred_fallthru
      _
    // Predicated region
    $region26: #{basic_discriminator_forward.5} parent=1 // pred_check
      _
    $region27: #{basic_discriminator_forward.5} parent=1 // pred_check_branch
      %74 = sbr.rel (0) target = $region29
    $region28: #{basic_discriminator_forward.5} parent=1 // pred_region
      %75 = dma.done [#allocation6], 16384
    $region29: #{basic_discriminator_forward.5} parent=1 // pred_fallthru
      _
    // Predicated region
    $region30: #{basic_discriminator_forward.5} parent=1 // pred_check
      _
    $region31: #{basic_discriminator_forward.5} parent=1 // pred_check_branch
      %77 = sbr.rel (0) target = $region33
    $region32: #{basic_discriminator_forward.5} parent=1 // pred_region
      %78 = dma.done [#allocation6], 2688
    $region33: #{basic_discriminator_forward.5} parent=1 // pred_fallthru
      _
    // Predicated region
    $region34: #{basic_discriminator_forward.5} parent=1 // pred_check
      _
    $region35: #{basic_discriminator_forward.5} parent=1 // pred_check_branch
      %80 = sbr.rel (0) target = $region37
    $region36: #{basic_discriminator_forward.5} parent=1 // pred_region
      %81 = dma.done [#allocation9], 16
    $region37: #{basic_discriminator_forward.5} parent=1 // pred_fallthru
      _
    // Predicated region
    $region38: #{basic_discriminator_forward.5} parent=1 // pred_check
      _
    $region39: #{basic_discriminator_forward.5} parent=1 // pred_check_branch
      %83 = sbr.rel (0) target = $region41
    $region40: #{basic_discriminator_forward.5} parent=1 // pred_region
      %84 = dma.done [#allocation9], 16
    $region41: #{basic_discriminator_forward.5} parent=1 // pred_fallthru
      _
    %v86 = vld [vmem:[#allocation2] sm:$0xf]
    %v87 = vld [vmem:[#allocation2 + $0x4] sm:$0xf]
    %v88 = vld [vmem:[#allocation2 + $0x8] sm:$0xf]
    %v89 = vld [vmem:[#allocation2 + $0xc] sm:$0xf]
    %v90 = vld [vmem:[#allocation2 + $0x10] sm:$0xf]
    %v91 = vld [vmem:[#allocation2 + $0x14] sm:$0xf]
    %v92 = vld [vmem:[#allocation2 + $0x18] sm:$0xf]
    %v93 = vld [vmem:[#allocation2 + $0x1c] sm:$0xf]
    %v94 = vld [vmem:[#allocation2 + $0x20] sm:$0xf]
    %v95 = vld [vmem:[#allocation2 + $0x24] sm:$0xf]
    %v96 = vld [vmem:[#allocation2 + $0x28] sm:$0xf]
    %v97 = vld [vmem:[#allocation2 + $0x2c] sm:$0xf]
    %v98 = vld [vmem:[#allocation2 + $0x30] sm:$0xf]
    %v99 = vld [vmem:[#allocation2 + $0x34] sm:$0xf]
    %v100 = vld [vmem:[#allocation2 + $0x38] sm:$0xf]
    %v101 = vld [vmem:[#allocation2 + $0x3c] sm:$0xf]
    %v102 = vld [vmem:[#allocation2 + $0x40] sm:$0xf]
    %v103 = vld [vmem:[#allocation2 + $0x44] sm:$0xf]
    %v104 = vld [vmem:[#allocation2 + $0x48] sm:$0xf]
    %v105 = vld [vmem:[#allocation2 + $0x4c] sm:$0xf]
    %v106 = vld [vmem:[#allocation2 + $0x50] sm:$0x1]
    %v107 = vld [vmem:[#allocation5] sm:$0xf]
    %v108 = vld [vmem:[#allocation5 + $0x4] sm:$0xf]
    %v109 = vld [vmem:[#allocation5 + $0x8] sm:$0xf]
    %v110 = vld [vmem:[#allocation5 + $0xc] sm:$0xf]
    %v111 = vld [vmem:[#allocation5 + $0x10] sm:$0xf]
    %v112 = vld [vmem:[#allocation5 + $0x14] sm:$0xf]
    %v113 = vld [vmem:[#allocation5 + $0x18] sm:$0xf]
    %v114 = vld [vmem:[#allocation5 + $0x1c] sm:$0xf]
    %v115 = vld [vmem:[#allocation5 + $0x20] sm:$0xf]
    %v116 = vld [vmem:[#allocation5 + $0x24] sm:$0xf]
    %v117 = vld [vmem:[#allocation5 + $0x28] sm:$0xf]
    %v118 = vld [vmem:[#allocation5 + $0x2c] sm:$0xf]
    %v119 = vld [vmem:[#allocation5 + $0x30] sm:$0xf]
    %v120 = vld [vmem:[#allocation5 + $0x34] sm:$0xf]
    %v121 = vld [vmem:[#allocation5 + $0x38] sm:$0xf]
    %v122 = vld [vmem:[#allocation5 + $0x3c] sm:$0xf]
    %s123 = scalar_lea.vmem [#allocation2], 88
    %v124 = vld [vmem:[%s123] sm:$0xf]
    %v125 = vld [vmem:[%s123 + $0x4] sm:$0xf]
    %v126 = vld [vmem:[%s123 + $0x8] sm:$0xf]
    %v127 = vld [vmem:[%s123 + $0xc] sm:$0xf]
    %v128 = vld [vmem:[%s123 + $0x10] sm:$0xf]
    %v129 = vld [vmem:[%s123 + $0x14] sm:$0xf]
    %v130 = vld [vmem:[%s123 + $0x18] sm:$0xf]
    %v131 = vld [vmem:[%s123 + $0x1c] sm:$0xf]
    %v132 = vld [vmem:[%s123 + $0x20] sm:$0xf]
    %v133 = vld [vmem:[%s123 + $0x24] sm:$0xf]
    %v134 = vld [vmem:[%s123 + $0x28] sm:$0xf]
    %v135 = vld [vmem:[%s123 + $0x2c] sm:$0xf]
    %v136 = vld [vmem:[%s123 + $0x30] sm:$0xf]
    %v137 = vld [vmem:[%s123 + $0x34] sm:$0xf]
    %v138 = vld [vmem:[%s123 + $0x38] sm:$0xf]
    %v139 = vld [vmem:[%s123 + $0x3c] sm:$0xf]
    %v140 = vld [vmem:[%s123 + $0x40] sm:$0xf]
    %v141 = vld [vmem:[%s123 + $0x44] sm:$0xf]
    %v142 = vld [vmem:[%s123 + $0x48] sm:$0xf]
    %v143 = vld [vmem:[%s123 + $0x4c] sm:$0xf]
    %v144 = vld [vmem:[%s123 + $0x50] sm:$0x1]
    %s145 = scalar_lea.vmem [#allocation5], 64
    %v146 = vld [vmem:[%s145] sm:$0xf]
    %v147 = vld [vmem:[%s145 + $0x4] sm:$0xf]
    %v148 = vld [vmem:[%s145 + $0x8] sm:$0xf]
    %v149 = vld [vmem:[%s145 + $0xc] sm:$0xf]
    %v150 = vld [vmem:[%s145 + $0x10] sm:$0xf]
    %v151 = vld [vmem:[%s145 + $0x14] sm:$0xf]
    %v152 = vld [vmem:[%s145 + $0x18] sm:$0xf]
    %v153 = vld [vmem:[%s145 + $0x1c] sm:$0xf]
    %v154 = vld [vmem:[%s145 + $0x20] sm:$0xf]
    %v155 = vld [vmem:[%s145 + $0x24] sm:$0xf]
    %v156 = vld [vmem:[%s145 + $0x28] sm:$0xf]
    %v157 = vld [vmem:[%s145 + $0x2c] sm:$0xf]
    %v158 = vld [vmem:[%s145 + $0x30] sm:$0xf]
    %v159 = vld [vmem:[%s145 + $0x34] sm:$0xf]
    %v160 = vld [vmem:[%s145 + $0x38] sm:$0xf]
    %v161 = vld [vmem:[%s145 + $0x3c] sm:$0xf]
    %v183 = vunpack.c.l.b16 %v124
    %v184 = vunpack.c.l.b16 %v125
    %v185 = vunpack.c.l.b16 %v126
    %v186 = vunpack.c.l.b16 %v127
    %v187 = vunpack.c.l.b16 %v128
    %v188 = vunpack.c.l.b16 %v129
    %v189 = vunpack.c.l.b16 %v130
    %v190 = vunpack.c.l.b16 %v131
    %v191 = vunpack.c.l.b16 %v132
    %v192 = vunpack.c.l.b16 %v133
    %v193 = vunpack.c.l.b16 %v134
    %v194 = vunpack.c.l.b16 %v135
    %v195 = vunpack.c.l.b16 %v136
    %v196 = vunpack.c.l.b16 %v137
    %v197 = vunpack.c.l.b16 %v138
    %v198 = vunpack.c.l.b16 %v139
    %v199 = vunpack.c.l.b16 %v140
    %v200 = vunpack.c.l.b16 %v141
    %v201 = vunpack.c.l.b16 %v142
    %v202 = vunpack.c.l.b16 %v143
    %v203 = vunpack.c.l.b16 %v144
    %v204 = vpack.c.b16 %v184, %v183
    %v205 = vpack.c.b16 %v186, %v185
    %v206 = vpack.c.b16 %v188, %v187
    %v207 = vpack.c.b16 %v190, %v189
    %v208 = vpack.c.b16 %v192, %v191
    %v209 = vpack.c.b16 %v194, %v193
    %v210 = vpack.c.b16 %v196, %v195
    %v211 = vpack.c.b16 %v198, %v197
    %v212 = vpack.c.b16 %v200, %v199
    %v213 = vpack.c.b16 %v202, %v201
    %v214 = vpack.c.b16 %v203, %v203
    %v242 = vunpack.c.l.b16 %v146
    %v243 = vunpack.c.l.b16 %v147
    %v244 = vunpack.c.l.b16 %v148
    %v245 = vunpack.c.l.b16 %v149
    %v246 = vunpack.c.l.b16 %v150
    %v247 = vunpack.c.l.b16 %v151
    %v248 = vunpack.c.l.b16 %v152
    %v249 = vunpack.c.l.b16 %v153
    %v250 = vunpack.c.l.b16 %v154
    %v251 = vunpack.c.l.b16 %v155
    %v252 = vunpack.c.l.b16 %v156
    %v253 = vunpack.c.l.b16 %v157
    %v254 = vunpack.c.l.b16 %v158
    %v255 = vunpack.c.l.b16 %v159
    %v256 = vunpack.c.l.b16 %v160
    %v257 = vunpack.c.l.b16 %v161
    %v258 = vpack.c.b16 %v243, %v242
    %v259 = vpack.c.b16 %v245, %v244
    %v260 = vpack.c.b16 %v247, %v246
    %v261 = vpack.c.b16 %v249, %v248
    %v262 = vpack.c.b16 %v251, %v250
    %v263 = vpack.c.b16 %v253, %v252
    %v264 = vpack.c.b16 %v255, %v254
    %v265 = vpack.c.b16 %v257, %v256
    %274 = vmatprep.subr.bf16.mxu0 0
    %275 = vmatpush1.bf16.msra.mxu0 %v258
    %276 = vmatprep.subr.bf16.mxu0 0
    %277 = vmatpush1.bf16.msra.mxu0 %v259
    %278 = vmatprep.subr.bf16.mxu0 0
    %279 = vmatpush1.bf16.msra.mxu0 %v260
    %280 = vmatprep.subr.bf16.mxu0 0
    %281 = vmatpush1.bf16.msra.mxu0 %v261
    %282 = vmatprep.subr.bf16.mxu0 0
    %283 = vmatpush1.bf16.msra.mxu0 %v262
    %284 = vmatprep.subr.bf16.mxu0 0
    %285 = vmatpush1.bf16.msra.mxu0 %v263
    %286 = vmatprep.subr.bf16.mxu0 0
    %287 = vmatpush1.bf16.msra.mxu0 %v264
    %288 = vmatprep.subr.bf16.mxu0 0
    %289 = vmatpush1.bf16.msra.mxu0 %v265
    %290 = vmatprep.subr.bf16.mxu0 0
    %291 = vmatpush1.bf16.msra.mxu0 0
    %292 = vmatprep.subr.bf16.mxu0 0
    %293 = vmatpush1.bf16.msra.mxu0 0
    %294 = vmatprep.subr.bf16.mxu0 0
    %295 = vmatpush1.bf16.msra.mxu0 0
    %296 = vmatprep.subr.bf16.mxu0 0
    %297 = vmatpush1.bf16.msra.mxu0 0
    %298 = vmatprep.subr.bf16.mxu0 0
    %299 = vmatpush1.bf16.msra.mxu0 0
    %300 = vmatprep.subr.bf16.mxu0 0
    %301 = vmatpush1.bf16.msra.mxu0 0
    %302 = vmatprep.subr.bf16.mxu0 0
    %303 = vmatpush1.bf16.msra.mxu0 0
    %304 = vmatprep.subr.bf16.mxu0 0
    %305 = vmatpush1.bf16.msra.mxu0 0
    %306 = vmatprep.mubr.bf16.mxu0 0
    %307 = vmatmul.mubr.bf16.gmra.mrb[0].mxu0 %v204
    %v308 = vpop.f32.mrb[0].mxu0
    %v309 = vadd.f32 0.0, %v308
    %v310 = vpop.f32.mrb[0].mxu0
    %v311 = vpop.f32.mrb[0].mxu0
    %v312 = vadd.f32 0.0, %v311
    %v313 = vpop.f32.mrb[0].mxu0
    %314 = vmatprep.mubr.bf16.mxu0 0
    %315 = vmatmul.mubr.bf16.gmra.mrb[0].mxu0 %v205
    %v316 = vpop.f32.mrb[0].mxu0
    %v317 = vadd.f32 0.0, %v316
    %v318 = vpop.f32.mrb[0].mxu0
    %v319 = vpop.f32.mrb[0].mxu0
    %v320 = vadd.f32 0.0, %v319
    %v321 = vpop.f32.mrb[0].mxu0
    %322 = vmatprep.mubr.bf16.mxu0 0
    %323 = vmatmul.mubr.bf16.gmra.mrb[0].mxu0 %v206
    %v324 = vpop.f32.mrb[0].mxu0
    %v325 = vadd.f32 0.0, %v324
    %v326 = vpop.f32.mrb[0].mxu0
    %v327 = vpop.f32.mrb[0].mxu0
    %v328 = vadd.f32 0.0, %v327
    %v329 = vpop.f32.mrb[0].mxu0
    %330 = vmatprep.mubr.bf16.mxu0 0
    %331 = vmatmul.mubr.bf16.gmra.mrb[0].mxu0 %v207
    %v332 = vpop.f32.mrb[0].mxu0
    %v333 = vadd.f32 0.0, %v332
    %v334 = vpop.f32.mrb[0].mxu0
    %v335 = vpop.f32.mrb[0].mxu0
    %v336 = vadd.f32 0.0, %v335
    %v337 = vpop.f32.mrb[0].mxu0
    %338 = vmatprep.mubr.bf16.mxu0 0
    %339 = vmatmul.mubr.bf16.gmra.mrb[0].mxu0 %v208
    %v340 = vpop.f32.mrb[0].mxu0
    %v341 = vadd.f32 0.0, %v340
    %v342 = vpop.f32.mrb[0].mxu0
    %v343 = vpop.f32.mrb[0].mxu0
    %v344 = vadd.f32 0.0, %v343
    %v345 = vpop.f32.mrb[0].mxu0
    %346 = vmatprep.mubr.bf16.mxu0 0
    %347 = vmatmul.mubr.bf16.gmra.mrb[0].mxu0 %v209
    %v348 = vpop.f32.mrb[0].mxu0
    %v349 = vadd.f32 0.0, %v348
    %v350 = vpop.f32.mrb[0].mxu0
    %v351 = vpop.f32.mrb[0].mxu0
    %v352 = vadd.f32 0.0, %v351
    %v353 = vpop.f32.mrb[0].mxu0
    %354 = vmatprep.mubr.bf16.mxu0 0
    %355 = vmatmul.mubr.bf16.gmra.mrb[0].mxu0 %v210
    %v356 = vpop.f32.mrb[0].mxu0
    %v357 = vadd.f32 0.0, %v356
    %v358 = vpop.f32.mrb[0].mxu0
    %v359 = vpop.f32.mrb[0].mxu0
    %v360 = vadd.f32 0.0, %v359
    %v361 = vpop.f32.mrb[0].mxu0
    %362 = vmatprep.mubr.bf16.mxu0 0
    %363 = vmatmul.mubr.bf16.gmra.mrb[0].mxu0 %v211
    %v364 = vpop.f32.mrb[0].mxu0
    %v365 = vadd.f32 0.0, %v364
    %v366 = vpop.f32.mrb[0].mxu0
    %v367 = vpop.f32.mrb[0].mxu0
    %v368 = vadd.f32 0.0, %v367
    %v369 = vpop.f32.mrb[0].mxu0
    %370 = vmatprep.mubr.bf16.mxu0 0
    %371 = vmatmul.mubr.bf16.gmra.mrb[0].mxu0 %v212
    %v372 = vpop.f32.mrb[0].mxu0
    %v373 = vadd.f32 0.0, %v372
    %v374 = vpop.f32.mrb[0].mxu0
    %v375 = vpop.f32.mrb[0].mxu0
    %v376 = vadd.f32 0.0, %v375
    %v377 = vpop.f32.mrb[0].mxu0
    %378 = vmatprep.mubr.bf16.mxu0 0
    %379 = vmatmul.mubr.bf16.gmra.mrb[0].mxu0 %v213
    %v380 = vpop.f32.mrb[0].mxu0
    %v381 = vadd.f32 0.0, %v380
    %v382 = vpop.f32.mrb[0].mxu0
    %v383 = vpop.f32.mrb[0].mxu0
    %v384 = vadd.f32 0.0, %v383
    %v385 = vpop.f32.mrb[0].mxu0
    %386 = vmatprep.mubr.bf16.mxu0 0
    %387 = vmatmul.mubr.bf16.gmra.mrb[0].mxu0 %v214
    %v388 = vpop.f32.mrb[0].mxu0
    %v389 = vadd.f32 0.0, %v388
    %v390 = vpop.f32.mrb[0].mxu0
    %v391 = vpop.f32.mrb[0].mxu0
    %v392 = vpop.f32.mrb[0].mxu0
    %393 = vdwg.mxu0
    %v415 = vunpack.c.l.b16 %v86
    %v416 = vunpack.c.l.b16 %v87
    %v417 = vunpack.c.l.b16 %v88
    %v418 = vunpack.c.l.b16 %v89
    %v419 = vunpack.c.l.b16 %v90
    %v420 = vunpack.c.l.b16 %v91
    %v421 = vunpack.c.l.b16 %v92
    %v422 = vunpack.c.l.b16 %v93
    %v423 = vunpack.c.l.b16 %v94
    %v424 = vunpack.c.l.b16 %v95
    %v425 = vunpack.c.l.b16 %v96
    %v426 = vunpack.c.l.b16 %v97
    %v427 = vunpack.c.l.b16 %v98
    %v428 = vunpack.c.l.b16 %v99
    %v429 = vunpack.c.l.b16 %v100
    %v430 = vunpack.c.l.b16 %v101
    %v431 = vunpack.c.l.b16 %v102
    %v432 = vunpack.c.l.b16 %v103
    %v433 = vunpack.c.l.b16 %v104
    %v434 = vunpack.c.l.b16 %v105
    %v435 = vunpack.c.l.b16 %v106
    %v436 = vpack.c.b16 %v416, %v415
    %v437 = vpack.c.b16 %v418, %v417
    %v438 = vpack.c.b16 %v420, %v419
    %v439 = vpack.c.b16 %v422, %v421
    %v440 = vpack.c.b16 %v424, %v423
    %v441 = vpack.c.b16 %v426, %v425
    %v442 = vpack.c.b16 %v428, %v427
    %v443 = vpack.c.b16 %v430, %v429
    %v444 = vpack.c.b16 %v432, %v431
    %v445 = vpack.c.b16 %v434, %v433
    %v446 = vpack.c.b16 %v435, %v435
    %v474 = vunpack.c.l.b16 %v107
    %v475 = vunpack.c.l.b16 %v108
    %v476 = vunpack.c.l.b16 %v109
    %v477 = vunpack.c.l.b16 %v110
    %v478 = vunpack.c.l.b16 %v111
    %v479 = vunpack.c.l.b16 %v112
    %v480 = vunpack.c.l.b16 %v113
    %v481 = vunpack.c.l.b16 %v114
    %v482 = vunpack.c.l.b16 %v115
    %v483 = vunpack.c.l.b16 %v116
    %v484 = vunpack.c.l.b16 %v117
    %v485 = vunpack.c.l.b16 %v118
    %v486 = vunpack.c.l.b16 %v119
    %v487 = vunpack.c.l.b16 %v120
    %v488 = vunpack.c.l.b16 %v121
    %v489 = vunpack.c.l.b16 %v122
    %v490 = vpack.c.b16 %v475, %v474
    %v491 = vpack.c.b16 %v477, %v476
    %v492 = vpack.c.b16 %v479, %v478
    %v493 = vpack.c.b16 %v481, %v480
    %v494 = vpack.c.b16 %v483, %v482
    %v495 = vpack.c.b16 %v485, %v484
    %v496 = vpack.c.b16 %v487, %v486
    %v497 = vpack.c.b16 %v489, %v488
    %506 = vmatprep.subr.bf16.mxu0 0
    %507 = vmatpush1.bf16.msra.mxu0 %v490
    %508 = vmatprep.subr.bf16.mxu0 0
    %509 = vmatpush1.bf16.msra.mxu0 %v491
    %510 = vmatprep.subr.bf16.mxu0 0
    %511 = vmatpush1.bf16.msra.mxu0 %v492
    %512 = vmatprep.subr.bf16.mxu0 0
    %513 = vmatpush1.bf16.msra.mxu0 %v493
    %514 = vmatprep.subr.bf16.mxu0 0
    %515 = vmatpush1.bf16.msra.mxu0 %v494
    %516 = vmatprep.subr.bf16.mxu0 0
    %517 = vmatpush1.bf16.msra.mxu0 %v495
    %518 = vmatprep.subr.bf16.mxu0 0
    %519 = vmatpush1.bf16.msra.mxu0 %v496
    %520 = vmatprep.subr.bf16.mxu0 0
    %521 = vmatpush1.bf16.msra.mxu0 %v497
    %522 = vmatprep.subr.bf16.mxu0 0
    %523 = vmatpush1.bf16.msra.mxu0 0
    %524 = vmatprep.subr.bf16.mxu0 0
    %525 = vmatpush1.bf16.msra.mxu0 0
    %526 = vmatprep.subr.bf16.mxu0 0
    %527 = vmatpush1.bf16.msra.mxu0 0
    %528 = vmatprep.subr.bf16.mxu0 0
    %529 = vmatpush1.bf16.msra.mxu0 0
    %530 = vmatprep.subr.bf16.mxu0 0
    %531 = vmatpush1.bf16.msra.mxu0 0
    %532 = vmatprep.subr.bf16.mxu0 0
    %533 = vmatpush1.bf16.msra.mxu0 0
    %534 = vmatprep.subr.bf16.mxu0 0
    %535 = vmatpush1.bf16.msra.mxu0 0
    %536 = vmatprep.subr.bf16.mxu0 0
    %537 = vmatpush1.bf16.msra.mxu0 0
    %538 = vmatprep.mubr.bf16.mxu0 0
    %539 = vmatmul.mubr.bf16.gmra.mrb[0].mxu0 %v436
    %v540 = vpop.f32.mrb[0].mxu0
    %v541 = vadd.f32 %v309, %v540
    %v542 = vpop.f32.mrb[0].mxu0
    %v543 = vpop.f32.mrb[0].mxu0
    %v544 = vadd.f32 %v312, %v543
    %v545 = vpop.f32.mrb[0].mxu0
    %546 = vmatprep.mubr.bf16.mxu0 0
    %547 = vmatmul.mubr.bf16.gmra.mrb[0].mxu0 %v437
    %v548 = vpop.f32.mrb[0].mxu0
    %v549 = vadd.f32 %v317, %v548
    %v550 = vpop.f32.mrb[0].mxu0
    %v551 = vpop.f32.mrb[0].mxu0
    %v552 = vadd.f32 %v320, %v551
    %v553 = vpop.f32.mrb[0].mxu0
    %554 = vmatprep.mubr.bf16.mxu0 0
    %555 = vmatmul.mubr.bf16.gmra.mrb[0].mxu0 %v438
    %v556 = vpop.f32.mrb[0].mxu0
    %v557 = vadd.f32 %v325, %v556
    %v558 = vpop.f32.mrb[0].mxu0
    %v559 = vpop.f32.mrb[0].mxu0
    %v560 = vadd.f32 %v328, %v559
    %v561 = vpop.f32.mrb[0].mxu0
    %562 = vmatprep.mubr.bf16.mxu0 0
    %563 = vmatmul.mubr.bf16.gmra.mrb[0].mxu0 %v439
    %v564 = vpop.f32.mrb[0].mxu0
    %v565 = vadd.f32 %v333, %v564
    %v566 = vpop.f32.mrb[0].mxu0
    %v567 = vpop.f32.mrb[0].mxu0
    %v568 = vadd.f32 %v336, %v567
    %v569 = vpop.f32.mrb[0].mxu0
    %570 = vmatprep.mubr.bf16.mxu0 0
    %571 = vmatmul.mubr.bf16.gmra.mrb[0].mxu0 %v440
    %v572 = vpop.f32.mrb[0].mxu0
    %v573 = vadd.f32 %v341, %v572
    %v574 = vpop.f32.mrb[0].mxu0
    %v575 = vpop.f32.mrb[0].mxu0
    %v576 = vadd.f32 %v344, %v575
    %v577 = vpop.f32.mrb[0].mxu0
    %578 = vmatprep.mubr.bf16.mxu0 0
    %579 = vmatmul.mubr.bf16.gmra.mrb[0].mxu0 %v441
    %v580 = vpop.f32.mrb[0].mxu0
    %v581 = vadd.f32 %v349, %v580
    %v582 = vpop.f32.mrb[0].mxu0
    %v583 = vpop.f32.mrb[0].mxu0
    %v584 = vadd.f32 %v352, %v583
    %v585 = vpop.f32.mrb[0].mxu0
    %586 = vmatprep.mubr.bf16.mxu0 0
    %587 = vmatmul.mubr.bf16.gmra.mrb[0].mxu0 %v442
    %v588 = vpop.f32.mrb[0].mxu0
    %v589 = vadd.f32 %v357, %v588
    %v590 = vpop.f32.mrb[0].mxu0
    %v591 = vpop.f32.mrb[0].mxu0
    %v592 = vadd.f32 %v360, %v591
    %v593 = vpop.f32.mrb[0].mxu0
    %594 = vmatprep.mubr.bf16.mxu0 0
    %595 = vmatmul.mubr.bf16.gmra.mrb[0].mxu0 %v443
    %v596 = vpop.f32.mrb[0].mxu0
    %v597 = vadd.f32 %v365, %v596
    %v598 = vpop.f32.mrb[0].mxu0
    %v599 = vpop.f32.mrb[0].mxu0
    %v600 = vadd.f32 %v368, %v599
    %v601 = vpop.f32.mrb[0].mxu0
    %602 = vmatprep.mubr.bf16.mxu0 0
    %603 = vmatmul.mubr.bf16.gmra.mrb[0].mxu0 %v444
    %v604 = vpop.f32.mrb[0].mxu0
    %v605 = vadd.f32 %v373, %v604
    %v606 = vpop.f32.mrb[0].mxu0
    %v607 = vpop.f32.mrb[0].mxu0
    %v608 = vadd.f32 %v376, %v607
    %v609 = vpop.f32.mrb[0].mxu0
    %610 = vmatprep.mubr.bf16.mxu0 0
    %611 = vmatmul.mubr.bf16.gmra.mrb[0].mxu0 %v445
    %v612 = vpop.f32.mrb[0].mxu0
    %v613 = vadd.f32 %v381, %v612
    %v614 = vpop.f32.mrb[0].mxu0
    %v615 = vpop.f32.mrb[0].mxu0
    %v616 = vadd.f32 %v384, %v615
    %v617 = vpop.f32.mrb[0].mxu0
    %618 = vmatprep.mubr.bf16.mxu0 0
    %619 = vmatmul.mubr.bf16.gmra.mrb[0].mxu0 %v446
    %v620 = vpop.f32.mrb[0].mxu0
    %v621 = vadd.f32 %v389, %v620
    %v622 = vpop.f32.mrb[0].mxu0
    %v623 = vpop.f32.mrb[0].mxu0
    %v624 = vpop.f32.mrb[0].mxu0
    %625 = vdwg.mxu0
    %v626 = vld [vmem:[#allocation2 + $0x50] sm:$0x3]
    %s627 = scalar_lea.vmem [#allocation5], 128
    %v628 = vld [vmem:[%s627] sm:$0xf]
    %v629 = vld [vmem:[%s627 + $0x4] sm:$0xf]
    %v630 = vld [vmem:[%s627 + $0x8] sm:$0xf]
    %v631 = vld [vmem:[%s627 + $0xc] sm:$0xf]
    %v632 = vld [vmem:[%s627 + $0x10] sm:$0xf]
    %v633 = vld [vmem:[%s627 + $0x14] sm:$0xf]
    %v634 = vld [vmem:[%s627 + $0x18] sm:$0xf]
    %v635 = vld [vmem:[%s627 + $0x1c] sm:$0xf]
    %v636 = vld [vmem:[%s627 + $0x20] sm:$0xf]
    %v637 = vld [vmem:[%s627 + $0x24] sm:$0xf]
    %v638 = vld [vmem:[%s627 + $0x28] sm:$0xf]
    %v639 = vld [vmem:[%s627 + $0x2c] sm:$0xf]
    %v640 = vld [vmem:[%s627 + $0x30] sm:$0xf]
    %v641 = vld [vmem:[%s627 + $0x34] sm:$0xf]
    %v642 = vld [vmem:[%s627 + $0x38] sm:$0xf]
    %v643 = vld [vmem:[%s627 + $0x3c] sm:$0xf]
    %v645 = vunpack.c.l.b16 %v626
    %v646 = vpack.c.b16 %v645, %v645
    %vm647 = vsmask.f32 7424
    %v649 = vshrl.u32 %v436, 16
    %v651 = vshll.u32 %v436, 16
    %v653 = vrot.slane %v651, 1
    %v654 = vor.u32 %v649, %v653
    %v656 = vshll.u32 %v437, 16
    %v658 = vrot.slane %v656, 1
    %v659 = vsel %vm647, %v654, %v658
    %v660 = vshrl.u32 %v437, 16
    %v662 = vor.u32 %v660, %v658
    %v664 = vshll.u32 %v438, 16
    %v666 = vrot.slane %v664, 1
    %v667 = vsel %vm647, %v662, %v666
    %v668 = vshrl.u32 %v438, 16
    %v670 = vor.u32 %v668, %v666
    %v672 = vshll.u32 %v439, 16
    %v674 = vrot.slane %v672, 1
    %v675 = vsel %vm647, %v670, %v674
    %v676 = vshrl.u32 %v439, 16
    %v678 = vor.u32 %v676, %v674
    %v680 = vshll.u32 %v440, 16
    %v682 = vrot.slane %v680, 1
    %v683 = vsel %vm647, %v678, %v682
    %v684 = vshrl.u32 %v440, 16
    %v686 = vor.u32 %v684, %v682
    %v688 = vshll.u32 %v441, 16
    %v690 = vrot.slane %v688, 1
    %v691 = vsel %vm647, %v686, %v690
    %v692 = vshrl.u32 %v441, 16
    %v694 = vor.u32 %v692, %v690
    %v696 = vshll.u32 %v442, 16
    %v698 = vrot.slane %v696, 1
    %v699 = vsel %vm647, %v694, %v698
    %v700 = vshrl.u32 %v442, 16
    %v702 = vor.u32 %v700, %v698
    %v704 = vshll.u32 %v443, 16
    %v706 = vrot.slane %v704, 1
    %v707 = vsel %vm647, %v702, %v706
    %v708 = vshrl.u32 %v443, 16
    %v710 = vor.u32 %v708, %v706
    %v712 = vshll.u32 %v444, 16
    %v714 = vrot.slane %v712, 1
    %v715 = vsel %vm647, %v710, %v714
    %v716 = vshrl.u32 %v444, 16
    %v718 = vor.u32 %v716, %v714
    %v720 = vshll.u32 %v445, 16
    %v722 = vrot.slane %v720, 1
    %v723 = vsel %vm647, %v718, %v722
    %v724 = vshrl.u32 %v445, 16
    %v726 = vor.u32 %v724, %v722
    %v728 = vshll.u32 %v646, 16
    %v730 = vrot.slane %v728, 1
    %v731 = vsel %vm647, %v726, %v730
    %v732 = vshrl.u32 %v646, 16
    %v734 = vor.u32 %v732, %v730
    %v762 = vunpack.c.l.b16 %v628
    %v763 = vunpack.c.l.b16 %v629
    %v764 = vunpack.c.l.b16 %v630
    %v765 = vunpack.c.l.b16 %v631
    %v766 = vunpack.c.l.b16 %v632
    %v767 = vunpack.c.l.b16 %v633
    %v768 = vunpack.c.l.b16 %v634
    %v769 = vunpack.c.l.b16 %v635
    %v770 = vunpack.c.l.b16 %v636
    %v771 = vunpack.c.l.b16 %v637
    %v772 = vunpack.c.l.b16 %v638
    %v773 = vunpack.c.l.b16 %v639
    %v774 = vunpack.c.l.b16 %v640
    %v775 = vunpack.c.l.b16 %v641
    %v776 = vunpack.c.l.b16 %v642
    %v777 = vunpack.c.l.b16 %v643
    %v778 = vpack.c.b16 %v763, %v762
    %v779 = vpack.c.b16 %v765, %v764
    %v780 = vpack.c.b16 %v767, %v766
    %v781 = vpack.c.b16 %v769, %v768
    %v782 = vpack.c.b16 %v771, %v770
    %v783 = vpack.c.b16 %v773, %v772
    %v784 = vpack.c.b16 %v775, %v774
    %v785 = vpack.c.b16 %v777, %v776
    %794 = vmatprep.subr.bf16.mxu0 0
    %795 = vmatpush1.bf16.msra.mxu0 %v778
    %796 = vmatprep.subr.bf16.mxu0 0
    %797 = vmatpush1.bf16.msra.mxu0 %v779
    %798 = vmatprep.subr.bf16.mxu0 0
    %799 = vmatpush1.bf16.msra.mxu0 %v780
    %800 = vmatprep.subr.bf16.mxu0 0
    %801 = vmatpush1.bf16.msra.mxu0 %v781
    %802 = vmatprep.subr.bf16.mxu0 0
    %803 = vmatpush1.bf16.msra.mxu0 %v782
    %804 = vmatprep.subr.bf16.mxu0 0
    %805 = vmatpush1.bf16.msra.mxu0 %v783
    %806 = vmatprep.subr.bf16.mxu0 0
    %807 = vmatpush1.bf16.msra.mxu0 %v784
    %808 = vmatprep.subr.bf16.mxu0 0
    %809 = vmatpush1.bf16.msra.mxu0 %v785
    %810 = vmatprep.subr.bf16.mxu0 0
    %811 = vmatpush1.bf16.msra.mxu0 0
    %812 = vmatprep.subr.bf16.mxu0 0
    %813 = vmatpush1.bf16.msra.mxu0 0
    %814 = vmatprep.subr.bf16.mxu0 0
    %815 = vmatpush1.bf16.msra.mxu0 0
    %816 = vmatprep.subr.bf16.mxu0 0
    %817 = vmatpush1.bf16.msra.mxu0 0
    %818 = vmatprep.subr.bf16.mxu0 0
    %819 = vmatpush1.bf16.msra.mxu0 0
    %820 = vmatprep.subr.bf16.mxu0 0
    %821 = vmatpush1.bf16.msra.mxu0 0
    %822 = vmatprep.subr.bf16.mxu0 0
    %823 = vmatpush1.bf16.msra.mxu0 0
    %824 = vmatprep.subr.bf16.mxu0 0
    %825 = vmatpush1.bf16.msra.mxu0 0
    %826 = vmatprep.mubr.bf16.mxu0 0
    %827 = vmatmul.mubr.bf16.gmra.mrb[0].mxu0 %v659
    %v828 = vpop.f32.mrb[0].mxu0
    %v829 = vadd.f32 0.0, %v828
    %v830 = vpop.f32.mrb[0].mxu0
    %v831 = vpop.f32.mrb[0].mxu0
    %v832 = vadd.f32 0.0, %v831
    %v833 = vpop.f32.mrb[0].mxu0
    %834 = vmatprep.mubr.bf16.mxu0 0
    %835 = vmatmul.mubr.bf16.gmra.mrb[0].mxu0 %v667
    %v836 = vpop.f32.mrb[0].mxu0
    %v837 = vadd.f32 0.0, %v836
    %v838 = vpop.f32.mrb[0].mxu0
    %v839 = vpop.f32.mrb[0].mxu0
    %v840 = vadd.f32 0.0, %v839
    %v841 = vpop.f32.mrb[0].mxu0
    %842 = vmatprep.mubr.bf16.mxu0 0
    %843 = vmatmul.mubr.bf16.gmra.mrb[0].mxu0 %v675
    %v844 = vpop.f32.mrb[0].mxu0
    %v845 = vadd.f32 0.0, %v844
    %v846 = vpop.f32.mrb[0].mxu0
    %v847 = vpop.f32.mrb[0].mxu0
    %v848 = vadd.f32 0.0, %v847
    %v849 = vpop.f32.mrb[0].mxu0
    %850 = vmatprep.mubr.bf16.mxu0 0
    %851 = vmatmul.mubr.bf16.gmra.mrb[0].mxu0 %v683
    %v852 = vpop.f32.mrb[0].mxu0
    %v853 = vadd.f32 0.0, %v852
    %v854 = vpop.f32.mrb[0].mxu0
    %v855 = vpop.f32.mrb[0].mxu0
    %v856 = vadd.f32 0.0, %v855
    %v857 = vpop.f32.mrb[0].mxu0
    %858 = vmatprep.mubr.bf16.mxu0 0
    %859 = vmatmul.mubr.bf16.gmra.mrb[0].mxu0 %v691
    %v860 = vpop.f32.mrb[0].mxu0
    %v861 = vadd.f32 0.0, %v860
    %v862 = vpop.f32.mrb[0].mxu0
    %v863 = vpop.f32.mrb[0].mxu0
    %v864 = vadd.f32 0.0, %v863
    %v865 = vpop.f32.mrb[0].mxu0
    %866 = vmatprep.mubr.bf16.mxu0 0
    %867 = vmatmul.mubr.bf16.gmra.mrb[0].mxu0 %v699
    %v868 = vpop.f32.mrb[0].mxu0
    %v869 = vadd.f32 0.0, %v868
    %v870 = vpop.f32.mrb[0].mxu0
    %v871 = vpop.f32.mrb[0].mxu0
    %v872 = vadd.f32 0.0, %v871
    %v873 = vpop.f32.mrb[0].mxu0
    %874 = vmatprep.mubr.bf16.mxu0 0
    %875 = vmatmul.mubr.bf16.gmra.mrb[0].mxu0 %v707
    %v876 = vpop.f32.mrb[0].mxu0
    %v877 = vadd.f32 0.0, %v876
    %v878 = vpop.f32.mrb[0].mxu0
    %v879 = vpop.f32.mrb[0].mxu0
    %v880 = vadd.f32 0.0, %v879
    %v881 = vpop.f32.mrb[0].mxu0
    %882 = vmatprep.mubr.bf16.mxu0 0
    %883 = vmatmul.mubr.bf16.gmra.mrb[0].mxu0 %v715
    %v884 = vpop.f32.mrb[0].mxu0
    %v885 = vadd.f32 0.0, %v884
    %v886 = vpop.f32.mrb[0].mxu0
    %v887 = vpop.f32.mrb[0].mxu0
    %v888 = vadd.f32 0.0, %v887
    %v889 = vpop.f32.mrb[0].mxu0
    %890 = vmatprep.mubr.bf16.mxu0 0
    %891 = vmatmul.mubr.bf16.gmra.mrb[0].mxu0 %v723
    %v892 = vpop.f32.mrb[0].mxu0
    %v893 = vadd.f32 0.0, %v892
    %v894 = vpop.f32.mrb[0].mxu0
    %v895 = vpop.f32.mrb[0].mxu0
    %v896 = vadd.f32 0.0, %v895
    %v897 = vpop.f32.mrb[0].mxu0
    %898 = vmatprep.mubr.bf16.mxu0 0
    %899 = vmatmul.mubr.bf16.gmra.mrb[0].mxu0 %v731
    %v900 = vpop.f32.mrb[0].mxu0
    %v901 = vadd.f32 0.0, %v900
    %v902 = vpop.f32.mrb[0].mxu0
    %v903 = vpop.f32.mrb[0].mxu0
    %v904 = vadd.f32 0.0, %v903
    %v905 = vpop.f32.mrb[0].mxu0
    %906 = vmatprep.mubr.bf16.mxu0 0
    %907 = vmatmul.mubr.bf16.gmra.mrb[0].mxu0 %v734
    %v908 = vpop.f32.mrb[0].mxu0
    %v909 = vadd.f32 0.0, %v908
    %v910 = vpop.f32.mrb[0].mxu0
    %v911 = vpop.f32.mrb[0].mxu0
    %v912 = vpop.f32.mrb[0].mxu0
    %913 = vdwg.mxu0
    %v914 = vadd.f32 %v541, %v829
    %v915 = vadd.f32 %v544, %v832
    %v916 = vadd.f32 %v549, %v837
    %v917 = vadd.f32 %v552, %v840
    %v918 = vadd.f32 %v557, %v845
    %v919 = vadd.f32 %v560, %v848
    %v920 = vadd.f32 %v565, %v853
    %v921 = vadd.f32 %v568, %v856
    %v922 = vadd.f32 %v573, %v861
    %v923 = vadd.f32 %v576, %v864
    %v924 = vadd.f32 %v581, %v869
    %v925 = vadd.f32 %v584, %v872
    %v926 = vadd.f32 %v589, %v877
    %v927 = vadd.f32 %v592, %v880
    %v928 = vadd.f32 %v597, %v885
    %v929 = vadd.f32 %v600, %v888
    %v930 = vadd.f32 %v605, %v893
    %v931 = vadd.f32 %v608, %v896
    %v932 = vadd.f32 %v613, %v901
    %v933 = vadd.f32 %v616, %v904
    %v934 = vadd.f32 %v621, %v909
    %v935 = vld [vmem:[%s123 + $0x50] sm:$0x3]
    %s936 = scalar_lea.vmem [#allocation5], 192
    %v937 = vld [vmem:[%s936] sm:$0xf]
    %v938 = vld [vmem:[%s936 + $0x4] sm:$0xf]
    %v939 = vld [vmem:[%s936 + $0x8] sm:$0xf]
    %v940 = vld [vmem:[%s936 + $0xc] sm:$0xf]
    %v941 = vld [vmem:[%s936 + $0x10] sm:$0xf]
    %v942 = vld [vmem:[%s936 + $0x14] sm:$0xf]
    %v943 = vld [vmem:[%s936 + $0x18] sm:$0xf]
    %v944 = vld [vmem:[%s936 + $0x1c] sm:$0xf]
    %v945 = vld [vmem:[%s936 + $0x20] sm:$0xf]
    %v946 = vld [vmem:[%s936 + $0x24] sm:$0xf]
    %v947 = vld [vmem:[%s936 + $0x28] sm:$0xf]
    %v948 = vld [vmem:[%s936 + $0x2c] sm:$0xf]
    %v949 = vld [vmem:[%s936 + $0x30] sm:$0xf]
    %v950 = vld [vmem:[%s936 + $0x34] sm:$0xf]
    %v951 = vld [vmem:[%s936 + $0x38] sm:$0xf]
    %v952 = vld [vmem:[%s936 + $0x3c] sm:$0xf]
    %v954 = vunpack.c.l.b16 %v935
    %v955 = vpack.c.b16 %v954, %v954
    %v957 = vshrl.u32 %v204, 16
    %v959 = vshll.u32 %v204, 16
    %v961 = vrot.slane %v959, 1
    %v962 = vor.u32 %v957, %v961
    %v964 = vshll.u32 %v205, 16
    %v966 = vrot.slane %v964, 1
    %v967 = vsel %vm647, %v962, %v966
    %v968 = vshrl.u32 %v205, 16
    %v970 = vor.u32 %v968, %v966
    %v972 = vshll.u32 %v206, 16
    %v974 = vrot.slane %v972, 1
    %v975 = vsel %vm647, %v970, %v974
    %v976 = vshrl.u32 %v206, 16
    %v978 = vor.u32 %v976, %v974
    %v980 = vshll.u32 %v207, 16
    %v982 = vrot.slane %v980, 1
    %v983 = vsel %vm647, %v978, %v982
    %v984 = vshrl.u32 %v207, 16
    %v986 = vor.u32 %v984, %v982
    %v988 = vshll.u32 %v208, 16
    %v990 = vrot.slane %v988, 1
    %v991 = vsel %vm647, %v986, %v990
    %v992 = vshrl.u32 %v208, 16
    %v994 = vor.u32 %v992, %v990
    %v996 = vshll.u32 %v209, 16
    %v998 = vrot.slane %v996, 1
    %v999 = vsel %vm647, %v994, %v998
    %v1000 = vshrl.u32 %v209, 16
    %v1002 = vor.u32 %v1000, %v998
    %v1004 = vshll.u32 %v210, 16
    %v1006 = vrot.slane %v1004, 1
    %v1007 = vsel %vm647, %v1002, %v1006
    %v1008 = vshrl.u32 %v210, 16
    %v1010 = vor.u32 %v1008, %v1006
    %v1012 = vshll.u32 %v211, 16
    %v1014 = vrot.slane %v1012, 1
    %v1015 = vsel %vm647, %v1010, %v1014
    %v1016 = vshrl.u32 %v211, 16
    %v1018 = vor.u32 %v1016, %v1014
    %v1020 = vshll.u32 %v212, 16
    %v1022 = vrot.slane %v1020, 1
    %v1023 = vsel %vm647, %v1018, %v1022
    %v1024 = vshrl.u32 %v212, 16
    %v1026 = vor.u32 %v1024, %v1022
    %v1028 = vshll.u32 %v213, 16
    %v1030 = vrot.slane %v1028, 1
    %v1031 = vsel %vm647, %v1026, %v1030
    %v1032 = vshrl.u32 %v213, 16
    %v1034 = vor.u32 %v1032, %v1030
    %v1036 = vshll.u32 %v955, 16
    %v1038 = vrot.slane %v1036, 1
    %v1039 = vsel %vm647, %v1034, %v1038
    %v1040 = vshrl.u32 %v955, 16
    %v1042 = vor.u32 %v1040, %v1038
    %v1070 = vunpack.c.l.b16 %v937
    %v1071 = vunpack.c.l.b16 %v938
    %v1072 = vunpack.c.l.b16 %v939
    %v1073 = vunpack.c.l.b16 %v940
    %v1074 = vunpack.c.l.b16 %v941
    %v1075 = vunpack.c.l.b16 %v942
    %v1076 = vunpack.c.l.b16 %v943
    %v1077 = vunpack.c.l.b16 %v944
    %v1078 = vunpack.c.l.b16 %v945
    %v1079 = vunpack.c.l.b16 %v946
    %v1080 = vunpack.c.l.b16 %v947
    %v1081 = vunpack.c.l.b16 %v948
    %v1082 = vunpack.c.l.b16 %v949
    %v1083 = vunpack.c.l.b16 %v950
    %v1084 = vunpack.c.l.b16 %v951
    %v1085 = vunpack.c.l.b16 %v952
    %v1086 = vpack.c.b16 %v1071, %v1070
    %v1087 = vpack.c.b16 %v1073, %v1072
    %v1088 = vpack.c.b16 %v1075, %v1074
    %v1089 = vpack.c.b16 %v1077, %v1076
    %v1090 = vpack.c.b16 %v1079, %v1078
    %v1091 = vpack.c.b16 %v1081, %v1080
    %v1092 = vpack.c.b16 %v1083, %v1082
    %v1093 = vpack.c.b16 %v1085, %v1084
    %1102 = vmatprep.subr.bf16.mxu0 0
    %1103 = vmatpush1.bf16.msra.mxu0 %v1086
    %1104 = vmatprep.subr.bf16.mxu0 0
    %1105 = vmatpush1.bf16.msra.mxu0 %v1087
    %1106 = vmatprep.subr.bf16.mxu0 0
    %1107 = vmatpush1.bf16.msra.mxu0 %v1088
    %1108 = vmatprep.subr.bf16.mxu0 0
    %1109 = vmatpush1.bf16.msra.mxu0 %v1089
    %1110 = vmatprep.subr.bf16.mxu0 0
    %1111 = vmatpush1.bf16.msra.mxu0 %v1090
    %1112 = vmatprep.subr.bf16.mxu0 0
    %1113 = vmatpush1.bf16.msra.mxu0 %v1091
    %1114 = vmatprep.subr.bf16.mxu0 0
    %1115 = vmatpush1.bf16.msra.mxu0 %v1092
    %1116 = vmatprep.subr.bf16.mxu0 0
    %1117 = vmatpush1.bf16.msra.mxu0 %v1093
    %1118 = vmatprep.subr.bf16.mxu0 0
    %1119 = vmatpush1.bf16.msra.mxu0 0
    %1120 = vmatprep.subr.bf16.mxu0 0
    %1121 = vmatpush1.bf16.msra.mxu0 0
    %1122 = vmatprep.subr.bf16.mxu0 0
    %1123 = vmatpush1.bf16.msra.mxu0 0
    %1124 = vmatprep.subr.bf16.mxu0 0
    %1125 = vmatpush1.bf16.msra.mxu0 0
    %1126 = vmatprep.subr.bf16.mxu0 0
    %1127 = vmatpush1.bf16.msra.mxu0 0
    %1128 = vmatprep.subr.bf16.mxu0 0
    %1129 = vmatpush1.bf16.msra.mxu0 0
    %1130 = vmatprep.subr.bf16.mxu0 0
    %1131 = vmatpush1.bf16.msra.mxu0 0
    %1132 = vmatprep.subr.bf16.mxu0 0
    %1133 = vmatpush1.bf16.msra.mxu0 0
    %1134 = vmatprep.mubr.bf16.mxu0 0
    %1135 = vmatmul.mubr.bf16.gmra.mrb[0].mxu0 %v967
    %v1136 = vpop.f32.mrb[0].mxu0
    %v1137 = vadd.f32 0.0, %v1136
    %v1138 = vpop.f32.mrb[0].mxu0
    %v1139 = vpop.f32.mrb[0].mxu0
    %v1140 = vadd.f32 0.0, %v1139
    %v1141 = vpop.f32.mrb[0].mxu0
    %1142 = vmatprep.mubr.bf16.mxu0 0
    %1143 = vmatmul.mubr.bf16.gmra.mrb[0].mxu0 %v975
    %v1144 = vpop.f32.mrb[0].mxu0
    %v1145 = vadd.f32 0.0, %v1144
    %v1146 = vpop.f32.mrb[0].mxu0
    %v1147 = vpop.f32.mrb[0].mxu0
    %v1148 = vadd.f32 0.0, %v1147
    %v1149 = vpop.f32.mrb[0].mxu0
    %1150 = vmatprep.mubr.bf16.mxu0 0
    %1151 = vmatmul.mubr.bf16.gmra.mrb[0].mxu0 %v983
    %v1152 = vpop.f32.mrb[0].mxu0
    %v1153 = vadd.f32 0.0, %v1152
    %v1154 = vpop.f32.mrb[0].mxu0
    %v1155 = vpop.f32.mrb[0].mxu0
    %v1156 = vadd.f32 0.0, %v1155
    %v1157 = vpop.f32.mrb[0].mxu0
    %1158 = vmatprep.mubr.bf16.mxu0 0
    %1159 = vmatmul.mubr.bf16.gmra.mrb[0].mxu0 %v991
    %v1160 = vpop.f32.mrb[0].mxu0
    %v1161 = vadd.f32 0.0, %v1160
    %v1162 = vpop.f32.mrb[0].mxu0
    %v1163 = vpop.f32.mrb[0].mxu0
    %v1164 = vadd.f32 0.0, %v1163
    %v1165 = vpop.f32.mrb[0].mxu0
    %1166 = vmatprep.mubr.bf16.mxu0 0
    %1167 = vmatmul.mubr.bf16.gmra.mrb[0].mxu0 %v999
    %v1168 = vpop.f32.mrb[0].mxu0
    %v1169 = vadd.f32 0.0, %v1168
    %v1170 = vpop.f32.mrb[0].mxu0
    %v1171 = vpop.f32.mrb[0].mxu0
    %v1172 = vadd.f32 0.0, %v1171
    %v1173 = vpop.f32.mrb[0].mxu0
    %1174 = vmatprep.mubr.bf16.mxu0 0
    %1175 = vmatmul.mubr.bf16.gmra.mrb[0].mxu0 %v1007
    %v1176 = vpop.f32.mrb[0].mxu0
    %v1177 = vadd.f32 0.0, %v1176
    %v1178 = vpop.f32.mrb[0].mxu0
    %v1179 = vpop.f32.mrb[0].mxu0
    %v1180 = vadd.f32 0.0, %v1179
    %v1181 = vpop.f32.mrb[0].mxu0
    %1182 = vmatprep.mubr.bf16.mxu0 0
    %1183 = vmatmul.mubr.bf16.gmra.mrb[0].mxu0 %v1015
    %v1184 = vpop.f32.mrb[0].mxu0
    %v1185 = vadd.f32 0.0, %v1184
    %v1186 = vpop.f32.mrb[0].mxu0
    %v1187 = vpop.f32.mrb[0].mxu0
    %v1188 = vadd.f32 0.0, %v1187
    %v1189 = vpop.f32.mrb[0].mxu0
    %1190 = vmatprep.mubr.bf16.mxu0 0
    %1191 = vmatmul.mubr.bf16.gmra.mrb[0].mxu0 %v1023
    %v1192 = vpop.f32.mrb[0].mxu0
    %v1193 = vadd.f32 0.0, %v1192
    %v1194 = vpop.f32.mrb[0].mxu0
    %v1195 = vpop.f32.mrb[0].mxu0
    %v1196 = vadd.f32 0.0, %v1195
    %v1197 = vpop.f32.mrb[0].mxu0
    %1198 = vmatprep.mubr.bf16.mxu0 0
    %1199 = vmatmul.mubr.bf16.gmra.mrb[0].mxu0 %v1031
    %v1200 = vpop.f32.mrb[0].mxu0
    %v1201 = vadd.f32 0.0, %v1200
    %v1202 = vpop.f32.mrb[0].mxu0
    %v1203 = vpop.f32.mrb[0].mxu0
    %v1204 = vadd.f32 0.0, %v1203
    %v1205 = vpop.f32.mrb[0].mxu0
    %1206 = vmatprep.mubr.bf16.mxu0 0
    %1207 = vmatmul.mubr.bf16.gmra.mrb[0].mxu0 %v1039
    %v1208 = vpop.f32.mrb[0].mxu0
    %v1209 = vadd.f32 0.0, %v1208
    %v1210 = vpop.f32.mrb[0].mxu0
    %v1211 = vpop.f32.mrb[0].mxu0
    %v1212 = vadd.f32 0.0, %v1211
    %v1213 = vpop.f32.mrb[0].mxu0
    %1214 = vmatprep.mubr.bf16.mxu0 0
    %1215 = vmatmul.mubr.bf16.gmra.mrb[0].mxu0 %v1042
    %v1216 = vpop.f32.mrb[0].mxu0
    %v1217 = vadd.f32 0.0, %v1216
    %v1218 = vpop.f32.mrb[0].mxu0
    %v1219 = vpop.f32.mrb[0].mxu0
    %v1220 = vpop.f32.mrb[0].mxu0
    %1221 = vdwg.mxu0
    %v1222 = vadd.f32 %v914, %v1137
    %v1223 = vadd.f32 %v915, %v1140
    %v1224 = vadd.f32 %v916, %v1145
    %v1225 = vadd.f32 %v917, %v1148
    %v1226 = vadd.f32 %v918, %v1153
    %v1227 = vadd.f32 %v919, %v1156
    %v1228 = vadd.f32 %v920, %v1161
    %v1229 = vadd.f32 %v921, %v1164
    %v1230 = vadd.f32 %v922, %v1169
    %v1231 = vadd.f32 %v923, %v1172
    %v1232 = vadd.f32 %v924, %v1177
    %v1233 = vadd.f32 %v925, %v1180
    %v1234 = vadd.f32 %v926, %v1185
    %v1235 = vadd.f32 %v927, %v1188
    %v1236 = vadd.f32 %v928, %v1193
    %v1237 = vadd.f32 %v929, %v1196
    %v1238 = vadd.f32 %v930, %v1201
    %v1239 = vadd.f32 %v931, %v1204
    %v1240 = vadd.f32 %v932, %v1209
    %v1241 = vadd.f32 %v933, %v1212
    %v1242 = vadd.f32 %v934, %v1217
    %s1243 = scalar_lea.vmem [#allocation2], 176
    %v1244 = vld [vmem:[%s1243] sm:$0xf]
    %v1245 = vld [vmem:[%s1243 + $0x4] sm:$0xf]
    %v1246 = vld [vmem:[%s1243 + $0x8] sm:$0xf]
    %v1247 = vld [vmem:[%s1243 + $0xc] sm:$0xf]
    %v1248 = vld [vmem:[%s1243 + $0x10] sm:$0xf]
    %v1249 = vld [vmem:[%s1243 + $0x14] sm:$0xf]
    %v1250 = vld [vmem:[%s1243 + $0x18] sm:$0xf]
    %v1251 = vld [vmem:[%s1243 + $0x1c] sm:$0xf]
    %v1252 = vld [vmem:[%s1243 + $0x20] sm:$0xf]
    %v1253 = vld [vmem:[%s1243 + $0x24] sm:$0xf]
    %v1254 = vld [vmem:[%s1243 + $0x28] sm:$0xf]
    %v1255 = vld [vmem:[%s1243 + $0x2c] sm:$0xf]
    %v1256 = vld [vmem:[%s1243 + $0x30] sm:$0xf]
    %v1257 = vld [vmem:[%s1243 + $0x34] sm:$0xf]
    %v1258 = vld [vmem:[%s1243 + $0x38] sm:$0xf]
    %v1259 = vld [vmem:[%s1243 + $0x3c] sm:$0xf]
    %v1260 = vld [vmem:[%s1243 + $0x40] sm:$0xf]
    %v1261 = vld [vmem:[%s1243 + $0x44] sm:$0xf]
    %v1262 = vld [vmem:[%s1243 + $0x48] sm:$0xf]
    %v1263 = vld [vmem:[%s1243 + $0x4c] sm:$0xf]
    %v1264 = vld [vmem:[%s1243 + $0x50] sm:$0x1]
    %s1265 = scalar_lea.vmem [#allocation5], 256
    %v1266 = vld [vmem:[%s1265] sm:$0xf]
    %v1267 = vld [vmem:[%s1265 + $0x4] sm:$0xf]
    %v1268 = vld [vmem:[%s1265 + $0x8] sm:$0xf]
    %v1269 = vld [vmem:[%s1265 + $0xc] sm:$0xf]
    %v1270 = vld [vmem:[%s1265 + $0x10] sm:$0xf]
    %v1271 = vld [vmem:[%s1265 + $0x14] sm:$0xf]
    %v1272 = vld [vmem:[%s1265 + $0x18] sm:$0xf]
    %v1273 = vld [vmem:[%s1265 + $0x1c] sm:$0xf]
    %v1274 = vld [vmem:[%s1265 + $0x20] sm:$0xf]
    %v1275 = vld [vmem:[%s1265 + $0x24] sm:$0xf]
    %v1276 = vld [vmem:[%s1265 + $0x28] sm:$0xf]
    %v1277 = vld [vmem:[%s1265 + $0x2c] sm:$0xf]
    %v1278 = vld [vmem:[%s1265 + $0x30] sm:$0xf]
    %v1279 = vld [vmem:[%s1265 + $0x34] sm:$0xf]
    %v1280 = vld [vmem:[%s1265 + $0x38] sm:$0xf]
    %v1281 = vld [vmem:[%s1265 + $0x3c] sm:$0xf]
    %v1303 = vunpack.c.l.b16 %v1244
    %v1304 = vunpack.c.l.b16 %v1245
    %v1305 = vunpack.c.l.b16 %v1246
    %v1306 = vunpack.c.l.b16 %v1247
    %v1307 = vunpack.c.l.b16 %v1248
    %v1308 = vunpack.c.l.b16 %v1249
    %v1309 = vunpack.c.l.b16 %v1250
    %v1310 = vunpack.c.l.b16 %v1251
    %v1311 = vunpack.c.l.b16 %v1252
    %v1312 = vunpack.c.l.b16 %v1253
    %v1313 = vunpack.c.l.b16 %v1254
    %v1314 = vunpack.c.l.b16 %v1255
    %v1315 = vunpack.c.l.b16 %v1256
    %v1316 = vunpack.c.l.b16 %v1257
    %v1317 = vunpack.c.l.b16 %v1258
    %v1318 = vunpack.c.l.b16 %v1259
    %v1319 = vunpack.c.l.b16 %v1260
    %v1320 = vunpack.c.l.b16 %v1261
    %v1321 = vunpack.c.l.b16 %v1262
    %v1322 = vunpack.c.l.b16 %v1263
    %v1323 = vunpack.c.l.b16 %v1264
    %v1324 = vpack.c.b16 %v1304, %v1303
    %v1325 = vpack.c.b16 %v1306, %v1305
    %v1326 = vpack.c.b16 %v1308, %v1307
    %v1327 = vpack.c.b16 %v1310, %v1309
    %v1328 = vpack.c.b16 %v1312, %v1311
    %v1329 = vpack.c.b16 %v1314, %v1313
    %v1330 = vpack.c.b16 %v1316, %v1315
    %v1331 = vpack.c.b16 %v1318, %v1317
    %v1332 = vpack.c.b16 %v1320, %v1319
    %v1333 = vpack.c.b16 %v1322, %v1321
    %v1334 = vpack.c.b16 %v1323, %v1323
    %v1362 = vunpack.c.l.b16 %v1266
    %v1363 = vunpack.c.l.b16 %v1267
    %v1364 = vunpack.c.l.b16 %v1268
    %v1365 = vunpack.c.l.b16 %v1269
    %v1366 = vunpack.c.l.b16 %v1270
    %v1367 = vunpack.c.l.b16 %v1271
    %v1368 = vunpack.c.l.b16 %v1272
    %v1369 = vunpack.c.l.b16 %v1273
    %v1370 = vunpack.c.l.b16 %v1274
    %v1371 = vunpack.c.l.b16 %v1275
    %v1372 = vunpack.c.l.b16 %v1276
    %v1373 = vunpack.c.l.b16 %v1277
    %v1374 = vunpack.c.l.b16 %v1278
    %v1375 = vunpack.c.l.b16 %v1279
    %v1376 = vunpack.c.l.b16 %v1280
    %v1377 = vunpack.c.l.b16 %v1281
    %v1378 = vpack.c.b16 %v1363, %v1362
    %v1379 = vpack.c.b16 %v1365, %v1364
    %v1380 = vpack.c.b16 %v1367, %v1366
    %v1381 = vpack.c.b16 %v1369, %v1368
    %v1382 = vpack.c.b16 %v1371, %v1370
    %v1383 = vpack.c.b16 %v1373, %v1372
    %v1384 = vpack.c.b16 %v1375, %v1374
    %v1385 = vpack.c.b16 %v1377, %v1376
    %1394 = vmatprep.subr.bf16.mxu0 0
    %1395 = vmatpush1.bf16.msra.mxu0 %v1378
    %1396 = vmatprep.subr.bf16.mxu0 0
    %1397 = vmatpush1.bf16.msra.mxu0 %v1379
    %1398 = vmatprep.subr.bf16.mxu0 0
    %1399 = vmatpush1.bf16.msra.mxu0 %v1380
    %1400 = vmatprep.subr.bf16.mxu0 0
    %1401 = vmatpush1.bf16.msra.mxu0 %v1381
    %1402 = vmatprep.subr.bf16.mxu0 0
    %1403 = vmatpush1.bf16.msra.mxu0 %v1382
    %1404 = vmatprep.subr.bf16.mxu0 0
    %1405 = vmatpush1.bf16.msra.mxu0 %v1383
    %1406 = vmatprep.subr.bf16.mxu0 0
    %1407 = vmatpush1.bf16.msra.mxu0 %v1384
    %1408 = vmatprep.subr.bf16.mxu0 0
    %1409 = vmatpush1.bf16.msra.mxu0 %v1385
    %1410 = vmatprep.subr.bf16.mxu0 0
    %1411 = vmatpush1.bf16.msra.mxu0 0
    %1412 = vmatprep.subr.bf16.mxu0 0
    %1413 = vmatpush1.bf16.msra.mxu0 0
    %1414 = vmatprep.subr.bf16.mxu0 0
    %1415 = vmatpush1.bf16.msra.mxu0 0
    %1416 = vmatprep.subr.bf16.mxu0 0
    %1417 = vmatpush1.bf16.msra.mxu0 0
    %1418 = vmatprep.subr.bf16.mxu0 0
    %1419 = vmatpush1.bf16.msra.mxu0 0
    %1420 = vmatprep.subr.bf16.mxu0 0
    %1421 = vmatpush1.bf16.msra.mxu0 0
    %1422 = vmatprep.subr.bf16.mxu0 0
    %1423 = vmatpush1.bf16.msra.mxu0 0
    %1424 = vmatprep.subr.bf16.mxu0 0
    %1425 = vmatpush1.bf16.msra.mxu0 0
    %1426 = vmatprep.mubr.bf16.mxu0 0
    %1427 = vmatmul.mubr.bf16.gmra.mrb[0].mxu0 %v1324
    %v1428 = vpop.f32.mrb[0].mxu0
    %v1429 = vadd.f32 0.0, %v1428
    %v1430 = vpop.f32.mrb[0].mxu0
    %v1431 = vpop.f32.mrb[0].mxu0
    %v1432 = vadd.f32 0.0, %v1431
    %v1433 = vpop.f32.mrb[0].mxu0
    %1434 = vmatprep.mubr.bf16.mxu0 0
    %1435 = vmatmul.mubr.bf16.gmra.mrb[0].mxu0 %v1325
    %v1436 = vpop.f32.mrb[0].mxu0
    %v1437 = vadd.f32 0.0, %v1436
    %v1438 = vpop.f32.mrb[0].mxu0
    %v1439 = vpop.f32.mrb[0].mxu0
    %v1440 = vadd.f32 0.0, %v1439
    %v1441 = vpop.f32.mrb[0].mxu0
    %1442 = vmatprep.mubr.bf16.mxu0 0
    %1443 = vmatmul.mubr.bf16.gmra.mrb[0].mxu0 %v1326
    %v1444 = vpop.f32.mrb[0].mxu0
    %v1445 = vadd.f32 0.0, %v1444
    %v1446 = vpop.f32.mrb[0].mxu0
    %v1447 = vpop.f32.mrb[0].mxu0
    %v1448 = vadd.f32 0.0, %v1447
    %v1449 = vpop.f32.mrb[0].mxu0
    %1450 = vmatprep.mubr.bf16.mxu0 0
    %1451 = vmatmul.mubr.bf16.gmra.mrb[0].mxu0 %v1327
    %v1452 = vpop.f32.mrb[0].mxu0
    %v1453 = vadd.f32 0.0, %v1452
    %v1454 = vpop.f32.mrb[0].mxu0
    %v1455 = vpop.f32.mrb[0].mxu0
    %v1456 = vadd.f32 0.0, %v1455
    %v1457 = vpop.f32.mrb[0].mxu0
    %1458 = vmatprep.mubr.bf16.mxu0 0
    %1459 = vmatmul.mubr.bf16.gmra.mrb[0].mxu0 %v1328
    %v1460 = vpop.f32.mrb[0].mxu0
    %v1461 = vadd.f32 0.0, %v1460
    %v1462 = vpop.f32.mrb[0].mxu0
    %v1463 = vpop.f32.mrb[0].mxu0
    %v1464 = vadd.f32 0.0, %v1463
    %v1465 = vpop.f32.mrb[0].mxu0
    %1466 = vmatprep.mubr.bf16.mxu0 0
    %1467 = vmatmul.mubr.bf16.gmra.mrb[0].mxu0 %v1329
    %v1468 = vpop.f32.mrb[0].mxu0
    %v1469 = vadd.f32 0.0, %v1468
    %v1470 = vpop.f32.mrb[0].mxu0
    %v1471 = vpop.f32.mrb[0].mxu0
    %v1472 = vadd.f32 0.0, %v1471
    %v1473 = vpop.f32.mrb[0].mxu0
    %1474 = vmatprep.mubr.bf16.mxu0 0
    %1475 = vmatmul.mubr.bf16.gmra.mrb[0].mxu0 %v1330
    %v1476 = vpop.f32.mrb[0].mxu0
    %v1477 = vadd.f32 0.0, %v1476
    %v1478 = vpop.f32.mrb[0].mxu0
    %v1479 = vpop.f32.mrb[0].mxu0
    %v1480 = vadd.f32 0.0, %v1479
    %v1481 = vpop.f32.mrb[0].mxu0
    %1482 = vmatprep.mubr.bf16.mxu0 0
    %1483 = vmatmul.mubr.bf16.gmra.mrb[0].mxu0 %v1331
    %v1484 = vpop.f32.mrb[0].mxu0
    %v1485 = vadd.f32 0.0, %v1484
    %v1486 = vpop.f32.mrb[0].mxu0
    %v1487 = vpop.f32.mrb[0].mxu0
    %v1488 = vadd.f32 0.0, %v1487
    %v1489 = vpop.f32.mrb[0].mxu0
    %1490 = vmatprep.mubr.bf16.mxu0 0
    %1491 = vmatmul.mubr.bf16.gmra.mrb[0].mxu0 %v1332
    %v1492 = vpop.f32.mrb[0].mxu0
    %v1493 = vadd.f32 0.0, %v1492
    %v1494 = vpop.f32.mrb[0].mxu0
    %v1495 = vpop.f32.mrb[0].mxu0
    %v1496 = vadd.f32 0.0, %v1495
    %v1497 = vpop.f32.mrb[0].mxu0
    %1498 = vmatprep.mubr.bf16.mxu0 0
    %1499 = vmatmul.mubr.bf16.gmra.mrb[0].mxu0 %v1333
    %v1500 = vpop.f32.mrb[0].mxu0
    %v1501 = vadd.f32 0.0, %v1500
    %v1502 = vpop.f32.mrb[0].mxu0
    %v1503 = vpop.f32.mrb[0].mxu0
    %v1504 = vadd.f32 0.0, %v1503
    %v1505 = vpop.f32.mrb[0].mxu0
    %1506 = vmatprep.mubr.bf16.mxu0 0
    %1507 = vmatmul.mubr.bf16.gmra.mrb[0].mxu0 %v1334
    %v1508 = vpop.f32.mrb[0].mxu0
    %v1509 = vadd.f32 0.0, %v1508
    %v1510 = vpop.f32.mrb[0].mxu0
    %v1511 = vpop.f32.mrb[0].mxu0
    %v1512 = vpop.f32.mrb[0].mxu0
    %1513 = vdwg.mxu0
    %v1514 = vadd.f32 %v1222, %v1429
    %v1515 = vadd.f32 %v1223, %v1432
    %v1516 = vadd.f32 %v1224, %v1437
    %v1517 = vadd.f32 %v1225, %v1440
    %v1518 = vadd.f32 %v1226, %v1445
    %v1519 = vadd.f32 %v1227, %v1448
    %v1520 = vadd.f32 %v1228, %v1453
    %v1521 = vadd.f32 %v1229, %v1456
    %v1522 = vadd.f32 %v1230, %v1461
    %v1523 = vadd.f32 %v1231, %v1464
    %v1524 = vadd.f32 %v1232, %v1469
    %v1525 = vadd.f32 %v1233, %v1472
    %v1526 = vadd.f32 %v1234, %v1477
    %v1527 = vadd.f32 %v1235, %v1480
    %v1528 = vadd.f32 %v1236, %v1485
    %v1529 = vadd.f32 %v1237, %v1488
    %v1530 = vadd.f32 %v1238, %v1493
    %v1531 = vadd.f32 %v1239, %v1496
    %v1532 = vadd.f32 %v1240, %v1501
    %v1533 = vadd.f32 %v1241, %v1504
    %v1534 = vadd.f32 %v1242, %v1509
    %s1535 = scalar_lea.vmem [#allocation2], 264
    %v1536 = vld [vmem:[%s1535] sm:$0xf]
    %v1537 = vld [vmem:[%s1535 + $0x4] sm:$0xf]
    %v1538 = vld [vmem:[%s1535 + $0x8] sm:$0xf]
    %v1539 = vld [vmem:[%s1535 + $0xc] sm:$0xf]
    %v1540 = vld [vmem:[%s1535 + $0x10] sm:$0xf]
    %v1541 = vld [vmem:[%s1535 + $0x14] sm:$0xf]
    %v1542 = vld [vmem:[%s1535 + $0x18] sm:$0xf]
    %v1543 = vld [vmem:[%s1535 + $0x1c] sm:$0xf]
    %v1544 = vld [vmem:[%s1535 + $0x20] sm:$0xf]
    %v1545 = vld [vmem:[%s1535 + $0x24] sm:$0xf]
    %v1546 = vld [vmem:[%s1535 + $0x28] sm:$0xf]
    %v1547 = vld [vmem:[%s1535 + $0x2c] sm:$0xf]
    %v1548 = vld [vmem:[%s1535 + $0x30] sm:$0xf]
    %v1549 = vld [vmem:[%s1535 + $0x34] sm:$0xf]
    %v1550 = vld [vmem:[%s1535 + $0x38] sm:$0xf]
    %v1551 = vld [vmem:[%s1535 + $0x3c] sm:$0xf]
    %v1552 = vld [vmem:[%s1535 + $0x40] sm:$0xf]
    %v1553 = vld [vmem:[%s1535 + $0x44] sm:$0xf]
    %v1554 = vld [vmem:[%s1535 + $0x48] sm:$0xf]
    %v1555 = vld [vmem:[%s1535 + $0x4c] sm:$0xf]
    %v1556 = vld [vmem:[%s1535 + $0x50] sm:$0x1]
    %s1557 = scalar_lea.vmem [#allocation5], 320
    %v1558 = vld [vmem:[%s1557] sm:$0xf]
    %v1559 = vld [vmem:[%s1557 + $0x4] sm:$0xf]
    %v1560 = vld [vmem:[%s1557 + $0x8] sm:$0xf]
    %v1561 = vld [vmem:[%s1557 + $0xc] sm:$0xf]
    %v1562 = vld [vmem:[%s1557 + $0x10] sm:$0xf]
    %v1563 = vld [vmem:[%s1557 + $0x14] sm:$0xf]
    %v1564 = vld [vmem:[%s1557 + $0x18] sm:$0xf]
    %v1565 = vld [vmem:[%s1557 + $0x1c] sm:$0xf]
    %v1566 = vld [vmem:[%s1557 + $0x20] sm:$0xf]
    %v1567 = vld [vmem:[%s1557 + $0x24] sm:$0xf]
    %v1568 = vld [vmem:[%s1557 + $0x28] sm:$0xf]
    %v1569 = vld [vmem:[%s1557 + $0x2c] sm:$0xf]
    %v1570 = vld [vmem:[%s1557 + $0x30] sm:$0xf]
    %v1571 = vld [vmem:[%s1557 + $0x34] sm:$0xf]
    %v1572 = vld [vmem:[%s1557 + $0x38] sm:$0xf]
    %v1573 = vld [vmem:[%s1557 + $0x3c] sm:$0xf]
    %v1595 = vunpack.c.l.b16 %v1536
    %v1596 = vunpack.c.l.b16 %v1537
    %v1597 = vunpack.c.l.b16 %v1538
    %v1598 = vunpack.c.l.b16 %v1539
    %v1599 = vunpack.c.l.b16 %v1540
    %v1600 = vunpack.c.l.b16 %v1541
    %v1601 = vunpack.c.l.b16 %v1542
    %v1602 = vunpack.c.l.b16 %v1543
    %v1603 = vunpack.c.l.b16 %v1544
    %v1604 = vunpack.c.l.b16 %v1545
    %v1605 = vunpack.c.l.b16 %v1546
    %v1606 = vunpack.c.l.b16 %v1547
    %v1607 = vunpack.c.l.b16 %v1548
    %v1608 = vunpack.c.l.b16 %v1549
    %v1609 = vunpack.c.l.b16 %v1550
    %v1610 = vunpack.c.l.b16 %v1551
    %v1611 = vunpack.c.l.b16 %v1552
    %v1612 = vunpack.c.l.b16 %v1553
    %v1613 = vunpack.c.l.b16 %v1554
    %v1614 = vunpack.c.l.b16 %v1555
    %v1615 = vunpack.c.l.b16 %v1556
    %v1616 = vpack.c.b16 %v1596, %v1595
    %v1617 = vpack.c.b16 %v1598, %v1597
    %v1618 = vpack.c.b16 %v1600, %v1599
    %v1619 = vpack.c.b16 %v1602, %v1601
    %v1620 = vpack.c.b16 %v1604, %v1603
    %v1621 = vpack.c.b16 %v1606, %v1605
    %v1622 = vpack.c.b16 %v1608, %v1607
    %v1623 = vpack.c.b16 %v1610, %v1609
    %v1624 = vpack.c.b16 %v1612, %v1611
    %v1625 = vpack.c.b16 %v1614, %v1613
    %v1626 = vpack.c.b16 %v1615, %v1615
    %v1654 = vunpack.c.l.b16 %v1558
    %v1655 = vunpack.c.l.b16 %v1559
    %v1656 = vunpack.c.l.b16 %v1560
    %v1657 = vunpack.c.l.b16 %v1561
    %v1658 = vunpack.c.l.b16 %v1562
    %v1659 = vunpack.c.l.b16 %v1563
    %v1660 = vunpack.c.l.b16 %v1564
    %v1661 = vunpack.c.l.b16 %v1565
    %v1662 = vunpack.c.l.b16 %v1566
    %v1663 = vunpack.c.l.b16 %v1567
    %v1664 = vunpack.c.l.b16 %v1568
    %v1665 = vunpack.c.l.b16 %v1569
    %v1666 = vunpack.c.l.b16 %v1570
    %v1667 = vunpack.c.l.b16 %v1571
    %v1668 = vunpack.c.l.b16 %v1572
    %v1669 = vunpack.c.l.b16 %v1573
    %v1670 = vpack.c.b16 %v1655, %v1654
    %v1671 = vpack.c.b16 %v1657, %v1656
    %v1672 = vpack.c.b16 %v1659, %v1658
    %v1673 = vpack.c.b16 %v1661, %v1660
    %v1674 = vpack.c.b16 %v1663, %v1662
    %v1675 = vpack.c.b16 %v1665, %v1664
    %v1676 = vpack.c.b16 %v1667, %v1666
    %v1677 = vpack.c.b16 %v1669, %v1668
    %1686 = vmatprep.subr.bf16.mxu0 0
    %1687 = vmatpush1.bf16.msra.mxu0 %v1670
    %1688 = vmatprep.subr.bf16.mxu0 0
    %1689 = vmatpush1.bf16.msra.mxu0 %v1671
    %1690 = vmatprep.subr.bf16.mxu0 0
    %1691 = vmatpush1.bf16.msra.mxu0 %v1672
    %1692 = vmatprep.subr.bf16.mxu0 0
    %1693 = vmatpush1.bf16.msra.mxu0 %v1673
    %1694 = vmatprep.subr.bf16.mxu0 0
    %1695 = vmatpush1.bf16.msra.mxu0 %v1674
    %1696 = vmatprep.subr.bf16.mxu0 0
    %1697 = vmatpush1.bf16.msra.mxu0 %v1675
    %1698 = vmatprep.subr.bf16.mxu0 0
    %1699 = vmatpush1.bf16.msra.mxu0 %v1676
    %1700 = vmatprep.subr.bf16.mxu0 0
    %1701 = vmatpush1.bf16.msra.mxu0 %v1677
    %1702 = vmatprep.subr.bf16.mxu0 0
    %1703 = vmatpush1.bf16.msra.mxu0 0
    %1704 = vmatprep.subr.bf16.mxu0 0
    %1705 = vmatpush1.bf16.msra.mxu0 0
    %1706 = vmatprep.subr.bf16.mxu0 0
    %1707 = vmatpush1.bf16.msra.mxu0 0
    %1708 = vmatprep.subr.bf16.mxu0 0
    %1709 = vmatpush1.bf16.msra.mxu0 0
    %1710 = vmatprep.subr.bf16.mxu0 0
    %1711 = vmatpush1.bf16.msra.mxu0 0
    %1712 = vmatprep.subr.bf16.mxu0 0
    %1713 = vmatpush1.bf16.msra.mxu0 0
    %1714 = vmatprep.subr.bf16.mxu0 0
    %1715 = vmatpush1.bf16.msra.mxu0 0
    %1716 = vmatprep.subr.bf16.mxu0 0
    %1717 = vmatpush1.bf16.msra.mxu0 0
    %1718 = vmatprep.mubr.bf16.mxu0 0
    %1719 = vmatmul.mubr.bf16.gmra.mrb[0].mxu0 %v1616
    %v1720 = vpop.f32.mrb[0].mxu0
    %v1721 = vadd.f32 0.0, %v1720
    %v1722 = vpop.f32.mrb[0].mxu0
    %v1723 = vpop.f32.mrb[0].mxu0
    %v1724 = vadd.f32 0.0, %v1723
    %v1725 = vpop.f32.mrb[0].mxu0
    %1726 = vmatprep.mubr.bf16.mxu0 0
    %1727 = vmatmul.mubr.bf16.gmra.mrb[0].mxu0 %v1617
    %v1728 = vpop.f32.mrb[0].mxu0
    %v1729 = vadd.f32 0.0, %v1728
    %v1730 = vpop.f32.mrb[0].mxu0
    %v1731 = vpop.f32.mrb[0].mxu0
    %v1732 = vadd.f32 0.0, %v1731
    %v1733 = vpop.f32.mrb[0].mxu0
    %1734 = vmatprep.mubr.bf16.mxu0 0
    %1735 = vmatmul.mubr.bf16.gmra.mrb[0].mxu0 %v1618
    %v1736 = vpop.f32.mrb[0].mxu0
    %v1737 = vadd.f32 0.0, %v1736
    %v1738 = vpop.f32.mrb[0].mxu0
    %v1739 = vpop.f32.mrb[0].mxu0
    %v1740 = vadd.f32 0.0, %v1739
    %v1741 = vpop.f32.mrb[0].mxu0
    %1742 = vmatprep.mubr.bf16.mxu0 0
    %1743 = vmatmul.mubr.bf16.gmra.mrb[0].mxu0 %v1619
    %v1744 = vpop.f32.mrb[0].mxu0
    %v1745 = vadd.f32 0.0, %v1744
    %v1746 = vpop.f32.mrb[0].mxu0
    %v1747 = vpop.f32.mrb[0].mxu0
    %v1748 = vadd.f32 0.0, %v1747
    %v1749 = vpop.f32.mrb[0].mxu0
    %1750 = vmatprep.mubr.bf16.mxu0 0
    %1751 = vmatmul.mubr.bf16.gmra.mrb[0].mxu0 %v1620
    %v1752 = vpop.f32.mrb[0].mxu0
    %v1753 = vadd.f32 0.0, %v1752
    %v1754 = vpop.f32.mrb[0].mxu0
    %v1755 = vpop.f32.mrb[0].mxu0
    %v1756 = vadd.f32 0.0, %v1755
    %v1757 = vpop.f32.mrb[0].mxu0
    %1758 = vmatprep.mubr.bf16.mxu0 0
    %1759 = vmatmul.mubr.bf16.gmra.mrb[0].mxu0 %v1621
    %v1760 = vpop.f32.mrb[0].mxu0
    %v1761 = vadd.f32 0.0, %v1760
    %v1762 = vpop.f32.mrb[0].mxu0
    %v1763 = vpop.f32.mrb[0].mxu0
    %v1764 = vadd.f32 0.0, %v1763
    %v1765 = vpop.f32.mrb[0].mxu0
    %1766 = vmatprep.mubr.bf16.mxu0 0
    %1767 = vmatmul.mubr.bf16.gmra.mrb[0].mxu0 %v1622
    %v1768 = vpop.f32.mrb[0].mxu0
    %v1769 = vadd.f32 0.0, %v1768
    %v1770 = vpop.f32.mrb[0].mxu0
    %v1771 = vpop.f32.mrb[0].mxu0
    %v1772 = vadd.f32 0.0, %v1771
    %v1773 = vpop.f32.mrb[0].mxu0
    %1774 = vmatprep.mubr.bf16.mxu0 0
    %1775 = vmatmul.mubr.bf16.gmra.mrb[0].mxu0 %v1623
    %v1776 = vpop.f32.mrb[0].mxu0
    %v1777 = vadd.f32 0.0, %v1776
    %v1778 = vpop.f32.mrb[0].mxu0
    %v1779 = vpop.f32.mrb[0].mxu0
    %v1780 = vadd.f32 0.0, %v1779
    %v1781 = vpop.f32.mrb[0].mxu0
    %1782 = vmatprep.mubr.bf16.mxu0 0
    %1783 = vmatmul.mubr.bf16.gmra.mrb[0].mxu0 %v1624
    %v1784 = vpop.f32.mrb[0].mxu0
    %v1785 = vadd.f32 0.0, %v1784
    %v1786 = vpop.f32.mrb[0].mxu0
    %v1787 = vpop.f32.mrb[0].mxu0
    %v1788 = vadd.f32 0.0, %v1787
    %v1789 = vpop.f32.mrb[0].mxu0
    %1790 = vmatprep.mubr.bf16.mxu0 0
    %1791 = vmatmul.mubr.bf16.gmra.mrb[0].mxu0 %v1625
    %v1792 = vpop.f32.mrb[0].mxu0
    %v1793 = vadd.f32 0.0, %v1792
    %v1794 = vpop.f32.mrb[0].mxu0
    %v1795 = vpop.f32.mrb[0].mxu0
    %v1796 = vadd.f32 0.0, %v1795
    %v1797 = vpop.f32.mrb[0].mxu0
    %1798 = vmatprep.mubr.bf16.mxu0 0
    %1799 = vmatmul.mubr.bf16.gmra.mrb[0].mxu0 %v1626
    %v1800 = vpop.f32.mrb[0].mxu0
    %v1801 = vadd.f32 0.0, %v1800
    %v1802 = vpop.f32.mrb[0].mxu0
    %v1803 = vpop.f32.mrb[0].mxu0
    %v1804 = vpop.f32.mrb[0].mxu0
    %1805 = vdwg.mxu0
    %v1806 = vadd.f32 %v1514, %v1721
    %v1807 = vadd.f32 %v1515, %v1724
    %v1808 = vadd.f32 %v1516, %v1729
    %v1809 = vadd.f32 %v1517, %v1732
    %v1810 = vadd.f32 %v1518, %v1737
    %v1811 = vadd.f32 %v1519, %v1740
    %v1812 = vadd.f32 %v1520, %v1745
    %v1813 = vadd.f32 %v1521, %v1748
    %v1814 = vadd.f32 %v1522, %v1753
    %v1815 = vadd.f32 %v1523, %v1756
    %v1816 = vadd.f32 %v1524, %v1761
    %v1817 = vadd.f32 %v1525, %v1764
    %v1818 = vadd.f32 %v1526, %v1769
    %v1819 = vadd.f32 %v1527, %v1772
    %v1820 = vadd.f32 %v1528, %v1777
    %v1821 = vadd.f32 %v1529, %v1780
    %v1822 = vadd.f32 %v1530, %v1785
    %v1823 = vadd.f32 %v1531, %v1788
    %v1824 = vadd.f32 %v1532, %v1793
    %v1825 = vadd.f32 %v1533, %v1796
    %v1826 = vadd.f32 %v1534, %v1801
    %v1827 = vld [vmem:[%s1243 + $0x50] sm:$0x3]
    %s1828 = scalar_lea.vmem [#allocation5], 384
    %v1829 = vld [vmem:[%s1828] sm:$0xf]
    %v1830 = vld [vmem:[%s1828 + $0x4] sm:$0xf]
    %v1831 = vld [vmem:[%s1828 + $0x8] sm:$0xf]
    %v1832 = vld [vmem:[%s1828 + $0xc] sm:$0xf]
    %v1833 = vld [vmem:[%s1828 + $0x10] sm:$0xf]
    %v1834 = vld [vmem:[%s1828 + $0x14] sm:$0xf]
    %v1835 = vld [vmem:[%s1828 + $0x18] sm:$0xf]
    %v1836 = vld [vmem:[%s1828 + $0x1c] sm:$0xf]
    %v1837 = vld [vmem:[%s1828 + $0x20] sm:$0xf]
    %v1838 = vld [vmem:[%s1828 + $0x24] sm:$0xf]
    %v1839 = vld [vmem:[%s1828 + $0x28] sm:$0xf]
    %v1840 = vld [vmem:[%s1828 + $0x2c] sm:$0xf]
    %v1841 = vld [vmem:[%s1828 + $0x30] sm:$0xf]
    %v1842 = vld [vmem:[%s1828 + $0x34] sm:$0xf]
    %v1843 = vld [vmem:[%s1828 + $0x38] sm:$0xf]
    %v1844 = vld [vmem:[%s1828 + $0x3c] sm:$0xf]
    %v1846 = vunpack.c.l.b16 %v1827
    %v1847 = vpack.c.b16 %v1846, %v1846
    %v1849 = vshrl.u32 %v1324, 16
    %v1851 = vshll.u32 %v1324, 16
    %v1853 = vrot.slane %v1851, 1
    %v1854 = vor.u32 %v1849, %v1853
    %v1856 = vshll.u32 %v1325, 16
    %v1858 = vrot.slane %v1856, 1
    %v1859 = vsel %vm647, %v1854, %v1858
    %v1860 = vshrl.u32 %v1325, 16
    %v1862 = vor.u32 %v1860, %v1858
    %v1864 = vshll.u32 %v1326, 16
    %v1866 = vrot.slane %v1864, 1
    %v1867 = vsel %vm647, %v1862, %v1866
    %v1868 = vshrl.u32 %v1326, 16
    %v1870 = vor.u32 %v1868, %v1866
    %v1872 = vshll.u32 %v1327, 16
    %v1874 = vrot.slane %v1872, 1
    %v1875 = vsel %vm647, %v1870, %v1874
    %v1876 = vshrl.u32 %v1327, 16
    %v1878 = vor.u32 %v1876, %v1874
    %v1880 = vshll.u32 %v1328, 16
    %v1882 = vrot.slane %v1880, 1
    %v1883 = vsel %vm647, %v1878, %v1882
    %v1884 = vshrl.u32 %v1328, 16
    %v1886 = vor.u32 %v1884, %v1882
    %v1888 = vshll.u32 %v1329, 16
    %v1890 = vrot.slane %v1888, 1
    %v1891 = vsel %vm647, %v1886, %v1890
    %v1892 = vshrl.u32 %v1329, 16
    %v1894 = vor.u32 %v1892, %v1890
    %v1896 = vshll.u32 %v1330, 16
    %v1898 = vrot.slane %v1896, 1
    %v1899 = vsel %vm647, %v1894, %v1898
    %v1900 = vshrl.u32 %v1330, 16
    %v1902 = vor.u32 %v1900, %v1898
    %v1904 = vshll.u32 %v1331, 16
    %v1906 = vrot.slane %v1904, 1
    %v1907 = vsel %vm647, %v1902, %v1906
    %v1908 = vshrl.u32 %v1331, 16
    %v1910 = vor.u32 %v1908, %v1906
    %v1912 = vshll.u32 %v1332, 16
    %v1914 = vrot.slane %v1912, 1
    %v1915 = vsel %vm647, %v1910, %v1914
    %v1916 = vshrl.u32 %v1332, 16
    %v1918 = vor.u32 %v1916, %v1914
    %v1920 = vshll.u32 %v1333, 16
    %v1922 = vrot.slane %v1920, 1
    %v1923 = vsel %vm647, %v1918, %v1922
    %v1924 = vshrl.u32 %v1333, 16
    %v1926 = vor.u32 %v1924, %v1922
    %v1928 = vshll.u32 %v1847, 16
    %v1930 = vrot.slane %v1928, 1
    %v1931 = vsel %vm647, %v1926, %v1930
    %v1932 = vshrl.u32 %v1847, 16
    %v1934 = vor.u32 %v1932, %v1930
    %v1962 = vunpack.c.l.b16 %v1829
    %v1963 = vunpack.c.l.b16 %v1830
    %v1964 = vunpack.c.l.b16 %v1831
    %v1965 = vunpack.c.l.b16 %v1832
    %v1966 = vunpack.c.l.b16 %v1833
    %v1967 = vunpack.c.l.b16 %v1834
    %v1968 = vunpack.c.l.b16 %v1835
    %v1969 = vunpack.c.l.b16 %v1836
    %v1970 = vunpack.c.l.b16 %v1837
    %v1971 = vunpack.c.l.b16 %v1838
    %v1972 = vunpack.c.l.b16 %v1839
    %v1973 = vunpack.c.l.b16 %v1840
    %v1974 = vunpack.c.l.b16 %v1841
    %v1975 = vunpack.c.l.b16 %v1842
    %v1976 = vunpack.c.l.b16 %v1843
    %v1977 = vunpack.c.l.b16 %v1844
    %v1978 = vpack.c.b16 %v1963, %v1962
    %v1979 = vpack.c.b16 %v1965, %v1964
    %v1980 = vpack.c.b16 %v1967, %v1966
    %v1981 = vpack.c.b16 %v1969, %v1968
    %v1982 = vpack.c.b16 %v1971, %v1970
    %v1983 = vpack.c.b16 %v1973, %v1972
    %v1984 = vpack.c.b16 %v1975, %v1974
    %v1985 = vpack.c.b16 %v1977, %v1976
    %1994 = vmatprep.subr.bf16.mxu0 0
    %1995 = vmatpush1.bf16.msra.mxu0 %v1978
    %1996 = vmatprep.subr.bf16.mxu0 0
    %1997 = vmatpush1.bf16.msra.mxu0 %v1979
    %1998 = vmatprep.subr.bf16.mxu0 0
    %1999 = vmatpush1.bf16.msra.mxu0 %v1980
    %2000 = vmatprep.subr.bf16.mxu0 0
    %2001 = vmatpush1.bf16.msra.mxu0 %v1981
    %2002 = vmatprep.subr.bf16.mxu0 0
    %2003 = vmatpush1.bf16.msra.mxu0 %v1982
    %2004 = vmatprep.subr.bf16.mxu0 0
    %2005 = vmatpush1.bf16.msra.mxu0 %v1983
    %2006 = vmatprep.subr.bf16.mxu0 0
    %2007 = vmatpush1.bf16.msra.mxu0 %v1984
    %2008 = vmatprep.subr.bf16.mxu0 0
    %2009 = vmatpush1.bf16.msra.mxu0 %v1985
    %2010 = vmatprep.subr.bf16.mxu0 0
    %2011 = vmatpush1.bf16.msra.mxu0 0
    %2012 = vmatprep.subr.bf16.mxu0 0
    %2013 = vmatpush1.bf16.msra.mxu0 0
    %2014 = vmatprep.subr.bf16.mxu0 0
    %2015 = vmatpush1.bf16.msra.mxu0 0
    %2016 = vmatprep.subr.bf16.mxu0 0
    %2017 = vmatpush1.bf16.msra.mxu0 0
    %2018 = vmatprep.subr.bf16.mxu0 0
    %2019 = vmatpush1.bf16.msra.mxu0 0
    %2020 = vmatprep.subr.bf16.mxu0 0
    %2021 = vmatpush1.bf16.msra.mxu0 0
    %2022 = vmatprep.subr.bf16.mxu0 0
    %2023 = vmatpush1.bf16.msra.mxu0 0
    %2024 = vmatprep.subr.bf16.mxu0 0
    %2025 = vmatpush1.bf16.msra.mxu0 0
    %2026 = vmatprep.mubr.bf16.mxu0 0
    %2027 = vmatmul.mubr.bf16.gmra.mrb[0].mxu0 %v1859
    %v2028 = vpop.f32.mrb[0].mxu0
    %v2029 = vadd.f32 0.0, %v2028
    %v2030 = vpop.f32.mrb[0].mxu0
    %v2031 = vpop.f32.mrb[0].mxu0
    %v2032 = vadd.f32 0.0, %v2031
    %v2033 = vpop.f32.mrb[0].mxu0
    %2034 = vmatprep.mubr.bf16.mxu0 0
    %2035 = vmatmul.mubr.bf16.gmra.mrb[0].mxu0 %v1867
    %v2036 = vpop.f32.mrb[0].mxu0
    %v2037 = vadd.f32 0.0, %v2036
    %v2038 = vpop.f32.mrb[0].mxu0
    %v2039 = vpop.f32.mrb[0].mxu0
    %v2040 = vadd.f32 0.0, %v2039
    %v2041 = vpop.f32.mrb[0].mxu0
    %2042 = vmatprep.mubr.bf16.mxu0 0
    %2043 = vmatmul.mubr.bf16.gmra.mrb[0].mxu0 %v1875
    %v2044 = vpop.f32.mrb[0].mxu0
    %v2045 = vadd.f32 0.0, %v2044
    %v2046 = vpop.f32.mrb[0].mxu0
    %v2047 = vpop.f32.mrb[0].mxu0
    %v2048 = vadd.f32 0.0, %v2047
    %v2049 = vpop.f32.mrb[0].mxu0
    %2050 = vmatprep.mubr.bf16.mxu0 0
    %2051 = vmatmul.mubr.bf16.gmra.mrb[0].mxu0 %v1883
    %v2052 = vpop.f32.mrb[0].mxu0
    %v2053 = vadd.f32 0.0, %v2052
    %v2054 = vpop.f32.mrb[0].mxu0
    %v2055 = vpop.f32.mrb[0].mxu0
    %v2056 = vadd.f32 0.0, %v2055
    %v2057 = vpop.f32.mrb[0].mxu0
    %2058 = vmatprep.mubr.bf16.mxu0 0
    %2059 = vmatmul.mubr.bf16.gmra.mrb[0].mxu0 %v1891
    %v2060 = vpop.f32.mrb[0].mxu0
    %v2061 = vadd.f32 0.0, %v2060
    %v2062 = vpop.f32.mrb[0].mxu0
    %v2063 = vpop.f32.mrb[0].mxu0
    %v2064 = vadd.f32 0.0, %v2063
    %v2065 = vpop.f32.mrb[0].mxu0
    %2066 = vmatprep.mubr.bf16.mxu0 0
    %2067 = vmatmul.mubr.bf16.gmra.mrb[0].mxu0 %v1899
    %v2068 = vpop.f32.mrb[0].mxu0
    %v2069 = vadd.f32 0.0, %v2068
    %v2070 = vpop.f32.mrb[0].mxu0
    %v2071 = vpop.f32.mrb[0].mxu0
    %v2072 = vadd.f32 0.0, %v2071
    %v2073 = vpop.f32.mrb[0].mxu0
    %2074 = vmatprep.mubr.bf16.mxu0 0
    %2075 = vmatmul.mubr.bf16.gmra.mrb[0].mxu0 %v1907
    %v2076 = vpop.f32.mrb[0].mxu0
    %v2077 = vadd.f32 0.0, %v2076
    %v2078 = vpop.f32.mrb[0].mxu0
    %v2079 = vpop.f32.mrb[0].mxu0
    %v2080 = vadd.f32 0.0, %v2079
    %v2081 = vpop.f32.mrb[0].mxu0
    %2082 = vmatprep.mubr.bf16.mxu0 0
    %2083 = vmatmul.mubr.bf16.gmra.mrb[0].mxu0 %v1915
    %v2084 = vpop.f32.mrb[0].mxu0
    %v2085 = vadd.f32 0.0, %v2084
    %v2086 = vpop.f32.mrb[0].mxu0
    %v2087 = vpop.f32.mrb[0].mxu0
    %v2088 = vadd.f32 0.0, %v2087
    %v2089 = vpop.f32.mrb[0].mxu0
    %2090 = vmatprep.mubr.bf16.mxu0 0
    %2091 = vmatmul.mubr.bf16.gmra.mrb[0].mxu0 %v1923
    %v2092 = vpop.f32.mrb[0].mxu0
    %v2093 = vadd.f32 0.0, %v2092
    %v2094 = vpop.f32.mrb[0].mxu0
    %v2095 = vpop.f32.mrb[0].mxu0
    %v2096 = vadd.f32 0.0, %v2095
    %v2097 = vpop.f32.mrb[0].mxu0
    %2098 = vmatprep.mubr.bf16.mxu0 0
    %2099 = vmatmul.mubr.bf16.gmra.mrb[0].mxu0 %v1931
    %v2100 = vpop.f32.mrb[0].mxu0
    %v2101 = vadd.f32 0.0, %v2100
    %v2102 = vpop.f32.mrb[0].mxu0
    %v2103 = vpop.f32.mrb[0].mxu0
    %v2104 = vadd.f32 0.0, %v2103
    %v2105 = vpop.f32.mrb[0].mxu0
    %2106 = vmatprep.mubr.bf16.mxu0 0
    %2107 = vmatmul.mubr.bf16.gmra.mrb[0].mxu0 %v1934
    %v2108 = vpop.f32.mrb[0].mxu0
    %v2109 = vadd.f32 0.0, %v2108
    %v2110 = vpop.f32.mrb[0].mxu0
    %v2111 = vpop.f32.mrb[0].mxu0
    %v2112 = vpop.f32.mrb[0].mxu0
    %2113 = vdwg.mxu0
    %v2114 = vadd.f32 %v1806, %v2029
    %v2115 = vadd.f32 %v1807, %v2032
    %v2116 = vadd.f32 %v1808, %v2037
    %v2117 = vadd.f32 %v1809, %v2040
    %v2118 = vadd.f32 %v1810, %v2045
    %v2119 = vadd.f32 %v1811, %v2048
    %v2120 = vadd.f32 %v1812, %v2053
    %v2121 = vadd.f32 %v1813, %v2056
    %v2122 = vadd.f32 %v1814, %v2061
    %v2123 = vadd.f32 %v1815, %v2064
    %v2124 = vadd.f32 %v1816, %v2069
    %v2125 = vadd.f32 %v1817, %v2072
    %v2126 = vadd.f32 %v1818, %v2077
    %v2127 = vadd.f32 %v1819, %v2080
    %v2128 = vadd.f32 %v1820, %v2085
    %v2129 = vadd.f32 %v1821, %v2088
    %v2130 = vadd.f32 %v1822, %v2093
    %v2131 = vadd.f32 %v1823, %v2096
    %v2132 = vadd.f32 %v1824, %v2101
    %v2133 = vadd.f32 %v1825, %v2104
    %v2134 = vadd.f32 %v1826, %v2109
    %v2135 = vld [vmem:[%s1535 + $0x50] sm:$0x3]
    %s2136 = scalar_lea.vmem [#allocation5], 448
    %v2137 = vld [vmem:[%s2136] sm:$0xf]
    %v2138 = vld [vmem:[%s2136 + $0x4] sm:$0xf]
    %v2139 = vld [vmem:[%s2136 + $0x8] sm:$0xf]
    %v2140 = vld [vmem:[%s2136 + $0xc] sm:$0xf]
    %v2141 = vld [vmem:[%s2136 + $0x10] sm:$0xf]
    %v2142 = vld [vmem:[%s2136 + $0x14] sm:$0xf]
    %v2143 = vld [vmem:[%s2136 + $0x18] sm:$0xf]
    %v2144 = vld [vmem:[%s2136 + $0x1c] sm:$0xf]
    %v2145 = vld [vmem:[%s2136 + $0x20] sm:$0xf]
    %v2146 = vld [vmem:[%s2136 + $0x24] sm:$0xf]
    %v2147 = vld [vmem:[%s2136 + $0x28] sm:$0xf]
    %v2148 = vld [vmem:[%s2136 + $0x2c] sm:$0xf]
    %v2149 = vld [vmem:[%s2136 + $0x30] sm:$0xf]
    %v2150 = vld [vmem:[%s2136 + $0x34] sm:$0xf]
    %v2151 = vld [vmem:[%s2136 + $0x38] sm:$0xf]
    %v2152 = vld [vmem:[%s2136 + $0x3c] sm:$0xf]
    %v2154 = vunpack.c.l.b16 %v2135
    %v2155 = vpack.c.b16 %v2154, %v2154
    %v2157 = vshrl.u32 %v1616, 16
    %v2159 = vshll.u32 %v1616, 16
    %v2161 = vrot.slane %v2159, 1
    %v2162 = vor.u32 %v2157, %v2161
    %v2164 = vshll.u32 %v1617, 16
    %v2166 = vrot.slane %v2164, 1
    %v2167 = vsel %vm647, %v2162, %v2166
    %v2168 = vshrl.u32 %v1617, 16
    %v2170 = vor.u32 %v2168, %v2166
    %v2172 = vshll.u32 %v1618, 16
    %v2174 = vrot.slane %v2172, 1
    %v2175 = vsel %vm647, %v2170, %v2174
    %v2176 = vshrl.u32 %v1618, 16
    %v2178 = vor.u32 %v2176, %v2174
    %v2180 = vshll.u32 %v1619, 16
    %v2182 = vrot.slane %v2180, 1
    %v2183 = vsel %vm647, %v2178, %v2182
    %v2184 = vshrl.u32 %v1619, 16
    %v2186 = vor.u32 %v2184, %v2182
    %v2188 = vshll.u32 %v1620, 16
    %v2190 = vrot.slane %v2188, 1
    %v2191 = vsel %vm647, %v2186, %v2190
    %v2192 = vshrl.u32 %v1620, 16
    %v2194 = vor.u32 %v2192, %v2190
    %v2196 = vshll.u32 %v1621, 16
    %v2198 = vrot.slane %v2196, 1
    %v2199 = vsel %vm647, %v2194, %v2198
    %v2200 = vshrl.u32 %v1621, 16
    %v2202 = vor.u32 %v2200, %v2198
    %v2204 = vshll.u32 %v1622, 16
    %v2206 = vrot.slane %v2204, 1
    %v2207 = vsel %vm647, %v2202, %v2206
    %v2208 = vshrl.u32 %v1622, 16
    %v2210 = vor.u32 %v2208, %v2206
    %v2212 = vshll.u32 %v1623, 16
    %v2214 = vrot.slane %v2212, 1
    %v2215 = vsel %vm647, %v2210, %v2214
    %v2216 = vshrl.u32 %v1623, 16
    %v2218 = vor.u32 %v2216, %v2214
    %v2220 = vshll.u32 %v1624, 16
    %v2222 = vrot.slane %v2220, 1
    %v2223 = vsel %vm647, %v2218, %v2222
    %v2224 = vshrl.u32 %v1624, 16
    %v2226 = vor.u32 %v2224, %v2222
    %v2228 = vshll.u32 %v1625, 16
    %v2230 = vrot.slane %v2228, 1
    %v2231 = vsel %vm647, %v2226, %v2230
    %v2232 = vshrl.u32 %v1625, 16
    %v2234 = vor.u32 %v2232, %v2230
    %v2236 = vshll.u32 %v2155, 16
    %v2238 = vrot.slane %v2236, 1
    %v2239 = vsel %vm647, %v2234, %v2238
    %v2240 = vshrl.u32 %v2155, 16
    %v2242 = vor.u32 %v2240, %v2238
    %v2270 = vunpack.c.l.b16 %v2137
    %v2271 = vunpack.c.l.b16 %v2138
    %v2272 = vunpack.c.l.b16 %v2139
    %v2273 = vunpack.c.l.b16 %v2140
    %v2274 = vunpack.c.l.b16 %v2141
    %v2275 = vunpack.c.l.b16 %v2142
    %v2276 = vunpack.c.l.b16 %v2143
    %v2277 = vunpack.c.l.b16 %v2144
    %v2278 = vunpack.c.l.b16 %v2145
    %v2279 = vunpack.c.l.b16 %v2146
    %v2280 = vunpack.c.l.b16 %v2147
    %v2281 = vunpack.c.l.b16 %v2148
    %v2282 = vunpack.c.l.b16 %v2149
    %v2283 = vunpack.c.l.b16 %v2150
    %v2284 = vunpack.c.l.b16 %v2151
    %v2285 = vunpack.c.l.b16 %v2152
    %v2286 = vpack.c.b16 %v2271, %v2270
    %v2287 = vpack.c.b16 %v2273, %v2272
    %v2288 = vpack.c.b16 %v2275, %v2274
    %v2289 = vpack.c.b16 %v2277, %v2276
    %v2290 = vpack.c.b16 %v2279, %v2278
    %v2291 = vpack.c.b16 %v2281, %v2280
    %v2292 = vpack.c.b16 %v2283, %v2282
    %v2293 = vpack.c.b16 %v2285, %v2284
    %2302 = vmatprep.subr.bf16.mxu0 0
    %2303 = vmatpush1.bf16.msra.mxu0 %v2286
    %2304 = vmatprep.subr.bf16.mxu0 0
    %2305 = vmatpush1.bf16.msra.mxu0 %v2287
    %2306 = vmatprep.subr.bf16.mxu0 0
    %2307 = vmatpush1.bf16.msra.mxu0 %v2288
    %2308 = vmatprep.subr.bf16.mxu0 0
    %2309 = vmatpush1.bf16.msra.mxu0 %v2289
    %2310 = vmatprep.subr.bf16.mxu0 0
    %2311 = vmatpush1.bf16.msra.mxu0 %v2290
    %2312 = vmatprep.subr.bf16.mxu0 0
    %2313 = vmatpush1.bf16.msra.mxu0 %v2291
    %2314 = vmatprep.subr.bf16.mxu0 0
    %2315 = vmatpush1.bf16.msra.mxu0 %v2292
    %2316 = vmatprep.subr.bf16.mxu0 0
    %2317 = vmatpush1.bf16.msra.mxu0 %v2293
    %2318 = vmatprep.subr.bf16.mxu0 0
    %2319 = vmatpush1.bf16.msra.mxu0 0
    %2320 = vmatprep.subr.bf16.mxu0 0
    %2321 = vmatpush1.bf16.msra.mxu0 0
    %2322 = vmatprep.subr.bf16.mxu0 0
    %2323 = vmatpush1.bf16.msra.mxu0 0
    %2324 = vmatprep.subr.bf16.mxu0 0
    %2325 = vmatpush1.bf16.msra.mxu0 0
    %2326 = vmatprep.subr.bf16.mxu0 0
    %2327 = vmatpush1.bf16.msra.mxu0 0
    %2328 = vmatprep.subr.bf16.mxu0 0
    %2329 = vmatpush1.bf16.msra.mxu0 0
    %2330 = vmatprep.subr.bf16.mxu0 0
    %2331 = vmatpush1.bf16.msra.mxu0 0
    %2332 = vmatprep.subr.bf16.mxu0 0
    %2333 = vmatpush1.bf16.msra.mxu0 0
    %2334 = vmatprep.mubr.bf16.mxu0 0
    %2335 = vmatmul.mubr.bf16.gmra.mrb[0].mxu0 %v2167
    %v2336 = vpop.f32.mrb[0].mxu0
    %v2337 = vadd.f32 0.0, %v2336
    %v2338 = vpop.f32.mrb[0].mxu0
    %v2339 = vpop.f32.mrb[0].mxu0
    %v2340 = vadd.f32 0.0, %v2339
    %v2341 = vpop.f32.mrb[0].mxu0
    %2342 = vmatprep.mubr.bf16.mxu0 0
    %2343 = vmatmul.mubr.bf16.gmra.mrb[0].mxu0 %v2175
    %v2344 = vpop.f32.mrb[0].mxu0
    %v2345 = vadd.f32 0.0, %v2344
    %v2346 = vpop.f32.mrb[0].mxu0
    %v2347 = vpop.f32.mrb[0].mxu0
    %v2348 = vadd.f32 0.0, %v2347
    %v2349 = vpop.f32.mrb[0].mxu0
    %2350 = vmatprep.mubr.bf16.mxu0 0
    %2351 = vmatmul.mubr.bf16.gmra.mrb[0].mxu0 %v2183
    %v2352 = vpop.f32.mrb[0].mxu0
    %v2353 = vadd.f32 0.0, %v2352
    %v2354 = vpop.f32.mrb[0].mxu0
    %v2355 = vpop.f32.mrb[0].mxu0
    %v2356 = vadd.f32 0.0, %v2355
    %v2357 = vpop.f32.mrb[0].mxu0
    %2358 = vmatprep.mubr.bf16.mxu0 0
    %2359 = vmatmul.mubr.bf16.gmra.mrb[0].mxu0 %v2191
    %v2360 = vpop.f32.mrb[0].mxu0
    %v2361 = vadd.f32 0.0, %v2360
    %v2362 = vpop.f32.mrb[0].mxu0
    %v2363 = vpop.f32.mrb[0].mxu0
    %v2364 = vadd.f32 0.0, %v2363
    %v2365 = vpop.f32.mrb[0].mxu0
    %2366 = vmatprep.mubr.bf16.mxu0 0
    %2367 = vmatmul.mubr.bf16.gmra.mrb[0].mxu0 %v2199
    %v2368 = vpop.f32.mrb[0].mxu0
    %v2369 = vadd.f32 0.0, %v2368
    %v2370 = vpop.f32.mrb[0].mxu0
    %v2371 = vpop.f32.mrb[0].mxu0
    %v2372 = vadd.f32 0.0, %v2371
    %v2373 = vpop.f32.mrb[0].mxu0
    %2374 = vmatprep.mubr.bf16.mxu0 0
    %2375 = vmatmul.mubr.bf16.gmra.mrb[0].mxu0 %v2207
    %v2376 = vpop.f32.mrb[0].mxu0
    %v2377 = vadd.f32 0.0, %v2376
    %v2378 = vpop.f32.mrb[0].mxu0
    %v2379 = vpop.f32.mrb[0].mxu0
    %v2380 = vadd.f32 0.0, %v2379
    %v2381 = vpop.f32.mrb[0].mxu0
    %2382 = vmatprep.mubr.bf16.mxu0 0
    %2383 = vmatmul.mubr.bf16.gmra.mrb[0].mxu0 %v2215
    %v2384 = vpop.f32.mrb[0].mxu0
    %v2385 = vadd.f32 0.0, %v2384
    %v2386 = vpop.f32.mrb[0].mxu0
    %v2387 = vpop.f32.mrb[0].mxu0
    %v2388 = vadd.f32 0.0, %v2387
    %v2389 = vpop.f32.mrb[0].mxu0
    %2390 = vmatprep.mubr.bf16.mxu0 0
    %2391 = vmatmul.mubr.bf16.gmra.mrb[0].mxu0 %v2223
    %v2392 = vpop.f32.mrb[0].mxu0
    %v2393 = vadd.f32 0.0, %v2392
    %v2394 = vpop.f32.mrb[0].mxu0
    %v2395 = vpop.f32.mrb[0].mxu0
    %v2396 = vadd.f32 0.0, %v2395
    %v2397 = vpop.f32.mrb[0].mxu0
    %2398 = vmatprep.mubr.bf16.mxu0 0
    %2399 = vmatmul.mubr.bf16.gmra.mrb[0].mxu0 %v2231
    %v2400 = vpop.f32.mrb[0].mxu0
    %v2401 = vadd.f32 0.0, %v2400
    %v2402 = vpop.f32.mrb[0].mxu0
    %v2403 = vpop.f32.mrb[0].mxu0
    %v2404 = vadd.f32 0.0, %v2403
    %v2405 = vpop.f32.mrb[0].mxu0
    %2406 = vmatprep.mubr.bf16.mxu0 0
    %2407 = vmatmul.mubr.bf16.gmra.mrb[0].mxu0 %v2239
    %v2408 = vpop.f32.mrb[0].mxu0
    %v2409 = vadd.f32 0.0, %v2408
    %v2410 = vpop.f32.mrb[0].mxu0
    %v2411 = vpop.f32.mrb[0].mxu0
    %v2412 = vadd.f32 0.0, %v2411
    %v2413 = vpop.f32.mrb[0].mxu0
    %2414 = vmatprep.mubr.bf16.mxu0 0
    %2415 = vmatmul.mubr.bf16.gmra.mrb[0].mxu0 %v2242
    %v2416 = vpop.f32.mrb[0].mxu0
    %v2417 = vadd.f32 0.0, %v2416
    %v2418 = vpop.f32.mrb[0].mxu0
    %v2419 = vpop.f32.mrb[0].mxu0
    %v2420 = vpop.f32.mrb[0].mxu0
    %2421 = vdwg.mxu0
    %v2422 = vadd.f32 %v2114, %v2337
    %v2423 = vadd.f32 %v2115, %v2340
    %v2424 = vadd.f32 %v2116, %v2345
    %v2425 = vadd.f32 %v2117, %v2348
    %v2426 = vadd.f32 %v2118, %v2353
    %v2427 = vadd.f32 %v2119, %v2356
    %v2428 = vadd.f32 %v2120, %v2361
    %v2429 = vadd.f32 %v2121, %v2364
    %v2430 = vadd.f32 %v2122, %v2369
    %v2431 = vadd.f32 %v2123, %v2372
    %v2432 = vadd.f32 %v2124, %v2377
    %v2433 = vadd.f32 %v2125, %v2380
    %v2434 = vadd.f32 %v2126, %v2385
    %v2435 = vadd.f32 %v2127, %v2388
    %v2436 = vadd.f32 %v2128, %v2393
    %v2437 = vadd.f32 %v2129, %v2396
    %v2438 = vadd.f32 %v2130, %v2401
    %v2439 = vadd.f32 %v2131, %v2404
    %v2440 = vadd.f32 %v2132, %v2409
    %v2441 = vadd.f32 %v2133, %v2412
    %v2442 = vadd.f32 %v2134, %v2417
    %v2443 = vld [vmem:[#allocation2 + $0x4] sm:$0xf]
    %v2444 = vld [vmem:[#allocation2 + $0x8] sm:$0xf]
    %v2445 = vld [vmem:[#allocation2 + $0xc] sm:$0xf]
    %v2446 = vld [vmem:[#allocation2 + $0x10] sm:$0xf]
    %v2447 = vld [vmem:[#allocation2 + $0x14] sm:$0xf]
    %v2448 = vld [vmem:[#allocation2 + $0x18] sm:$0xf]
    %v2449 = vld [vmem:[#allocation2 + $0x1c] sm:$0xf]
    %v2450 = vld [vmem:[#allocation2 + $0x20] sm:$0xf]
    %v2451 = vld [vmem:[#allocation2 + $0x24] sm:$0xf]
    %v2452 = vld [vmem:[#allocation2 + $0x28] sm:$0xf]
    %v2453 = vld [vmem:[#allocation2 + $0x2c] sm:$0xf]
    %v2454 = vld [vmem:[#allocation2 + $0x30] sm:$0xf]
    %v2455 = vld [vmem:[#allocation2 + $0x34] sm:$0xf]
    %v2456 = vld [vmem:[#allocation2 + $0x38] sm:$0xf]
    %v2457 = vld [vmem:[#allocation2 + $0x3c] sm:$0xf]
    %v2458 = vld [vmem:[#allocation2 + $0x40] sm:$0xf]
    %v2459 = vld [vmem:[#allocation2 + $0x44] sm:$0xf]
    %v2460 = vld [vmem:[#allocation2 + $0x48] sm:$0xf]
    %v2461 = vld [vmem:[#allocation2 + $0x4c] sm:$0xf]
    %v2462 = vld [vmem:[#allocation2 + $0x50] sm:$0xf]
    %v2463 = vld [vmem:[#allocation2 + $0x54] sm:$0x3]
    %s2464 = scalar_lea.vmem [#allocation5], 512
    %v2465 = vld [vmem:[%s2464] sm:$0xf]
    %v2466 = vld [vmem:[%s2464 + $0x4] sm:$0xf]
    %v2467 = vld [vmem:[%s2464 + $0x8] sm:$0xf]
    %v2468 = vld [vmem:[%s2464 + $0xc] sm:$0xf]
    %v2469 = vld [vmem:[%s2464 + $0x10] sm:$0xf]
    %v2470 = vld [vmem:[%s2464 + $0x14] sm:$0xf]
    %v2471 = vld [vmem:[%s2464 + $0x18] sm:$0xf]
    %v2472 = vld [vmem:[%s2464 + $0x1c] sm:$0xf]
    %v2473 = vld [vmem:[%s2464 + $0x20] sm:$0xf]
    %v2474 = vld [vmem:[%s2464 + $0x24] sm:$0xf]
    %v2475 = vld [vmem:[%s2464 + $0x28] sm:$0xf]
    %v2476 = vld [vmem:[%s2464 + $0x2c] sm:$0xf]
    %v2477 = vld [vmem:[%s2464 + $0x30] sm:$0xf]
    %v2478 = vld [vmem:[%s2464 + $0x34] sm:$0xf]
    %v2479 = vld [vmem:[%s2464 + $0x38] sm:$0xf]
    %v2480 = vld [vmem:[%s2464 + $0x3c] sm:$0xf]
    %v2502 = vunpack.c.l.b16 %v2443
    %v2503 = vunpack.c.l.b16 %v2444
    %v2504 = vunpack.c.l.b16 %v2445
    %v2505 = vunpack.c.l.b16 %v2446
    %v2506 = vunpack.c.l.b16 %v2447
    %v2507 = vunpack.c.l.b16 %v2448
    %v2508 = vunpack.c.l.b16 %v2449
    %v2509 = vunpack.c.l.b16 %v2450
    %v2510 = vunpack.c.l.b16 %v2451
    %v2511 = vunpack.c.l.b16 %v2452
    %v2512 = vunpack.c.l.b16 %v2453
    %v2513 = vunpack.c.l.b16 %v2454
    %v2514 = vunpack.c.l.b16 %v2455
    %v2515 = vunpack.c.l.b16 %v2456
    %v2516 = vunpack.c.l.b16 %v2457
    %v2517 = vunpack.c.l.b16 %v2458
    %v2518 = vunpack.c.l.b16 %v2459
    %v2519 = vunpack.c.l.b16 %v2460
    %v2520 = vunpack.c.l.b16 %v2461
    %v2521 = vunpack.c.l.b16 %v2462
    %v2522 = vunpack.c.l.b16 %v2463
    %v2523 = vpack.c.b16 %v2503, %v2502
    %v2524 = vpack.c.b16 %v2505, %v2504
    %v2525 = vpack.c.b16 %v2507, %v2506
    %v2526 = vpack.c.b16 %v2509, %v2508
    %v2527 = vpack.c.b16 %v2511, %v2510
    %v2528 = vpack.c.b16 %v2513, %v2512
    %v2529 = vpack.c.b16 %v2515, %v2514
    %v2530 = vpack.c.b16 %v2517, %v2516
    %v2531 = vpack.c.b16 %v2519, %v2518
    %v2532 = vpack.c.b16 %v2521, %v2520
    %v2533 = vpack.c.b16 %v2522, %v2522
    %v2535 = vshrl.u32 %v2523, 16
    %v2537 = vshll.u32 %v2523, 16
    %v2539 = vrot.slane %v2537, 1
    %v2540 = vor.u32 %v2535, %v2539
    %v2542 = vshll.u32 %v2524, 16
    %v2544 = vrot.slane %v2542, 1
    %v2545 = vsel %vm647, %v2540, %v2544
    %v2546 = vshrl.u32 %v2524, 16
    %v2548 = vor.u32 %v2546, %v2544
    %v2550 = vshll.u32 %v2525, 16
    %v2552 = vrot.slane %v2550, 1
    %v2553 = vsel %vm647, %v2548, %v2552
    %v2554 = vshrl.u32 %v2525, 16
    %v2556 = vor.u32 %v2554, %v2552
    %v2558 = vshll.u32 %v2526, 16
    %v2560 = vrot.slane %v2558, 1
    %v2561 = vsel %vm647, %v2556, %v2560
    %v2562 = vshrl.u32 %v2526, 16
    %v2564 = vor.u32 %v2562, %v2560
    %v2566 = vshll.u32 %v2527, 16
    %v2568 = vrot.slane %v2566, 1
    %v2569 = vsel %vm647, %v2564, %v2568
    %v2570 = vshrl.u32 %v2527, 16
    %v2572 = vor.u32 %v2570, %v2568
    %v2574 = vshll.u32 %v2528, 16
    %v2576 = vrot.slane %v2574, 1
    %v2577 = vsel %vm647, %v2572, %v2576
    %v2578 = vshrl.u32 %v2528, 16
    %v2580 = vor.u32 %v2578, %v2576
    %v2582 = vshll.u32 %v2529, 16
    %v2584 = vrot.slane %v2582, 1
    %v2585 = vsel %vm647, %v2580, %v2584
    %v2586 = vshrl.u32 %v2529, 16
    %v2588 = vor.u32 %v2586, %v2584
    %v2590 = vshll.u32 %v2530, 16
    %v2592 = vrot.slane %v2590, 1
    %v2593 = vsel %vm647, %v2588, %v2592
    %v2594 = vshrl.u32 %v2530, 16
    %v2596 = vor.u32 %v2594, %v2592
    %v2598 = vshll.u32 %v2531, 16
    %v2600 = vrot.slane %v2598, 1
    %v2601 = vsel %vm647, %v2596, %v2600
    %v2602 = vshrl.u32 %v2531, 16
    %v2604 = vor.u32 %v2602, %v2600
    %v2606 = vshll.u32 %v2532, 16
    %v2608 = vrot.slane %v2606, 1
    %v2609 = vsel %vm647, %v2604, %v2608
    %v2610 = vshrl.u32 %v2532, 16
    %v2612 = vor.u32 %v2610, %v2608
    %v2614 = vshll.u32 %v2533, 16
    %v2616 = vrot.slane %v2614, 1
    %v2617 = vsel %vm647, %v2612, %v2616
    %v2618 = vshrl.u32 %v2533, 16
    %v2620 = vor.u32 %v2618, %v2616
    %v2648 = vunpack.c.l.b16 %v2465
    %v2649 = vunpack.c.l.b16 %v2466
    %v2650 = vunpack.c.l.b16 %v2467
    %v2651 = vunpack.c.l.b16 %v2468
    %v2652 = vunpack.c.l.b16 %v2469
    %v2653 = vunpack.c.l.b16 %v2470
    %v2654 = vunpack.c.l.b16 %v2471
    %v2655 = vunpack.c.l.b16 %v2472
    %v2656 = vunpack.c.l.b16 %v2473
    %v2657 = vunpack.c.l.b16 %v2474
    %v2658 = vunpack.c.l.b16 %v2475
    %v2659 = vunpack.c.l.b16 %v2476
    %v2660 = vunpack.c.l.b16 %v2477
    %v2661 = vunpack.c.l.b16 %v2478
    %v2662 = vunpack.c.l.b16 %v2479
    %v2663 = vunpack.c.l.b16 %v2480
    %v2664 = vpack.c.b16 %v2649, %v2648
    %v2665 = vpack.c.b16 %v2651, %v2650
    %v2666 = vpack.c.b16 %v2653, %v2652
    %v2667 = vpack.c.b16 %v2655, %v2654
    %v2668 = vpack.c.b16 %v2657, %v2656
    %v2669 = vpack.c.b16 %v2659, %v2658
    %v2670 = vpack.c.b16 %v2661, %v2660
    %v2671 = vpack.c.b16 %v2663, %v2662
    %2680 = vmatprep.subr.bf16.mxu0 0
    %2681 = vmatpush1.bf16.msra.mxu0 %v2664
    %2682 = vmatprep.subr.bf16.mxu0 0
    %2683 = vmatpush1.bf16.msra.mxu0 %v2665
    %2684 = vmatprep.subr.bf16.mxu0 0
    %2685 = vmatpush1.bf16.msra.mxu0 %v2666
    %2686 = vmatprep.subr.bf16.mxu0 0
    %2687 = vmatpush1.bf16.msra.mxu0 %v2667
    %2688 = vmatprep.subr.bf16.mxu0 0
    %2689 = vmatpush1.bf16.msra.mxu0 %v2668
    %2690 = vmatprep.subr.bf16.mxu0 0
    %2691 = vmatpush1.bf16.msra.mxu0 %v2669
    %2692 = vmatprep.subr.bf16.mxu0 0
    %2693 = vmatpush1.bf16.msra.mxu0 %v2670
    %2694 = vmatprep.subr.bf16.mxu0 0
    %2695 = vmatpush1.bf16.msra.mxu0 %v2671
    %2696 = vmatprep.subr.bf16.mxu0 0
    %2697 = vmatpush1.bf16.msra.mxu0 0
    %2698 = vmatprep.subr.bf16.mxu0 0
    %2699 = vmatpush1.bf16.msra.mxu0 0
    %2700 = vmatprep.subr.bf16.mxu0 0
    %2701 = vmatpush1.bf16.msra.mxu0 0
    %2702 = vmatprep.subr.bf16.mxu0 0
    %2703 = vmatpush1.bf16.msra.mxu0 0
    %2704 = vmatprep.subr.bf16.mxu0 0
    %2705 = vmatpush1.bf16.msra.mxu0 0
    %2706 = vmatprep.subr.bf16.mxu0 0
    %2707 = vmatpush1.bf16.msra.mxu0 0
    %2708 = vmatprep.subr.bf16.mxu0 0
    %2709 = vmatpush1.bf16.msra.mxu0 0
    %2710 = vmatprep.subr.bf16.mxu0 0
    %2711 = vmatpush1.bf16.msra.mxu0 0
    %2712 = vmatprep.mubr.bf16.mxu0 0
    %2713 = vmatmul.mubr.bf16.gmra.mrb[0].mxu0 %v2545
    %v2714 = vpop.f32.mrb[0].mxu0
    %v2715 = vadd.f32 0.0, %v2714
    %v2716 = vpop.f32.mrb[0].mxu0
    %v2717 = vpop.f32.mrb[0].mxu0
    %v2718 = vadd.f32 0.0, %v2717
    %v2719 = vpop.f32.mrb[0].mxu0
    %2720 = vmatprep.mubr.bf16.mxu0 0
    %2721 = vmatmul.mubr.bf16.gmra.mrb[0].mxu0 %v2553
    %v2722 = vpop.f32.mrb[0].mxu0
    %v2723 = vadd.f32 0.0, %v2722
    %v2724 = vpop.f32.mrb[0].mxu0
    %v2725 = vpop.f32.mrb[0].mxu0
    %v2726 = vadd.f32 0.0, %v2725
    %v2727 = vpop.f32.mrb[0].mxu0
    %2728 = vmatprep.mubr.bf16.mxu0 0
    %2729 = vmatmul.mubr.bf16.gmra.mrb[0].mxu0 %v2561
    %v2730 = vpop.f32.mrb[0].mxu0
    %v2731 = vadd.f32 0.0, %v2730
    %v2732 = vpop.f32.mrb[0].mxu0
    %v2733 = vpop.f32.mrb[0].mxu0
    %v2734 = vadd.f32 0.0, %v2733
    %v2735 = vpop.f32.mrb[0].mxu0
    %2736 = vmatprep.mubr.bf16.mxu0 0
    %2737 = vmatmul.mubr.bf16.gmra.mrb[0].mxu0 %v2569
    %v2738 = vpop.f32.mrb[0].mxu0
    %v2739 = vadd.f32 0.0, %v2738
    %v2740 = vpop.f32.mrb[0].mxu0
    %v2741 = vpop.f32.mrb[0].mxu0
    %v2742 = vadd.f32 0.0, %v2741
    %v2743 = vpop.f32.mrb[0].mxu0
    %2744 = vmatprep.mubr.bf16.mxu0 0
    %2745 = vmatmul.mubr.bf16.gmra.mrb[0].mxu0 %v2577
    %v2746 = vpop.f32.mrb[0].mxu0
    %v2747 = vadd.f32 0.0, %v2746
    %v2748 = vpop.f32.mrb[0].mxu0
    %v2749 = vpop.f32.mrb[0].mxu0
    %v2750 = vadd.f32 0.0, %v2749
    %v2751 = vpop.f32.mrb[0].mxu0
    %2752 = vmatprep.mubr.bf16.mxu0 0
    %2753 = vmatmul.mubr.bf16.gmra.mrb[0].mxu0 %v2585
    %v2754 = vpop.f32.mrb[0].mxu0
    %v2755 = vadd.f32 0.0, %v2754
    %v2756 = vpop.f32.mrb[0].mxu0
    %v2757 = vpop.f32.mrb[0].mxu0
    %v2758 = vadd.f32 0.0, %v2757
    %v2759 = vpop.f32.mrb[0].mxu0
    %2760 = vmatprep.mubr.bf16.mxu0 0
    %2761 = vmatmul.mubr.bf16.gmra.mrb[0].mxu0 %v2593
    %v2762 = vpop.f32.mrb[0].mxu0
    %v2763 = vadd.f32 0.0, %v2762
    %v2764 = vpop.f32.mrb[0].mxu0
    %v2765 = vpop.f32.mrb[0].mxu0
    %v2766 = vadd.f32 0.0, %v2765
    %v2767 = vpop.f32.mrb[0].mxu0
    %2768 = vmatprep.mubr.bf16.mxu0 0
    %2769 = vmatmul.mubr.bf16.gmra.mrb[0].mxu0 %v2601
    %v2770 = vpop.f32.mrb[0].mxu0
    %v2771 = vadd.f32 0.0, %v2770
    %v2772 = vpop.f32.mrb[0].mxu0
    %v2773 = vpop.f32.mrb[0].mxu0
    %v2774 = vadd.f32 0.0, %v2773
    %v2775 = vpop.f32.mrb[0].mxu0
    %2776 = vmatprep.mubr.bf16.mxu0 0
    %2777 = vmatmul.mubr.bf16.gmra.mrb[0].mxu0 %v2609
    %v2778 = vpop.f32.mrb[0].mxu0
    %v2779 = vadd.f32 0.0, %v2778
    %v2780 = vpop.f32.mrb[0].mxu0
    %v2781 = vpop.f32.mrb[0].mxu0
    %v2782 = vadd.f32 0.0, %v2781
    %v2783 = vpop.f32.mrb[0].mxu0
    %2784 = vmatprep.mubr.bf16.mxu0 0
    %2785 = vmatmul.mubr.bf16.gmra.mrb[0].mxu0 %v2617
    %v2786 = vpop.f32.mrb[0].mxu0
    %v2787 = vadd.f32 0.0, %v2786
    %v2788 = vpop.f32.mrb[0].mxu0
    %v2789 = vpop.f32.mrb[0].mxu0
    %v2790 = vadd.f32 0.0, %v2789
    %v2791 = vpop.f32.mrb[0].mxu0
    %2792 = vmatprep.mubr.bf16.mxu0 0
    %2793 = vmatmul.mubr.bf16.gmra.mrb[0].mxu0 %v2620
    %v2794 = vpop.f32.mrb[0].mxu0
    %v2795 = vadd.f32 0.0, %v2794
    %v2796 = vpop.f32.mrb[0].mxu0
    %v2797 = vpop.f32.mrb[0].mxu0
    %v2798 = vpop.f32.mrb[0].mxu0
    %2799 = vdwg.mxu0
    %v2800 = vadd.f32 %v2422, %v2715
    %v2801 = vadd.f32 %v2423, %v2718
    %v2802 = vadd.f32 %v2424, %v2723
    %v2803 = vadd.f32 %v2425, %v2726
    %v2804 = vadd.f32 %v2426, %v2731
    %v2805 = vadd.f32 %v2427, %v2734
    %v2806 = vadd.f32 %v2428, %v2739
    %v2807 = vadd.f32 %v2429, %v2742
    %v2808 = vadd.f32 %v2430, %v2747
    %v2809 = vadd.f32 %v2431, %v2750
    %v2810 = vadd.f32 %v2432, %v2755
    %v2811 = vadd.f32 %v2433, %v2758
    %v2812 = vadd.f32 %v2434, %v2763
    %v2813 = vadd.f32 %v2435, %v2766
    %v2814 = vadd.f32 %v2436, %v2771
    %v2815 = vadd.f32 %v2437, %v2774
    %v2816 = vadd.f32 %v2438, %v2779
    %v2817 = vadd.f32 %v2439, %v2782
    %v2818 = vadd.f32 %v2440, %v2787
    %v2819 = vadd.f32 %v2441, %v2790
    %v2820 = vadd.f32 %v2442, %v2795
    %v2821 = vld [vmem:[%s123 + $0x4] sm:$0xf]
    %v2822 = vld [vmem:[%s123 + $0x8] sm:$0xf]
    %v2823 = vld [vmem:[%s123 + $0xc] sm:$0xf]
    %v2824 = vld [vmem:[%s123 + $0x10] sm:$0xf]
    %v2825 = vld [vmem:[%s123 + $0x14] sm:$0xf]
    %v2826 = vld [vmem:[%s123 + $0x18] sm:$0xf]
    %v2827 = vld [vmem:[%s123 + $0x1c] sm:$0xf]
    %v2828 = vld [vmem:[%s123 + $0x20] sm:$0xf]
    %v2829 = vld [vmem:[%s123 + $0x24] sm:$0xf]
    %v2830 = vld [vmem:[%s123 + $0x28] sm:$0xf]
    %v2831 = vld [vmem:[%s123 + $0x2c] sm:$0xf]
    %v2832 = vld [vmem:[%s123 + $0x30] sm:$0xf]
    %v2833 = vld [vmem:[%s123 + $0x34] sm:$0xf]
    %v2834 = vld [vmem:[%s123 + $0x38] sm:$0xf]
    %v2835 = vld [vmem:[%s123 + $0x3c] sm:$0xf]
    %v2836 = vld [vmem:[%s123 + $0x40] sm:$0xf]
    %v2837 = vld [vmem:[%s123 + $0x44] sm:$0xf]
    %v2838 = vld [vmem:[%s123 + $0x48] sm:$0xf]
    %v2839 = vld [vmem:[%s123 + $0x4c] sm:$0xf]
    %v2840 = vld [vmem:[%s123 + $0x50] sm:$0xf]
    %v2841 = vld [vmem:[%s123 + $0x54] sm:$0x3]
    %s2842 = scalar_lea.vmem [#allocation5], 576
    %v2843 = vld [vmem:[%s2842] sm:$0xf]
    %v2844 = vld [vmem:[%s2842 + $0x4] sm:$0xf]
    %v2845 = vld [vmem:[%s2842 + $0x8] sm:$0xf]
    %v2846 = vld [vmem:[%s2842 + $0xc] sm:$0xf]
    %v2847 = vld [vmem:[%s2842 + $0x10] sm:$0xf]
    %v2848 = vld [vmem:[%s2842 + $0x14] sm:$0xf]
    %v2849 = vld [vmem:[%s2842 + $0x18] sm:$0xf]
    %v2850 = vld [vmem:[%s2842 + $0x1c] sm:$0xf]
    %v2851 = vld [vmem:[%s2842 + $0x20] sm:$0xf]
    %v2852 = vld [vmem:[%s2842 + $0x24] sm:$0xf]
    %v2853 = vld [vmem:[%s2842 + $0x28] sm:$0xf]
    %v2854 = vld [vmem:[%s2842 + $0x2c] sm:$0xf]
    %v2855 = vld [vmem:[%s2842 + $0x30] sm:$0xf]
    %v2856 = vld [vmem:[%s2842 + $0x34] sm:$0xf]
    %v2857 = vld [vmem:[%s2842 + $0x38] sm:$0xf]
    %v2858 = vld [vmem:[%s2842 + $0x3c] sm:$0xf]
    %v2880 = vunpack.c.l.b16 %v2821
    %v2881 = vunpack.c.l.b16 %v2822
    %v2882 = vunpack.c.l.b16 %v2823
    %v2883 = vunpack.c.l.b16 %v2824
    %v2884 = vunpack.c.l.b16 %v2825
    %v2885 = vunpack.c.l.b16 %v2826
    %v2886 = vunpack.c.l.b16 %v2827
    %v2887 = vunpack.c.l.b16 %v2828
    %v2888 = vunpack.c.l.b16 %v2829
    %v2889 = vunpack.c.l.b16 %v2830
    %v2890 = vunpack.c.l.b16 %v2831
    %v2891 = vunpack.c.l.b16 %v2832
    %v2892 = vunpack.c.l.b16 %v2833
    %v2893 = vunpack.c.l.b16 %v2834
    %v2894 = vunpack.c.l.b16 %v2835
    %v2895 = vunpack.c.l.b16 %v2836
    %v2896 = vunpack.c.l.b16 %v2837
    %v2897 = vunpack.c.l.b16 %v2838
    %v2898 = vunpack.c.l.b16 %v2839
    %v2899 = vunpack.c.l.b16 %v2840
    %v2900 = vunpack.c.l.b16 %v2841
    %v2901 = vpack.c.b16 %v2881, %v2880
    %v2902 = vpack.c.b16 %v2883, %v2882
    %v2903 = vpack.c.b16 %v2885, %v2884
    %v2904 = vpack.c.b16 %v2887, %v2886
    %v2905 = vpack.c.b16 %v2889, %v2888
    %v2906 = vpack.c.b16 %v2891, %v2890
    %v2907 = vpack.c.b16 %v2893, %v2892
    %v2908 = vpack.c.b16 %v2895, %v2894
    %v2909 = vpack.c.b16 %v2897, %v2896
    %v2910 = vpack.c.b16 %v2899, %v2898
    %v2911 = vpack.c.b16 %v2900, %v2900
    %v2913 = vshrl.u32 %v2901, 16
    %v2915 = vshll.u32 %v2901, 16
    %v2917 = vrot.slane %v2915, 1
    %v2918 = vor.u32 %v2913, %v2917
    %v2920 = vshll.u32 %v2902, 16
    %v2922 = vrot.slane %v2920, 1
    %v2923 = vsel %vm647, %v2918, %v2922
    %v2924 = vshrl.u32 %v2902, 16
    %v2926 = vor.u32 %v2924, %v2922
    %v2928 = vshll.u32 %v2903, 16
    %v2930 = vrot.slane %v2928, 1
    %v2931 = vsel %vm647, %v2926, %v2930
    %v2932 = vshrl.u32 %v2903, 16
    %v2934 = vor.u32 %v2932, %v2930
    %v2936 = vshll.u32 %v2904, 16
    %v2938 = vrot.slane %v2936, 1
    %v2939 = vsel %vm647, %v2934, %v2938
    %v2940 = vshrl.u32 %v2904, 16
    %v2942 = vor.u32 %v2940, %v2938
    %v2944 = vshll.u32 %v2905, 16
    %v2946 = vrot.slane %v2944, 1
    %v2947 = vsel %vm647, %v2942, %v2946
    %v2948 = vshrl.u32 %v2905, 16
    %v2950 = vor.u32 %v2948, %v2946
    %v2952 = vshll.u32 %v2906, 16
    %v2954 = vrot.slane %v2952, 1
    %v2955 = vsel %vm647, %v2950, %v2954
    %v2956 = vshrl.u32 %v2906, 16
    %v2958 = vor.u32 %v2956, %v2954
    %v2960 = vshll.u32 %v2907, 16
    %v2962 = vrot.slane %v2960, 1
    %v2963 = vsel %vm647, %v2958, %v2962
    %v2964 = vshrl.u32 %v2907, 16
    %v2966 = vor.u32 %v2964, %v2962
    %v2968 = vshll.u32 %v2908, 16
    %v2970 = vrot.slane %v2968, 1
    %v2971 = vsel %vm647, %v2966, %v2970
    %v2972 = vshrl.u32 %v2908, 16
    %v2974 = vor.u32 %v2972, %v2970
    %v2976 = vshll.u32 %v2909, 16
    %v2978 = vrot.slane %v2976, 1
    %v2979 = vsel %vm647, %v2974, %v2978
    %v2980 = vshrl.u32 %v2909, 16
    %v2982 = vor.u32 %v2980, %v2978
    %v2984 = vshll.u32 %v2910, 16
    %v2986 = vrot.slane %v2984, 1
    %v2987 = vsel %vm647, %v2982, %v2986
    %v2988 = vshrl.u32 %v2910, 16
    %v2990 = vor.u32 %v2988, %v2986
    %v2992 = vshll.u32 %v2911, 16
    %v2994 = vrot.slane %v2992, 1
    %v2995 = vsel %vm647, %v2990, %v2994
    %v2996 = vshrl.u32 %v2911, 16
    %v2998 = vor.u32 %v2996, %v2994
    %v3026 = vunpack.c.l.b16 %v2843
    %v3027 = vunpack.c.l.b16 %v2844
    %v3028 = vunpack.c.l.b16 %v2845
    %v3029 = vunpack.c.l.b16 %v2846
    %v3030 = vunpack.c.l.b16 %v2847
    %v3031 = vunpack.c.l.b16 %v2848
    %v3032 = vunpack.c.l.b16 %v2849
    %v3033 = vunpack.c.l.b16 %v2850
    %v3034 = vunpack.c.l.b16 %v2851
    %v3035 = vunpack.c.l.b16 %v2852
    %v3036 = vunpack.c.l.b16 %v2853
    %v3037 = vunpack.c.l.b16 %v2854
    %v3038 = vunpack.c.l.b16 %v2855
    %v3039 = vunpack.c.l.b16 %v2856
    %v3040 = vunpack.c.l.b16 %v2857
    %v3041 = vunpack.c.l.b16 %v2858
    %v3042 = vpack.c.b16 %v3027, %v3026
    %v3043 = vpack.c.b16 %v3029, %v3028
    %v3044 = vpack.c.b16 %v3031, %v3030
    %v3045 = vpack.c.b16 %v3033, %v3032
    %v3046 = vpack.c.b16 %v3035, %v3034
    %v3047 = vpack.c.b16 %v3037, %v3036
    %v3048 = vpack.c.b16 %v3039, %v3038
    %v3049 = vpack.c.b16 %v3041, %v3040
    %3058 = vmatprep.subr.bf16.mxu0 0
    %3059 = vmatpush1.bf16.msra.mxu0 %v3042
    %3060 = vmatprep.subr.bf16.mxu0 0
    %3061 = vmatpush1.bf16.msra.mxu0 %v3043
    %3062 = vmatprep.subr.bf16.mxu0 0
    %3063 = vmatpush1.bf16.msra.mxu0 %v3044
    %3064 = vmatprep.subr.bf16.mxu0 0
    %3065 = vmatpush1.bf16.msra.mxu0 %v3045
    %3066 = vmatprep.subr.bf16.mxu0 0
    %3067 = vmatpush1.bf16.msra.mxu0 %v3046
    %3068 = vmatprep.subr.bf16.mxu0 0
    %3069 = vmatpush1.bf16.msra.mxu0 %v3047
    %3070 = vmatprep.subr.bf16.mxu0 0
    %3071 = vmatpush1.bf16.msra.mxu0 %v3048
    %3072 = vmatprep.subr.bf16.mxu0 0
    %3073 = vmatpush1.bf16.msra.mxu0 %v3049
    %3074 = vmatprep.subr.bf16.mxu0 0
    %3075 = vmatpush1.bf16.msra.mxu0 0
    %3076 = vmatprep.subr.bf16.mxu0 0
    %3077 = vmatpush1.bf16.msra.mxu0 0
    %3078 = vmatprep.subr.bf16.mxu0 0
    %3079 = vmatpush1.bf16.msra.mxu0 0
    %3080 = vmatprep.subr.bf16.mxu0 0
    %3081 = vmatpush1.bf16.msra.mxu0 0
    %3082 = vmatprep.subr.bf16.mxu0 0
    %3083 = vmatpush1.bf16.msra.mxu0 0
    %3084 = vmatprep.subr.bf16.mxu0 0
    %3085 = vmatpush1.bf16.msra.mxu0 0
    %3086 = vmatprep.subr.bf16.mxu0 0
    %3087 = vmatpush1.bf16.msra.mxu0 0
    %3088 = vmatprep.subr.bf16.mxu0 0
    %3089 = vmatpush1.bf16.msra.mxu0 0
    %3090 = vmatprep.mubr.bf16.mxu0 0
    %3091 = vmatmul.mubr.bf16.gmra.mrb[0].mxu0 %v2923
    %v3092 = vpop.f32.mrb[0].mxu0
    %v3093 = vadd.f32 0.0, %v3092
    %v3094 = vpop.f32.mrb[0].mxu0
    %v3095 = vpop.f32.mrb[0].mxu0
    %v3096 = vadd.f32 0.0, %v3095
    %v3097 = vpop.f32.mrb[0].mxu0
    %3098 = vmatprep.mubr.bf16.mxu0 0
    %3099 = vmatmul.mubr.bf16.gmra.mrb[0].mxu0 %v2931
    %v3100 = vpop.f32.mrb[0].mxu0
    %v3101 = vadd.f32 0.0, %v3100
    %v3102 = vpop.f32.mrb[0].mxu0
    %v3103 = vpop.f32.mrb[0].mxu0
    %v3104 = vadd.f32 0.0, %v3103
    %v3105 = vpop.f32.mrb[0].mxu0
    %3106 = vmatprep.mubr.bf16.mxu0 0
    %3107 = vmatmul.mubr.bf16.gmra.mrb[0].mxu0 %v2939
    %v3108 = vpop.f32.mrb[0].mxu0
    %v3109 = vadd.f32 0.0, %v3108
    %v3110 = vpop.f32.mrb[0].mxu0
    %v3111 = vpop.f32.mrb[0].mxu0
    %v3112 = vadd.f32 0.0, %v3111
    %v3113 = vpop.f32.mrb[0].mxu0
    %3114 = vmatprep.mubr.bf16.mxu0 0
    %3115 = vmatmul.mubr.bf16.gmra.mrb[0].mxu0 %v2947
    %v3116 = vpop.f32.mrb[0].mxu0
    %v3117 = vadd.f32 0.0, %v3116
    %v3118 = vpop.f32.mrb[0].mxu0
    %v3119 = vpop.f32.mrb[0].mxu0
    %v3120 = vadd.f32 0.0, %v3119
    %v3121 = vpop.f32.mrb[0].mxu0
    %3122 = vmatprep.mubr.bf16.mxu0 0
    %3123 = vmatmul.mubr.bf16.gmra.mrb[0].mxu0 %v2955
    %v3124 = vpop.f32.mrb[0].mxu0
    %v3125 = vadd.f32 0.0, %v3124
    %v3126 = vpop.f32.mrb[0].mxu0
    %v3127 = vpop.f32.mrb[0].mxu0
    %v3128 = vadd.f32 0.0, %v3127
    %v3129 = vpop.f32.mrb[0].mxu0
    %3130 = vmatprep.mubr.bf16.mxu0 0
    %3131 = vmatmul.mubr.bf16.gmra.mrb[0].mxu0 %v2963
    %v3132 = vpop.f32.mrb[0].mxu0
    %v3133 = vadd.f32 0.0, %v3132
    %v3134 = vpop.f32.mrb[0].mxu0
    %v3135 = vpop.f32.mrb[0].mxu0
    %v3136 = vadd.f32 0.0, %v3135
    %v3137 = vpop.f32.mrb[0].mxu0
    %3138 = vmatprep.mubr.bf16.mxu0 0
    %3139 = vmatmul.mubr.bf16.gmra.mrb[0].mxu0 %v2971
    %v3140 = vpop.f32.mrb[0].mxu0
    %v3141 = vadd.f32 0.0, %v3140
    %v3142 = vpop.f32.mrb[0].mxu0
    %v3143 = vpop.f32.mrb[0].mxu0
    %v3144 = vadd.f32 0.0, %v3143
    %v3145 = vpop.f32.mrb[0].mxu0
    %3146 = vmatprep.mubr.bf16.mxu0 0
    %3147 = vmatmul.mubr.bf16.gmra.mrb[0].mxu0 %v2979
    %v3148 = vpop.f32.mrb[0].mxu0
    %v3149 = vadd.f32 0.0, %v3148
    %v3150 = vpop.f32.mrb[0].mxu0
    %v3151 = vpop.f32.mrb[0].mxu0
    %v3152 = vadd.f32 0.0, %v3151
    %v3153 = vpop.f32.mrb[0].mxu0
    %3154 = vmatprep.mubr.bf16.mxu0 0
    %3155 = vmatmul.mubr.bf16.gmra.mrb[0].mxu0 %v2987
    %v3156 = vpop.f32.mrb[0].mxu0
    %v3157 = vadd.f32 0.0, %v3156
    %v3158 = vpop.f32.mrb[0].mxu0
    %v3159 = vpop.f32.mrb[0].mxu0
    %v3160 = vadd.f32 0.0, %v3159
    %v3161 = vpop.f32.mrb[0].mxu0
    %3162 = vmatprep.mubr.bf16.mxu0 0
    %3163 = vmatmul.mubr.bf16.gmra.mrb[0].mxu0 %v2995
    %v3164 = vpop.f32.mrb[0].mxu0
    %v3165 = vadd.f32 0.0, %v3164
    %v3166 = vpop.f32.mrb[0].mxu0
    %v3167 = vpop.f32.mrb[0].mxu0
    %v3168 = vadd.f32 0.0, %v3167
    %v3169 = vpop.f32.mrb[0].mxu0
    %3170 = vmatprep.mubr.bf16.mxu0 0
    %3171 = vmatmul.mubr.bf16.gmra.mrb[0].mxu0 %v2998
    %v3172 = vpop.f32.mrb[0].mxu0
    %v3173 = vadd.f32 0.0, %v3172
    %v3174 = vpop.f32.mrb[0].mxu0
    %v3175 = vpop.f32.mrb[0].mxu0
    %v3176 = vpop.f32.mrb[0].mxu0
    %3177 = vdwg.mxu0
    %v3178 = vadd.f32 %v2800, %v3093
    %v3179 = vadd.f32 %v2801, %v3096
    %v3180 = vadd.f32 %v2802, %v3101
    %v3181 = vadd.f32 %v2803, %v3104
    %v3182 = vadd.f32 %v2804, %v3109
    %v3183 = vadd.f32 %v2805, %v3112
    %v3184 = vadd.f32 %v2806, %v3117
    %v3185 = vadd.f32 %v2807, %v3120
    %v3186 = vadd.f32 %v2808, %v3125
    %v3187 = vadd.f32 %v2809, %v3128
    %v3188 = vadd.f32 %v2810, %v3133
    %v3189 = vadd.f32 %v2811, %v3136
    %v3190 = vadd.f32 %v2812, %v3141
    %v3191 = vadd.f32 %v2813, %v3144
    %v3192 = vadd.f32 %v2814, %v3149
    %v3193 = vadd.f32 %v2815, %v3152
    %v3194 = vadd.f32 %v2816, %v3157
    %v3195 = vadd.f32 %v2817, %v3160
    %v3196 = vadd.f32 %v2818, %v3165
    %v3197 = vadd.f32 %v2819, %v3168
    %v3198 = vadd.f32 %v2820, %v3173
    %v3199 = vld [vmem:[#allocation2 + $0x4] sm:$0xe]
    %s3200 = scalar_lea.vmem [#allocation5], 640
    %v3201 = vld [vmem:[%s3200] sm:$0xf]
    %v3202 = vld [vmem:[%s3200 + $0x4] sm:$0xf]
    %v3203 = vld [vmem:[%s3200 + $0x8] sm:$0xf]
    %v3204 = vld [vmem:[%s3200 + $0xc] sm:$0xf]
    %v3205 = vld [vmem:[%s3200 + $0x10] sm:$0xf]
    %v3206 = vld [vmem:[%s3200 + $0x14] sm:$0xf]
    %v3207 = vld [vmem:[%s3200 + $0x18] sm:$0xf]
    %v3208 = vld [vmem:[%s3200 + $0x1c] sm:$0xf]
    %v3209 = vld [vmem:[%s3200 + $0x20] sm:$0xf]
    %v3210 = vld [vmem:[%s3200 + $0x24] sm:$0xf]
    %v3211 = vld [vmem:[%s3200 + $0x28] sm:$0xf]
    %v3212 = vld [vmem:[%s3200 + $0x2c] sm:$0xf]
    %v3213 = vld [vmem:[%s3200 + $0x30] sm:$0xf]
    %v3214 = vld [vmem:[%s3200 + $0x34] sm:$0xf]
    %v3215 = vld [vmem:[%s3200 + $0x38] sm:$0xf]
    %v3216 = vld [vmem:[%s3200 + $0x3c] sm:$0xf]
    %v3218 = vunpack.c.l.b16 %v3199
    %v3219 = vpack.c.b16 %v2503, %v3218
    %vm3220 = vcmask 1046528
    %v3221 = vrot.slane %v3219, 1
    %v3222 = vrot.slane %v2524, 1
    %v3223 = vsel %vm3220, %v3221, %v3222
    %v3224 = vrot.slane %v2525, 1
    %v3225 = vsel %vm3220, %v3222, %v3224
    %v3226 = vrot.slane %v2526, 1
    %v3227 = vsel %vm3220, %v3224, %v3226
    %v3228 = vrot.slane %v2527, 1
    %v3229 = vsel %vm3220, %v3226, %v3228
    %v3230 = vrot.slane %v2528, 1
    %v3231 = vsel %vm3220, %v3228, %v3230
    %v3232 = vrot.slane %v2529, 1
    %v3233 = vsel %vm3220, %v3230, %v3232
    %v3234 = vrot.slane %v2530, 1
    %v3235 = vsel %vm3220, %v3232, %v3234
    %v3236 = vrot.slane %v2531, 1
    %v3237 = vsel %vm3220, %v3234, %v3236
    %v3238 = vrot.slane %v2532, 1
    %v3239 = vsel %vm3220, %v3236, %v3238
    %v3240 = vrot.slane %v2533, 1
    %v3241 = vsel %vm3220, %v3238, %v3240
    %v3269 = vunpack.c.l.b16 %v3201
    %v3270 = vunpack.c.l.b16 %v3202
    %v3271 = vunpack.c.l.b16 %v3203
    %v3272 = vunpack.c.l.b16 %v3204
    %v3273 = vunpack.c.l.b16 %v3205
    %v3274 = vunpack.c.l.b16 %v3206
    %v3275 = vunpack.c.l.b16 %v3207
    %v3276 = vunpack.c.l.b16 %v3208
    %v3277 = vunpack.c.l.b16 %v3209
    %v3278 = vunpack.c.l.b16 %v3210
    %v3279 = vunpack.c.l.b16 %v3211
    %v3280 = vunpack.c.l.b16 %v3212
    %v3281 = vunpack.c.l.b16 %v3213
    %v3282 = vunpack.c.l.b16 %v3214
    %v3283 = vunpack.c.l.b16 %v3215
    %v3284 = vunpack.c.l.b16 %v3216
    %v3285 = vpack.c.b16 %v3270, %v3269
    %v3286 = vpack.c.b16 %v3272, %v3271
    %v3287 = vpack.c.b16 %v3274, %v3273
    %v3288 = vpack.c.b16 %v3276, %v3275
    %v3289 = vpack.c.b16 %v3278, %v3277
    %v3290 = vpack.c.b16 %v3280, %v3279
    %v3291 = vpack.c.b16 %v3282, %v3281
    %v3292 = vpack.c.b16 %v3284, %v3283
    %3301 = vmatprep.subr.bf16.mxu0 0
    %3302 = vmatpush1.bf16.msra.mxu0 %v3285
    %3303 = vmatprep.subr.bf16.mxu0 0
    %3304 = vmatpush1.bf16.msra.mxu0 %v3286
    %3305 = vmatprep.subr.bf16.mxu0 0
    %3306 = vmatpush1.bf16.msra.mxu0 %v3287
    %3307 = vmatprep.subr.bf16.mxu0 0
    %3308 = vmatpush1.bf16.msra.mxu0 %v3288
    %3309 = vmatprep.subr.bf16.mxu0 0
    %3310 = vmatpush1.bf16.msra.mxu0 %v3289
    %3311 = vmatprep.subr.bf16.mxu0 0
    %3312 = vmatpush1.bf16.msra.mxu0 %v3290
    %3313 = vmatprep.subr.bf16.mxu0 0
    %3314 = vmatpush1.bf16.msra.mxu0 %v3291
    %3315 = vmatprep.subr.bf16.mxu0 0
    %3316 = vmatpush1.bf16.msra.mxu0 %v3292
    %3317 = vmatprep.subr.bf16.mxu0 0
    %3318 = vmatpush1.bf16.msra.mxu0 0
    %3319 = vmatprep.subr.bf16.mxu0 0
    %3320 = vmatpush1.bf16.msra.mxu0 0
    %3321 = vmatprep.subr.bf16.mxu0 0
    %3322 = vmatpush1.bf16.msra.mxu0 0
    %3323 = vmatprep.subr.bf16.mxu0 0
    %3324 = vmatpush1.bf16.msra.mxu0 0
    %3325 = vmatprep.subr.bf16.mxu0 0
    %3326 = vmatpush1.bf16.msra.mxu0 0
    %3327 = vmatprep.subr.bf16.mxu0 0
    %3328 = vmatpush1.bf16.msra.mxu0 0
    %3329 = vmatprep.subr.bf16.mxu0 0
    %3330 = vmatpush1.bf16.msra.mxu0 0
    %3331 = vmatprep.subr.bf16.mxu0 0
    %3332 = vmatpush1.bf16.msra.mxu0 0
    %3333 = vmatprep.mubr.bf16.mxu0 0
    %3334 = vmatmul.mubr.bf16.gmra.mrb[0].mxu0 %v3223
    %v3335 = vpop.f32.mrb[0].mxu0
    %v3336 = vadd.f32 0.0, %v3335
    %v3337 = vpop.f32.mrb[0].mxu0
    %v3338 = vpop.f32.mrb[0].mxu0
    %v3339 = vadd.f32 0.0, %v3338
    %v3340 = vpop.f32.mrb[0].mxu0
    %3341 = vmatprep.mubr.bf16.mxu0 0
    %3342 = vmatmul.mubr.bf16.gmra.mrb[0].mxu0 %v3225
    %v3343 = vpop.f32.mrb[0].mxu0
    %v3344 = vadd.f32 0.0, %v3343
    %v3345 = vpop.f32.mrb[0].mxu0
    %v3346 = vpop.f32.mrb[0].mxu0
    %v3347 = vadd.f32 0.0, %v3346
    %v3348 = vpop.f32.mrb[0].mxu0
    %3349 = vmatprep.mubr.bf16.mxu0 0
    %3350 = vmatmul.mubr.bf16.gmra.mrb[0].mxu0 %v3227
    %v3351 = vpop.f32.mrb[0].mxu0
    %v3352 = vadd.f32 0.0, %v3351
    %v3353 = vpop.f32.mrb[0].mxu0
    %v3354 = vpop.f32.mrb[0].mxu0
    %v3355 = vadd.f32 0.0, %v3354
    %v3356 = vpop.f32.mrb[0].mxu0
    %3357 = vmatprep.mubr.bf16.mxu0 0
    %3358 = vmatmul.mubr.bf16.gmra.mrb[0].mxu0 %v3229
    %v3359 = vpop.f32.mrb[0].mxu0
    %v3360 = vadd.f32 0.0, %v3359
    %v3361 = vpop.f32.mrb[0].mxu0
    %v3362 = vpop.f32.mrb[0].mxu0
    %v3363 = vadd.f32 0.0, %v3362
    %v3364 = vpop.f32.mrb[0].mxu0
    %3365 = vmatprep.mubr.bf16.mxu0 0
    %3366 = vmatmul.mubr.bf16.gmra.mrb[0].mxu0 %v3231
    %v3367 = vpop.f32.mrb[0].mxu0
    %v3368 = vadd.f32 0.0, %v3367
    %v3369 = vpop.f32.mrb[0].mxu0
    %v3370 = vpop.f32.mrb[0].mxu0
    %v3371 = vadd.f32 0.0, %v3370
    %v3372 = vpop.f32.mrb[0].mxu0
    %3373 = vmatprep.mubr.bf16.mxu0 0
    %3374 = vmatmul.mubr.bf16.gmra.mrb[0].mxu0 %v3233
    %v3375 = vpop.f32.mrb[0].mxu0
    %v3376 = vadd.f32 0.0, %v3375
    %v3377 = vpop.f32.mrb[0].mxu0
    %v3378 = vpop.f32.mrb[0].mxu0
    %v3379 = vadd.f32 0.0, %v3378
    %v3380 = vpop.f32.mrb[0].mxu0
    %3381 = vmatprep.mubr.bf16.mxu0 0
    %3382 = vmatmul.mubr.bf16.gmra.mrb[0].mxu0 %v3235
    %v3383 = vpop.f32.mrb[0].mxu0
    %v3384 = vadd.f32 0.0, %v3383
    %v3385 = vpop.f32.mrb[0].mxu0
    %v3386 = vpop.f32.mrb[0].mxu0
    %v3387 = vadd.f32 0.0, %v3386
    %v3388 = vpop.f32.mrb[0].mxu0
    %3389 = vmatprep.mubr.bf16.mxu0 0
    %3390 = vmatmul.mubr.bf16.gmra.mrb[0].mxu0 %v3237
    %v3391 = vpop.f32.mrb[0].mxu0
    %v3392 = vadd.f32 0.0, %v3391
    %v3393 = vpop.f32.mrb[0].mxu0
    %v3394 = vpop.f32.mrb[0].mxu0
    %v3395 = vadd.f32 0.0, %v3394
    %v3396 = vpop.f32.mrb[0].mxu0
    %3397 = vmatprep.mubr.bf16.mxu0 0
    %3398 = vmatmul.mubr.bf16.gmra.mrb[0].mxu0 %v3239
    %v3399 = vpop.f32.mrb[0].mxu0
    %v3400 = vadd.f32 0.0, %v3399
    %v3401 = vpop.f32.mrb[0].mxu0
    %v3402 = vpop.f32.mrb[0].mxu0
    %v3403 = vadd.f32 0.0, %v3402
    %v3404 = vpop.f32.mrb[0].mxu0
    %3405 = vmatprep.mubr.bf16.mxu0 0
    %3406 = vmatmul.mubr.bf16.gmra.mrb[0].mxu0 %v3241
    %v3407 = vpop.f32.mrb[0].mxu0
    %v3408 = vadd.f32 0.0, %v3407
    %v3409 = vpop.f32.mrb[0].mxu0
    %v3410 = vpop.f32.mrb[0].mxu0
    %v3411 = vadd.f32 0.0, %v3410
    %v3412 = vpop.f32.mrb[0].mxu0
    %3413 = vmatprep.mubr.bf16.mxu0 0
    %3414 = vmatmul.mubr.bf16.gmra.mrb[0].mxu0 %v3240
    %v3415 = vpop.f32.mrb[0].mxu0
    %v3416 = vadd.f32 0.0, %v3415
    %v3417 = vpop.f32.mrb[0].mxu0
    %v3418 = vpop.f32.mrb[0].mxu0
    %v3419 = vpop.f32.mrb[0].mxu0
    %3420 = vdwg.mxu0
    %v3421 = vadd.f32 %v3178, %v3336
    %v3422 = vadd.f32 %v3179, %v3339
    %v3423 = vadd.f32 %v3180, %v3344
    %v3424 = vadd.f32 %v3181, %v3347
    %v3425 = vadd.f32 %v3182, %v3352
    %v3426 = vadd.f32 %v3183, %v3355
    %v3427 = vadd.f32 %v3184, %v3360
    %v3428 = vadd.f32 %v3185, %v3363
    %v3429 = vadd.f32 %v3186, %v3368
    %v3430 = vadd.f32 %v3187, %v3371
    %v3431 = vadd.f32 %v3188, %v3376
    %v3432 = vadd.f32 %v3189, %v3379
    %v3433 = vadd.f32 %v3190, %v3384
    %v3434 = vadd.f32 %v3191, %v3387
    %v3435 = vadd.f32 %v3192, %v3392
    %v3436 = vadd.f32 %v3193, %v3395
    %v3437 = vadd.f32 %v3194, %v3400
    %v3438 = vadd.f32 %v3195, %v3403
    %v3439 = vadd.f32 %v3196, %v3408
    %v3440 = vadd.f32 %v3197, %v3411
    %v3441 = vadd.f32 %v3198, %v3416
    %v3442 = vld [vmem:[%s123 + $0x4] sm:$0xe]
    %s3443 = scalar_lea.vmem [#allocation5], 704
    %v3444 = vld [vmem:[%s3443] sm:$0xf]
    %v3445 = vld [vmem:[%s3443 + $0x4] sm:$0xf]
    %v3446 = vld [vmem:[%s3443 + $0x8] sm:$0xf]
    %v3447 = vld [vmem:[%s3443 + $0xc] sm:$0xf]
    %v3448 = vld [vmem:[%s3443 + $0x10] sm:$0xf]
    %v3449 = vld [vmem:[%s3443 + $0x14] sm:$0xf]
    %v3450 = vld [vmem:[%s3443 + $0x18] sm:$0xf]
    %v3451 = vld [vmem:[%s3443 + $0x1c] sm:$0xf]
    %v3452 = vld [vmem:[%s3443 + $0x20] sm:$0xf]
    %v3453 = vld [vmem:[%s3443 + $0x24] sm:$0xf]
    %v3454 = vld [vmem:[%s3443 + $0x28] sm:$0xf]
    %v3455 = vld [vmem:[%s3443 + $0x2c] sm:$0xf]
    %v3456 = vld [vmem:[%s3443 + $0x30] sm:$0xf]
    %v3457 = vld [vmem:[%s3443 + $0x34] sm:$0xf]
    %v3458 = vld [vmem:[%s3443 + $0x38] sm:$0xf]
    %v3459 = vld [vmem:[%s3443 + $0x3c] sm:$0xf]
    %v3461 = vunpack.c.l.b16 %v3442
    %v3462 = vpack.c.b16 %v2881, %v3461
    %v3463 = vrot.slane %v3462, 1
    %v3464 = vrot.slane %v2902, 1
    %v3465 = vsel %vm3220, %v3463, %v3464
    %v3466 = vrot.slane %v2903, 1
    %v3467 = vsel %vm3220, %v3464, %v3466
    %v3468 = vrot.slane %v2904, 1
    %v3469 = vsel %vm3220, %v3466, %v3468
    %v3470 = vrot.slane %v2905, 1
    %v3471 = vsel %vm3220, %v3468, %v3470
    %v3472 = vrot.slane %v2906, 1
    %v3473 = vsel %vm3220, %v3470, %v3472
    %v3474 = vrot.slane %v2907, 1
    %v3475 = vsel %vm3220, %v3472, %v3474
    %v3476 = vrot.slane %v2908, 1
    %v3477 = vsel %vm3220, %v3474, %v3476
    %v3478 = vrot.slane %v2909, 1
    %v3479 = vsel %vm3220, %v3476, %v3478
    %v3480 = vrot.slane %v2910, 1
    %v3481 = vsel %vm3220, %v3478, %v3480
    %v3482 = vrot.slane %v2911, 1
    %v3483 = vsel %vm3220, %v3480, %v3482
    %v3511 = vunpack.c.l.b16 %v3444
    %v3512 = vunpack.c.l.b16 %v3445
    %v3513 = vunpack.c.l.b16 %v3446
    %v3514 = vunpack.c.l.b16 %v3447
    %v3515 = vunpack.c.l.b16 %v3448
    %v3516 = vunpack.c.l.b16 %v3449
    %v3517 = vunpack.c.l.b16 %v3450
    %v3518 = vunpack.c.l.b16 %v3451
    %v3519 = vunpack.c.l.b16 %v3452
    %v3520 = vunpack.c.l.b16 %v3453
    %v3521 = vunpack.c.l.b16 %v3454
    %v3522 = vunpack.c.l.b16 %v3455
    %v3523 = vunpack.c.l.b16 %v3456
    %v3524 = vunpack.c.l.b16 %v3457
    %v3525 = vunpack.c.l.b16 %v3458
    %v3526 = vunpack.c.l.b16 %v3459
    %v3527 = vpack.c.b16 %v3512, %v3511
    %v3528 = vpack.c.b16 %v3514, %v3513
    %v3529 = vpack.c.b16 %v3516, %v3515
    %v3530 = vpack.c.b16 %v3518, %v3517
    %v3531 = vpack.c.b16 %v3520, %v3519
    %v3532 = vpack.c.b16 %v3522, %v3521
    %v3533 = vpack.c.b16 %v3524, %v3523
    %v3534 = vpack.c.b16 %v3526, %v3525
    %3543 = vmatprep.subr.bf16.mxu0 0
    %3544 = vmatpush1.bf16.msra.mxu0 %v3527
    %3545 = vmatprep.subr.bf16.mxu0 0
    %3546 = vmatpush1.bf16.msra.mxu0 %v3528
    %3547 = vmatprep.subr.bf16.mxu0 0
    %3548 = vmatpush1.bf16.msra.mxu0 %v3529
    %3549 = vmatprep.subr.bf16.mxu0 0
    %3550 = vmatpush1.bf16.msra.mxu0 %v3530
    %3551 = vmatprep.subr.bf16.mxu0 0
    %3552 = vmatpush1.bf16.msra.mxu0 %v3531
    %3553 = vmatprep.subr.bf16.mxu0 0
    %3554 = vmatpush1.bf16.msra.mxu0 %v3532
    %3555 = vmatprep.subr.bf16.mxu0 0
    %3556 = vmatpush1.bf16.msra.mxu0 %v3533
    %3557 = vmatprep.subr.bf16.mxu0 0
    %3558 = vmatpush1.bf16.msra.mxu0 %v3534
    %3559 = vmatprep.subr.bf16.mxu0 0
    %3560 = vmatpush1.bf16.msra.mxu0 0
    %3561 = vmatprep.subr.bf16.mxu0 0
    %3562 = vmatpush1.bf16.msra.mxu0 0
    %3563 = vmatprep.subr.bf16.mxu0 0
    %3564 = vmatpush1.bf16.msra.mxu0 0
    %3565 = vmatprep.subr.bf16.mxu0 0
    %3566 = vmatpush1.bf16.msra.mxu0 0
    %3567 = vmatprep.subr.bf16.mxu0 0
    %3568 = vmatpush1.bf16.msra.mxu0 0
    %3569 = vmatprep.subr.bf16.mxu0 0
    %3570 = vmatpush1.bf16.msra.mxu0 0
    %3571 = vmatprep.subr.bf16.mxu0 0
    %3572 = vmatpush1.bf16.msra.mxu0 0
    %3573 = vmatprep.subr.bf16.mxu0 0
    %3574 = vmatpush1.bf16.msra.mxu0 0
    %3575 = vmatprep.mubr.bf16.mxu0 0
    %3576 = vmatmul.mubr.bf16.gmra.mrb[0].mxu0 %v3465
    %v3577 = vpop.f32.mrb[0].mxu0
    %v3578 = vadd.f32 0.0, %v3577
    %v3579 = vpop.f32.mrb[0].mxu0
    %v3580 = vpop.f32.mrb[0].mxu0
    %v3581 = vadd.f32 0.0, %v3580
    %v3582 = vpop.f32.mrb[0].mxu0
    %3583 = vmatprep.mubr.bf16.mxu0 0
    %3584 = vmatmul.mubr.bf16.gmra.mrb[0].mxu0 %v3467
    %v3585 = vpop.f32.mrb[0].mxu0
    %v3586 = vadd.f32 0.0, %v3585
    %v3587 = vpop.f32.mrb[0].mxu0
    %v3588 = vpop.f32.mrb[0].mxu0
    %v3589 = vadd.f32 0.0, %v3588
    %v3590 = vpop.f32.mrb[0].mxu0
    %3591 = vmatprep.mubr.bf16.mxu0 0
    %3592 = vmatmul.mubr.bf16.gmra.mrb[0].mxu0 %v3469
    %v3593 = vpop.f32.mrb[0].mxu0
    %v3594 = vadd.f32 0.0, %v3593
    %v3595 = vpop.f32.mrb[0].mxu0
    %v3596 = vpop.f32.mrb[0].mxu0
    %v3597 = vadd.f32 0.0, %v3596
    %v3598 = vpop.f32.mrb[0].mxu0
    %3599 = vmatprep.mubr.bf16.mxu0 0
    %3600 = vmatmul.mubr.bf16.gmra.mrb[0].mxu0 %v3471
    %v3601 = vpop.f32.mrb[0].mxu0
    %v3602 = vadd.f32 0.0, %v3601
    %v3603 = vpop.f32.mrb[0].mxu0
    %v3604 = vpop.f32.mrb[0].mxu0
    %v3605 = vadd.f32 0.0, %v3604
    %v3606 = vpop.f32.mrb[0].mxu0
    %3607 = vmatprep.mubr.bf16.mxu0 0
    %3608 = vmatmul.mubr.bf16.gmra.mrb[0].mxu0 %v3473
    %v3609 = vpop.f32.mrb[0].mxu0
    %v3610 = vadd.f32 0.0, %v3609
    %v3611 = vpop.f32.mrb[0].mxu0
    %v3612 = vpop.f32.mrb[0].mxu0
    %v3613 = vadd.f32 0.0, %v3612
    %v3614 = vpop.f32.mrb[0].mxu0
    %3615 = vmatprep.mubr.bf16.mxu0 0
    %3616 = vmatmul.mubr.bf16.gmra.mrb[0].mxu0 %v3475
    %v3617 = vpop.f32.mrb[0].mxu0
    %v3618 = vadd.f32 0.0, %v3617
    %v3619 = vpop.f32.mrb[0].mxu0
    %v3620 = vpop.f32.mrb[0].mxu0
    %v3621 = vadd.f32 0.0, %v3620
    %v3622 = vpop.f32.mrb[0].mxu0
    %3623 = vmatprep.mubr.bf16.mxu0 0
    %3624 = vmatmul.mubr.bf16.gmra.mrb[0].mxu0 %v3477
    %v3625 = vpop.f32.mrb[0].mxu0
    %v3626 = vadd.f32 0.0, %v3625
    %v3627 = vpop.f32.mrb[0].mxu0
    %v3628 = vpop.f32.mrb[0].mxu0
    %v3629 = vadd.f32 0.0, %v3628
    %v3630 = vpop.f32.mrb[0].mxu0
    %3631 = vmatprep.mubr.bf16.mxu0 0
    %3632 = vmatmul.mubr.bf16.gmra.mrb[0].mxu0 %v3479
    %v3633 = vpop.f32.mrb[0].mxu0
    %v3634 = vadd.f32 0.0, %v3633
    %v3635 = vpop.f32.mrb[0].mxu0
    %v3636 = vpop.f32.mrb[0].mxu0
    %v3637 = vadd.f32 0.0, %v3636
    %v3638 = vpop.f32.mrb[0].mxu0
    %3639 = vmatprep.mubr.bf16.mxu0 0
    %3640 = vmatmul.mubr.bf16.gmra.mrb[0].mxu0 %v3481
    %v3641 = vpop.f32.mrb[0].mxu0
    %v3642 = vadd.f32 0.0, %v3641
    %v3643 = vpop.f32.mrb[0].mxu0
    %v3644 = vpop.f32.mrb[0].mxu0
    %v3645 = vadd.f32 0.0, %v3644
    %v3646 = vpop.f32.mrb[0].mxu0
    %3647 = vmatprep.mubr.bf16.mxu0 0
    %3648 = vmatmul.mubr.bf16.gmra.mrb[0].mxu0 %v3483
    %v3649 = vpop.f32.mrb[0].mxu0
    %v3650 = vadd.f32 0.0, %v3649
    %v3651 = vpop.f32.mrb[0].mxu0
    %v3652 = vpop.f32.mrb[0].mxu0
    %v3653 = vadd.f32 0.0, %v3652
    %v3654 = vpop.f32.mrb[0].mxu0
    %3655 = vmatprep.mubr.bf16.mxu0 0
    %3656 = vmatmul.mubr.bf16.gmra.mrb[0].mxu0 %v3482
    %v3657 = vpop.f32.mrb[0].mxu0
    %v3658 = vadd.f32 0.0, %v3657
    %v3659 = vpop.f32.mrb[0].mxu0
    %v3660 = vpop.f32.mrb[0].mxu0
    %v3661 = vpop.f32.mrb[0].mxu0
    %3662 = vdwg.mxu0
    %v3663 = vadd.f32 %v3421, %v3578
    %v3664 = vadd.f32 %v3422, %v3581
    %v3665 = vadd.f32 %v3423, %v3586
    %v3666 = vadd.f32 %v3424, %v3589
    %v3667 = vadd.f32 %v3425, %v3594
    %v3668 = vadd.f32 %v3426, %v3597
    %v3669 = vadd.f32 %v3427, %v3602
    %v3670 = vadd.f32 %v3428, %v3605
    %v3671 = vadd.f32 %v3429, %v3610
    %v3672 = vadd.f32 %v3430, %v3613
    %v3673 = vadd.f32 %v3431, %v3618
    %v3674 = vadd.f32 %v3432, %v3621
    %v3675 = vadd.f32 %v3433, %v3626
    %v3676 = vadd.f32 %v3434, %v3629
    %v3677 = vadd.f32 %v3435, %v3634
    %v3678 = vadd.f32 %v3436, %v3637
    %v3679 = vadd.f32 %v3437, %v3642
    %v3680 = vadd.f32 %v3438, %v3645
    %v3681 = vadd.f32 %v3439, %v3650
    %v3682 = vadd.f32 %v3440, %v3653
    %v3683 = vadd.f32 %v3441, %v3658
    %v3684 = vld [vmem:[%s1243 + $0x4] sm:$0xf]
    %v3685 = vld [vmem:[%s1243 + $0x8] sm:$0xf]
    %v3686 = vld [vmem:[%s1243 + $0xc] sm:$0xf]
    %v3687 = vld [vmem:[%s1243 + $0x10] sm:$0xf]
    %v3688 = vld [vmem:[%s1243 + $0x14] sm:$0xf]
    %v3689 = vld [vmem:[%s1243 + $0x18] sm:$0xf]
    %v3690 = vld [vmem:[%s1243 + $0x1c] sm:$0xf]
    %v3691 = vld [vmem:[%s1243 + $0x20] sm:$0xf]
    %v3692 = vld [vmem:[%s1243 + $0x24] sm:$0xf]
    %v3693 = vld [vmem:[%s1243 + $0x28] sm:$0xf]
    %v3694 = vld [vmem:[%s1243 + $0x2c] sm:$0xf]
    %v3695 = vld [vmem:[%s1243 + $0x30] sm:$0xf]
    %v3696 = vld [vmem:[%s1243 + $0x34] sm:$0xf]
    %v3697 = vld [vmem:[%s1243 + $0x38] sm:$0xf]
    %v3698 = vld [vmem:[%s1243 + $0x3c] sm:$0xf]
    %v3699 = vld [vmem:[%s1243 + $0x40] sm:$0xf]
    %v3700 = vld [vmem:[%s1243 + $0x44] sm:$0xf]
    %v3701 = vld [vmem:[%s1243 + $0x48] sm:$0xf]
    %v3702 = vld [vmem:[%s1243 + $0x4c] sm:$0xf]
    %v3703 = vld [vmem:[%s1243 + $0x50] sm:$0xf]
    %v3704 = vld [vmem:[%s1243 + $0x54] sm:$0x3]
    %s3705 = scalar_lea.vmem [#allocation5], 768
    %v3706 = vld [vmem:[%s3705] sm:$0xf]
    %v3707 = vld [vmem:[%s3705 + $0x4] sm:$0xf]
    %v3708 = vld [vmem:[%s3705 + $0x8] sm:$0xf]
    %v3709 = vld [vmem:[%s3705 + $0xc] sm:$0xf]
    %v3710 = vld [vmem:[%s3705 + $0x10] sm:$0xf]
    %v3711 = vld [vmem:[%s3705 + $0x14] sm:$0xf]
    %v3712 = vld [vmem:[%s3705 + $0x18] sm:$0xf]
    %v3713 = vld [vmem:[%s3705 + $0x1c] sm:$0xf]
    %v3714 = vld [vmem:[%s3705 + $0x20] sm:$0xf]
    %v3715 = vld [vmem:[%s3705 + $0x24] sm:$0xf]
    %v3716 = vld [vmem:[%s3705 + $0x28] sm:$0xf]
    %v3717 = vld [vmem:[%s3705 + $0x2c] sm:$0xf]
    %v3718 = vld [vmem:[%s3705 + $0x30] sm:$0xf]
    %v3719 = vld [vmem:[%s3705 + $0x34] sm:$0xf]
    %v3720 = vld [vmem:[%s3705 + $0x38] sm:$0xf]
    %v3721 = vld [vmem:[%s3705 + $0x3c] sm:$0xf]
    %v3743 = vunpack.c.l.b16 %v3684
    %v3744 = vunpack.c.l.b16 %v3685
    %v3745 = vunpack.c.l.b16 %v3686
    %v3746 = vunpack.c.l.b16 %v3687
    %v3747 = vunpack.c.l.b16 %v3688
    %v3748 = vunpack.c.l.b16 %v3689
    %v3749 = vunpack.c.l.b16 %v3690
    %v3750 = vunpack.c.l.b16 %v3691
    %v3751 = vunpack.c.l.b16 %v3692
    %v3752 = vunpack.c.l.b16 %v3693
    %v3753 = vunpack.c.l.b16 %v3694
    %v3754 = vunpack.c.l.b16 %v3695
    %v3755 = vunpack.c.l.b16 %v3696
    %v3756 = vunpack.c.l.b16 %v3697
    %v3757 = vunpack.c.l.b16 %v3698
    %v3758 = vunpack.c.l.b16 %v3699
    %v3759 = vunpack.c.l.b16 %v3700
    %v3760 = vunpack.c.l.b16 %v3701
    %v3761 = vunpack.c.l.b16 %v3702
    %v3762 = vunpack.c.l.b16 %v3703
    %v3763 = vunpack.c.l.b16 %v3704
    %v3764 = vpack.c.b16 %v3744, %v3743
    %v3765 = vpack.c.b16 %v3746, %v3745
    %v3766 = vpack.c.b16 %v3748, %v3747
    %v3767 = vpack.c.b16 %v3750, %v3749
    %v3768 = vpack.c.b16 %v3752, %v3751
    %v3769 = vpack.c.b16 %v3754, %v3753
    %v3770 = vpack.c.b16 %v3756, %v3755
    %v3771 = vpack.c.b16 %v3758, %v3757
    %v3772 = vpack.c.b16 %v3760, %v3759
    %v3773 = vpack.c.b16 %v3762, %v3761
    %v3774 = vpack.c.b16 %v3763, %v3763
    %v3776 = vshrl.u32 %v3764, 16
    %v3778 = vshll.u32 %v3764, 16
    %v3780 = vrot.slane %v3778, 1
    %v3781 = vor.u32 %v3776, %v3780
    %v3783 = vshll.u32 %v3765, 16
    %v3785 = vrot.slane %v3783, 1
    %v3786 = vsel %vm647, %v3781, %v3785
    %v3787 = vshrl.u32 %v3765, 16
    %v3789 = vor.u32 %v3787, %v3785
    %v3791 = vshll.u32 %v3766, 16
    %v3793 = vrot.slane %v3791, 1
    %v3794 = vsel %vm647, %v3789, %v3793
    %v3795 = vshrl.u32 %v3766, 16
    %v3797 = vor.u32 %v3795, %v3793
    %v3799 = vshll.u32 %v3767, 16
    %v3801 = vrot.slane %v3799, 1
    %v3802 = vsel %vm647, %v3797, %v3801
    %v3803 = vshrl.u32 %v3767, 16
    %v3805 = vor.u32 %v3803, %v3801
    %v3807 = vshll.u32 %v3768, 16
    %v3809 = vrot.slane %v3807, 1
    %v3810 = vsel %vm647, %v3805, %v3809
    %v3811 = vshrl.u32 %v3768, 16
    %v3813 = vor.u32 %v3811, %v3809
    %v3815 = vshll.u32 %v3769, 16
    %v3817 = vrot.slane %v3815, 1
    %v3818 = vsel %vm647, %v3813, %v3817
    %v3819 = vshrl.u32 %v3769, 16
    %v3821 = vor.u32 %v3819, %v3817
    %v3823 = vshll.u32 %v3770, 16
    %v3825 = vrot.slane %v3823, 1
    %v3826 = vsel %vm647, %v3821, %v3825
    %v3827 = vshrl.u32 %v3770, 16
    %v3829 = vor.u32 %v3827, %v3825
    %v3831 = vshll.u32 %v3771, 16
    %v3833 = vrot.slane %v3831, 1
    %v3834 = vsel %vm647, %v3829, %v3833
    %v3835 = vshrl.u32 %v3771, 16
    %v3837 = vor.u32 %v3835, %v3833
    %v3839 = vshll.u32 %v3772, 16
    %v3841 = vrot.slane %v3839, 1
    %v3842 = vsel %vm647, %v3837, %v3841
    %v3843 = vshrl.u32 %v3772, 16
    %v3845 = vor.u32 %v3843, %v3841
    %v3847 = vshll.u32 %v3773, 16
    %v3849 = vrot.slane %v3847, 1
    %v3850 = vsel %vm647, %v3845, %v3849
    %v3851 = vshrl.u32 %v3773, 16
    %v3853 = vor.u32 %v3851, %v3849
    %v3855 = vshll.u32 %v3774, 16
    %v3857 = vrot.slane %v3855, 1
    %v3858 = vsel %vm647, %v3853, %v3857
    %v3859 = vshrl.u32 %v3774, 16
    %v3861 = vor.u32 %v3859, %v3857
    %v3889 = vunpack.c.l.b16 %v3706
    %v3890 = vunpack.c.l.b16 %v3707
    %v3891 = vunpack.c.l.b16 %v3708
    %v3892 = vunpack.c.l.b16 %v3709
    %v3893 = vunpack.c.l.b16 %v3710
    %v3894 = vunpack.c.l.b16 %v3711
    %v3895 = vunpack.c.l.b16 %v3712
    %v3896 = vunpack.c.l.b16 %v3713
    %v3897 = vunpack.c.l.b16 %v3714
    %v3898 = vunpack.c.l.b16 %v3715
    %v3899 = vunpack.c.l.b16 %v3716
    %v3900 = vunpack.c.l.b16 %v3717
    %v3901 = vunpack.c.l.b16 %v3718
    %v3902 = vunpack.c.l.b16 %v3719
    %v3903 = vunpack.c.l.b16 %v3720
    %v3904 = vunpack.c.l.b16 %v3721
    %v3905 = vpack.c.b16 %v3890, %v3889
    %v3906 = vpack.c.b16 %v3892, %v3891
    %v3907 = vpack.c.b16 %v3894, %v3893
    %v3908 = vpack.c.b16 %v3896, %v3895
    %v3909 = vpack.c.b16 %v3898, %v3897
    %v3910 = vpack.c.b16 %v3900, %v3899
    %v3911 = vpack.c.b16 %v3902, %v3901
    %v3912 = vpack.c.b16 %v3904, %v3903
    %3921 = vmatprep.subr.bf16.mxu0 0
    %3922 = vmatpush1.bf16.msra.mxu0 %v3905
    %3923 = vmatprep.subr.bf16.mxu0 0
    %3924 = vmatpush1.bf16.msra.mxu0 %v3906
    %3925 = vmatprep.subr.bf16.mxu0 0
    %3926 = vmatpush1.bf16.msra.mxu0 %v3907
    %3927 = vmatprep.subr.bf16.mxu0 0
    %3928 = vmatpush1.bf16.msra.mxu0 %v3908
    %3929 = vmatprep.subr.bf16.mxu0 0
    %3930 = vmatpush1.bf16.msra.mxu0 %v3909
    %3931 = vmatprep.subr.bf16.mxu0 0
    %3932 = vmatpush1.bf16.msra.mxu0 %v3910
    %3933 = vmatprep.subr.bf16.mxu0 0
    %3934 = vmatpush1.bf16.msra.mxu0 %v3911
    %3935 = vmatprep.subr.bf16.mxu0 0
    %3936 = vmatpush1.bf16.msra.mxu0 %v3912
    %3937 = vmatprep.subr.bf16.mxu0 0
    %3938 = vmatpush1.bf16.msra.mxu0 0
    %3939 = vmatprep.subr.bf16.mxu0 0
    %3940 = vmatpush1.bf16.msra.mxu0 0
    %3941 = vmatprep.subr.bf16.mxu0 0
    %3942 = vmatpush1.bf16.msra.mxu0 0
    %3943 = vmatprep.subr.bf16.mxu0 0
    %3944 = vmatpush1.bf16.msra.mxu0 0
    %3945 = vmatprep.subr.bf16.mxu0 0
    %3946 = vmatpush1.bf16.msra.mxu0 0
    %3947 = vmatprep.subr.bf16.mxu0 0
    %3948 = vmatpush1.bf16.msra.mxu0 0
    %3949 = vmatprep.subr.bf16.mxu0 0
    %3950 = vmatpush1.bf16.msra.mxu0 0
    %3951 = vmatprep.subr.bf16.mxu0 0
    %3952 = vmatpush1.bf16.msra.mxu0 0
    %3953 = vmatprep.mubr.bf16.mxu0 0
    %3954 = vmatmul.mubr.bf16.gmra.mrb[0].mxu0 %v3786
    %v3955 = vpop.f32.mrb[0].mxu0
    %v3956 = vadd.f32 0.0, %v3955
    %v3957 = vpop.f32.mrb[0].mxu0
    %v3958 = vpop.f32.mrb[0].mxu0
    %v3959 = vadd.f32 0.0, %v3958
    %v3960 = vpop.f32.mrb[0].mxu0
    %3961 = vmatprep.mubr.bf16.mxu0 0
    %3962 = vmatmul.mubr.bf16.gmra.mrb[0].mxu0 %v3794
    %v3963 = vpop.f32.mrb[0].mxu0
    %v3964 = vadd.f32 0.0, %v3963
    %v3965 = vpop.f32.mrb[0].mxu0
    %v3966 = vpop.f32.mrb[0].mxu0
    %v3967 = vadd.f32 0.0, %v3966
    %v3968 = vpop.f32.mrb[0].mxu0
    %3969 = vmatprep.mubr.bf16.mxu0 0
    %3970 = vmatmul.mubr.bf16.gmra.mrb[0].mxu0 %v3802
    %v3971 = vpop.f32.mrb[0].mxu0
    %v3972 = vadd.f32 0.0, %v3971
    %v3973 = vpop.f32.mrb[0].mxu0
    %v3974 = vpop.f32.mrb[0].mxu0
    %v3975 = vadd.f32 0.0, %v3974
    %v3976 = vpop.f32.mrb[0].mxu0
    %3977 = vmatprep.mubr.bf16.mxu0 0
    %3978 = vmatmul.mubr.bf16.gmra.mrb[0].mxu0 %v3810
    %v3979 = vpop.f32.mrb[0].mxu0
    %v3980 = vadd.f32 0.0, %v3979
    %v3981 = vpop.f32.mrb[0].mxu0
    %v3982 = vpop.f32.mrb[0].mxu0
    %v3983 = vadd.f32 0.0, %v3982
    %v3984 = vpop.f32.mrb[0].mxu0
    %3985 = vmatprep.mubr.bf16.mxu0 0
    %3986 = vmatmul.mubr.bf16.gmra.mrb[0].mxu0 %v3818
    %v3987 = vpop.f32.mrb[0].mxu0
    %v3988 = vadd.f32 0.0, %v3987
    %v3989 = vpop.f32.mrb[0].mxu0
    %v3990 = vpop.f32.mrb[0].mxu0
    %v3991 = vadd.f32 0.0, %v3990
    %v3992 = vpop.f32.mrb[0].mxu0
    %3993 = vmatprep.mubr.bf16.mxu0 0
    %3994 = vmatmul.mubr.bf16.gmra.mrb[0].mxu0 %v3826
    %v3995 = vpop.f32.mrb[0].mxu0
    %v3996 = vadd.f32 0.0, %v3995
    %v3997 = vpop.f32.mrb[0].mxu0
    %v3998 = vpop.f32.mrb[0].mxu0
    %v3999 = vadd.f32 0.0, %v3998
    %v4000 = vpop.f32.mrb[0].mxu0
    %4001 = vmatprep.mubr.bf16.mxu0 0
    %4002 = vmatmul.mubr.bf16.gmra.mrb[0].mxu0 %v3834
    %v4003 = vpop.f32.mrb[0].mxu0
    %v4004 = vadd.f32 0.0, %v4003
    %v4005 = vpop.f32.mrb[0].mxu0
    %v4006 = vpop.f32.mrb[0].mxu0
    %v4007 = vadd.f32 0.0, %v4006
    %v4008 = vpop.f32.mrb[0].mxu0
    %4009 = vmatprep.mubr.bf16.mxu0 0
    %4010 = vmatmul.mubr.bf16.gmra.mrb[0].mxu0 %v3842
    %v4011 = vpop.f32.mrb[0].mxu0
    %v4012 = vadd.f32 0.0, %v4011
    %v4013 = vpop.f32.mrb[0].mxu0
    %v4014 = vpop.f32.mrb[0].mxu0
    %v4015 = vadd.f32 0.0, %v4014
    %v4016 = vpop.f32.mrb[0].mxu0
    %4017 = vmatprep.mubr.bf16.mxu0 0
    %4018 = vmatmul.mubr.bf16.gmra.mrb[0].mxu0 %v3850
    %v4019 = vpop.f32.mrb[0].mxu0
    %v4020 = vadd.f32 0.0, %v4019
    %v4021 = vpop.f32.mrb[0].mxu0
    %v4022 = vpop.f32.mrb[0].mxu0
    %v4023 = vadd.f32 0.0, %v4022
    %v4024 = vpop.f32.mrb[0].mxu0
    %4025 = vmatprep.mubr.bf16.mxu0 0
    %4026 = vmatmul.mubr.bf16.gmra.mrb[0].mxu0 %v3858
    %v4027 = vpop.f32.mrb[0].mxu0
    %v4028 = vadd.f32 0.0, %v4027
    %v4029 = vpop.f32.mrb[0].mxu0
    %v4030 = vpop.f32.mrb[0].mxu0
    %v4031 = vadd.f32 0.0, %v4030
    %v4032 = vpop.f32.mrb[0].mxu0
    %4033 = vmatprep.mubr.bf16.mxu0 0
    %4034 = vmatmul.mubr.bf16.gmra.mrb[0].mxu0 %v3861
    %v4035 = vpop.f32.mrb[0].mxu0
    %v4036 = vadd.f32 0.0, %v4035
    %v4037 = vpop.f32.mrb[0].mxu0
    %v4038 = vpop.f32.mrb[0].mxu0
    %v4039 = vpop.f32.mrb[0].mxu0
    %4040 = vdwg.mxu0
    %v4041 = vadd.f32 %v3663, %v3956
    %v4042 = vadd.f32 %v3664, %v3959
    %v4043 = vadd.f32 %v3665, %v3964
    %v4044 = vadd.f32 %v3666, %v3967
    %v4045 = vadd.f32 %v3667, %v3972
    %v4046 = vadd.f32 %v3668, %v3975
    %v4047 = vadd.f32 %v3669, %v3980
    %v4048 = vadd.f32 %v3670, %v3983
    %v4049 = vadd.f32 %v3671, %v3988
    %v4050 = vadd.f32 %v3672, %v3991
    %v4051 = vadd.f32 %v3673, %v3996
    %v4052 = vadd.f32 %v3674, %v3999
    %v4053 = vadd.f32 %v3675, %v4004
    %v4054 = vadd.f32 %v3676, %v4007
    %v4055 = vadd.f32 %v3677, %v4012
    %v4056 = vadd.f32 %v3678, %v4015
    %v4057 = vadd.f32 %v3679, %v4020
    %v4058 = vadd.f32 %v3680, %v4023
    %v4059 = vadd.f32 %v3681, %v4028
    %v4060 = vadd.f32 %v3682, %v4031
    %v4061 = vadd.f32 %v3683, %v4036
    %v4062 = vld [vmem:[%s1535 + $0x4] sm:$0xf]
    %v4063 = vld [vmem:[%s1535 + $0x8] sm:$0xf]
    %v4064 = vld [vmem:[%s1535 + $0xc] sm:$0xf]
    %v4065 = vld [vmem:[%s1535 + $0x10] sm:$0xf]
    %v4066 = vld [vmem:[%s1535 + $0x14] sm:$0xf]
    %v4067 = vld [vmem:[%s1535 + $0x18] sm:$0xf]
    %v4068 = vld [vmem:[%s1535 + $0x1c] sm:$0xf]
    %v4069 = vld [vmem:[%s1535 + $0x20] sm:$0xf]
    %v4070 = vld [vmem:[%s1535 + $0x24] sm:$0xf]
    %v4071 = vld [vmem:[%s1535 + $0x28] sm:$0xf]
    %v4072 = vld [vmem:[%s1535 + $0x2c] sm:$0xf]
    %v4073 = vld [vmem:[%s1535 + $0x30] sm:$0xf]
    %v4074 = vld [vmem:[%s1535 + $0x34] sm:$0xf]
    %v4075 = vld [vmem:[%s1535 + $0x38] sm:$0xf]
    %v4076 = vld [vmem:[%s1535 + $0x3c] sm:$0xf]
    %v4077 = vld [vmem:[%s1535 + $0x40] sm:$0xf]
    %v4078 = vld [vmem:[%s1535 + $0x44] sm:$0xf]
    %v4079 = vld [vmem:[%s1535 + $0x48] sm:$0xf]
    %v4080 = vld [vmem:[%s1535 + $0x4c] sm:$0xf]
    %v4081 = vld [vmem:[%s1535 + $0x50] sm:$0xf]
    %v4082 = vld [vmem:[%s1535 + $0x54] sm:$0x3]
    %s4083 = scalar_lea.vmem [#allocation5], 832
    %v4084 = vld [vmem:[%s4083] sm:$0xf]
    %v4085 = vld [vmem:[%s4083 + $0x4] sm:$0xf]
    %v4086 = vld [vmem:[%s4083 + $0x8] sm:$0xf]
    %v4087 = vld [vmem:[%s4083 + $0xc] sm:$0xf]
    %v4088 = vld [vmem:[%s4083 + $0x10] sm:$0xf]
    %v4089 = vld [vmem:[%s4083 + $0x14] sm:$0xf]
    %v4090 = vld [vmem:[%s4083 + $0x18] sm:$0xf]
    %v4091 = vld [vmem:[%s4083 + $0x1c] sm:$0xf]
    %v4092 = vld [vmem:[%s4083 + $0x20] sm:$0xf]
    %v4093 = vld [vmem:[%s4083 + $0x24] sm:$0xf]
    %v4094 = vld [vmem:[%s4083 + $0x28] sm:$0xf]
    %v4095 = vld [vmem:[%s4083 + $0x2c] sm:$0xf]
    %v4096 = vld [vmem:[%s4083 + $0x30] sm:$0xf]
    %v4097 = vld [vmem:[%s4083 + $0x34] sm:$0xf]
    %v4098 = vld [vmem:[%s4083 + $0x38] sm:$0xf]
    %v4099 = vld [vmem:[%s4083 + $0x3c] sm:$0xf]
    %v4121 = vunpack.c.l.b16 %v4062
    %v4122 = vunpack.c.l.b16 %v4063
    %v4123 = vunpack.c.l.b16 %v4064
    %v4124 = vunpack.c.l.b16 %v4065
    %v4125 = vunpack.c.l.b16 %v4066
    %v4126 = vunpack.c.l.b16 %v4067
    %v4127 = vunpack.c.l.b16 %v4068
    %v4128 = vunpack.c.l.b16 %v4069
    %v4129 = vunpack.c.l.b16 %v4070
    %v4130 = vunpack.c.l.b16 %v4071
    %v4131 = vunpack.c.l.b16 %v4072
    %v4132 = vunpack.c.l.b16 %v4073
    %v4133 = vunpack.c.l.b16 %v4074
    %v4134 = vunpack.c.l.b16 %v4075
    %v4135 = vunpack.c.l.b16 %v4076
    %v4136 = vunpack.c.l.b16 %v4077
    %v4137 = vunpack.c.l.b16 %v4078
    %v4138 = vunpack.c.l.b16 %v4079
    %v4139 = vunpack.c.l.b16 %v4080
    %v4140 = vunpack.c.l.b16 %v4081
    %v4141 = vunpack.c.l.b16 %v4082
    %v4142 = vpack.c.b16 %v4122, %v4121
    %v4143 = vpack.c.b16 %v4124, %v4123
    %v4144 = vpack.c.b16 %v4126, %v4125
    %v4145 = vpack.c.b16 %v4128, %v4127
    %v4146 = vpack.c.b16 %v4130, %v4129
    %v4147 = vpack.c.b16 %v4132, %v4131
    %v4148 = vpack.c.b16 %v4134, %v4133
    %v4149 = vpack.c.b16 %v4136, %v4135
    %v4150 = vpack.c.b16 %v4138, %v4137
    %v4151 = vpack.c.b16 %v4140, %v4139
    %v4152 = vpack.c.b16 %v4141, %v4141
    %v4154 = vshrl.u32 %v4142, 16
    %v4156 = vshll.u32 %v4142, 16
    %v4158 = vrot.slane %v4156, 1
    %v4159 = vor.u32 %v4154, %v4158
    %v4161 = vshll.u32 %v4143, 16
    %v4163 = vrot.slane %v4161, 1
    %v4164 = vsel %vm647, %v4159, %v4163
    %v4165 = vshrl.u32 %v4143, 16
    %v4167 = vor.u32 %v4165, %v4163
    %v4169 = vshll.u32 %v4144, 16
    %v4171 = vrot.slane %v4169, 1
    %v4172 = vsel %vm647, %v4167, %v4171
    %v4173 = vshrl.u32 %v4144, 16
    %v4175 = vor.u32 %v4173, %v4171
    %v4177 = vshll.u32 %v4145, 16
    %v4179 = vrot.slane %v4177, 1
    %v4180 = vsel %vm647, %v4175, %v4179
    %v4181 = vshrl.u32 %v4145, 16
    %v4183 = vor.u32 %v4181, %v4179
    %v4185 = vshll.u32 %v4146, 16
    %v4187 = vrot.slane %v4185, 1
    %v4188 = vsel %vm647, %v4183, %v4187
    %v4189 = vshrl.u32 %v4146, 16
    %v4191 = vor.u32 %v4189, %v4187
    %v4193 = vshll.u32 %v4147, 16
    %v4195 = vrot.slane %v4193, 1
    %v4196 = vsel %vm647, %v4191, %v4195
    %v4197 = vshrl.u32 %v4147, 16
    %v4199 = vor.u32 %v4197, %v4195
    %v4201 = vshll.u32 %v4148, 16
    %v4203 = vrot.slane %v4201, 1
    %v4204 = vsel %vm647, %v4199, %v4203
    %v4205 = vshrl.u32 %v4148, 16
    %v4207 = vor.u32 %v4205, %v4203
    %v4209 = vshll.u32 %v4149, 16
    %v4211 = vrot.slane %v4209, 1
    %v4212 = vsel %vm647, %v4207, %v4211
    %v4213 = vshrl.u32 %v4149, 16
    %v4215 = vor.u32 %v4213, %v4211
    %v4217 = vshll.u32 %v4150, 16
    %v4219 = vrot.slane %v4217, 1
    %v4220 = vsel %vm647, %v4215, %v4219
    %v4221 = vshrl.u32 %v4150, 16
    %v4223 = vor.u32 %v4221, %v4219
    %v4225 = vshll.u32 %v4151, 16
    %v4227 = vrot.slane %v4225, 1
    %v4228 = vsel %vm647, %v4223, %v4227
    %v4229 = vshrl.u32 %v4151, 16
    %v4231 = vor.u32 %v4229, %v4227
    %v4233 = vshll.u32 %v4152, 16
    %v4235 = vrot.slane %v4233, 1
    %v4236 = vsel %vm647, %v4231, %v4235
    %v4237 = vshrl.u32 %v4152, 16
    %v4239 = vor.u32 %v4237, %v4235
    %v4267 = vunpack.c.l.b16 %v4084
    %v4268 = vunpack.c.l.b16 %v4085
    %v4269 = vunpack.c.l.b16 %v4086
    %v4270 = vunpack.c.l.b16 %v4087
    %v4271 = vunpack.c.l.b16 %v4088
    %v4272 = vunpack.c.l.b16 %v4089
    %v4273 = vunpack.c.l.b16 %v4090
    %v4274 = vunpack.c.l.b16 %v4091
    %v4275 = vunpack.c.l.b16 %v4092
    %v4276 = vunpack.c.l.b16 %v4093
    %v4277 = vunpack.c.l.b16 %v4094
    %v4278 = vunpack.c.l.b16 %v4095
    %v4279 = vunpack.c.l.b16 %v4096
    %v4280 = vunpack.c.l.b16 %v4097
    %v4281 = vunpack.c.l.b16 %v4098
    %v4282 = vunpack.c.l.b16 %v4099
    %v4283 = vpack.c.b16 %v4268, %v4267
    %v4284 = vpack.c.b16 %v4270, %v4269
    %v4285 = vpack.c.b16 %v4272, %v4271
    %v4286 = vpack.c.b16 %v4274, %v4273
    %v4287 = vpack.c.b16 %v4276, %v4275
    %v4288 = vpack.c.b16 %v4278, %v4277
    %v4289 = vpack.c.b16 %v4280, %v4279
    %v4290 = vpack.c.b16 %v4282, %v4281
    %4299 = vmatprep.subr.bf16.mxu0 0
    %4300 = vmatpush1.bf16.msra.mxu0 %v4283
    %4301 = vmatprep.subr.bf16.mxu0 0
    %4302 = vmatpush1.bf16.msra.mxu0 %v4284
    %4303 = vmatprep.subr.bf16.mxu0 0
    %4304 = vmatpush1.bf16.msra.mxu0 %v4285
    %4305 = vmatprep.subr.bf16.mxu0 0
    %4306 = vmatpush1.bf16.msra.mxu0 %v4286
    %4307 = vmatprep.subr.bf16.mxu0 0
    %4308 = vmatpush1.bf16.msra.mxu0 %v4287
    %4309 = vmatprep.subr.bf16.mxu0 0
    %4310 = vmatpush1.bf16.msra.mxu0 %v4288
    %4311 = vmatprep.subr.bf16.mxu0 0
    %4312 = vmatpush1.bf16.msra.mxu0 %v4289
    %4313 = vmatprep.subr.bf16.mxu0 0
    %4314 = vmatpush1.bf16.msra.mxu0 %v4290
    %4315 = vmatprep.subr.bf16.mxu0 0
    %4316 = vmatpush1.bf16.msra.mxu0 0
    %4317 = vmatprep.subr.bf16.mxu0 0
    %4318 = vmatpush1.bf16.msra.mxu0 0
    %4319 = vmatprep.subr.bf16.mxu0 0
    %4320 = vmatpush1.bf16.msra.mxu0 0
    %4321 = vmatprep.subr.bf16.mxu0 0
    %4322 = vmatpush1.bf16.msra.mxu0 0
    %4323 = vmatprep.subr.bf16.mxu0 0
    %4324 = vmatpush1.bf16.msra.mxu0 0
    %4325 = vmatprep.subr.bf16.mxu0 0
    %4326 = vmatpush1.bf16.msra.mxu0 0
    %4327 = vmatprep.subr.bf16.mxu0 0
    %4328 = vmatpush1.bf16.msra.mxu0 0
    %4329 = vmatprep.subr.bf16.mxu0 0
    %4330 = vmatpush1.bf16.msra.mxu0 0
    %4331 = vmatprep.mubr.bf16.mxu0 0
    %4332 = vmatmul.mubr.bf16.gmra.mrb[0].mxu0 %v4164
    %v4333 = vpop.f32.mrb[0].mxu0
    %v4334 = vadd.f32 0.0, %v4333
    %v4335 = vpop.f32.mrb[0].mxu0
    %v4336 = vpop.f32.mrb[0].mxu0
    %v4337 = vadd.f32 0.0, %v4336
    %v4338 = vpop.f32.mrb[0].mxu0
    %4339 = vmatprep.mubr.bf16.mxu0 0
    %4340 = vmatmul.mubr.bf16.gmra.mrb[0].mxu0 %v4172
    %v4341 = vpop.f32.mrb[0].mxu0
    %v4342 = vadd.f32 0.0, %v4341
    %v4343 = vpop.f32.mrb[0].mxu0
    %v4344 = vpop.f32.mrb[0].mxu0
    %v4345 = vadd.f32 0.0, %v4344
    %v4346 = vpop.f32.mrb[0].mxu0
    %4347 = vmatprep.mubr.bf16.mxu0 0
    %4348 = vmatmul.mubr.bf16.gmra.mrb[0].mxu0 %v4180
    %v4349 = vpop.f32.mrb[0].mxu0
    %v4350 = vadd.f32 0.0, %v4349
    %v4351 = vpop.f32.mrb[0].mxu0
    %v4352 = vpop.f32.mrb[0].mxu0
    %v4353 = vadd.f32 0.0, %v4352
    %v4354 = vpop.f32.mrb[0].mxu0
    %4355 = vmatprep.mubr.bf16.mxu0 0
    %4356 = vmatmul.mubr.bf16.gmra.mrb[0].mxu0 %v4188
    %v4357 = vpop.f32.mrb[0].mxu0
    %v4358 = vadd.f32 0.0, %v4357
    %v4359 = vpop.f32.mrb[0].mxu0
    %v4360 = vpop.f32.mrb[0].mxu0
    %v4361 = vadd.f32 0.0, %v4360
    %v4362 = vpop.f32.mrb[0].mxu0
    %4363 = vmatprep.mubr.bf16.mxu0 0
    %4364 = vmatmul.mubr.bf16.gmra.mrb[0].mxu0 %v4196
    %v4365 = vpop.f32.mrb[0].mxu0
    %v4366 = vadd.f32 0.0, %v4365
    %v4367 = vpop.f32.mrb[0].mxu0
    %v4368 = vpop.f32.mrb[0].mxu0
    %v4369 = vadd.f32 0.0, %v4368
    %v4370 = vpop.f32.mrb[0].mxu0
    %4371 = vmatprep.mubr.bf16.mxu0 0
    %4372 = vmatmul.mubr.bf16.gmra.mrb[0].mxu0 %v4204
    %v4373 = vpop.f32.mrb[0].mxu0
    %v4374 = vadd.f32 0.0, %v4373
    %v4375 = vpop.f32.mrb[0].mxu0
    %v4376 = vpop.f32.mrb[0].mxu0
    %v4377 = vadd.f32 0.0, %v4376
    %v4378 = vpop.f32.mrb[0].mxu0
    %4379 = vmatprep.mubr.bf16.mxu0 0
    %4380 = vmatmul.mubr.bf16.gmra.mrb[0].mxu0 %v4212
    %v4381 = vpop.f32.mrb[0].mxu0
    %v4382 = vadd.f32 0.0, %v4381
    %v4383 = vpop.f32.mrb[0].mxu0
    %v4384 = vpop.f32.mrb[0].mxu0
    %v4385 = vadd.f32 0.0, %v4384
    %v4386 = vpop.f32.mrb[0].mxu0
    %4387 = vmatprep.mubr.bf16.mxu0 0
    %4388 = vmatmul.mubr.bf16.gmra.mrb[0].mxu0 %v4220
    %v4389 = vpop.f32.mrb[0].mxu0
    %v4390 = vadd.f32 0.0, %v4389
    %v4391 = vpop.f32.mrb[0].mxu0
    %v4392 = vpop.f32.mrb[0].mxu0
    %v4393 = vadd.f32 0.0, %v4392
    %v4394 = vpop.f32.mrb[0].mxu0
    %4395 = vmatprep.mubr.bf16.mxu0 0
    %4396 = vmatmul.mubr.bf16.gmra.mrb[0].mxu0 %v4228
    %v4397 = vpop.f32.mrb[0].mxu0
    %v4398 = vadd.f32 0.0, %v4397
    %v4399 = vpop.f32.mrb[0].mxu0
    %v4400 = vpop.f32.mrb[0].mxu0
    %v4401 = vadd.f32 0.0, %v4400
    %v4402 = vpop.f32.mrb[0].mxu0
    %4403 = vmatprep.mubr.bf16.mxu0 0
    %4404 = vmatmul.mubr.bf16.gmra.mrb[0].mxu0 %v4236
    %v4405 = vpop.f32.mrb[0].mxu0
    %v4406 = vadd.f32 0.0, %v4405
    %v4407 = vpop.f32.mrb[0].mxu0
    %v4408 = vpop.f32.mrb[0].mxu0
    %v4409 = vadd.f32 0.0, %v4408
    %v4410 = vpop.f32.mrb[0].mxu0
    %4411 = vmatprep.mubr.bf16.mxu0 0
    %4412 = vmatmul.mubr.bf16.gmra.mrb[0].mxu0 %v4239
    %v4413 = vpop.f32.mrb[0].mxu0
    %v4414 = vadd.f32 0.0, %v4413
    %v4415 = vpop.f32.mrb[0].mxu0
    %v4416 = vpop.f32.mrb[0].mxu0
    %v4417 = vpop.f32.mrb[0].mxu0
    %4418 = vdwg.mxu0
    %v4419 = vadd.f32 %v4041, %v4334
    %v4420 = vadd.f32 %v4042, %v4337
    %v4421 = vadd.f32 %v4043, %v4342
    %v4422 = vadd.f32 %v4044, %v4345
    %v4423 = vadd.f32 %v4045, %v4350
    %v4424 = vadd.f32 %v4046, %v4353
    %v4425 = vadd.f32 %v4047, %v4358
    %v4426 = vadd.f32 %v4048, %v4361
    %v4427 = vadd.f32 %v4049, %v4366
    %v4428 = vadd.f32 %v4050, %v4369
    %v4429 = vadd.f32 %v4051, %v4374
    %v4430 = vadd.f32 %v4052, %v4377
    %v4431 = vadd.f32 %v4053, %v4382
    %v4432 = vadd.f32 %v4054, %v4385
    %v4433 = vadd.f32 %v4055, %v4390
    %v4434 = vadd.f32 %v4056, %v4393
    %v4435 = vadd.f32 %v4057, %v4398
    %v4436 = vadd.f32 %v4058, %v4401
    %v4437 = vadd.f32 %v4059, %v4406
    %v4438 = vadd.f32 %v4060, %v4409
    %v4439 = vadd.f32 %v4061, %v4414
    %v4440 = vld [vmem:[%s1243 + $0x4] sm:$0xe]
    %s4441 = scalar_lea.vmem [#allocation5], 896
    %v4442 = vld [vmem:[%s4441] sm:$0xf]
    %v4443 = vld [vmem:[%s4441 + $0x4] sm:$0xf]
    %v4444 = vld [vmem:[%s4441 + $0x8] sm:$0xf]
    %v4445 = vld [vmem:[%s4441 + $0xc] sm:$0xf]
    %v4446 = vld [vmem:[%s4441 + $0x10] sm:$0xf]
    %v4447 = vld [vmem:[%s4441 + $0x14] sm:$0xf]
    %v4448 = vld [vmem:[%s4441 + $0x18] sm:$0xf]
    %v4449 = vld [vmem:[%s4441 + $0x1c] sm:$0xf]
    %v4450 = vld [vmem:[%s4441 + $0x20] sm:$0xf]
    %v4451 = vld [vmem:[%s4441 + $0x24] sm:$0xf]
    %v4452 = vld [vmem:[%s4441 + $0x28] sm:$0xf]
    %v4453 = vld [vmem:[%s4441 + $0x2c] sm:$0xf]
    %v4454 = vld [vmem:[%s4441 + $0x30] sm:$0xf]
    %v4455 = vld [vmem:[%s4441 + $0x34] sm:$0xf]
    %v4456 = vld [vmem:[%s4441 + $0x38] sm:$0xf]
    %v4457 = vld [vmem:[%s4441 + $0x3c] sm:$0xf]
    %v4459 = vunpack.c.l.b16 %v4440
    %v4460 = vpack.c.b16 %v3744, %v4459
    %v4461 = vrot.slane %v4460, 1
    %v4462 = vrot.slane %v3765, 1
    %v4463 = vsel %vm3220, %v4461, %v4462
    %v4464 = vrot.slane %v3766, 1
    %v4465 = vsel %vm3220, %v4462, %v4464
    %v4466 = vrot.slane %v3767, 1
    %v4467 = vsel %vm3220, %v4464, %v4466
    %v4468 = vrot.slane %v3768, 1
    %v4469 = vsel %vm3220, %v4466, %v4468
    %v4470 = vrot.slane %v3769, 1
    %v4471 = vsel %vm3220, %v4468, %v4470
    %v4472 = vrot.slane %v3770, 1
    %v4473 = vsel %vm3220, %v4470, %v4472
    %v4474 = vrot.slane %v3771, 1
    %v4475 = vsel %vm3220, %v4472, %v4474
    %v4476 = vrot.slane %v3772, 1
    %v4477 = vsel %vm3220, %v4474, %v4476
    %v4478 = vrot.slane %v3773, 1
    %v4479 = vsel %vm3220, %v4476, %v4478
    %v4480 = vrot.slane %v3774, 1
    %v4481 = vsel %vm3220, %v4478, %v4480
    %v4509 = vunpack.c.l.b16 %v4442
    %v4510 = vunpack.c.l.b16 %v4443
    %v4511 = vunpack.c.l.b16 %v4444
    %v4512 = vunpack.c.l.b16 %v4445
    %v4513 = vunpack.c.l.b16 %v4446
    %v4514 = vunpack.c.l.b16 %v4447
    %v4515 = vunpack.c.l.b16 %v4448
    %v4516 = vunpack.c.l.b16 %v4449
    %v4517 = vunpack.c.l.b16 %v4450
    %v4518 = vunpack.c.l.b16 %v4451
    %v4519 = vunpack.c.l.b16 %v4452
    %v4520 = vunpack.c.l.b16 %v4453
    %v4521 = vunpack.c.l.b16 %v4454
    %v4522 = vunpack.c.l.b16 %v4455
    %v4523 = vunpack.c.l.b16 %v4456
    %v4524 = vunpack.c.l.b16 %v4457
    %v4525 = vpack.c.b16 %v4510, %v4509
    %v4526 = vpack.c.b16 %v4512, %v4511
    %v4527 = vpack.c.b16 %v4514, %v4513
    %v4528 = vpack.c.b16 %v4516, %v4515
    %v4529 = vpack.c.b16 %v4518, %v4517
    %v4530 = vpack.c.b16 %v4520, %v4519
    %v4531 = vpack.c.b16 %v4522, %v4521
    %v4532 = vpack.c.b16 %v4524, %v4523
    %4541 = vmatprep.subr.bf16.mxu0 0
    %4542 = vmatpush1.bf16.msra.mxu0 %v4525
    %4543 = vmatprep.subr.bf16.mxu0 0
    %4544 = vmatpush1.bf16.msra.mxu0 %v4526
    %4545 = vmatprep.subr.bf16.mxu0 0
    %4546 = vmatpush1.bf16.msra.mxu0 %v4527
    %4547 = vmatprep.subr.bf16.mxu0 0
    %4548 = vmatpush1.bf16.msra.mxu0 %v4528
    %4549 = vmatprep.subr.bf16.mxu0 0
    %4550 = vmatpush1.bf16.msra.mxu0 %v4529
    %4551 = vmatprep.subr.bf16.mxu0 0
    %4552 = vmatpush1.bf16.msra.mxu0 %v4530
    %4553 = vmatprep.subr.bf16.mxu0 0
    %4554 = vmatpush1.bf16.msra.mxu0 %v4531
    %4555 = vmatprep.subr.bf16.mxu0 0
    %4556 = vmatpush1.bf16.msra.mxu0 %v4532
    %4557 = vmatprep.subr.bf16.mxu0 0
    %4558 = vmatpush1.bf16.msra.mxu0 0
    %4559 = vmatprep.subr.bf16.mxu0 0
    %4560 = vmatpush1.bf16.msra.mxu0 0
    %4561 = vmatprep.subr.bf16.mxu0 0
    %4562 = vmatpush1.bf16.msra.mxu0 0
    %4563 = vmatprep.subr.bf16.mxu0 0
    %4564 = vmatpush1.bf16.msra.mxu0 0
    %4565 = vmatprep.subr.bf16.mxu0 0
    %4566 = vmatpush1.bf16.msra.mxu0 0
    %4567 = vmatprep.subr.bf16.mxu0 0
    %4568 = vmatpush1.bf16.msra.mxu0 0
    %4569 = vmatprep.subr.bf16.mxu0 0
    %4570 = vmatpush1.bf16.msra.mxu0 0
    %4571 = vmatprep.subr.bf16.mxu0 0
    %4572 = vmatpush1.bf16.msra.mxu0 0
    %4573 = vmatprep.mubr.bf16.mxu0 0
    %4574 = vmatmul.mubr.bf16.gmra.mrb[0].mxu0 %v4463
    %v4575 = vpop.f32.mrb[0].mxu0
    %v4576 = vadd.f32 0.0, %v4575
    %v4577 = vpop.f32.mrb[0].mxu0
    %v4578 = vpop.f32.mrb[0].mxu0
    %v4579 = vadd.f32 0.0, %v4578
    %v4580 = vpop.f32.mrb[0].mxu0
    %4581 = vmatprep.mubr.bf16.mxu0 0
    %4582 = vmatmul.mubr.bf16.gmra.mrb[0].mxu0 %v4465
    %v4583 = vpop.f32.mrb[0].mxu0
    %v4584 = vadd.f32 0.0, %v4583
    %v4585 = vpop.f32.mrb[0].mxu0
    %v4586 = vpop.f32.mrb[0].mxu0
    %v4587 = vadd.f32 0.0, %v4586
    %v4588 = vpop.f32.mrb[0].mxu0
    %4589 = vmatprep.mubr.bf16.mxu0 0
    %4590 = vmatmul.mubr.bf16.gmra.mrb[0].mxu0 %v4467
    %v4591 = vpop.f32.mrb[0].mxu0
    %v4592 = vadd.f32 0.0, %v4591
    %v4593 = vpop.f32.mrb[0].mxu0
    %v4594 = vpop.f32.mrb[0].mxu0
    %v4595 = vadd.f32 0.0, %v4594
    %v4596 = vpop.f32.mrb[0].mxu0
    %4597 = vmatprep.mubr.bf16.mxu0 0
    %4598 = vmatmul.mubr.bf16.gmra.mrb[0].mxu0 %v4469
    %v4599 = vpop.f32.mrb[0].mxu0
    %v4600 = vadd.f32 0.0, %v4599
    %v4601 = vpop.f32.mrb[0].mxu0
    %v4602 = vpop.f32.mrb[0].mxu0
    %v4603 = vadd.f32 0.0, %v4602
    %v4604 = vpop.f32.mrb[0].mxu0
    %4605 = vmatprep.mubr.bf16.mxu0 0
    %4606 = vmatmul.mubr.bf16.gmra.mrb[0].mxu0 %v4471
    %v4607 = vpop.f32.mrb[0].mxu0
    %v4608 = vadd.f32 0.0, %v4607
    %v4609 = vpop.f32.mrb[0].mxu0
    %v4610 = vpop.f32.mrb[0].mxu0
    %v4611 = vadd.f32 0.0, %v4610
    %v4612 = vpop.f32.mrb[0].mxu0
    %4613 = vmatprep.mubr.bf16.mxu0 0
    %4614 = vmatmul.mubr.bf16.gmra.mrb[0].mxu0 %v4473
    %v4615 = vpop.f32.mrb[0].mxu0
    %v4616 = vadd.f32 0.0, %v4615
    %v4617 = vpop.f32.mrb[0].mxu0
    %v4618 = vpop.f32.mrb[0].mxu0
    %v4619 = vadd.f32 0.0, %v4618
    %v4620 = vpop.f32.mrb[0].mxu0
    %4621 = vmatprep.mubr.bf16.mxu0 0
    %4622 = vmatmul.mubr.bf16.gmra.mrb[0].mxu0 %v4475
    %v4623 = vpop.f32.mrb[0].mxu0
    %v4624 = vadd.f32 0.0, %v4623
    %v4625 = vpop.f32.mrb[0].mxu0
    %v4626 = vpop.f32.mrb[0].mxu0
    %v4627 = vadd.f32 0.0, %v4626
    %v4628 = vpop.f32.mrb[0].mxu0
    %4629 = vmatprep.mubr.bf16.mxu0 0
    %4630 = vmatmul.mubr.bf16.gmra.mrb[0].mxu0 %v4477
    %v4631 = vpop.f32.mrb[0].mxu0
    %v4632 = vadd.f32 0.0, %v4631
    %v4633 = vpop.f32.mrb[0].mxu0
    %v4634 = vpop.f32.mrb[0].mxu0
    %v4635 = vadd.f32 0.0, %v4634
    %v4636 = vpop.f32.mrb[0].mxu0
    %4637 = vmatprep.mubr.bf16.mxu0 0
    %4638 = vmatmul.mubr.bf16.gmra.mrb[0].mxu0 %v4479
    %v4639 = vpop.f32.mrb[0].mxu0
    %v4640 = vadd.f32 0.0, %v4639
    %v4641 = vpop.f32.mrb[0].mxu0
    %v4642 = vpop.f32.mrb[0].mxu0
    %v4643 = vadd.f32 0.0, %v4642
    %v4644 = vpop.f32.mrb[0].mxu0
    %4645 = vmatprep.mubr.bf16.mxu0 0
    %4646 = vmatmul.mubr.bf16.gmra.mrb[0].mxu0 %v4481
    %v4647 = vpop.f32.mrb[0].mxu0
    %v4648 = vadd.f32 0.0, %v4647
    %v4649 = vpop.f32.mrb[0].mxu0
    %v4650 = vpop.f32.mrb[0].mxu0
    %v4651 = vadd.f32 0.0, %v4650
    %v4652 = vpop.f32.mrb[0].mxu0
    %4653 = vmatprep.mubr.bf16.mxu0 0
    %4654 = vmatmul.mubr.bf16.gmra.mrb[0].mxu0 %v4480
    %v4655 = vpop.f32.mrb[0].mxu0
    %v4656 = vadd.f32 0.0, %v4655
    %v4657 = vpop.f32.mrb[0].mxu0
    %v4658 = vpop.f32.mrb[0].mxu0
    %v4659 = vpop.f32.mrb[0].mxu0
    %4660 = vdwg.mxu0
    %v4661 = vadd.f32 %v4419, %v4576
    %v4662 = vadd.f32 %v4420, %v4579
    %v4663 = vadd.f32 %v4421, %v4584
    %v4664 = vadd.f32 %v4422, %v4587
    %v4665 = vadd.f32 %v4423, %v4592
    %v4666 = vadd.f32 %v4424, %v4595
    %v4667 = vadd.f32 %v4425, %v4600
    %v4668 = vadd.f32 %v4426, %v4603
    %v4669 = vadd.f32 %v4427, %v4608
    %v4670 = vadd.f32 %v4428, %v4611
    %v4671 = vadd.f32 %v4429, %v4616
    %v4672 = vadd.f32 %v4430, %v4619
    %v4673 = vadd.f32 %v4431, %v4624
    %v4674 = vadd.f32 %v4432, %v4627
    %v4675 = vadd.f32 %v4433, %v4632
    %v4676 = vadd.f32 %v4434, %v4635
    %v4677 = vadd.f32 %v4435, %v4640
    %v4678 = vadd.f32 %v4436, %v4643
    %v4679 = vadd.f32 %v4437, %v4648
    %v4680 = vadd.f32 %v4438, %v4651
    %v4681 = vadd.f32 %v4439, %v4656
    %v4682 = vld [vmem:[%s1535 + $0x4] sm:$0xe]
    %s4683 = scalar_lea.vmem [#allocation5], 960
    %v4684 = vld [vmem:[%s4683] sm:$0xf]
    %v4685 = vld [vmem:[%s4683 + $0x4] sm:$0xf]
    %v4686 = vld [vmem:[%s4683 + $0x8] sm:$0xf]
    %v4687 = vld [vmem:[%s4683 + $0xc] sm:$0xf]
    %v4688 = vld [vmem:[%s4683 + $0x10] sm:$0xf]
    %v4689 = vld [vmem:[%s4683 + $0x14] sm:$0xf]
    %v4690 = vld [vmem:[%s4683 + $0x18] sm:$0xf]
    %v4691 = vld [vmem:[%s4683 + $0x1c] sm:$0xf]
    %v4692 = vld [vmem:[%s4683 + $0x20] sm:$0xf]
    %v4693 = vld [vmem:[%s4683 + $0x24] sm:$0xf]
    %v4694 = vld [vmem:[%s4683 + $0x28] sm:$0xf]
    %v4695 = vld [vmem:[%s4683 + $0x2c] sm:$0xf]
    %v4696 = vld [vmem:[%s4683 + $0x30] sm:$0xf]
    %v4697 = vld [vmem:[%s4683 + $0x34] sm:$0xf]
    %v4698 = vld [vmem:[%s4683 + $0x38] sm:$0xf]
    %v4699 = vld [vmem:[%s4683 + $0x3c] sm:$0xf]
    %v4701 = vunpack.c.l.b16 %v4682
    %v4702 = vpack.c.b16 %v4122, %v4701
    %v4703 = vrot.slane %v4702, 1
    %v4704 = vrot.slane %v4143, 1
    %v4705 = vsel %vm3220, %v4703, %v4704
    %v4706 = vrot.slane %v4144, 1
    %v4707 = vsel %vm3220, %v4704, %v4706
    %v4708 = vrot.slane %v4145, 1
    %v4709 = vsel %vm3220, %v4706, %v4708
    %v4710 = vrot.slane %v4146, 1
    %v4711 = vsel %vm3220, %v4708, %v4710
    %v4712 = vrot.slane %v4147, 1
    %v4713 = vsel %vm3220, %v4710, %v4712
    %v4714 = vrot.slane %v4148, 1
    %v4715 = vsel %vm3220, %v4712, %v4714
    %v4716 = vrot.slane %v4149, 1
    %v4717 = vsel %vm3220, %v4714, %v4716
    %v4718 = vrot.slane %v4150, 1
    %v4719 = vsel %vm3220, %v4716, %v4718
    %v4720 = vrot.slane %v4151, 1
    %v4721 = vsel %vm3220, %v4718, %v4720
    %v4722 = vrot.slane %v4152, 1
    %v4723 = vsel %vm3220, %v4720, %v4722
    %v4751 = vunpack.c.l.b16 %v4684
    %v4752 = vunpack.c.l.b16 %v4685
    %v4753 = vunpack.c.l.b16 %v4686
    %v4754 = vunpack.c.l.b16 %v4687
    %v4755 = vunpack.c.l.b16 %v4688
    %v4756 = vunpack.c.l.b16 %v4689
    %v4757 = vunpack.c.l.b16 %v4690
    %v4758 = vunpack.c.l.b16 %v4691
    %v4759 = vunpack.c.l.b16 %v4692
    %v4760 = vunpack.c.l.b16 %v4693
    %v4761 = vunpack.c.l.b16 %v4694
    %v4762 = vunpack.c.l.b16 %v4695
    %v4763 = vunpack.c.l.b16 %v4696
    %v4764 = vunpack.c.l.b16 %v4697
    %v4765 = vunpack.c.l.b16 %v4698
    %v4766 = vunpack.c.l.b16 %v4699
    %v4767 = vpack.c.b16 %v4752, %v4751
    %v4768 = vpack.c.b16 %v4754, %v4753
    %v4769 = vpack.c.b16 %v4756, %v4755
    %v4770 = vpack.c.b16 %v4758, %v4757
    %v4771 = vpack.c.b16 %v4760, %v4759
    %v4772 = vpack.c.b16 %v4762, %v4761
    %v4773 = vpack.c.b16 %v4764, %v4763
    %v4774 = vpack.c.b16 %v4766, %v4765
    %4783 = vmatprep.subr.bf16.mxu0 0
    %4784 = vmatpush1.bf16.msra.mxu0 %v4767
    %4785 = vmatprep.subr.bf16.mxu0 0
    %4786 = vmatpush1.bf16.msra.mxu0 %v4768
    %4787 = vmatprep.subr.bf16.mxu0 0
    %4788 = vmatpush1.bf16.msra.mxu0 %v4769
    %4789 = vmatprep.subr.bf16.mxu0 0
    %4790 = vmatpush1.bf16.msra.mxu0 %v4770
    %4791 = vmatprep.subr.bf16.mxu0 0
    %4792 = vmatpush1.bf16.msra.mxu0 %v4771
    %4793 = vmatprep.subr.bf16.mxu0 0
    %4794 = vmatpush1.bf16.msra.mxu0 %v4772
    %4795 = vmatprep.subr.bf16.mxu0 0
    %4796 = vmatpush1.bf16.msra.mxu0 %v4773
    %4797 = vmatprep.subr.bf16.mxu0 0
    %4798 = vmatpush1.bf16.msra.mxu0 %v4774
    %4799 = vmatprep.subr.bf16.mxu0 0
    %4800 = vmatpush1.bf16.msra.mxu0 0
    %4801 = vmatprep.subr.bf16.mxu0 0
    %4802 = vmatpush1.bf16.msra.mxu0 0
    %4803 = vmatprep.subr.bf16.mxu0 0
    %4804 = vmatpush1.bf16.msra.mxu0 0
    %4805 = vmatprep.subr.bf16.mxu0 0
    %4806 = vmatpush1.bf16.msra.mxu0 0
    %4807 = vmatprep.subr.bf16.mxu0 0
    %4808 = vmatpush1.bf16.msra.mxu0 0
    %4809 = vmatprep.subr.bf16.mxu0 0
    %4810 = vmatpush1.bf16.msra.mxu0 0
    %4811 = vmatprep.subr.bf16.mxu0 0
    %4812 = vmatpush1.bf16.msra.mxu0 0
    %4813 = vmatprep.subr.bf16.mxu0 0
    %4814 = vmatpush1.bf16.msra.mxu0 0
    %4815 = vmatprep.mubr.bf16.mxu0 0
    %4816 = vmatmul.mubr.bf16.gmra.mrb[0].mxu0 %v4705
    %v4817 = vpop.f32.mrb[0].mxu0
    %v4818 = vadd.f32 0.0, %v4817
    %v4819 = vpop.f32.mrb[0].mxu0
    %v4820 = vpop.f32.mrb[0].mxu0
    %v4821 = vadd.f32 0.0, %v4820
    %v4822 = vpop.f32.mrb[0].mxu0
    %4823 = vmatprep.mubr.bf16.mxu0 0
    %4824 = vmatmul.mubr.bf16.gmra.mrb[0].mxu0 %v4707
    %v4825 = vpop.f32.mrb[0].mxu0
    %v4826 = vadd.f32 0.0, %v4825
    %v4827 = vpop.f32.mrb[0].mxu0
    %v4828 = vpop.f32.mrb[0].mxu0
    %v4829 = vadd.f32 0.0, %v4828
    %v4830 = vpop.f32.mrb[0].mxu0
    %4831 = vmatprep.mubr.bf16.mxu0 0
    %4832 = vmatmul.mubr.bf16.gmra.mrb[0].mxu0 %v4709
    %v4833 = vpop.f32.mrb[0].mxu0
    %v4834 = vadd.f32 0.0, %v4833
    %v4835 = vpop.f32.mrb[0].mxu0
    %v4836 = vpop.f32.mrb[0].mxu0
    %v4837 = vadd.f32 0.0, %v4836
    %v4838 = vpop.f32.mrb[0].mxu0
    %4839 = vmatprep.mubr.bf16.mxu0 0
    %4840 = vmatmul.mubr.bf16.gmra.mrb[0].mxu0 %v4711
    %v4841 = vpop.f32.mrb[0].mxu0
    %v4842 = vadd.f32 0.0, %v4841
    %v4843 = vpop.f32.mrb[0].mxu0
    %v4844 = vpop.f32.mrb[0].mxu0
    %v4845 = vadd.f32 0.0, %v4844
    %v4846 = vpop.f32.mrb[0].mxu0
    %4847 = vmatprep.mubr.bf16.mxu0 0
    %4848 = vmatmul.mubr.bf16.gmra.mrb[0].mxu0 %v4713
    %v4849 = vpop.f32.mrb[0].mxu0
    %v4850 = vadd.f32 0.0, %v4849
    %v4851 = vpop.f32.mrb[0].mxu0
    %v4852 = vpop.f32.mrb[0].mxu0
    %v4853 = vadd.f32 0.0, %v4852
    %v4854 = vpop.f32.mrb[0].mxu0
    %4855 = vmatprep.mubr.bf16.mxu0 0
    %4856 = vmatmul.mubr.bf16.gmra.mrb[0].mxu0 %v4715
    %v4857 = vpop.f32.mrb[0].mxu0
    %v4858 = vadd.f32 0.0, %v4857
    %v4859 = vpop.f32.mrb[0].mxu0
    %v4860 = vpop.f32.mrb[0].mxu0
    %v4861 = vadd.f32 0.0, %v4860
    %v4862 = vpop.f32.mrb[0].mxu0
    %4863 = vmatprep.mubr.bf16.mxu0 0
    %4864 = vmatmul.mubr.bf16.gmra.mrb[0].mxu0 %v4717
    %v4865 = vpop.f32.mrb[0].mxu0
    %v4866 = vadd.f32 0.0, %v4865
    %v4867 = vpop.f32.mrb[0].mxu0
    %v4868 = vpop.f32.mrb[0].mxu0
    %v4869 = vadd.f32 0.0, %v4868
    %v4870 = vpop.f32.mrb[0].mxu0
    %4871 = vmatprep.mubr.bf16.mxu0 0
    %4872 = vmatmul.mubr.bf16.gmra.mrb[0].mxu0 %v4719
    %v4873 = vpop.f32.mrb[0].mxu0
    %v4874 = vadd.f32 0.0, %v4873
    %v4875 = vpop.f32.mrb[0].mxu0
    %v4876 = vpop.f32.mrb[0].mxu0
    %v4877 = vadd.f32 0.0, %v4876
    %v4878 = vpop.f32.mrb[0].mxu0
    %4879 = vmatprep.mubr.bf16.mxu0 0
    %4880 = vmatmul.mubr.bf16.gmra.mrb[0].mxu0 %v4721
    %v4881 = vpop.f32.mrb[0].mxu0
    %v4882 = vadd.f32 0.0, %v4881
    %v4883 = vpop.f32.mrb[0].mxu0
    %v4884 = vpop.f32.mrb[0].mxu0
    %v4885 = vadd.f32 0.0, %v4884
    %v4886 = vpop.f32.mrb[0].mxu0
    %4887 = vmatprep.mubr.bf16.mxu0 0
    %4888 = vmatmul.mubr.bf16.gmra.mrb[0].mxu0 %v4723
    %v4889 = vpop.f32.mrb[0].mxu0
    %v4890 = vadd.f32 0.0, %v4889
    %v4891 = vpop.f32.mrb[0].mxu0
    %v4892 = vpop.f32.mrb[0].mxu0
    %v4893 = vadd.f32 0.0, %v4892
    %v4894 = vpop.f32.mrb[0].mxu0
    %4895 = vmatprep.mubr.bf16.mxu0 0
    %4896 = vmatmul.mubr.bf16.gmra.mrb[0].mxu0 %v4722
    %v4897 = vpop.f32.mrb[0].mxu0
    %v4898 = vadd.f32 0.0, %v4897
    %v4899 = vpop.f32.mrb[0].mxu0
    %v4900 = vpop.f32.mrb[0].mxu0
    %v4901 = vpop.f32.mrb[0].mxu0
    %4902 = vdwg.mxu0
    %v4903 = vadd.f32 %v4661, %v4818
    %v4904 = vadd.f32 %v4662, %v4821
    %v4905 = vadd.f32 %v4663, %v4826
    %v4906 = vadd.f32 %v4664, %v4829
    %v4907 = vadd.f32 %v4665, %v4834
    %v4908 = vadd.f32 %v4666, %v4837
    %v4909 = vadd.f32 %v4667, %v4842
    %v4910 = vadd.f32 %v4668, %v4845
    %v4911 = vadd.f32 %v4669, %v4850
    %v4912 = vadd.f32 %v4670, %v4853
    %v4913 = vadd.f32 %v4671, %v4858
    %v4914 = vadd.f32 %v4672, %v4861
    %v4915 = vadd.f32 %v4673, %v4866
    %v4916 = vadd.f32 %v4674, %v4869
    %v4917 = vadd.f32 %v4675, %v4874
    %v4918 = vadd.f32 %v4676, %v4877
    %v4919 = vadd.f32 %v4677, %v4882
    %v4920 = vadd.f32 %v4678, %v4885
    %v4921 = vadd.f32 %v4679, %v4890
    %v4922 = vadd.f32 %v4680, %v4893
    %v4923 = vadd.f32 %v4681, %v4898
    %v4924 = vld [vmem:[#allocation7] sm:$0xff]
    %v4925 = vld [vmem:[#allocation7 + $0x8] sm:$0xff]
    %v4926 = vld [vmem:[#allocation7 + $0x10] sm:$0xff]
    %v4927 = vld [vmem:[#allocation7 + $0x18] sm:$0xff]
    %v4928 = vld [vmem:[#allocation7 + $0x20] sm:$0xff]
    %v4929 = vld [vmem:[#allocation7 + $0x28] sm:$0xff]
    %v4930 = vld [vmem:[#allocation7 + $0x30] sm:$0xff]
    %v4931 = vld [vmem:[#allocation7 + $0x38] sm:$0xff]
    %v4932 = vld [vmem:[#allocation7 + $0x40] sm:$0xff]
    %v4933 = vld [vmem:[#allocation7 + $0x48] sm:$0xff]
    %v4934 = vld [vmem:[#allocation7 + $0x50] sm:$0xff]
    %v4935 = vld [vmem:[#allocation7 + $0x58] sm:$0xff]
    %v4936 = vld [vmem:[#allocation7 + $0x60] sm:$0xff]
    %v4937 = vld [vmem:[#allocation7 + $0x68] sm:$0xff]
    %v4938 = vld [vmem:[#allocation7 + $0x70] sm:$0xff]
    %v4939 = vld [vmem:[#allocation7 + $0x78] sm:$0xff]
    %v4940 = vld [vmem:[#allocation7 + $0x80] sm:$0xff]
    %v4941 = vld [vmem:[#allocation7 + $0x88] sm:$0xff]
    %v4942 = vld [vmem:[#allocation7 + $0x90] sm:$0xff]
    %v4943 = vld [vmem:[#allocation7 + $0x98] sm:$0xff]
    %v4944 = vld [vmem:[#allocation7 + $0xa0] sm:$0x3]
    %4946 = vset.pattern.permute.xlu0 0
    %4947 = vperm.xlu0 %4946, %v4924
    %v4948 = vpop.permute.xlu0 %4947
    %4951 = vset.pattern.permute.xlu0 0
    %4952 = vperm.xlu0 %4951, %v4925
    %v4953 = vpop.permute.xlu0 %4952
    %4956 = vset.pattern.permute.xlu0 0
    %4957 = vperm.xlu0 %4956, %v4926
    %v4958 = vpop.permute.xlu0 %4957
    %4961 = vset.pattern.permute.xlu0 0
    %4962 = vperm.xlu0 %4961, %v4927
    %v4963 = vpop.permute.xlu0 %4962
    %4966 = vset.pattern.permute.xlu0 0
    %4967 = vperm.xlu0 %4966, %v4928
    %v4968 = vpop.permute.xlu0 %4967
    %4971 = vset.pattern.permute.xlu0 0
    %4972 = vperm.xlu0 %4971, %v4929
    %v4973 = vpop.permute.xlu0 %4972
    %4976 = vset.pattern.permute.xlu0 0
    %4977 = vperm.xlu0 %4976, %v4930
    %v4978 = vpop.permute.xlu0 %4977
    %4981 = vset.pattern.permute.xlu0 0
    %4982 = vperm.xlu0 %4981, %v4931
    %v4983 = vpop.permute.xlu0 %4982
    %4986 = vset.pattern.permute.xlu0 0
    %4987 = vperm.xlu0 %4986, %v4932
    %v4988 = vpop.permute.xlu0 %4987
    %4991 = vset.pattern.permute.xlu0 0
    %4992 = vperm.xlu0 %4991, %v4933
    %v4993 = vpop.permute.xlu0 %4992
    %4996 = vset.pattern.permute.xlu0 0
    %4997 = vperm.xlu0 %4996, %v4934
    %v4998 = vpop.permute.xlu0 %4997
    %5001 = vset.pattern.permute.xlu0 0
    %5002 = vperm.xlu0 %5001, %v4935
    %v5003 = vpop.permute.xlu0 %5002
    %5006 = vset.pattern.permute.xlu0 0
    %5007 = vperm.xlu0 %5006, %v4936
    %v5008 = vpop.permute.xlu0 %5007
    %5011 = vset.pattern.permute.xlu0 0
    %5012 = vperm.xlu0 %5011, %v4937
    %v5013 = vpop.permute.xlu0 %5012
    %5016 = vset.pattern.permute.xlu0 0
    %5017 = vperm.xlu0 %5016, %v4938
    %v5018 = vpop.permute.xlu0 %5017
    %5021 = vset.pattern.permute.xlu0 0
    %5022 = vperm.xlu0 %5021, %v4939
    %v5023 = vpop.permute.xlu0 %5022
    %5026 = vset.pattern.permute.xlu0 0
    %5027 = vperm.xlu0 %5026, %v4940
    %v5028 = vpop.permute.xlu0 %5027
    %5031 = vset.pattern.permute.xlu0 0
    %5032 = vperm.xlu0 %5031, %v4941
    %v5033 = vpop.permute.xlu0 %5032
    %5036 = vset.pattern.permute.xlu0 0
    %5037 = vperm.xlu0 %5036, %v4942
    %v5038 = vpop.permute.xlu0 %5037
    %5041 = vset.pattern.permute.xlu0 0
    %5042 = vperm.xlu0 %5041, %v4943
    %v5043 = vpop.permute.xlu0 %5042
    %5046 = vset.pattern.permute.xlu0 0
    %5047 = vperm.xlu0 %5046, %v4944
    %v5048 = vpop.permute.xlu0 %5047
    %v5050 = vmul.f32 %v4903, %v4948
    %v5051 = vmul.f32 %v4904, %v4953
    %v5052 = vmul.f32 %v4905, %v4958
    %v5053 = vmul.f32 %v4906, %v4963
    %v5054 = vmul.f32 %v4907, %v4968
    %v5055 = vmul.f32 %v4908, %v4973
    %v5056 = vmul.f32 %v4909, %v4978
    %v5057 = vmul.f32 %v4910, %v4983
    %v5058 = vmul.f32 %v4911, %v4988
    %v5059 = vmul.f32 %v4912, %v4993
    %v5060 = vmul.f32 %v4913, %v4998
    %v5061 = vmul.f32 %v4914, %v5003
    %v5062 = vmul.f32 %v4915, %v5008
    %v5063 = vmul.f32 %v4916, %v5013
    %v5064 = vmul.f32 %v4917, %v5018
    %v5065 = vmul.f32 %v4918, %v5023
    %v5066 = vmul.f32 %v4919, %v5028
    %v5067 = vmul.f32 %v4920, %v5033
    %v5068 = vmul.f32 %v4921, %v5038
    %v5069 = vmul.f32 %v4922, %v5043
    %v5070 = vmul.f32 %v4923, %v5048
    %v5071 = vadd.f32 %v5050, %v5051
    %v5072 = vadd.f32 %v5071, %v5052
    %v5073 = vadd.f32 %v5072, %v5053
    %v5074 = vadd.f32 %v5073, %v5054
    %v5075 = vadd.f32 %v5074, %v5055
    %v5076 = vadd.f32 %v5075, %v5056
    %v5077 = vadd.f32 %v5076, %v5057
    %v5078 = vadd.f32 %v5077, %v5058
    %v5079 = vadd.f32 %v5078, %v5059
    %v5080 = vadd.f32 %v5079, %v5060
    %v5081 = vadd.f32 %v5080, %v5061
    %v5082 = vadd.f32 %v5081, %v5062
    %v5083 = vadd.f32 %v5082, %v5063
    %v5084 = vadd.f32 %v5083, %v5064
    %v5085 = vadd.f32 %v5084, %v5065
    %v5086 = vadd.f32 %v5085, %v5066
    %v5087 = vadd.f32 %v5086, %v5067
    %v5088 = vadd.f32 %v5087, %v5068
    %v5089 = vadd.f32 %v5088, %v5069
    %vm5090 = vcmask 1041408
    %v5091 = vsel %vm5090, %v5070, 0.0
    %v5092 = vadd.f32 %v5089, %v5091
    %v5093 = vrot.slane %v5092, 4
    %v5094 = vadd.f32 %v5092, %v5093
    %v5095 = vrot.slane %v5094, 2
    %v5096 = vadd.f32 %v5094, %v5095
    %v5097 = vrot.slane %v5096, 1
    %v5098 = vadd.f32 %v5096, %v5097
    %v5099 = vmul.f32 %v5098, 0.0078125
    %v5100 = vsub.f32 %v4903, %v5099
    %v5101 = vsub.f32 %v4904, %v5099
    %v5102 = vsub.f32 %v4905, %v5099
    %v5103 = vsub.f32 %v4906, %v5099
    %v5104 = vsub.f32 %v4907, %v5099
    %v5105 = vsub.f32 %v4908, %v5099
    %v5106 = vsub.f32 %v4909, %v5099
    %v5107 = vsub.f32 %v4910, %v5099
    %v5108 = vsub.f32 %v4911, %v5099
    %v5109 = vsub.f32 %v4912, %v5099
    %v5110 = vsub.f32 %v4913, %v5099
    %v5111 = vsub.f32 %v4914, %v5099
    %v5112 = vsub.f32 %v4915, %v5099
    %v5113 = vsub.f32 %v4916, %v5099
    %v5114 = vsub.f32 %v4917, %v5099
    %v5115 = vsub.f32 %v4918, %v5099
    %v5116 = vsub.f32 %v4919, %v5099
    %v5117 = vsub.f32 %v4920, %v5099
    %v5118 = vsub.f32 %v4921, %v5099
    %v5119 = vsub.f32 %v4922, %v5099
    %v5120 = vsub.f32 %v4923, %v5099
    %v5121 = vmul.f32 %v5100, %v4948
    %v5122 = vmul.f32 %v5101, %v4953
    %v5123 = vmul.f32 %v5102, %v4958
    %v5124 = vmul.f32 %v5103, %v4963
    %v5125 = vmul.f32 %v5104, %v4968
    %v5126 = vmul.f32 %v5105, %v4973
    %v5127 = vmul.f32 %v5106, %v4978
    %v5128 = vmul.f32 %v5107, %v4983
    %v5129 = vmul.f32 %v5108, %v4988
    %v5130 = vmul.f32 %v5109, %v4993
    %v5131 = vmul.f32 %v5110, %v4998
    %v5132 = vmul.f32 %v5111, %v5003
    %v5133 = vmul.f32 %v5112, %v5008
    %v5134 = vmul.f32 %v5113, %v5013
    %v5135 = vmul.f32 %v5114, %v5018
    %v5136 = vmul.f32 %v5115, %v5023
    %v5137 = vmul.f32 %v5116, %v5028
    %v5138 = vmul.f32 %v5117, %v5033
    %v5139 = vmul.f32 %v5118, %v5038
    %v5140 = vmul.f32 %v5119, %v5043
    %v5141 = vmul.f32 %v5120, %v5048
    %v5142 = vmul.f32 %v5121, %v5121
    %v5143 = vmul.f32 %v5122, %v5122
    %v5144 = vmul.f32 %v5123, %v5123
    %v5145 = vmul.f32 %v5124, %v5124
    %v5146 = vmul.f32 %v5125, %v5125
    %v5147 = vmul.f32 %v5126, %v5126
    %v5148 = vmul.f32 %v5127, %v5127
    %v5149 = vmul.f32 %v5128, %v5128
    %v5150 = vmul.f32 %v5129, %v5129
    %v5151 = vmul.f32 %v5130, %v5130
    %v5152 = vmul.f32 %v5131, %v5131
    %v5153 = vmul.f32 %v5132, %v5132
    %v5154 = vmul.f32 %v5133, %v5133
    %v5155 = vmul.f32 %v5134, %v5134
    %v5156 = vmul.f32 %v5135, %v5135
    %v5157 = vmul.f32 %v5136, %v5136
    %v5158 = vmul.f32 %v5137, %v5137
    %v5159 = vmul.f32 %v5138, %v5138
    %v5160 = vmul.f32 %v5139, %v5139
    %v5161 = vmul.f32 %v5140, %v5140
    %v5162 = vmul.f32 %v5141, %v5141
    %v5163 = vadd.f32 %v5142, %v5143
    %v5164 = vadd.f32 %v5163, %v5144
    %v5165 = vadd.f32 %v5164, %v5145
    %v5166 = vadd.f32 %v5165, %v5146
    %v5167 = vadd.f32 %v5166, %v5147
    %v5168 = vadd.f32 %v5167, %v5148
    %v5169 = vadd.f32 %v5168, %v5149
    %v5170 = vadd.f32 %v5169, %v5150
    %v5171 = vadd.f32 %v5170, %v5151
    %v5172 = vadd.f32 %v5171, %v5152
    %v5173 = vadd.f32 %v5172, %v5153
    %v5174 = vadd.f32 %v5173, %v5154
    %v5175 = vadd.f32 %v5174, %v5155
    %v5176 = vadd.f32 %v5175, %v5156
    %v5177 = vadd.f32 %v5176, %v5157
    %v5178 = vadd.f32 %v5177, %v5158
    %v5179 = vadd.f32 %v5178, %v5159
    %v5180 = vadd.f32 %v5179, %v5160
    %v5181 = vadd.f32 %v5180, %v5161
    %v5182 = vsel %vm5090, %v5162, 0.0
    %v5183 = vadd.f32 %v5181, %v5182
    %v5184 = vrot.slane %v5183, 4
    %v5185 = vadd.f32 %v5183, %v5184
    %v5186 = vrot.slane %v5185, 2
    %v5187 = vadd.f32 %v5185, %v5186
    %v5188 = vrot.slane %v5187, 1
    %v5189 = vadd.f32 %v5187, %v5188
    %v5190 = vmul.f32 %v5189, 0.0078125
    %v5191 = vadd.f32 %v5190, 1e-05
    %v5192 = vrsqrt.pop %v5191
    %v5193 = vmul.f32 %v5100, %v5192
    %v5194 = vmul.f32 %v5101, %v5192
    %v5195 = vmul.f32 %v5102, %v5192
    %v5196 = vmul.f32 %v5103, %v5192
    %v5197 = vmul.f32 %v5104, %v5192
    %v5198 = vmul.f32 %v5105, %v5192
    %v5199 = vmul.f32 %v5106, %v5192
    %v5200 = vmul.f32 %v5107, %v5192
    %v5201 = vmul.f32 %v5108, %v5192
    %v5202 = vmul.f32 %v5109, %v5192
    %v5203 = vmul.f32 %v5110, %v5192
    %v5204 = vmul.f32 %v5111, %v5192
    %v5205 = vmul.f32 %v5112, %v5192
    %v5206 = vmul.f32 %v5113, %v5192
    %v5207 = vmul.f32 %v5114, %v5192
    %v5208 = vmul.f32 %v5115, %v5192
    %v5209 = vmul.f32 %v5116, %v5192
    %v5210 = vmul.f32 %v5117, %v5192
    %v5211 = vmul.f32 %v5118, %v5192
    %v5212 = vmul.f32 %v5119, %v5192
    %v5213 = vmul.f32 %v5120, %v5192
    %v5214 = vld [vmem:[#allocation8] sm:$0x1]
    %v5216 = vlaneseq
    %v5217 = vshrl.u32 %v5216, 7
    %v5218 = vsub.s32 0, %v5217
    %v5219 = vrot.slane %v5214, %v5218
    %v5221 = vmul.f32 %v5193, %v5219
    %v5222 = vmul.f32 %v5194, %v5219
    %v5223 = vmul.f32 %v5195, %v5219
    %v5224 = vmul.f32 %v5196, %v5219
    %v5225 = vmul.f32 %v5197, %v5219
    %v5226 = vmul.f32 %v5198, %v5219
    %v5227 = vmul.f32 %v5199, %v5219
    %v5228 = vmul.f32 %v5200, %v5219
    %v5229 = vmul.f32 %v5201, %v5219
    %v5230 = vmul.f32 %v5202, %v5219
    %v5231 = vmul.f32 %v5203, %v5219
    %v5232 = vmul.f32 %v5204, %v5219
    %v5233 = vmul.f32 %v5205, %v5219
    %v5234 = vmul.f32 %v5206, %v5219
    %v5235 = vmul.f32 %v5207, %v5219
    %v5236 = vmul.f32 %v5208, %v5219
    %v5237 = vmul.f32 %v5209, %v5219
    %v5238 = vmul.f32 %v5210, %v5219
    %v5239 = vmul.f32 %v5211, %v5219
    %v5240 = vmul.f32 %v5212, %v5219
    %v5241 = vmul.f32 %v5213, %v5219
    %v5242 = vld [vmem:[#allocation10] sm:$0x1]
    %v5244 = vlaneseq
    %v5245 = vshrl.u32 %v5244, 7
    %v5246 = vsub.s32 0, %v5245
    %v5247 = vrot.slane %v5242, %v5246
    %v5249 = vadd.f32 %v5221, %v5247
    %v5250 = vadd.f32 %v5222, %v5247
    %v5251 = vadd.f32 %v5223, %v5247
    %v5252 = vadd.f32 %v5224, %v5247
    %v5253 = vadd.f32 %v5225, %v5247
    %v5254 = vadd.f32 %v5226, %v5247
    %v5255 = vadd.f32 %v5227, %v5247
    %v5256 = vadd.f32 %v5228, %v5247
    %v5257 = vadd.f32 %v5229, %v5247
    %v5258 = vadd.f32 %v5230, %v5247
    %v5259 = vadd.f32 %v5231, %v5247
    %v5260 = vadd.f32 %v5232, %v5247
    %v5261 = vadd.f32 %v5233, %v5247
    %v5262 = vadd.f32 %v5234, %v5247
    %v5263 = vadd.f32 %v5235, %v5247
    %v5264 = vadd.f32 %v5236, %v5247
    %v5265 = vadd.f32 %v5237, %v5247
    %v5266 = vadd.f32 %v5238, %v5247
    %v5267 = vadd.f32 %v5239, %v5247
    %v5268 = vadd.f32 %v5240, %v5247
    %v5269 = vadd.f32 %v5241, %v5247
    %vm5270 = vcmp.gt.f32.partialorder %v5249, 0.0
    %vm5271 = vcmp.gt.f32.partialorder %v5250, 0.0
    %vm5272 = vcmp.gt.f32.partialorder %v5251, 0.0
    %vm5273 = vcmp.gt.f32.partialorder %v5252, 0.0
    %vm5274 = vcmp.gt.f32.partialorder %v5253, 0.0
    %vm5275 = vcmp.gt.f32.partialorder %v5254, 0.0
    %vm5276 = vcmp.gt.f32.partialorder %v5255, 0.0
    %vm5277 = vcmp.gt.f32.partialorder %v5256, 0.0
    %vm5278 = vcmp.gt.f32.partialorder %v5257, 0.0
    %vm5279 = vcmp.gt.f32.partialorder %v5258, 0.0
    %vm5280 = vcmp.gt.f32.partialorder %v5259, 0.0
    %vm5281 = vcmp.gt.f32.partialorder %v5260, 0.0
    %vm5282 = vcmp.gt.f32.partialorder %v5261, 0.0
    %vm5283 = vcmp.gt.f32.partialorder %v5262, 0.0
    %vm5284 = vcmp.gt.f32.partialorder %v5263, 0.0
    %vm5285 = vcmp.gt.f32.partialorder %v5264, 0.0
    %vm5286 = vcmp.gt.f32.partialorder %v5265, 0.0
    %vm5287 = vcmp.gt.f32.partialorder %v5266, 0.0
    %vm5288 = vcmp.gt.f32.partialorder %v5267, 0.0
    %vm5289 = vcmp.gt.f32.partialorder %v5268, 0.0
    %vm5290 = vcmp.gt.f32.partialorder %v5269, 0.0
    %v5291 = vmul.f32 %v5249, 0.2
    %v5292 = vmul.f32 %v5250, 0.2
    %v5293 = vmul.f32 %v5251, 0.2
    %v5294 = vmul.f32 %v5252, 0.2
    %v5295 = vmul.f32 %v5253, 0.2
    %v5296 = vmul.f32 %v5254, 0.2
    %v5297 = vmul.f32 %v5255, 0.2
    %v5298 = vmul.f32 %v5256, 0.2
    %v5299 = vmul.f32 %v5257, 0.2
    %v5300 = vmul.f32 %v5258, 0.2
    %v5301 = vmul.f32 %v5259, 0.2
    %v5302 = vmul.f32 %v5260, 0.2
    %v5303 = vmul.f32 %v5261, 0.2
    %v5304 = vmul.f32 %v5262, 0.2
    %v5305 = vmul.f32 %v5263, 0.2
    %v5306 = vmul.f32 %v5264, 0.2
    %v5307 = vmul.f32 %v5265, 0.2
    %v5308 = vmul.f32 %v5266, 0.2
    %v5309 = vmul.f32 %v5267, 0.2
    %v5310 = vmul.f32 %v5268, 0.2
    %v5311 = vmul.f32 %v5269, 0.2
    %v5312 = vsel %vm5270, %v5249, %v5291
    %v5313 = vsel %vm5271, %v5250, %v5292
    %v5314 = vsel %vm5272, %v5251, %v5293
    %v5315 = vsel %vm5273, %v5252, %v5294
    %v5316 = vsel %vm5274, %v5253, %v5295
    %v5317 = vsel %vm5275, %v5254, %v5296
    %v5318 = vsel %vm5276, %v5255, %v5297
    %v5319 = vsel %vm5277, %v5256, %v5298
    %v5320 = vsel %vm5278, %v5257, %v5299
    %v5321 = vsel %vm5279, %v5258, %v5300
    %v5322 = vsel %vm5280, %v5259, %v5301
    %v5323 = vsel %vm5281, %v5260, %v5302
    %v5324 = vsel %vm5282, %v5261, %v5303
    %v5325 = vsel %vm5283, %v5262, %v5304
    %v5326 = vsel %vm5284, %v5263, %v5305
    %v5327 = vsel %vm5285, %v5264, %v5306
    %v5328 = vsel %vm5286, %v5265, %v5307
    %v5329 = vsel %vm5287, %v5266, %v5308
    %v5330 = vsel %vm5288, %v5267, %v5309
    %v5331 = vsel %vm5289, %v5268, %v5310
    %v5332 = vsel %vm5290, %v5269, %v5311
    %v5333 = vpack.c.bf16 %v5313, %v5312
    %v5334 = vpack.c.bf16 %v5315, %v5314
    %v5335 = vpack.c.bf16 %v5317, %v5316
    %v5336 = vpack.c.bf16 %v5319, %v5318
    %v5337 = vpack.c.bf16 %v5321, %v5320
    %v5338 = vpack.c.bf16 %v5323, %v5322
    %v5339 = vpack.c.bf16 %v5325, %v5324
    %v5340 = vpack.c.bf16 %v5327, %v5326
    %v5341 = vpack.c.bf16 %v5329, %v5328
    %v5342 = vpack.c.bf16 %v5331, %v5330
    %v5343 = vpack.c.bf16 %v5332, %v5332
    %v5355 = vunpack.c.l.b16 %v5333
    %v5356 = vunpack.c.h.b16 %v5333
    %v5357 = vunpack.c.l.b16 %v5334
    %v5358 = vunpack.c.h.b16 %v5334
    %v5359 = vunpack.c.l.b16 %v5335
    %v5360 = vunpack.c.h.b16 %v5335
    %v5361 = vunpack.c.l.b16 %v5336
    %v5362 = vunpack.c.h.b16 %v5336
    %v5363 = vunpack.c.l.b16 %v5337
    %v5364 = vunpack.c.h.b16 %v5337
    %v5365 = vunpack.c.l.b16 %v5338
    %v5366 = vunpack.c.h.b16 %v5338
    %v5367 = vunpack.c.l.b16 %v5339
    %v5368 = vunpack.c.h.b16 %v5339
    %v5369 = vunpack.c.l.b16 %v5340
    %v5370 = vunpack.c.h.b16 %v5340
    %v5371 = vunpack.c.l.b16 %v5341
    %v5372 = vunpack.c.h.b16 %v5341
    %v5373 = vunpack.c.l.b16 %v5342
    %v5374 = vunpack.c.h.b16 %v5342
    %v5375 = vunpack.c.l.b16 %v5343
    %v5376 = vpack.c.b16 %v5355, %v5355
    %v5377 = vpack.c.b16 %v5356, %v5356
    %v5378 = vpack.c.b16 %v5357, %v5357
    %v5379 = vpack.c.b16 %v5358, %v5358
    %v5380 = vpack.c.b16 %v5359, %v5359
    %v5381 = vpack.c.b16 %v5360, %v5360
    %v5382 = vpack.c.b16 %v5361, %v5361
    %v5383 = vpack.c.b16 %v5362, %v5362
    %v5384 = vpack.c.b16 %v5363, %v5363
    %v5385 = vpack.c.b16 %v5364, %v5364
    %v5386 = vpack.c.b16 %v5365, %v5365
    %v5387 = vpack.c.b16 %v5366, %v5366
    %v5388 = vpack.c.b16 %v5367, %v5367
    %v5389 = vpack.c.b16 %v5368, %v5368
    %v5390 = vpack.c.b16 %v5369, %v5369
    %v5391 = vpack.c.b16 %v5370, %v5370
    %v5392 = vpack.c.b16 %v5371, %v5371
    %v5393 = vpack.c.b16 %v5372, %v5372
    %v5394 = vpack.c.b16 %v5373, %v5373
    %v5395 = vpack.c.b16 %v5374, %v5374
    %v5396 = vpack.c.b16 %v5375, %v5375
    %5418 = vst [vmem:[#allocation11] sm:$0xf] %v5376
    %5419 = vst [vmem:[#allocation11 + $0x4] sm:$0xf] %v5377
    %5420 = vst [vmem:[#allocation11 + $0x8] sm:$0xf] %v5378
    %5421 = vst [vmem:[#allocation11 + $0xc] sm:$0xf] %v5379
    %5422 = vst [vmem:[#allocation11 + $0x10] sm:$0xf] %v5380
    %5423 = vst [vmem:[#allocation11 + $0x14] sm:$0xf] %v5381
    %5424 = vst [vmem:[#allocation11 + $0x18] sm:$0xf] %v5382
    %5425 = vst [vmem:[#allocation11 + $0x1c] sm:$0xf] %v5383
    %5426 = vst [vmem:[#allocation11 + $0x20] sm:$0xf] %v5384
    %5427 = vst [vmem:[#allocation11 + $0x24] sm:$0xf] %v5385
    %5428 = vst [vmem:[#allocation11 + $0x28] sm:$0xf] %v5386
    %5429 = vst [vmem:[#allocation11 + $0x2c] sm:$0xf] %v5387
    %5430 = vst [vmem:[#allocation11 + $0x30] sm:$0xf] %v5388
    %5431 = vst [vmem:[#allocation11 + $0x34] sm:$0xf] %v5389
    %5432 = vst [vmem:[#allocation11 + $0x38] sm:$0xf] %v5390
    %5433 = vst [vmem:[#allocation11 + $0x3c] sm:$0xf] %v5391
    %5434 = vst [vmem:[#allocation11 + $0x40] sm:$0xf] %v5392
    %5435 = vst [vmem:[#allocation11 + $0x44] sm:$0xf] %v5393
    %5436 = vst [vmem:[#allocation11 + $0x48] sm:$0xf] %v5394
    %5437 = vst [vmem:[#allocation11 + $0x4c] sm:$0xf] %v5395
    %5438 = vst [vmem:[#allocation11 + $0x50] sm:$0x1] %v5396
    // Predicated region
    $region42: #{basic_discriminator_forward.5} parent=1 // pred_check
      _
    $region43: #{basic_discriminator_forward.5} parent=1 // pred_check_branch
      %5440 = sbr.rel (0) target = $region45
    $region44: #{basic_discriminator_forward.5} parent=1 // pred_region
      %s5442 = ssub.s32 1344, 1344
      %5443 = vsyncadd [#allocation4], %s5442
      %s5444 = sshll.u32 [#allocation11], 4
      %s5445 = int_to_ptr.vmem [resolvable:$true] %s5444
      %5450 = dma.vmem_to_hbm [thread:$0]  %s5445, 1344, %s5, [#allocation4], 64, 64, 4
    $region45: #{basic_discriminator_forward.5} parent=1 // pred_fallthru
      _
    // Predicated region
    $region46: #{basic_discriminator_forward.5} parent=1 // pred_check
      _
    $region47: #{basic_discriminator_forward.5} parent=1 // pred_check_branch
      %5452 = sbr.rel (0) target = $region49
    $region48: #{basic_discriminator_forward.5} parent=1 // pred_region
      %5453 = dma.done [#allocation4], 1344
    $region49: #{basic_discriminator_forward.5} parent=1 // pred_fallthru
      _
    %5454 = vsyncpa [#allocation3], 1
    %5455 = vsyncpa [#allocation6], 1
    %5456 = vsyncpa [#allocation9], 1
    %5457 = vsyncpa [#allocation4], 1

</llo_original>
